<compile_context>
chip_gen: v5e
topology: v5e:2x2
jax: 0.10.0
libtpu: 0.0.40
codegen_flags: <defaults>
</compile_context>

<pallas_src>
import functools

import jax
import jax.numpy as jnp
from jax import lax
from jax.experimental import pallas as pl
from jax.experimental.pallas import tpu as pltpu  # noqa: F401  (TPU backend)

LANE = 128  # vreg lane width / padded conv channel count


# ---------------------------------------------------------------------------
# Pallas kernels
# ---------------------------------------------------------------------------
def _mm_bias_relu_kernel(x_ref, w_ref, b_ref, o_ref):
    # x: [M, K] bf16, w: [K, N] bf16, b: [1, N] f32 -> o: [M, N] bf16
    y = jnp.dot(x_ref[...], w_ref[...], preferred_element_type=jnp.float32)
    y = jnp.maximum(y + b_ref[...], 0.0)          # f32 epilogue (v5e-safe)
    o_ref[...] = y.astype(o_ref.dtype)


def mm_bias_relu(x, w, b):
    """relu(x @ w + b) on the MXU; whole problem resident in VMEM (shapes are small)."""
    M, K = x.shape
    _, N = w.shape
    return pl.pallas_call(
        _mm_bias_relu_kernel,
        out_shape=jax.ShapeDtypeStruct((M, N), jnp.bfloat16),
        grid=(1,),
        in_specs=[
            pl.BlockSpec((M, K), lambda i: (0, 0)),
            pl.BlockSpec((K, N), lambda i: (0, 0)),
            pl.BlockSpec((1, N), lambda i: (0, 0)),
        ],
        out_specs=pl.BlockSpec((M, N), lambda i: (0, 0)),
    )(x, w, b)


def _head_kernel(feat_ref, w1_ref, b1_ref, w2a_ref, b2a_ref, w2v_ref, b2v_ref, o_ref,
                 *, hidden):
    # feat: [B, 2048] bf16   w1: [2048, 1024] bf16 (adv|value hiddens packed)
    # Both 1024->512 Linears as one MXU call, then the two small second Linears and
    # the dueling combine as an epilogue.  All accumulation / epilogue math in f32.
    h = jnp.dot(feat_ref[...], w1_ref[...], preferred_element_type=jnp.float32)
    h = jnp.maximum(h + b1_ref[...], 0.0).astype(w2a_ref.dtype)   # -> bf16 for MXU
    adv = jnp.dot(h[:, :hidden], w2a_ref[...],
                  preferred_element_type=jnp.float32) + b2a_ref[...]       # [B, A]
    val = jnp.dot(h[:, hidden:], w2v_ref[...],
                  preferred_element_type=jnp.float32) + b2v_ref[...]       # [B, 1]
    # PyTorch `advantage.mean()` (no dim) -> mean over ALL elements.
    mean = jnp.sum(adv) * (1.0 / adv.size)
    o_ref[...] = (val + adv - mean).astype(o_ref.dtype)


def dueling_head(feat, w1, b1, w2a, b2a, w2v, b2v):
    B, F = feat.shape
    H2 = w1.shape[1]
    hidden = H2 // 2
    A = w2a.shape[1]
    return pl.pallas_call(
        functools.partial(_head_kernel, hidden=hidden),
        out_shape=jax.ShapeDtypeStruct((B, A), jnp.float32),
        grid=(1,),
        in_specs=[
            pl.BlockSpec((B, F), lambda i: (0, 0)),
            pl.BlockSpec((F, H2), lambda i: (0, 0)),
            pl.BlockSpec((1, H2), lambda i: (0, 0)),
            pl.BlockSpec((hidden, A), lambda i: (0, 0)),
            pl.BlockSpec((1, A), lambda i: (0, 0)),
            pl.BlockSpec((hidden, 1), lambda i: (0, 0)),
            pl.BlockSpec((1, 1), lambda i: (0, 0)),
        ],
        out_specs=pl.BlockSpec((B, A), lambda i: (0, 0)),
    )(feat, w1, b1, w2a, b2a, w2v, b2v)


# ---------------------------------------------------------------------------
# Glue: single-op patch extraction (identity conv) — feature order is (C, kh, kw),
# matching PyTorch weight.view(O, C*kh*kw).
# ---------------------------------------------------------------------------
def conv_layer(h_nhwc, wk, bk, *, ksize, stride):
    B = h_nhwc.shape[0]
    patches = lax.conv_general_dilated_patches(
        h_nhwc, (ksize, ksize), (stride, stride), "VALID",
        dimension_numbers=("NHWC", "HWIO", "NHWC"))
    _, OH, OW, K = patches.shape
    y = mm_bias_relu(patches.reshape(B * OH * OW, K), wk, bk)   # [B*OH*OW, 128] bf16
    return y.reshape(B, OH, OW, LANE)


# ---------------------------------------------------------------------------
# Parameters (PyTorch layout) + one-time packing into kernel-friendly layout
# ---------------------------------------------------------------------------
def init_params(key, in_channels=4, num_actions=4):
    ks = jax.random.split(key, 14)
    n = lambda k, shape, s: jax.random.normal(k, shape, jnp.float32) * s
    return {
        # conv stack (PyTorch: [O, C, kh, kw])
        "c1w": n(ks[0], (32, in_channels, 8, 8), 0.05), "c1b": n(ks[1], (32,), 0.05),
        "c2w": n(ks[2], (64, 32, 4, 4), 0.05),          "c2b": n(ks[3], (64,), 0.05),
        "c3w": n(ks[4], (64, 64, 3, 3), 0.05),          "c3b": n(ks[5], (64,), 0.05),
        # advantage head (PyTorch Linear: [out, in])
        "a1w": n(ks[6], (512, 4 * 4 * 64), 0.03),       "a1b": n(ks[7], (512,), 0.03),
        "a2w": n(ks[8], (num_actions, 512), 0.03),      "a2b": n(ks[9], (num_actions,), 0.03),
        # value head
        "v1w": n(ks[10], (512, 4 * 4 * 64), 0.03),      "v1b": n(ks[11], (512,), 0.03),
        "v2w": n(ks[12], (1, 512), 0.03),               "v2b": n(ks[13], (1,), 0.03),
    }


def prepare_params(p):
    """Pad / permute / pack PyTorch-layout weights once into the kernel layout (bf16)."""
    bf = jnp.bfloat16

    def prep_conv(w, b, c_pad):
        O, C, KH, KW = w.shape
        w = jnp.pad(w, ((0, 0), (0, c_pad - C), (0, 0), (0, 0)))      # pad input channels
        wk = w.reshape(O, c_pad * KH * KW).T                          # [K, O]
        wk = jnp.pad(wk, ((0, 0), (0, LANE - O)))                     # lane-dense output
        bk = jnp.pad(b, (0, LANE - O)).reshape(1, LANE)               # padded bias = 0
        return wk.astype(bf), bk.astype(jnp.float32)

    c1w, c1b = prep_conv(p["c1w"], p["c1b"], p["c1w"].shape[1])       # C=4, no channel pad
    c2w, c2b = prep_conv(p["c2w"], p["c2b"], LANE)                    # C: 32 -> 128 (zeros)
    c3w, c3b = prep_conv(p["c3w"], p["c3b"], LANE)                    # C: 64 -> 128 (zeros)

    # Pack advantage/value first Linears into one [2048, 1024] matrix whose rows are
    # permuted from PyTorch's (C,H,W) flatten order to the kernel's (H,W,Cpad) order.
    hid = p["a1w"].shape[0]                                           # 512
    a1 = p["a1w"].reshape(hid, 64, 4, 4)
    v1 = p["v1w"].reshape(hid, 64, 4, 4)
    w1 = jnp.concatenate([a1, v1], axis=0)                            # [1024, 64, 4, 4]
    w1 = jnp.pad(w1, ((0, 0), (0, LANE - 64), (0, 0), (0, 0)))        # pad feat channels
    w1 = w1.transpose(2, 3, 1, 0).reshape(4 * 4 * LANE, 2 * hid)      # row = (h*4+w)*128+c
    b1 = jnp.concatenate([p["a1b"], p["v1b"]]).reshape(1, 2 * hid)

    return {
        "c1w": c1w, "c1b": c1b, "c2w": c2w, "c2b": c2b, "c3w": c3w, "c3b": c3b,
        "w1": w1.astype(bf), "b1": b1.astype(jnp.float32),
        "w2a": p["a2w"].T.astype(bf), "b2a": p["a2b"].reshape(1, -1).astype(jnp.float32),
        "w2v": p["v2w"].T.astype(bf), "b2v": p["v2b"].reshape(1, -1).astype(jnp.float32),
    }


# ---------------------------------------------------------------------------
# Forward pass
# ---------------------------------------------------------------------------
def dueling_dqn_forward(kp, x):
    """x: [B, 4, 60, 60] f32 (NCHW) -> q-values [B, num_actions] f32."""
    B = x.shape[0]
    h = x.transpose(0, 2, 3, 1).astype(jnp.bfloat16)                  # NHWC, bf16, once
    h = conv_layer(h, kp["c1w"], kp["c1b"], ksize=8, stride=4)        # [B,14,14,128]
    h = conv_layer(h, kp["c2w"], kp["c2b"], ksize=4, stride=2)        # [B, 6, 6,128]
    h = conv_layer(h, kp["c3w"], kp["c3b"], ksize=3, stride=1)        # [B, 4, 4,128]
    feat = h.reshape(B, 4 * 4 * LANE)                                 # [B, 2048] bf16
    return dueling_head(feat, kp["w1"], kp["b1"],
                        kp["w2a"], kp["b2a"], kp["w2v"], kp["b2v"])   # [B, A] f32


# ---------------------------------------------------------------------------
# References (pure JAX, PyTorch-faithful structure) for silent sanity checks.
# ---------------------------------------------------------------------------
def _reference_forward_bf16(p, x):
    """Same math & same bf16 rounding points as the Pallas path (tight check)."""
    bf = jnp.bfloat16

    def conv(h, w, b, s):
        y = lax.conv_general_dilated(h, w.astype(bf), (s, s), "VALID",
                                     dimension_numbers=("NCHW", "OIHW", "NCHW"),
                                     preferred_element_type=jnp.float32)
        return jnp.maximum(y + b[None, :, None, None], 0.0).astype(bf)

    def lin(u, w, b):
        return jnp.dot(u, w.T.astype(bf), preferred_element_type=jnp.float32) + b

    h = conv(x.astype(bf), p["c1w"], p["c1b"], 4)
    h = conv(h, p["c2w"], p["c2b"], 2)
    h = conv(h, p["c3w"], p["c3b"], 1)
    feat = h.reshape(x.shape[0], -1)                                  # bf16, (C,H,W) order
    a = jnp.maximum(lin(feat, p["a1w"], p["a1b"]), 0.0).astype(bf)
    adv = lin(a, p["a2w"], p["a2b"])
    v = jnp.maximum(lin(feat, p["v1w"], p["v1b"]), 0.0).astype(bf)
    val = lin(v, p["v2w"], p["v2b"])
    return val + adv - jnp.sum(adv) / adv.size


def _reference_forward_f32(p, x):
    """Plain f32 reference of the PyTorch module (loose check vs bf16 kernel path)."""
    def conv(h, w, b, s):
        y = lax.conv_general_dilated(h, w, (s, s), "VALID",
                                     dimension_numbers=("NCHW", "OIHW", "NCHW"))
        return jnp.maximum(y + b[None, :, None, None], 0.0)

    h = conv(x, p["c1w"], p["c1b"], 4)
    h = conv(h, p["c2w"], p["c2b"], 2)
    h = conv(h, p["c3w"], p["c3b"], 1)
    feat = h.reshape(x.shape[0], -1)
    adv = jnp.maximum(feat @ p["a1w"].T + p["a1b"], 0.0) @ p["a2w"].T + p["a2b"]
    val = jnp.maximum(feat @ p["v1w"].T + p["v1b"], 0.0) @ p["v2w"].T + p["v2b"]
    return val + adv - adv.mean()


if __name__ == "__main__":
    key = jax.random.PRNGKey(0)
    pkey, xkey = jax.random.split(key)
    params = init_params(pkey, in_channels=4, num_actions=4)
    kparams = prepare_params(params)

    # 60x60 spatial so the conv stack yields the 4*4*64 features the Linear layers expect.
    x = jax.random.normal(xkey, (2, 4, 60, 60), jnp.float32)

    fwd = jax.jit(dueling_dqn_forward)
    q = jax.block_until_ready(fwd(kparams, x))
    assert q.shape == (2, 4)

    ref_bf16 = jax.block_until_ready(_reference_forward_bf16(params, x))
    ref_f32 = jax.block_until_ready(_reference_forward_f32(params, x))
    assert jnp.allclose(q, ref_bf16, atol=2e-3, rtol=2e-3), (q, ref_bf16)
    assert jnp.allclose(q, ref_f32, atol=5e-2, rtol=5e-2), (q, ref_f32)

    print("KERNEL_OK")
</pallas_src>

<mosaic_0001>
module attributes {stable_mosaic.version = 11 : i64} {
  func.func @_mm_bias_relu_kernel(%arg0: i32, %arg1: memref<392x256xbf16, #tpu.memory_space<vmem>>, %arg2: memref<256x128xbf16, #tpu.memory_space<vmem>>, %arg3: memref<1x128xf32, #tpu.memory_space<vmem>>, %arg4: memref<392x128xbf16, #tpu.memory_space<vmem>>) attributes {dimension_semantics = [#tpu.dimension_semantics<arbitrary>], iteration_bounds = array<i64: 1>, scalar_prefetch = 0 : i64, scratch_operands = 0 : i64, tpu.core_type = #tpu.core_type<tc>, window_params = [{pipeline_mode = #tpu.pipeline_mode<synchronous>, transform_indices = @transform_0, window_bounds = array<i64: 392, 256>}, {pipeline_mode = #tpu.pipeline_mode<synchronous>, transform_indices = @transform_1, window_bounds = array<i64: 256, 128>}, {pipeline_mode = #tpu.pipeline_mode<synchronous>, transform_indices = @transform_2, window_bounds = array<i64: 1, 128>}, {pipeline_mode = #tpu.pipeline_mode<synchronous>, transform_indices = @transform_3, window_bounds = array<i64: 392, 128>}]} {
    %c0 = arith.constant 0 : index
    %c0_0 = arith.constant 0 : index
    %0 = vector.load %arg1[%c0, %c0_0] : memref<392x256xbf16, #tpu.memory_space<vmem>>, vector<392x256xbf16>
    %c0_1 = arith.constant 0 : index
    %c0_2 = arith.constant 0 : index
    %1 = vector.load %arg2[%c0_1, %c0_2] : memref<256x128xbf16, #tpu.memory_space<vmem>>, vector<256x128xbf16>
    %cst = arith.constant dense<0.000000e+00> : vector<392x128xf32>
    %2 = tpu.matmul %0, %1, %cst {dimension_numbers = #tpu.dot_dimension_numbers<[1], [0], [0], [1], [0, 0, 1, 1], [], []>} : vector<392x256xbf16>, vector<256x128xbf16>, vector<392x128xf32> -> vector<392x128xf32>
    %c0_3 = arith.constant 0 : index
    %c0_4 = arith.constant 0 : index
    %3 = vector.load %arg3[%c0_3, %c0_4] : memref<1x128xf32, #tpu.memory_space<vmem>>, vector<1x128xf32>
    %4 = vector.broadcast %3 : vector<1x128xf32> to vector<392x128xf32>
    %5 = arith.addf %2, %4 : vector<392x128xf32>
    %cst_5 = arith.constant 0.000000e+00 : f32
    %6 = vector.broadcast %cst_5 : f32 to vector<392x128xf32>
    %7 = arith.maximumf %5, %6 : vector<392x128xf32>
    %8 = arith.truncf %7 : vector<392x128xf32> to vector<392x128xbf16>
    %c0_6 = arith.constant 0 : index
    %c0_7 = arith.constant 0 : index
    %9 = vector.load %arg4[%c0_6, %c0_7] : memref<392x128xbf16, #tpu.memory_space<vmem>>, vector<392x128xbf16>
    tpu.vector_store %arg4[%c0_6, %c0_7], %8 {strides = array<i32>} : memref<392x128xbf16, #tpu.memory_space<vmem>>, vector<392x128xbf16>,
    return
  }
  func.func @transform_0(%arg0: i32) -> (i32, i32) {
    %c0_i32 = arith.constant 0 : i32
    %c0_i32_0 = arith.constant 0 : i32
    %c0_i32_1 = arith.constant 0 : i32
    return %c0_i32, %c0_i32_0 : i32, i32
  }
  func.func @transform_1(%arg0: i32) -> (i32, i32) {
    %c0_i32 = arith.constant 0 : i32
    %c0_i32_0 = arith.constant 0 : i32
    %c0_i32_1 = arith.constant 0 : i32
    return %c0_i32, %c0_i32_0 : i32, i32
  }
  func.func @transform_2(%arg0: i32) -> (i32, i32) {
    %c0_i32 = arith.constant 0 : i32
    %c0_i32_0 = arith.constant 0 : i32
    %c0_i32_1 = arith.constant 0 : i32
    return %c0_i32, %c0_i32_0 : i32, i32
  }
  func.func @transform_3(%arg0: i32) -> (i32, i32) {
    %c0_i32 = arith.constant 0 : i32
    %c0_i32_0 = arith.constant 0 : i32
    %c0_i32_1 = arith.constant 0 : i32
    return %c0_i32, %c0_i32_0 : i32, i32
  }
}

module attributes {stable_mosaic.version = 11 : i64} {
  func.func @_mm_bias_relu_kernel(%arg0: i32, %arg1: memref<72x2048xbf16, #tpu.memory_space<vmem>>, %arg2: memref<2048x128xbf16, #tpu.memory_space<vmem>>, %arg3: memref<1x128xf32, #tpu.memory_space<vmem>>, %arg4: memref<72x128xbf16, #tpu.memory_space<vmem>>) attributes {dimension_semantics = [#tpu.dimension_semantics<arbitrary>], iteration_bounds = array<i64: 1>, scalar_prefetch = 0 : i64, scratch_operands = 0 : i64, tpu.core_type = #tpu.core_type<tc>, window_params = [{pipeline_mode = #tpu.pipeline_mode<synchronous>, transform_indices = @transform_0, window_bounds = array<i64: 72, 2048>}, {pipeline_mode = #tpu.pipeline_mode<synchronous>, transform_indices = @transform_1, window_bounds = array<i64: 2048, 128>}, {pipeline_mode = #tpu.pipeline_mode<synchronous>, transform_indices = @transform_2, window_bounds = array<i64: 1, 128>}, {pipeline_mode = #tpu.pipeline_mode<synchronous>, transform_indices = @transform_3, window_bounds = array<i64: 72, 128>}]} {
    %c0 = arith.constant 0 : index
    %c0_0 = arith.constant 0 : index
    %0 = vector.load %arg1[%c0, %c0_0] : memref<72x2048xbf16, #tpu.memory_space<vmem>>, vector<72x2048xbf16>
    %c0_1 = arith.constant 0 : index
    %c0_2 = arith.constant 0 : index
    %1 = vector.load %arg2[%c0_1, %c0_2] : memref<2048x128xbf16, #tpu.memory_space<vmem>>, vector<2048x128xbf16>
    %cst = arith.constant dense<0.000000e+00> : vector<72x128xf32>
    %2 = tpu.matmul %0, %1, %cst {dimension_numbers = #tpu.dot_dimension_numbers<[1], [0], [0], [1], [0, 0, 1, 1], [], []>} : vector<72x2048xbf16>, vector<2048x128xbf16>, vector<72x128xf32> -> vector<72x128xf32>
    %c0_3 = arith.constant 0 : index
    %c0_4 = arith.constant 0 : index
    %3 = vector.load %arg3[%c0_3, %c0_4] : memref<1x128xf32, #tpu.memory_space<vmem>>, vector<1x128xf32>
    %4 = vector.broadcast %3 : vector<1x128xf32> to vector<72x128xf32>
    %5 = arith.addf %2, %4 : vector<72x128xf32>
    %cst_5 = arith.constant 0.000000e+00 : f32
    %6 = vector.broadcast %cst_5 : f32 to vector<72x128xf32>
    %7 = arith.maximumf %5, %6 : vector<72x128xf32>
    %8 = arith.truncf %7 : vector<72x128xf32> to vector<72x128xbf16>
    %c0_6 = arith.constant 0 : index
    %c0_7 = arith.constant 0 : index
    %9 = vector.load %arg4[%c0_6, %c0_7] : memref<72x128xbf16, #tpu.memory_space<vmem>>, vector<72x128xbf16>
    tpu.vector_store %arg4[%c0_6, %c0_7], %8 {strides = array<i32>} : memref<72x128xbf16, #tpu.memory_space<vmem>>, vector<72x128xbf16>,
    return
  }
  func.func @transform_0(%arg0: i32) -> (i32, i32) {
    %c0_i32 = arith.constant 0 : i32
    %c0_i32_0 = arith.constant 0 : i32
    %c0_i32_1 = arith.constant 0 : i32
    return %c0_i32, %c0_i32_0 : i32, i32
  }
  func.func @transform_1(%arg0: i32) -> (i32, i32) {
    %c0_i32 = arith.constant 0 : i32
    %c0_i32_0 = arith.constant 0 : i32
    %c0_i32_1 = arith.constant 0 : i32
    return %c0_i32, %c0_i32_0 : i32, i32
  }
  func.func @transform_2(%arg0: i32) -> (i32, i32) {
    %c0_i32 = arith.constant 0 : i32
    %c0_i32_0 = arith.constant 0 : i32
    %c0_i32_1 = arith.constant 0 : i32
    return %c0_i32, %c0_i32_0 : i32, i32
  }
  func.func @transform_3(%arg0: i32) -> (i32, i32) {
    %c0_i32 = arith.constant 0 : i32
    %c0_i32_0 = arith.constant 0 : i32
    %c0_i32_1 = arith.constant 0 : i32
    return %c0_i32, %c0_i32_0 : i32, i32
  }
}

module attributes {stable_mosaic.version = 11 : i64} {
  func.func @_mm_bias_relu_kernel(%arg0: i32, %arg1: memref<32x1152xbf16, #tpu.memory_space<vmem>>, %arg2: memref<1152x128xbf16, #tpu.memory_space<vmem>>, %arg3: memref<1x128xf32, #tpu.memory_space<vmem>>, %arg4: memref<32x128xbf16, #tpu.memory_space<vmem>>) attributes {dimension_semantics = [#tpu.dimension_semantics<arbitrary>], iteration_bounds = array<i64: 1>, scalar_prefetch = 0 : i64, scratch_operands = 0 : i64, tpu.core_type = #tpu.core_type<tc>, window_params = [{pipeline_mode = #tpu.pipeline_mode<synchronous>, transform_indices = @transform_0, window_bounds = array<i64: 32, 1152>}, {pipeline_mode = #tpu.pipeline_mode<synchronous>, transform_indices = @transform_1, window_bounds = array<i64: 1152, 128>}, {pipeline_mode = #tpu.pipeline_mode<synchronous>, transform_indices = @transform_2, window_bounds = array<i64: 1, 128>}, {pipeline_mode = #tpu.pipeline_mode<synchronous>, transform_indices = @transform_3, window_bounds = array<i64: 32, 128>}]} {
    %c0 = arith.constant 0 : index
    %c0_0 = arith.constant 0 : index
    %0 = vector.load %arg1[%c0, %c0_0] : memref<32x1152xbf16, #tpu.memory_space<vmem>>, vector<32x1152xbf16>
    %c0_1 = arith.constant 0 : index
    %c0_2 = arith.constant 0 : index
    %1 = vector.load %arg2[%c0_1, %c0_2] : memref<1152x128xbf16, #tpu.memory_space<vmem>>, vector<1152x128xbf16>
    %cst = arith.constant dense<0.000000e+00> : vector<32x128xf32>
    %2 = tpu.matmul %0, %1, %cst {dimension_numbers = #tpu.dot_dimension_numbers<[1], [0], [0], [1], [0, 0, 1, 1], [], []>} : vector<32x1152xbf16>, vector<1152x128xbf16>, vector<32x128xf32> -> vector<32x128xf32>
    %c0_3 = arith.constant 0 : index
    %c0_4 = arith.constant 0 : index
    %3 = vector.load %arg3[%c0_3, %c0_4] : memref<1x128xf32, #tpu.memory_space<vmem>>, vector<1x128xf32>
    %4 = vector.broadcast %3 : vector<1x128xf32> to vector<32x128xf32>
    %5 = arith.addf %2, %4 : vector<32x128xf32>
    %cst_5 = arith.constant 0.000000e+00 : f32
    %6 = vector.broadcast %cst_5 : f32 to vector<32x128xf32>
    %7 = arith.maximumf %5, %6 : vector<32x128xf32>
    %8 = arith.truncf %7 : vector<32x128xf32> to vector<32x128xbf16>
    %c0_6 = arith.constant 0 : index
    %c0_7 = arith.constant 0 : index
    %9 = vector.load %arg4[%c0_6, %c0_7] : memref<32x128xbf16, #tpu.memory_space<vmem>>, vector<32x128xbf16>
    tpu.vector_store %arg4[%c0_6, %c0_7], %8 {strides = array<i32>} : memref<32x128xbf16, #tpu.memory_space<vmem>>, vector<32x128xbf16>,
    return
  }
  func.func @transform_0(%arg0: i32) -> (i32, i32) {
    %c0_i32 = arith.constant 0 : i32
    %c0_i32_0 = arith.constant 0 : i32
    %c0_i32_1 = arith.constant 0 : i32
    return %c0_i32, %c0_i32_0 : i32, i32
  }
  func.func @transform_1(%arg0: i32) -> (i32, i32) {
    %c0_i32 = arith.constant 0 : i32
    %c0_i32_0 = arith.constant 0 : i32
    %c0_i32_1 = arith.constant 0 : i32
    return %c0_i32, %c0_i32_0 : i32, i32
  }
  func.func @transform_2(%arg0: i32) -> (i32, i32) {
    %c0_i32 = arith.constant 0 : i32
    %c0_i32_0 = arith.constant 0 : i32
    %c0_i32_1 = arith.constant 0 : i32
    return %c0_i32, %c0_i32_0 : i32, i32
  }
  func.func @transform_3(%arg0: i32) -> (i32, i32) {
    %c0_i32 = arith.constant 0 : i32
    %c0_i32_0 = arith.constant 0 : i32
    %c0_i32_1 = arith.constant 0 : i32
    return %c0_i32, %c0_i32_0 : i32, i32
  }
}

module attributes {stable_mosaic.version = 11 : i64} {
  func.func @_head_kernel(%arg0: i32, %arg1: memref<2x2048xbf16, #tpu.memory_space<vmem>>, %arg2: memref<2048x1024xbf16, #tpu.memory_space<vmem>>, %arg3: memref<1x1024xf32, #tpu.memory_space<vmem>>, %arg4: memref<512x4xbf16, #tpu.memory_space<vmem>>, %arg5: memref<1x4xf32, #tpu.memory_space<vmem>>, %arg6: memref<512x1xbf16, #tpu.memory_space<vmem>>, %arg7: memref<1x1xf32, #tpu.memory_space<vmem>>, %arg8: memref<2x4xf32, #tpu.memory_space<vmem>>) attributes {dimension_semantics = [#tpu.dimension_semantics<arbitrary>], iteration_bounds = array<i64: 1>, scalar_prefetch = 0 : i64, scratch_operands = 0 : i64, tpu.core_type = #tpu.core_type<tc>, window_params = [{pipeline_mode = #tpu.pipeline_mode<synchronous>, transform_indices = @transform_0, window_bounds = array<i64: 2, 2048>}, {pipeline_mode = #tpu.pipeline_mode<synchronous>, transform_indices = @transform_1, window_bounds = array<i64: 2048, 1024>}, {pipeline_mode = #tpu.pipeline_mode<synchronous>, transform_indices = @transform_2, window_bounds = array<i64: 1, 1024>}, {pipeline_mode = #tpu.pipeline_mode<synchronous>, transform_indices = @transform_3, window_bounds = array<i64: 512, 4>}, {pipeline_mode = #tpu.pipeline_mode<synchronous>, transform_indices = @transform_4, window_bounds = array<i64: 1, 4>}, {pipeline_mode = #tpu.pipeline_mode<synchronous>, transform_indices = @transform_5, window_bounds = array<i64: 512, 1>}, {pipeline_mode = #tpu.pipeline_mode<synchronous>, transform_indices = @transform_6, window_bounds = array<i64: 1, 1>}, {pipeline_mode = #tpu.pipeline_mode<synchronous>, transform_indices = @transform_7, window_bounds = array<i64: 2, 4>}]} {
    %c0 = arith.constant 0 : index
    %c0_0 = arith.constant 0 : index
    %0 = vector.load %arg1[%c0, %c0_0] : memref<2x2048xbf16, #tpu.memory_space<vmem>>, vector<2x2048xbf16>
    %c0_1 = arith.constant 0 : index
    %c0_2 = arith.constant 0 : index
    %1 = vector.load %arg2[%c0_1, %c0_2] : memref<2048x1024xbf16, #tpu.memory_space<vmem>>, vector<2048x1024xbf16>
    %cst = arith.constant dense<0.000000e+00> : vector<2x1024xf32>
    %2 = tpu.matmul %0, %1, %cst {dimension_numbers = #tpu.dot_dimension_numbers<[1], [0], [0], [1], [0, 0, 1, 1], [], []>} : vector<2x2048xbf16>, vector<2048x1024xbf16>, vector<2x1024xf32> -> vector<2x1024xf32>
    %c0_3 = arith.constant 0 : index
    %c0_4 = arith.constant 0 : index
    %3 = vector.load %arg3[%c0_3, %c0_4] : memref<1x1024xf32, #tpu.memory_space<vmem>>, vector<1x1024xf32>
    %4 = vector.broadcast %3 : vector<1x1024xf32> to vector<2x1024xf32>
    %5 = arith.addf %2, %4 : vector<2x1024xf32>
    %cst_5 = arith.constant 0.000000e+00 : f32
    %6 = vector.broadcast %cst_5 : f32 to vector<2x1024xf32>
    %7 = arith.maximumf %5, %6 : vector<2x1024xf32>
    %8 = arith.truncf %7 : vector<2x1024xf32> to vector<2x1024xbf16>
    %9 = vector.extract_strided_slice %8 {offsets = [0, 0], sizes = [2, 512], strides = [1, 1]} : vector<2x1024xbf16> to vector<2x512xbf16>
    %c0_6 = arith.constant 0 : index
    %c0_7 = arith.constant 0 : index
    %10 = vector.load %arg4[%c0_6, %c0_7] : memref<512x4xbf16, #tpu.memory_space<vmem>>, vector<512x4xbf16>
    %cst_8 = arith.constant dense<0.000000e+00> : vector<2x4xf32>
    %11 = tpu.matmul %9, %10, %cst_8 {dimension_numbers = #tpu.dot_dimension_numbers<[1], [0], [0], [1], [0, 0, 1, 1], [], []>} : vector<2x512xbf16>, vector<512x4xbf16>, vector<2x4xf32> -> vector<2x4xf32>
    %c0_9 = arith.constant 0 : index
    %c0_10 = arith.constant 0 : index
    %12 = vector.load %arg5[%c0_9, %c0_10] : memref<1x4xf32, #tpu.memory_space<vmem>>, vector<1x4xf32>
    %13 = vector.broadcast %12 : vector<1x4xf32> to vector<2x4xf32>
    %14 = arith.addf %11, %13 : vector<2x4xf32>
    %15 = vector.extract_strided_slice %8 {offsets = [0, 512], sizes = [2, 512], strides = [1, 1]} : vector<2x1024xbf16> to vector<2x512xbf16>
    %c0_11 = arith.constant 0 : index
    %c0_12 = arith.constant 0 : index
    %16 = vector.load %arg6[%c0_11, %c0_12] : memref<512x1xbf16, #tpu.memory_space<vmem>>, vector<512x1xbf16>
    %cst_13 = arith.constant dense<0.000000e+00> : vector<2x1xf32>
    %17 = tpu.matmul %15, %16, %cst_13 {dimension_numbers = #tpu.dot_dimension_numbers<[1], [0], [0], [1], [0, 0, 1, 1], [], []>} : vector<2x512xbf16>, vector<512x1xbf16>, vector<2x1xf32> -> vector<2x1xf32>
    %c0_14 = arith.constant 0 : index
    %c0_15 = arith.constant 0 : index
    %18 = vector.load %arg7[%c0_14, %c0_15] : memref<1x1xf32, #tpu.memory_space<vmem>>, vector<1x1xf32>
    %19 = vector.broadcast %18 : vector<1x1xf32> to vector<2x1xf32>
    %20 = arith.addf %17, %19 : vector<2x1xf32>
    %21 = vector.shape_cast %14 : vector<2x4xf32> to vector<1x2x4xf32>
    %cst_16 = arith.constant dense<0.000000e+00> : vector<1xf32>
    %22 = vector.multi_reduction <add>, %21, %cst_16 [1, 2] : vector<1x2x4xf32> to vector<1xf32>
    %23 = vector.shape_cast %22 : vector<1xf32> to vector<1x1x1xf32>
    %24 = vector.extract %23[0, 0, 0] : f32 from vector<1x1x1xf32>
    %cst_17 = arith.constant 1.250000e-01 : f32
    %25 = arith.mulf %24, %cst_17 : f32
    %26 = vector.broadcast %20 : vector<2x1xf32> to vector<2x4xf32>
    %27 = arith.addf %26, %14 : vector<2x4xf32>
    %28 = vector.broadcast %25 : f32 to vector<2x4xf32>
    %29 = arith.subf %27, %28 : vector<2x4xf32>
    %c0_18 = arith.constant 0 : index
    %c0_19 = arith.constant 0 : index
    %30 = vector.load %arg8[%c0_18, %c0_19] : memref<2x4xf32, #tpu.memory_space<vmem>>, vector<2x4xf32>
    tpu.vector_store %arg8[%c0_18, %c0_19], %29 {strides = array<i32>} : memref<2x4xf32, #tpu.memory_space<vmem>>, vector<2x4xf32>,
    return
  }
  func.func @transform_0(%arg0: i32) -> (i32, i32) {
    %c0_i32 = arith.constant 0 : i32
    %c0_i32_0 = arith.constant 0 : i32
    %c0_i32_1 = arith.constant 0 : i32
    return %c0_i32, %c0_i32_0 : i32, i32
  }
  func.func @transform_1(%arg0: i32) -> (i32, i32) {
    %c0_i32 = arith.constant 0 : i32
    %c0_i32_0 = arith.constant 0 : i32
    %c0_i32_1 = arith.constant 0 : i32
    return %c0_i32, %c0_i32_0 : i32, i32
  }
  func.func @transform_2(%arg0: i32) -> (i32, i32) {
    %c0_i32 = arith.constant 0 : i32
    %c0_i32_0 = arith.constant 0 : i32
    %c0_i32_1 = arith.constant 0 : i32
    return %c0_i32, %c0_i32_0 : i32, i32
  }
  func.func @transform_3(%arg0: i32) -> (i32, i32) {
    %c0_i32 = arith.constant 0 : i32
    %c0_i32_0 = arith.constant 0 : i32
    %c0_i32_1 = arith.constant 0 : i32
    return %c0_i32, %c0_i32_0 : i32, i32
  }
  func.func @transform_4(%arg0: i32) -> (i32, i32) {
    %c0_i32 = arith.constant 0 : i32
    %c0_i32_0 = arith.constant 0 : i32
    %c0_i32_1 = arith.constant 0 : i32
    return %c0_i32, %c0_i32_0 : i32, i32
  }
  func.func @transform_5(%arg0: i32) -> (i32, i32) {
    %c0_i32 = arith.constant 0 : i32
    %c0_i32_0 = arith.constant 0 : i32
    %c0_i32_1 = arith.constant 0 : i32
    return %c0_i32, %c0_i32_0 : i32, i32
  }
  func.func @transform_6(%arg0: i32) -> (i32, i32) {
    %c0_i32 = arith.constant 0 : i32
    %c0_i32_0 = arith.constant 0 : i32
    %c0_i32_1 = arith.constant 0 : i32
    return %c0_i32, %c0_i32_0 : i32, i32
  }
  func.func @transform_7(%arg0: i32) -> (i32, i32) {
    %c0_i32 = arith.constant 0 : i32
    %c0_i32_0 = arith.constant 0 : i32
    %c0_i32_1 = arith.constant 0 : i32
    return %c0_i32, %c0_i32_0 : i32, i32
  }
}

</mosaic_0001>

<llo_original>
// kernel: dueling_dqn_forward.4
$region0: #{dueling_dqn_forward.4}
  #allocation0 [shape = 'u32[]', space=smem, size = 0x4, offset = 0x4, fixed_abs, tag = 'smem constant byte address 0x4 - core index']
  #allocation1 [shape = 'u32[72,128]{1,0:T(1,128)}', space=vmem, size = 0x9000, scoped, tag = 'internal scratch']
  %s0 = inlined_call_operand.vmem [shape: bf16[392,256], index: 0, kind: input, shape index: {}]
  %s1 = inlined_call_operand.vmem [shape: bf16[256,128], index: 1, kind: input, shape index: {}]
  %s2 = inlined_call_operand.vmem [shape: f32[1,128], index: 2, kind: input, shape index: {}]
  %s3 = inlined_call_operand.vmem [shape: bf16[392,128], index: 3, kind: output, shape index: {}]
  %s4 = sld [smem:[#allocation0]]
  $region22: #{dueling_dqn_forward.4} parent=0
    _
  %s6 = ssub.s32 1, %s4
  %s7 = scalar_select 0, %s6, %s4
  // Predicated region
  $region2: #{dueling_dqn_forward.4} parent=0 // pred_check
    _
  $region3: #{dueling_dqn_forward.4} parent=0 // pred_check_branch
    %9 = sbr.rel (0) target = $region5
  $region4: #{dueling_dqn_forward.4} parent=0 // pred_region
    _
  $region5: #{dueling_dqn_forward.4} parent=0 // pred_fallthru
    _
  // Predicated region
  $region6: #{dueling_dqn_forward.4} parent=0 // pred_check
    _
  $region7: #{dueling_dqn_forward.4} parent=0 // pred_check_branch
    %11 = sbr.rel (0) target = $region9
  $region8: #{dueling_dqn_forward.4} parent=0 // pred_region
    _
  $region9: #{dueling_dqn_forward.4} parent=0 // pred_fallthru
    _
  // Predicated region
  $region10: #{dueling_dqn_forward.4} parent=0 // pred_check
    _
  $region11: #{dueling_dqn_forward.4} parent=0 // pred_check_branch
    %13 = sbr.rel (0) target = $region13
  $region12: #{dueling_dqn_forward.4} parent=0 // pred_region
    _
  $region13: #{dueling_dqn_forward.4} parent=0 // pred_fallthru
    _
  %v14 = vld [vmem:[%s0] sm:$0xff]
  %v15 = vld [vmem:[%s0 + $0x8] sm:$0xff]
  %v16 = vld [vmem:[%s0 + $0x10] sm:$0xff]
  %v17 = vld [vmem:[%s0 + $0x18] sm:$0xff]
  %v18 = vld [vmem:[%s0 + $0x20] sm:$0xff]
  %v19 = vld [vmem:[%s0 + $0x28] sm:$0xff]
  %v20 = vld [vmem:[%s0 + $0x30] sm:$0xff]
  %v21 = vld [vmem:[%s0 + $0x38] sm:$0xff]
  %v22 = vld [vmem:[%s0 + $0x40] sm:$0xff]
  %v23 = vld [vmem:[%s0 + $0x48] sm:$0xff]
  %v24 = vld [vmem:[%s0 + $0x50] sm:$0xff]
  %v25 = vld [vmem:[%s0 + $0x58] sm:$0xff]
  %v26 = vld [vmem:[%s0 + $0x60] sm:$0xff]
  %v27 = vld [vmem:[%s0 + $0x68] sm:$0xff]
  %v28 = vld [vmem:[%s0 + $0x70] sm:$0xff]
  %v29 = vld [vmem:[%s0 + $0x78] sm:$0xff]
  %v30 = vld [vmem:[%s0 + $0x80] sm:$0xff]
  %v31 = vld [vmem:[%s0 + $0x88] sm:$0xff]
  %v32 = vld [vmem:[%s0 + $0x90] sm:$0xff]
  %v33 = vld [vmem:[%s0 + $0x98] sm:$0xff]
  %v34 = vld [vmem:[%s0 + $0xa0] sm:$0xff]
  %v35 = vld [vmem:[%s0 + $0xa8] sm:$0xff]
  %v36 = vld [vmem:[%s0 + $0xb0] sm:$0xff]
  %v37 = vld [vmem:[%s0 + $0xb8] sm:$0xff]
  %v38 = vld [vmem:[%s0 + $0xc0] sm:$0xff]
  %v39 = vld [vmem:[%s0 + $0xc8] sm:$0xff]
  %v40 = vld [vmem:[%s0 + $0xd0] sm:$0xff]
  %v41 = vld [vmem:[%s0 + $0xd8] sm:$0xff]
  %v42 = vld [vmem:[%s0 + $0xe0] sm:$0xff]
  %v43 = vld [vmem:[%s0 + $0xe8] sm:$0xff]
  %v44 = vld [vmem:[%s0 + $0xf0] sm:$0xff]
  %v45 = vld [vmem:[%s0 + $0xf8] sm:$0xff]
  %v46 = vld [vmem:[%s0 + $0x100] sm:$0xff]
  %v47 = vld [vmem:[%s0 + $0x108] sm:$0xff]
  %v48 = vld [vmem:[%s0 + $0x110] sm:$0xff]
  %v49 = vld [vmem:[%s0 + $0x118] sm:$0xff]
  %v50 = vld [vmem:[%s0 + $0x120] sm:$0xff]
  %v51 = vld [vmem:[%s0 + $0x128] sm:$0xff]
  %v52 = vld [vmem:[%s0 + $0x130] sm:$0xff]
  %v53 = vld [vmem:[%s0 + $0x138] sm:$0xff]
  %v54 = vld [vmem:[%s0 + $0x140] sm:$0xff]
  %v55 = vld [vmem:[%s0 + $0x148] sm:$0xff]
  %v56 = vld [vmem:[%s0 + $0x150] sm:$0xff]
  %v57 = vld [vmem:[%s0 + $0x158] sm:$0xff]
  %v58 = vld [vmem:[%s0 + $0x160] sm:$0xff]
  %v59 = vld [vmem:[%s0 + $0x168] sm:$0xff]
  %v60 = vld [vmem:[%s0 + $0x170] sm:$0xff]
  %v61 = vld [vmem:[%s0 + $0x178] sm:$0xff]
  %v62 = vld [vmem:[%s0 + $0x180] sm:$0xff]
  %v63 = vld [vmem:[%s1] sm:$0xf]
  %v64 = vld [vmem:[%s1 + $0x4] sm:$0xf]
  %v65 = vld [vmem:[%s1 + $0x8] sm:$0xf]
  %v66 = vld [vmem:[%s1 + $0xc] sm:$0xf]
  %v67 = vld [vmem:[%s1 + $0x10] sm:$0xf]
  %v68 = vld [vmem:[%s1 + $0x14] sm:$0xf]
  %v69 = vld [vmem:[%s1 + $0x18] sm:$0xf]
  %v70 = vld [vmem:[%s1 + $0x1c] sm:$0xf]
  %v71 = vld [vmem:[%s1 + $0x20] sm:$0xf]
  %v72 = vld [vmem:[%s1 + $0x24] sm:$0xf]
  %v73 = vld [vmem:[%s1 + $0x28] sm:$0xf]
  %v74 = vld [vmem:[%s1 + $0x2c] sm:$0xf]
  %v75 = vld [vmem:[%s1 + $0x30] sm:$0xf]
  %v76 = vld [vmem:[%s1 + $0x34] sm:$0xf]
  %v77 = vld [vmem:[%s1 + $0x38] sm:$0xf]
  %v78 = vld [vmem:[%s1 + $0x3c] sm:$0xf]
  %v79 = vld [vmem:[%s1 + $0x40] sm:$0xf]
  %v80 = vld [vmem:[%s1 + $0x44] sm:$0xf]
  %v81 = vld [vmem:[%s1 + $0x48] sm:$0xf]
  %v82 = vld [vmem:[%s1 + $0x4c] sm:$0xf]
  %v83 = vld [vmem:[%s1 + $0x50] sm:$0xf]
  %v84 = vld [vmem:[%s1 + $0x54] sm:$0xf]
  %v85 = vld [vmem:[%s1 + $0x58] sm:$0xf]
  %v86 = vld [vmem:[%s1 + $0x5c] sm:$0xf]
  %v87 = vld [vmem:[%s1 + $0x60] sm:$0xf]
  %v88 = vld [vmem:[%s1 + $0x64] sm:$0xf]
  %v89 = vld [vmem:[%s1 + $0x68] sm:$0xf]
  %v90 = vld [vmem:[%s1 + $0x6c] sm:$0xf]
  %v91 = vld [vmem:[%s1 + $0x70] sm:$0xf]
  %v92 = vld [vmem:[%s1 + $0x74] sm:$0xf]
  %v93 = vld [vmem:[%s1 + $0x78] sm:$0xf]
  %v94 = vld [vmem:[%s1 + $0x7c] sm:$0xf]
  %v95 = vld [vmem:[%s2] sm:$0x1]
  %v97 = vperm.slane %v95, 0
  %v148 = vunpack.c.l.b16 %v14
  %v149 = vunpack.c.h.b16 %v14
  %v150 = vunpack.c.l.b16 %v15
  %v151 = vunpack.c.h.b16 %v15
  %v152 = vunpack.c.l.b16 %v16
  %v153 = vunpack.c.h.b16 %v16
  %v154 = vunpack.c.l.b16 %v17
  %v155 = vunpack.c.h.b16 %v17
  %v156 = vunpack.c.l.b16 %v18
  %v157 = vunpack.c.h.b16 %v18
  %v158 = vunpack.c.l.b16 %v19
  %v159 = vunpack.c.h.b16 %v19
  %v160 = vunpack.c.l.b16 %v20
  %v161 = vunpack.c.h.b16 %v20
  %v162 = vunpack.c.l.b16 %v21
  %v163 = vunpack.c.h.b16 %v21
  %v164 = vunpack.c.l.b16 %v22
  %v165 = vunpack.c.h.b16 %v22
  %v166 = vunpack.c.l.b16 %v23
  %v167 = vunpack.c.h.b16 %v23
  %v168 = vunpack.c.l.b16 %v24
  %v169 = vunpack.c.h.b16 %v24
  %v170 = vunpack.c.l.b16 %v25
  %v171 = vunpack.c.h.b16 %v25
  %v172 = vunpack.c.l.b16 %v26
  %v173 = vunpack.c.h.b16 %v26
  %v174 = vunpack.c.l.b16 %v27
  %v175 = vunpack.c.h.b16 %v27
  %v176 = vunpack.c.l.b16 %v28
  %v177 = vunpack.c.h.b16 %v28
  %v178 = vunpack.c.l.b16 %v29
  %v179 = vunpack.c.h.b16 %v29
  %v180 = vunpack.c.l.b16 %v30
  %v181 = vunpack.c.h.b16 %v30
  %v182 = vunpack.c.l.b16 %v31
  %v183 = vunpack.c.h.b16 %v31
  %v184 = vunpack.c.l.b16 %v32
  %v185 = vunpack.c.h.b16 %v32
  %v186 = vunpack.c.l.b16 %v33
  %v187 = vunpack.c.h.b16 %v33
  %v188 = vunpack.c.l.b16 %v34
  %v189 = vunpack.c.h.b16 %v34
  %v190 = vunpack.c.l.b16 %v35
  %v191 = vunpack.c.h.b16 %v35
  %v192 = vunpack.c.l.b16 %v36
  %v193 = vunpack.c.h.b16 %v36
  %v194 = vunpack.c.l.b16 %v37
  %v195 = vunpack.c.h.b16 %v37
  %v196 = vunpack.c.l.b16 %v38
  %v197 = vunpack.c.h.b16 %v38
  %v198 = vunpack.c.l.b16 %v39
  %v199 = vunpack.c.h.b16 %v39
  %v200 = vunpack.c.l.b16 %v40
  %v201 = vunpack.c.h.b16 %v40
  %v202 = vunpack.c.l.b16 %v41
  %v203 = vunpack.c.h.b16 %v41
  %v204 = vunpack.c.l.b16 %v42
  %v205 = vunpack.c.h.b16 %v42
  %v206 = vunpack.c.l.b16 %v43
  %v207 = vunpack.c.h.b16 %v43
  %v208 = vunpack.c.l.b16 %v44
  %v209 = vunpack.c.h.b16 %v44
  %v210 = vunpack.c.l.b16 %v45
  %v211 = vunpack.c.h.b16 %v45
  %v212 = vunpack.c.l.b16 %v46
  %v213 = vunpack.c.h.b16 %v46
  %v214 = vunpack.c.l.b16 %v47
  %v215 = vunpack.c.h.b16 %v47
  %v216 = vunpack.c.l.b16 %v48
  %v217 = vunpack.c.h.b16 %v48
  %v218 = vunpack.c.l.b16 %v49
  %v219 = vunpack.c.h.b16 %v49
  %v220 = vunpack.c.l.b16 %v50
  %v221 = vunpack.c.h.b16 %v50
  %v222 = vunpack.c.l.b16 %v51
  %v223 = vunpack.c.h.b16 %v51
  %v224 = vunpack.c.l.b16 %v52
  %v225 = vunpack.c.h.b16 %v52
  %v226 = vunpack.c.l.b16 %v53
  %v227 = vunpack.c.h.b16 %v53
  %v228 = vunpack.c.l.b16 %v54
  %v229 = vunpack.c.h.b16 %v54
  %v230 = vunpack.c.l.b16 %v55
  %v231 = vunpack.c.h.b16 %v55
  %v232 = vunpack.c.l.b16 %v56
  %v233 = vunpack.c.h.b16 %v56
  %v234 = vunpack.c.l.b16 %v57
  %v235 = vunpack.c.h.b16 %v57
  %v236 = vunpack.c.l.b16 %v58
  %v237 = vunpack.c.h.b16 %v58
  %v238 = vunpack.c.l.b16 %v59
  %v239 = vunpack.c.h.b16 %v59
  %v240 = vunpack.c.l.b16 %v60
  %v241 = vunpack.c.h.b16 %v60
  %v242 = vunpack.c.l.b16 %v61
  %v243 = vunpack.c.h.b16 %v61
  %v244 = vunpack.c.l.b16 %v62
  %v245 = vunpack.c.h.b16 %v62
  %v246 = vpack.c.b16 %v150, %v148
  %v247 = vpack.c.b16 %v151, %v149
  %v248 = vpack.c.b16 %v154, %v152
  %v249 = vpack.c.b16 %v155, %v153
  %v250 = vpack.c.b16 %v158, %v156
  %v251 = vpack.c.b16 %v159, %v157
  %v252 = vpack.c.b16 %v162, %v160
  %v253 = vpack.c.b16 %v163, %v161
  %v254 = vpack.c.b16 %v166, %v164
  %v255 = vpack.c.b16 %v167, %v165
  %v256 = vpack.c.b16 %v170, %v168
  %v257 = vpack.c.b16 %v171, %v169
  %v258 = vpack.c.b16 %v174, %v172
  %v259 = vpack.c.b16 %v175, %v173
  %v260 = vpack.c.b16 %v178, %v176
  %v261 = vpack.c.b16 %v179, %v177
  %v262 = vpack.c.b16 %v182, %v180
  %v263 = vpack.c.b16 %v183, %v181
  %v264 = vpack.c.b16 %v186, %v184
  %v265 = vpack.c.b16 %v187, %v185
  %v266 = vpack.c.b16 %v190, %v188
  %v267 = vpack.c.b16 %v191, %v189
  %v268 = vpack.c.b16 %v194, %v192
  %v269 = vpack.c.b16 %v195, %v193
  %v270 = vpack.c.b16 %v198, %v196
  %v271 = vpack.c.b16 %v199, %v197
  %v272 = vpack.c.b16 %v202, %v200
  %v273 = vpack.c.b16 %v203, %v201
  %v274 = vpack.c.b16 %v206, %v204
  %v275 = vpack.c.b16 %v207, %v205
  %v276 = vpack.c.b16 %v210, %v208
  %v277 = vpack.c.b16 %v211, %v209
  %v278 = vpack.c.b16 %v214, %v212
  %v279 = vpack.c.b16 %v215, %v213
  %v280 = vpack.c.b16 %v218, %v216
  %v281 = vpack.c.b16 %v219, %v217
  %v282 = vpack.c.b16 %v222, %v220
  %v283 = vpack.c.b16 %v223, %v221
  %v284 = vpack.c.b16 %v226, %v224
  %v285 = vpack.c.b16 %v227, %v225
  %v286 = vpack.c.b16 %v230, %v228
  %v287 = vpack.c.b16 %v231, %v229
  %v288 = vpack.c.b16 %v234, %v232
  %v289 = vpack.c.b16 %v235, %v233
  %v290 = vpack.c.b16 %v238, %v236
  %v291 = vpack.c.b16 %v239, %v237
  %v292 = vpack.c.b16 %v242, %v240
  %v293 = vpack.c.b16 %v243, %v241
  %v294 = vpack.c.b16 %v244, %v244
  %v295 = vpack.c.b16 %v245, %v245
  %v378 = vunpack.c.l.b16 %v63
  %v379 = vunpack.c.l.b16 %v64
  %v380 = vunpack.c.l.b16 %v65
  %v381 = vunpack.c.l.b16 %v66
  %v382 = vunpack.c.l.b16 %v67
  %v383 = vunpack.c.l.b16 %v68
  %v384 = vunpack.c.l.b16 %v69
  %v385 = vunpack.c.l.b16 %v70
  %v386 = vunpack.c.l.b16 %v71
  %v387 = vunpack.c.l.b16 %v72
  %v388 = vunpack.c.l.b16 %v73
  %v389 = vunpack.c.l.b16 %v74
  %v390 = vunpack.c.l.b16 %v75
  %v391 = vunpack.c.l.b16 %v76
  %v392 = vunpack.c.l.b16 %v77
  %v393 = vunpack.c.l.b16 %v78
  %v394 = vunpack.c.l.b16 %v79
  %v395 = vunpack.c.l.b16 %v80
  %v396 = vunpack.c.l.b16 %v81
  %v397 = vunpack.c.l.b16 %v82
  %v398 = vunpack.c.l.b16 %v83
  %v399 = vunpack.c.l.b16 %v84
  %v400 = vunpack.c.l.b16 %v85
  %v401 = vunpack.c.l.b16 %v86
  %v402 = vunpack.c.l.b16 %v87
  %v403 = vunpack.c.l.b16 %v88
  %v404 = vunpack.c.l.b16 %v89
  %v405 = vunpack.c.l.b16 %v90
  %v406 = vunpack.c.l.b16 %v91
  %v407 = vunpack.c.l.b16 %v92
  %v408 = vunpack.c.l.b16 %v93
  %v409 = vunpack.c.l.b16 %v94
  %v410 = vpack.c.b16 %v379, %v378
  %v411 = vpack.c.b16 %v381, %v380
  %v412 = vpack.c.b16 %v383, %v382
  %v413 = vpack.c.b16 %v385, %v384
  %v414 = vpack.c.b16 %v387, %v386
  %v415 = vpack.c.b16 %v389, %v388
  %v416 = vpack.c.b16 %v391, %v390
  %v417 = vpack.c.b16 %v393, %v392
  %v418 = vpack.c.b16 %v395, %v394
  %v419 = vpack.c.b16 %v397, %v396
  %v420 = vpack.c.b16 %v399, %v398
  %v421 = vpack.c.b16 %v401, %v400
  %v422 = vpack.c.b16 %v403, %v402
  %v423 = vpack.c.b16 %v405, %v404
  %v424 = vpack.c.b16 %v407, %v406
  %v425 = vpack.c.b16 %v409, %v408
  %442 = vmatpush.bf16.msra.mxu0 %v417
  %443 = vmatpush.bf16.msra.mxu0 %v416
  %444 = vmatpush.bf16.msra.mxu0 %v415
  %445 = vmatpush.bf16.msra.mxu0 %v414
  %446 = vmatpush.bf16.msra.mxu0 %v413
  %447 = vmatpush.bf16.msra.mxu0 %v412
  %448 = vmatpush.bf16.msra.mxu0 %v411
  %449 = vmatpush.bf16.msra.mxu0 %v410
  %450 = vmatmul.bf16.gmra.mxu0 %v246
  %v451 = vpop.f32.mrf.mxu0
  %v452 = vadd.f32 %v97, %v451
  %v453 = vpop.f32.mrf.mxu0
  %v454 = vadd.f32 %v97, %v453
  %455 = vmatmul.bf16.gmra.mxu0 %v248
  %v456 = vpop.f32.mrf.mxu0
  %v457 = vadd.f32 %v97, %v456
  %v458 = vpop.f32.mrf.mxu0
  %v459 = vadd.f32 %v97, %v458
  %460 = vmatmul.bf16.gmra.mxu0 %v250
  %v461 = vpop.f32.mrf.mxu0
  %v462 = vadd.f32 %v97, %v461
  %v463 = vpop.f32.mrf.mxu0
  %v464 = vadd.f32 %v97, %v463
  %465 = vmatmul.bf16.gmra.mxu0 %v252
  %v466 = vpop.f32.mrf.mxu0
  %v467 = vadd.f32 %v97, %v466
  %v468 = vpop.f32.mrf.mxu0
  %v469 = vadd.f32 %v97, %v468
  %470 = vmatmul.bf16.gmra.mxu0 %v254
  %v471 = vpop.f32.mrf.mxu0
  %v472 = vadd.f32 %v97, %v471
  %v473 = vpop.f32.mrf.mxu0
  %v474 = vadd.f32 %v97, %v473
  %475 = vmatmul.bf16.gmra.mxu0 %v256
  %v476 = vpop.f32.mrf.mxu0
  %v477 = vadd.f32 %v97, %v476
  %v478 = vpop.f32.mrf.mxu0
  %v479 = vadd.f32 %v97, %v478
  %480 = vmatmul.bf16.gmra.mxu0 %v258
  %v481 = vpop.f32.mrf.mxu0
  %v482 = vadd.f32 %v97, %v481
  %v483 = vpop.f32.mrf.mxu0
  %v484 = vadd.f32 %v97, %v483
  %485 = vmatmul.bf16.gmra.mxu0 %v260
  %v486 = vpop.f32.mrf.mxu0
  %v487 = vadd.f32 %v97, %v486
  %v488 = vpop.f32.mrf.mxu0
  %v489 = vadd.f32 %v97, %v488
  %490 = vmatmul.bf16.gmra.mxu0 %v262
  %v491 = vpop.f32.mrf.mxu0
  %v492 = vadd.f32 %v97, %v491
  %v493 = vpop.f32.mrf.mxu0
  %v494 = vadd.f32 %v97, %v493
  %495 = vmatmul.bf16.gmra.mxu0 %v264
  %v496 = vpop.f32.mrf.mxu0
  %v497 = vadd.f32 %v97, %v496
  %v498 = vpop.f32.mrf.mxu0
  %v499 = vadd.f32 %v97, %v498
  %500 = vmatmul.bf16.gmra.mxu0 %v266
  %v501 = vpop.f32.mrf.mxu0
  %v502 = vadd.f32 %v97, %v501
  %v503 = vpop.f32.mrf.mxu0
  %v504 = vadd.f32 %v97, %v503
  %505 = vmatmul.bf16.gmra.mxu0 %v268
  %v506 = vpop.f32.mrf.mxu0
  %v507 = vadd.f32 %v97, %v506
  %v508 = vpop.f32.mrf.mxu0
  %v509 = vadd.f32 %v97, %v508
  %510 = vmatmul.bf16.gmra.mxu0 %v270
  %v511 = vpop.f32.mrf.mxu0
  %v512 = vadd.f32 %v97, %v511
  %v513 = vpop.f32.mrf.mxu0
  %v514 = vadd.f32 %v97, %v513
  %515 = vmatmul.bf16.gmra.mxu0 %v272
  %v516 = vpop.f32.mrf.mxu0
  %v517 = vadd.f32 %v97, %v516
  %v518 = vpop.f32.mrf.mxu0
  %v519 = vadd.f32 %v97, %v518
  %520 = vmatmul.bf16.gmra.mxu0 %v274
  %v521 = vpop.f32.mrf.mxu0
  %v522 = vadd.f32 %v97, %v521
  %v523 = vpop.f32.mrf.mxu0
  %v524 = vadd.f32 %v97, %v523
  %525 = vmatmul.bf16.gmra.mxu0 %v276
  %v526 = vpop.f32.mrf.mxu0
  %v527 = vadd.f32 %v97, %v526
  %v528 = vpop.f32.mrf.mxu0
  %v529 = vadd.f32 %v97, %v528
  %530 = vmatmul.bf16.gmra.mxu0 %v278
  %v531 = vpop.f32.mrf.mxu0
  %v532 = vadd.f32 %v97, %v531
  %v533 = vpop.f32.mrf.mxu0
  %v534 = vadd.f32 %v97, %v533
  %535 = vmatmul.bf16.gmra.mxu0 %v280
  %v536 = vpop.f32.mrf.mxu0
  %v537 = vadd.f32 %v97, %v536
  %v538 = vpop.f32.mrf.mxu0
  %v539 = vadd.f32 %v97, %v538
  %540 = vmatmul.bf16.gmra.mxu0 %v282
  %v541 = vpop.f32.mrf.mxu0
  %v542 = vadd.f32 %v97, %v541
  %v543 = vpop.f32.mrf.mxu0
  %v544 = vadd.f32 %v97, %v543
  %545 = vmatmul.bf16.gmra.mxu0 %v284
  %v546 = vpop.f32.mrf.mxu0
  %v547 = vadd.f32 %v97, %v546
  %v548 = vpop.f32.mrf.mxu0
  %v549 = vadd.f32 %v97, %v548
  %550 = vmatmul.bf16.gmra.mxu0 %v286
  %v551 = vpop.f32.mrf.mxu0
  %v552 = vadd.f32 %v97, %v551
  %v553 = vpop.f32.mrf.mxu0
  %v554 = vadd.f32 %v97, %v553
  %555 = vmatmul.bf16.gmra.mxu0 %v288
  %v556 = vpop.f32.mrf.mxu0
  %v557 = vadd.f32 %v97, %v556
  %v558 = vpop.f32.mrf.mxu0
  %v559 = vadd.f32 %v97, %v558
  %560 = vmatmul.bf16.gmra.mxu0 %v290
  %v561 = vpop.f32.mrf.mxu0
  %v562 = vadd.f32 %v97, %v561
  %v563 = vpop.f32.mrf.mxu0
  %v564 = vadd.f32 %v97, %v563
  %565 = vmatmul.bf16.gmra.mxu0 %v292
  %v566 = vpop.f32.mrf.mxu0
  %v567 = vadd.f32 %v97, %v566
  %v568 = vpop.f32.mrf.mxu0
  %v569 = vadd.f32 %v97, %v568
  %570 = vmatmul.bf16.gmra.mxu0 %v294
  %v571 = vpop.f32.mrf.mxu0
  %v572 = vadd.f32 %v97, %v571
  %v573 = vpop.f32.mrf.mxu0
  %574 = vdwg.mxu0
  %575 = vmatpush.bf16.msra.mxu0 %v425
  %576 = vmatpush.bf16.msra.mxu0 %v424
  %577 = vmatpush.bf16.msra.mxu0 %v423
  %578 = vmatpush.bf16.msra.mxu0 %v422
  %579 = vmatpush.bf16.msra.mxu0 %v421
  %580 = vmatpush.bf16.msra.mxu0 %v420
  %581 = vmatpush.bf16.msra.mxu0 %v419
  %582 = vmatpush.bf16.msra.mxu0 %v418
  %583 = vmatmul.bf16.gmra.mxu0 %v247
  %v584 = vpop.f32.mrf.mxu0
  %v585 = vadd.f32 %v452, %v584
  %v586 = vpop.f32.mrf.mxu0
  %v587 = vadd.f32 %v454, %v586
  %588 = vmatmul.bf16.gmra.mxu0 %v249
  %v589 = vpop.f32.mrf.mxu0
  %v590 = vadd.f32 %v457, %v589
  %v591 = vpop.f32.mrf.mxu0
  %v592 = vadd.f32 %v459, %v591
  %593 = vmatmul.bf16.gmra.mxu0 %v251
  %v594 = vpop.f32.mrf.mxu0
  %v595 = vadd.f32 %v462, %v594
  %v596 = vpop.f32.mrf.mxu0
  %v597 = vadd.f32 %v464, %v596
  %598 = vmatmul.bf16.gmra.mxu0 %v253
  %v599 = vpop.f32.mrf.mxu0
  %v600 = vadd.f32 %v467, %v599
  %v601 = vpop.f32.mrf.mxu0
  %v602 = vadd.f32 %v469, %v601
  %603 = vmatmul.bf16.gmra.mxu0 %v255
  %v604 = vpop.f32.mrf.mxu0
  %v605 = vadd.f32 %v472, %v604
  %v606 = vpop.f32.mrf.mxu0
  %v607 = vadd.f32 %v474, %v606
  %608 = vmatmul.bf16.gmra.mxu0 %v257
  %v609 = vpop.f32.mrf.mxu0
  %v610 = vadd.f32 %v477, %v609
  %v611 = vpop.f32.mrf.mxu0
  %v612 = vadd.f32 %v479, %v611
  %613 = vmatmul.bf16.gmra.mxu0 %v259
  %v614 = vpop.f32.mrf.mxu0
  %v615 = vadd.f32 %v482, %v614
  %v616 = vpop.f32.mrf.mxu0
  %v617 = vadd.f32 %v484, %v616
  %618 = vmatmul.bf16.gmra.mxu0 %v261
  %v619 = vpop.f32.mrf.mxu0
  %v620 = vadd.f32 %v487, %v619
  %v621 = vpop.f32.mrf.mxu0
  %v622 = vadd.f32 %v489, %v621
  %623 = vmatmul.bf16.gmra.mxu0 %v263
  %v624 = vpop.f32.mrf.mxu0
  %v625 = vadd.f32 %v492, %v624
  %v626 = vpop.f32.mrf.mxu0
  %v627 = vadd.f32 %v494, %v626
  %628 = vmatmul.bf16.gmra.mxu0 %v265
  %v629 = vpop.f32.mrf.mxu0
  %v630 = vadd.f32 %v497, %v629
  %v631 = vpop.f32.mrf.mxu0
  %v632 = vadd.f32 %v499, %v631
  %633 = vmatmul.bf16.gmra.mxu0 %v267
  %v634 = vpop.f32.mrf.mxu0
  %v635 = vadd.f32 %v502, %v634
  %v636 = vpop.f32.mrf.mxu0
  %v637 = vadd.f32 %v504, %v636
  %638 = vmatmul.bf16.gmra.mxu0 %v269
  %v639 = vpop.f32.mrf.mxu0
  %v640 = vadd.f32 %v507, %v639
  %v641 = vpop.f32.mrf.mxu0
  %v642 = vadd.f32 %v509, %v641
  %643 = vmatmul.bf16.gmra.mxu0 %v271
  %v644 = vpop.f32.mrf.mxu0
  %v645 = vadd.f32 %v512, %v644
  %v646 = vpop.f32.mrf.mxu0
  %v647 = vadd.f32 %v514, %v646
  %648 = vmatmul.bf16.gmra.mxu0 %v273
  %v649 = vpop.f32.mrf.mxu0
  %v650 = vadd.f32 %v517, %v649
  %v651 = vpop.f32.mrf.mxu0
  %v652 = vadd.f32 %v519, %v651
  %653 = vmatmul.bf16.gmra.mxu0 %v275
  %v654 = vpop.f32.mrf.mxu0
  %v655 = vadd.f32 %v522, %v654
  %v656 = vpop.f32.mrf.mxu0
  %v657 = vadd.f32 %v524, %v656
  %658 = vmatmul.bf16.gmra.mxu0 %v277
  %v659 = vpop.f32.mrf.mxu0
  %v660 = vadd.f32 %v527, %v659
  %v661 = vpop.f32.mrf.mxu0
  %v662 = vadd.f32 %v529, %v661
  %663 = vmatmul.bf16.gmra.mxu0 %v279
  %v664 = vpop.f32.mrf.mxu0
  %v665 = vadd.f32 %v532, %v664
  %v666 = vpop.f32.mrf.mxu0
  %v667 = vadd.f32 %v534, %v666
  %668 = vmatmul.bf16.gmra.mxu0 %v281
  %v669 = vpop.f32.mrf.mxu0
  %v670 = vadd.f32 %v537, %v669
  %v671 = vpop.f32.mrf.mxu0
  %v672 = vadd.f32 %v539, %v671
  %673 = vmatmul.bf16.gmra.mxu0 %v283
  %v674 = vpop.f32.mrf.mxu0
  %v675 = vadd.f32 %v542, %v674
  %v676 = vpop.f32.mrf.mxu0
  %v677 = vadd.f32 %v544, %v676
  %678 = vmatmul.bf16.gmra.mxu0 %v285
  %v679 = vpop.f32.mrf.mxu0
  %v680 = vadd.f32 %v547, %v679
  %v681 = vpop.f32.mrf.mxu0
  %v682 = vadd.f32 %v549, %v681
  %683 = vmatmul.bf16.gmra.mxu0 %v287
  %v684 = vpop.f32.mrf.mxu0
  %v685 = vadd.f32 %v552, %v684
  %v686 = vpop.f32.mrf.mxu0
  %v687 = vadd.f32 %v554, %v686
  %688 = vmatmul.bf16.gmra.mxu0 %v289
  %v689 = vpop.f32.mrf.mxu0
  %v690 = vadd.f32 %v557, %v689
  %v691 = vpop.f32.mrf.mxu0
  %v692 = vadd.f32 %v559, %v691
  %693 = vmatmul.bf16.gmra.mxu0 %v291
  %v694 = vpop.f32.mrf.mxu0
  %v695 = vadd.f32 %v562, %v694
  %v696 = vpop.f32.mrf.mxu0
  %v697 = vadd.f32 %v564, %v696
  %698 = vmatmul.bf16.gmra.mxu0 %v293
  %v699 = vpop.f32.mrf.mxu0
  %v700 = vadd.f32 %v567, %v699
  %v701 = vpop.f32.mrf.mxu0
  %v702 = vadd.f32 %v569, %v701
  %703 = vmatmul.bf16.gmra.mxu0 %v295
  %v704 = vpop.f32.mrf.mxu0
  %v705 = vadd.f32 %v572, %v704
  %v706 = vpop.f32.mrf.mxu0
  %707 = vdwg.mxu0
  %v708 = vmax.f32 %v585, 0.0
  %v709 = vmax.f32 %v587, 0.0
  %v710 = vmax.f32 %v590, 0.0
  %v711 = vmax.f32 %v592, 0.0
  %v712 = vmax.f32 %v595, 0.0
  %v713 = vmax.f32 %v597, 0.0
  %v714 = vmax.f32 %v600, 0.0
  %v715 = vmax.f32 %v602, 0.0
  %v716 = vmax.f32 %v605, 0.0
  %v717 = vmax.f32 %v607, 0.0
  %v718 = vmax.f32 %v610, 0.0
  %v719 = vmax.f32 %v612, 0.0
  %v720 = vmax.f32 %v615, 0.0
  %v721 = vmax.f32 %v617, 0.0
  %v722 = vmax.f32 %v620, 0.0
  %v723 = vmax.f32 %v622, 0.0
  %v724 = vmax.f32 %v625, 0.0
  %v725 = vmax.f32 %v627, 0.0
  %v726 = vmax.f32 %v630, 0.0
  %v727 = vmax.f32 %v632, 0.0
  %v728 = vmax.f32 %v635, 0.0
  %v729 = vmax.f32 %v637, 0.0
  %v730 = vmax.f32 %v640, 0.0
  %v731 = vmax.f32 %v642, 0.0
  %v732 = vmax.f32 %v645, 0.0
  %v733 = vmax.f32 %v647, 0.0
  %v734 = vmax.f32 %v650, 0.0
  %v735 = vmax.f32 %v652, 0.0
  %v736 = vmax.f32 %v655, 0.0
  %v737 = vmax.f32 %v657, 0.0
  %v738 = vmax.f32 %v660, 0.0
  %v739 = vmax.f32 %v662, 0.0
  %v740 = vmax.f32 %v665, 0.0
  %v741 = vmax.f32 %v667, 0.0
  %v742 = vmax.f32 %v670, 0.0
  %v743 = vmax.f32 %v672, 0.0
  %v744 = vmax.f32 %v675, 0.0
  %v745 = vmax.f32 %v677, 0.0
  %v746 = vmax.f32 %v680, 0.0
  %v747 = vmax.f32 %v682, 0.0
  %v748 = vmax.f32 %v685, 0.0
  %v749 = vmax.f32 %v687, 0.0
  %v750 = vmax.f32 %v690, 0.0
  %v751 = vmax.f32 %v692, 0.0
  %v752 = vmax.f32 %v695, 0.0
  %v753 = vmax.f32 %v697, 0.0
  %v754 = vmax.f32 %v700, 0.0
  %v755 = vmax.f32 %v702, 0.0
  %v756 = vmax.f32 %v705, 0.0
  %v757 = vpack.c.bf16 %v708, %v708
  %v758 = vpack.c.bf16 %v709, %v709
  %v759 = vpack.c.bf16 %v710, %v710
  %v760 = vpack.c.bf16 %v711, %v711
  %v761 = vpack.c.bf16 %v712, %v712
  %v762 = vpack.c.bf16 %v713, %v713
  %v763 = vpack.c.bf16 %v714, %v714
  %v764 = vpack.c.bf16 %v715, %v715
  %v765 = vpack.c.bf16 %v716, %v716
  %v766 = vpack.c.bf16 %v717, %v717
  %v767 = vpack.c.bf16 %v718, %v718
  %v768 = vpack.c.bf16 %v719, %v719
  %v769 = vpack.c.bf16 %v720, %v720
  %v770 = vpack.c.bf16 %v721, %v721
  %v771 = vpack.c.bf16 %v722, %v722
  %v772 = vpack.c.bf16 %v723, %v723
  %v773 = vpack.c.bf16 %v724, %v724
  %v774 = vpack.c.bf16 %v725, %v725
  %v775 = vpack.c.bf16 %v726, %v726
  %v776 = vpack.c.bf16 %v727, %v727
  %v777 = vpack.c.bf16 %v728, %v728
  %v778 = vpack.c.bf16 %v729, %v729
  %v779 = vpack.c.bf16 %v730, %v730
  %v780 = vpack.c.bf16 %v731, %v731
  %v781 = vpack.c.bf16 %v732, %v732
  %v782 = vpack.c.bf16 %v733, %v733
  %v783 = vpack.c.bf16 %v734, %v734
  %v784 = vpack.c.bf16 %v735, %v735
  %v785 = vpack.c.bf16 %v736, %v736
  %v786 = vpack.c.bf16 %v737, %v737
  %v787 = vpack.c.bf16 %v738, %v738
  %v788 = vpack.c.bf16 %v739, %v739
  %v789 = vpack.c.bf16 %v740, %v740
  %v790 = vpack.c.bf16 %v741, %v741
  %v791 = vpack.c.bf16 %v742, %v742
  %v792 = vpack.c.bf16 %v743, %v743
  %v793 = vpack.c.bf16 %v744, %v744
  %v794 = vpack.c.bf16 %v745, %v745
  %v795 = vpack.c.bf16 %v746, %v746
  %v796 = vpack.c.bf16 %v747, %v747
  %v797 = vpack.c.bf16 %v748, %v748
  %v798 = vpack.c.bf16 %v749, %v749
  %v799 = vpack.c.bf16 %v750, %v750
  %v800 = vpack.c.bf16 %v751, %v751
  %v801 = vpack.c.bf16 %v752, %v752
  %v802 = vpack.c.bf16 %v753, %v753
  %v803 = vpack.c.bf16 %v754, %v754
  %v804 = vpack.c.bf16 %v755, %v755
  %v805 = vpack.c.bf16 %v756, %v756
  %806 = vst [vmem:[%s3] sm:$0xf] %v757
  %807 = vst [vmem:[%s3 + $0x4] sm:$0xf] %v758
  %808 = vst [vmem:[%s3 + $0x8] sm:$0xf] %v759
  %809 = vst [vmem:[%s3 + $0xc] sm:$0xf] %v760
  %810 = vst [vmem:[%s3 + $0x10] sm:$0xf] %v761
  %811 = vst [vmem:[%s3 + $0x14] sm:$0xf] %v762
  %812 = vst [vmem:[%s3 + $0x18] sm:$0xf] %v763
  %813 = vst [vmem:[%s3 + $0x1c] sm:$0xf] %v764
  %814 = vst [vmem:[%s3 + $0x20] sm:$0xf] %v765
  %815 = vst [vmem:[%s3 + $0x24] sm:$0xf] %v766
  %816 = vst [vmem:[%s3 + $0x28] sm:$0xf] %v767
  %817 = vst [vmem:[%s3 + $0x2c] sm:$0xf] %v768
  %818 = vst [vmem:[%s3 + $0x30] sm:$0xf] %v769
  %819 = vst [vmem:[%s3 + $0x34] sm:$0xf] %v770
  %820 = vst [vmem:[%s3 + $0x38] sm:$0xf] %v771
  %821 = vst [vmem:[%s3 + $0x3c] sm:$0xf] %v772
  %822 = vst [vmem:[%s3 + $0x40] sm:$0xf] %v773
  %823 = vst [vmem:[%s3 + $0x44] sm:$0xf] %v774
  %824 = vst [vmem:[%s3 + $0x48] sm:$0xf] %v775
  %825 = vst [vmem:[%s3 + $0x4c] sm:$0xf] %v776
  %826 = vst [vmem:[%s3 + $0x50] sm:$0xf] %v777
  %827 = vst [vmem:[%s3 + $0x54] sm:$0xf] %v778
  %828 = vst [vmem:[%s3 + $0x58] sm:$0xf] %v779
  %829 = vst [vmem:[%s3 + $0x5c] sm:$0xf] %v780
  %830 = vst [vmem:[%s3 + $0x60] sm:$0xf] %v781
  %831 = vst [vmem:[%s3 + $0x64] sm:$0xf] %v782
  %832 = vst [vmem:[%s3 + $0x68] sm:$0xf] %v783
  %833 = vst [vmem:[%s3 + $0x6c] sm:$0xf] %v784
  %834 = vst [vmem:[%s3 + $0x70] sm:$0xf] %v785
  %835 = vst [vmem:[%s3 + $0x74] sm:$0xf] %v786
  %836 = vst [vmem:[%s3 + $0x78] sm:$0xf] %v787
  %837 = vst [vmem:[%s3 + $0x7c] sm:$0xf] %v788
  %838 = vst [vmem:[%s3 + $0x80] sm:$0xf] %v789
  %839 = vst [vmem:[%s3 + $0x84] sm:$0xf] %v790
  %840 = vst [vmem:[%s3 + $0x88] sm:$0xf] %v791
  %841 = vst [vmem:[%s3 + $0x8c] sm:$0xf] %v792
  %842 = vst [vmem:[%s3 + $0x90] sm:$0xf] %v793
  %843 = vst [vmem:[%s3 + $0x94] sm:$0xf] %v794
  %844 = vst [vmem:[%s3 + $0x98] sm:$0xf] %v795
  %845 = vst [vmem:[%s3 + $0x9c] sm:$0xf] %v796
  %846 = vst [vmem:[%s3 + $0xa0] sm:$0xf] %v797
  %847 = vst [vmem:[%s3 + $0xa4] sm:$0xf] %v798
  %848 = vst [vmem:[%s3 + $0xa8] sm:$0xf] %v799
  %849 = vst [vmem:[%s3 + $0xac] sm:$0xf] %v800
  %850 = vst [vmem:[%s3 + $0xb0] sm:$0xf] %v801
  %851 = vst [vmem:[%s3 + $0xb4] sm:$0xf] %v802
  %852 = vst [vmem:[%s3 + $0xb8] sm:$0xf] %v803
  %853 = vst [vmem:[%s3 + $0xbc] sm:$0xf] %v804
  %854 = vst [vmem:[%s3 + $0xc0] sm:$0xf] %v805
  // Predicated region
  $region14: #{dueling_dqn_forward.4} parent=0 // pred_check
    _
  $region15: #{dueling_dqn_forward.4} parent=0 // pred_check_branch
    %856 = sbr.rel (0) target = $region17
  $region16: #{dueling_dqn_forward.4} parent=0 // pred_region
    _
  $region17: #{dueling_dqn_forward.4} parent=0 // pred_fallthru
    _
  // Predicated region
  $region18: #{dueling_dqn_forward.4} parent=0 // pred_check
    _
  $region19: #{dueling_dqn_forward.4} parent=0 // pred_check_branch
    %858 = sbr.rel (0) target = $region21
  $region20: #{dueling_dqn_forward.4} parent=0 // pred_region
    _
  $region21: #{dueling_dqn_forward.4} parent=0 // pred_fallthru
    _

// kernel: dueling_dqn_forward.5
$region0: #{dueling_dqn_forward.5}
  #allocation0 [shape = 'u32[]', space=smem, size = 0x4, offset = 0x4, fixed_abs, tag = 'smem constant byte address 0x4 - core index']
  #allocation1 [shape = 'u32[72,128]{1,0:T(1,128)}', space=vmem, size = 0x9000, scoped, tag = 'internal scratch']
  %s0 = inlined_call_operand.vmem [shape: bf16[72,2048], index: 0, kind: input, shape index: {}]
  %s1 = inlined_call_operand.vmem [shape: bf16[2048,128], index: 1, kind: input, shape index: {}]
  %s2 = inlined_call_operand.vmem [shape: f32[1,128], index: 2, kind: input, shape index: {}]
  %s3 = inlined_call_operand.vmem [shape: bf16[72,128], index: 3, kind: output, shape index: {}]
  %s4 = sld [smem:[#allocation0]]
  $region22: #{dueling_dqn_forward.5} parent=0
    _
  %s6 = ssub.s32 1, %s4
  %s7 = scalar_select 0, %s6, %s4
  // Predicated region
  $region2: #{dueling_dqn_forward.5} parent=0 // pred_check
    _
  $region3: #{dueling_dqn_forward.5} parent=0 // pred_check_branch
    %9 = sbr.rel (0) target = $region5
  $region4: #{dueling_dqn_forward.5} parent=0 // pred_region
    _
  $region5: #{dueling_dqn_forward.5} parent=0 // pred_fallthru
    _
  // Predicated region
  $region6: #{dueling_dqn_forward.5} parent=0 // pred_check
    _
  $region7: #{dueling_dqn_forward.5} parent=0 // pred_check_branch
    %11 = sbr.rel (0) target = $region9
  $region8: #{dueling_dqn_forward.5} parent=0 // pred_region
    _
  $region9: #{dueling_dqn_forward.5} parent=0 // pred_fallthru
    _
  // Predicated region
  $region10: #{dueling_dqn_forward.5} parent=0 // pred_check
    _
  $region11: #{dueling_dqn_forward.5} parent=0 // pred_check_branch
    %13 = sbr.rel (0) target = $region13
  $region12: #{dueling_dqn_forward.5} parent=0 // pred_region
    _
  $region13: #{dueling_dqn_forward.5} parent=0 // pred_fallthru
    _
  %v14 = vld [vmem:[%s0] sm:$0xff]
  %v15 = vld [vmem:[%s0 + $0x8] sm:$0xff]
  %v16 = vld [vmem:[%s0 + $0x10] sm:$0xff]
  %v17 = vld [vmem:[%s0 + $0x18] sm:$0xff]
  %v18 = vld [vmem:[%s0 + $0x20] sm:$0xff]
  %v19 = vld [vmem:[%s0 + $0x28] sm:$0xff]
  %v20 = vld [vmem:[%s0 + $0x30] sm:$0xff]
  %v21 = vld [vmem:[%s0 + $0x38] sm:$0xff]
  %v22 = vld [vmem:[%s0 + $0x40] sm:$0xff]
  %v23 = vld [vmem:[%s0 + $0x48] sm:$0xff]
  %v24 = vld [vmem:[%s0 + $0x50] sm:$0xff]
  %v25 = vld [vmem:[%s0 + $0x58] sm:$0xff]
  %v26 = vld [vmem:[%s0 + $0x60] sm:$0xff]
  %v27 = vld [vmem:[%s0 + $0x68] sm:$0xff]
  %v28 = vld [vmem:[%s0 + $0x70] sm:$0xff]
  %v29 = vld [vmem:[%s0 + $0x78] sm:$0xff]
  %v30 = vld [vmem:[%s0 + $0x80] sm:$0xff]
  %v31 = vld [vmem:[%s0 + $0x88] sm:$0xff]
  %v32 = vld [vmem:[%s0 + $0x90] sm:$0xff]
  %v33 = vld [vmem:[%s0 + $0x98] sm:$0xff]
  %v34 = vld [vmem:[%s0 + $0xa0] sm:$0xff]
  %v35 = vld [vmem:[%s0 + $0xa8] sm:$0xff]
  %v36 = vld [vmem:[%s0 + $0xb0] sm:$0xff]
  %v37 = vld [vmem:[%s0 + $0xb8] sm:$0xff]
  %v38 = vld [vmem:[%s0 + $0xc0] sm:$0xff]
  %v39 = vld [vmem:[%s0 + $0xc8] sm:$0xff]
  %v40 = vld [vmem:[%s0 + $0xd0] sm:$0xff]
  %v41 = vld [vmem:[%s0 + $0xd8] sm:$0xff]
  %v42 = vld [vmem:[%s0 + $0xe0] sm:$0xff]
  %v43 = vld [vmem:[%s0 + $0xe8] sm:$0xff]
  %v44 = vld [vmem:[%s0 + $0xf0] sm:$0xff]
  %v45 = vld [vmem:[%s0 + $0xf8] sm:$0xff]
  %v46 = vld [vmem:[%s0 + $0x100] sm:$0xff]
  %v47 = vld [vmem:[%s0 + $0x108] sm:$0xff]
  %v48 = vld [vmem:[%s0 + $0x110] sm:$0xff]
  %v49 = vld [vmem:[%s0 + $0x118] sm:$0xff]
  %v50 = vld [vmem:[%s0 + $0x120] sm:$0xff]
  %v51 = vld [vmem:[%s0 + $0x128] sm:$0xff]
  %v52 = vld [vmem:[%s0 + $0x130] sm:$0xff]
  %v53 = vld [vmem:[%s0 + $0x138] sm:$0xff]
  %v54 = vld [vmem:[%s0 + $0x140] sm:$0xff]
  %v55 = vld [vmem:[%s0 + $0x148] sm:$0xff]
  %v56 = vld [vmem:[%s0 + $0x150] sm:$0xff]
  %v57 = vld [vmem:[%s0 + $0x158] sm:$0xff]
  %v58 = vld [vmem:[%s0 + $0x160] sm:$0xff]
  %v59 = vld [vmem:[%s0 + $0x168] sm:$0xff]
  %v60 = vld [vmem:[%s0 + $0x170] sm:$0xff]
  %v61 = vld [vmem:[%s0 + $0x178] sm:$0xff]
  %v62 = vld [vmem:[%s0 + $0x180] sm:$0xff]
  %v63 = vld [vmem:[%s0 + $0x188] sm:$0xff]
  %v64 = vld [vmem:[%s0 + $0x190] sm:$0xff]
  %v65 = vld [vmem:[%s0 + $0x198] sm:$0xff]
  %v66 = vld [vmem:[%s0 + $0x1a0] sm:$0xff]
  %v67 = vld [vmem:[%s0 + $0x1a8] sm:$0xff]
  %v68 = vld [vmem:[%s0 + $0x1b0] sm:$0xff]
  %v69 = vld [vmem:[%s0 + $0x1b8] sm:$0xff]
  %v70 = vld [vmem:[%s0 + $0x1c0] sm:$0xff]
  %v71 = vld [vmem:[%s0 + $0x1c8] sm:$0xff]
  %v72 = vld [vmem:[%s0 + $0x1d0] sm:$0xff]
  %v73 = vld [vmem:[%s0 + $0x1d8] sm:$0xff]
  %v74 = vld [vmem:[%s0 + $0x1e0] sm:$0xff]
  %v75 = vld [vmem:[%s0 + $0x1e8] sm:$0xff]
  %v76 = vld [vmem:[%s0 + $0x1f0] sm:$0xff]
  %v77 = vld [vmem:[%s0 + $0x1f8] sm:$0xff]
  %v78 = vld [vmem:[%s0 + $0x200] sm:$0xff]
  %v79 = vld [vmem:[%s0 + $0x208] sm:$0xff]
  %v80 = vld [vmem:[%s0 + $0x210] sm:$0xff]
  %v81 = vld [vmem:[%s0 + $0x218] sm:$0xff]
  %v82 = vld [vmem:[%s0 + $0x220] sm:$0xff]
  %v83 = vld [vmem:[%s0 + $0x228] sm:$0xff]
  %v84 = vld [vmem:[%s0 + $0x230] sm:$0xff]
  %v85 = vld [vmem:[%s0 + $0x238] sm:$0xff]
  %v86 = vld [vmem:[%s1] sm:$0xf]
  %v87 = vld [vmem:[%s1 + $0x4] sm:$0xf]
  %v88 = vld [vmem:[%s1 + $0x8] sm:$0xf]
  %v89 = vld [vmem:[%s1 + $0xc] sm:$0xf]
  %v90 = vld [vmem:[%s1 + $0x10] sm:$0xf]
  %v91 = vld [vmem:[%s1 + $0x14] sm:$0xf]
  %v92 = vld [vmem:[%s1 + $0x18] sm:$0xf]
  %v93 = vld [vmem:[%s1 + $0x1c] sm:$0xf]
  %v94 = vld [vmem:[%s1 + $0x20] sm:$0xf]
  %v95 = vld [vmem:[%s1 + $0x24] sm:$0xf]
  %v96 = vld [vmem:[%s1 + $0x28] sm:$0xf]
  %v97 = vld [vmem:[%s1 + $0x2c] sm:$0xf]
  %v98 = vld [vmem:[%s1 + $0x30] sm:$0xf]
  %v99 = vld [vmem:[%s1 + $0x34] sm:$0xf]
  %v100 = vld [vmem:[%s1 + $0x38] sm:$0xf]
  %v101 = vld [vmem:[%s1 + $0x3c] sm:$0xf]
  %v102 = vld [vmem:[%s1 + $0x40] sm:$0xf]
  %v103 = vld [vmem:[%s1 + $0x44] sm:$0xf]
  %v104 = vld [vmem:[%s1 + $0x48] sm:$0xf]
  %v105 = vld [vmem:[%s1 + $0x4c] sm:$0xf]
  %v106 = vld [vmem:[%s1 + $0x50] sm:$0xf]
  %v107 = vld [vmem:[%s1 + $0x54] sm:$0xf]
  %v108 = vld [vmem:[%s1 + $0x58] sm:$0xf]
  %v109 = vld [vmem:[%s1 + $0x5c] sm:$0xf]
  %v110 = vld [vmem:[%s1 + $0x60] sm:$0xf]
  %v111 = vld [vmem:[%s1 + $0x64] sm:$0xf]
  %v112 = vld [vmem:[%s1 + $0x68] sm:$0xf]
  %v113 = vld [vmem:[%s1 + $0x6c] sm:$0xf]
  %v114 = vld [vmem:[%s1 + $0x70] sm:$0xf]
  %v115 = vld [vmem:[%s1 + $0x74] sm:$0xf]
  %v116 = vld [vmem:[%s1 + $0x78] sm:$0xf]
  %v117 = vld [vmem:[%s1 + $0x7c] sm:$0xf]
  %v118 = vld [vmem:[%s1 + $0x80] sm:$0xf]
  %v119 = vld [vmem:[%s1 + $0x84] sm:$0xf]
  %v120 = vld [vmem:[%s1 + $0x88] sm:$0xf]
  %v121 = vld [vmem:[%s1 + $0x8c] sm:$0xf]
  %v122 = vld [vmem:[%s1 + $0x90] sm:$0xf]
  %v123 = vld [vmem:[%s1 + $0x94] sm:$0xf]
  %v124 = vld [vmem:[%s1 + $0x98] sm:$0xf]
  %v125 = vld [vmem:[%s1 + $0x9c] sm:$0xf]
  %v126 = vld [vmem:[%s1 + $0xa0] sm:$0xf]
  %v127 = vld [vmem:[%s1 + $0xa4] sm:$0xf]
  %v128 = vld [vmem:[%s1 + $0xa8] sm:$0xf]
  %v129 = vld [vmem:[%s1 + $0xac] sm:$0xf]
  %v130 = vld [vmem:[%s1 + $0xb0] sm:$0xf]
  %v131 = vld [vmem:[%s1 + $0xb4] sm:$0xf]
  %v132 = vld [vmem:[%s1 + $0xb8] sm:$0xf]
  %v133 = vld [vmem:[%s1 + $0xbc] sm:$0xf]
  %v134 = vld [vmem:[%s1 + $0xc0] sm:$0xf]
  %v135 = vld [vmem:[%s1 + $0xc4] sm:$0xf]
  %v136 = vld [vmem:[%s1 + $0xc8] sm:$0xf]
  %v137 = vld [vmem:[%s1 + $0xcc] sm:$0xf]
  %v138 = vld [vmem:[%s1 + $0xd0] sm:$0xf]
  %v139 = vld [vmem:[%s1 + $0xd4] sm:$0xf]
  %v140 = vld [vmem:[%s1 + $0xd8] sm:$0xf]
  %v141 = vld [vmem:[%s1 + $0xdc] sm:$0xf]
  %v142 = vld [vmem:[%s1 + $0xe0] sm:$0xf]
  %v143 = vld [vmem:[%s1 + $0xe4] sm:$0xf]
  %v144 = vld [vmem:[%s1 + $0xe8] sm:$0xf]
  %v145 = vld [vmem:[%s1 + $0xec] sm:$0xf]
  %v146 = vld [vmem:[%s1 + $0xf0] sm:$0xf]
  %v147 = vld [vmem:[%s1 + $0xf4] sm:$0xf]
  %v148 = vld [vmem:[%s1 + $0xf8] sm:$0xf]
  %v149 = vld [vmem:[%s1 + $0xfc] sm:$0xf]
  %v150 = vld [vmem:[%s1 + $0x100] sm:$0xf]
  %v151 = vld [vmem:[%s1 + $0x104] sm:$0xf]
  %v152 = vld [vmem:[%s1 + $0x108] sm:$0xf]
  %v153 = vld [vmem:[%s1 + $0x10c] sm:$0xf]
  %v154 = vld [vmem:[%s1 + $0x110] sm:$0xf]
  %v155 = vld [vmem:[%s1 + $0x114] sm:$0xf]
  %v156 = vld [vmem:[%s1 + $0x118] sm:$0xf]
  %v157 = vld [vmem:[%s1 + $0x11c] sm:$0xf]
  %v158 = vld [vmem:[%s1 + $0x120] sm:$0xf]
  %v159 = vld [vmem:[%s1 + $0x124] sm:$0xf]
  %v160 = vld [vmem:[%s1 + $0x128] sm:$0xf]
  %v161 = vld [vmem:[%s1 + $0x12c] sm:$0xf]
  %v162 = vld [vmem:[%s1 + $0x130] sm:$0xf]
  %v163 = vld [vmem:[%s1 + $0x134] sm:$0xf]
  %v164 = vld [vmem:[%s1 + $0x138] sm:$0xf]
  %v165 = vld [vmem:[%s1 + $0x13c] sm:$0xf]
  %v166 = vld [vmem:[%s1 + $0x140] sm:$0xf]
  %v167 = vld [vmem:[%s1 + $0x144] sm:$0xf]
  %v168 = vld [vmem:[%s1 + $0x148] sm:$0xf]
  %v169 = vld [vmem:[%s1 + $0x14c] sm:$0xf]
  %v170 = vld [vmem:[%s1 + $0x150] sm:$0xf]
  %v171 = vld [vmem:[%s1 + $0x154] sm:$0xf]
  %v172 = vld [vmem:[%s1 + $0x158] sm:$0xf]
  %v173 = vld [vmem:[%s1 + $0x15c] sm:$0xf]
  %v174 = vld [vmem:[%s1 + $0x160] sm:$0xf]
  %v175 = vld [vmem:[%s1 + $0x164] sm:$0xf]
  %v176 = vld [vmem:[%s1 + $0x168] sm:$0xf]
  %v177 = vld [vmem:[%s1 + $0x16c] sm:$0xf]
  %v178 = vld [vmem:[%s1 + $0x170] sm:$0xf]
  %v179 = vld [vmem:[%s1 + $0x174] sm:$0xf]
  %v180 = vld [vmem:[%s1 + $0x178] sm:$0xf]
  %v181 = vld [vmem:[%s1 + $0x17c] sm:$0xf]
  %v182 = vld [vmem:[%s1 + $0x180] sm:$0xf]
  %v183 = vld [vmem:[%s1 + $0x184] sm:$0xf]
  %v184 = vld [vmem:[%s1 + $0x188] sm:$0xf]
  %v185 = vld [vmem:[%s1 + $0x18c] sm:$0xf]
  %v186 = vld [vmem:[%s1 + $0x190] sm:$0xf]
  %v187 = vld [vmem:[%s1 + $0x194] sm:$0xf]
  %v188 = vld [vmem:[%s1 + $0x198] sm:$0xf]
  %v189 = vld [vmem:[%s1 + $0x19c] sm:$0xf]
  %v190 = vld [vmem:[%s1 + $0x1a0] sm:$0xf]
  %v191 = vld [vmem:[%s1 + $0x1a4] sm:$0xf]
  %v192 = vld [vmem:[%s1 + $0x1a8] sm:$0xf]
  %v193 = vld [vmem:[%s1 + $0x1ac] sm:$0xf]
  %v194 = vld [vmem:[%s1 + $0x1b0] sm:$0xf]
  %v195 = vld [vmem:[%s1 + $0x1b4] sm:$0xf]
  %v196 = vld [vmem:[%s1 + $0x1b8] sm:$0xf]
  %v197 = vld [vmem:[%s1 + $0x1bc] sm:$0xf]
  %v198 = vld [vmem:[%s1 + $0x1c0] sm:$0xf]
  %v199 = vld [vmem:[%s1 + $0x1c4] sm:$0xf]
  %v200 = vld [vmem:[%s1 + $0x1c8] sm:$0xf]
  %v201 = vld [vmem:[%s1 + $0x1cc] sm:$0xf]
  %v202 = vld [vmem:[%s1 + $0x1d0] sm:$0xf]
  %v203 = vld [vmem:[%s1 + $0x1d4] sm:$0xf]
  %v204 = vld [vmem:[%s1 + $0x1d8] sm:$0xf]
  %v205 = vld [vmem:[%s1 + $0x1dc] sm:$0xf]
  %v206 = vld [vmem:[%s1 + $0x1e0] sm:$0xf]
  %v207 = vld [vmem:[%s1 + $0x1e4] sm:$0xf]
  %v208 = vld [vmem:[%s1 + $0x1e8] sm:$0xf]
  %v209 = vld [vmem:[%s1 + $0x1ec] sm:$0xf]
  %v210 = vld [vmem:[%s1 + $0x1f0] sm:$0xf]
  %v211 = vld [vmem:[%s1 + $0x1f4] sm:$0xf]
  %v212 = vld [vmem:[%s1 + $0x1f8] sm:$0xf]
  %v213 = vld [vmem:[%s1 + $0x1fc] sm:$0xf]
  %v214 = vld [vmem:[%s1 + $0x200] sm:$0xf]
  %v215 = vld [vmem:[%s1 + $0x204] sm:$0xf]
  %v216 = vld [vmem:[%s1 + $0x208] sm:$0xf]
  %v217 = vld [vmem:[%s1 + $0x20c] sm:$0xf]
  %v218 = vld [vmem:[%s1 + $0x210] sm:$0xf]
  %v219 = vld [vmem:[%s1 + $0x214] sm:$0xf]
  %v220 = vld [vmem:[%s1 + $0x218] sm:$0xf]
  %v221 = vld [vmem:[%s1 + $0x21c] sm:$0xf]
  %v222 = vld [vmem:[%s1 + $0x220] sm:$0xf]
  %v223 = vld [vmem:[%s1 + $0x224] sm:$0xf]
  %v224 = vld [vmem:[%s1 + $0x228] sm:$0xf]
  %v225 = vld [vmem:[%s1 + $0x22c] sm:$0xf]
  %v226 = vld [vmem:[%s1 + $0x230] sm:$0xf]
  %v227 = vld [vmem:[%s1 + $0x234] sm:$0xf]
  %v228 = vld [vmem:[%s1 + $0x238] sm:$0xf]
  %v229 = vld [vmem:[%s1 + $0x23c] sm:$0xf]
  %v230 = vld [vmem:[%s1 + $0x240] sm:$0xf]
  %v231 = vld [vmem:[%s1 + $0x244] sm:$0xf]
  %v232 = vld [vmem:[%s1 + $0x248] sm:$0xf]
  %v233 = vld [vmem:[%s1 + $0x24c] sm:$0xf]
  %v234 = vld [vmem:[%s1 + $0x250] sm:$0xf]
  %v235 = vld [vmem:[%s1 + $0x254] sm:$0xf]
  %v236 = vld [vmem:[%s1 + $0x258] sm:$0xf]
  %v237 = vld [vmem:[%s1 + $0x25c] sm:$0xf]
  %v238 = vld [vmem:[%s1 + $0x260] sm:$0xf]
  %v239 = vld [vmem:[%s1 + $0x264] sm:$0xf]
  %v240 = vld [vmem:[%s1 + $0x268] sm:$0xf]
  %v241 = vld [vmem:[%s1 + $0x26c] sm:$0xf]
  %v242 = vld [vmem:[%s1 + $0x270] sm:$0xf]
  %v243 = vld [vmem:[%s1 + $0x274] sm:$0xf]
  %v244 = vld [vmem:[%s1 + $0x278] sm:$0xf]
  %v245 = vld [vmem:[%s1 + $0x27c] sm:$0xf]
  %v246 = vld [vmem:[%s1 + $0x280] sm:$0xf]
  %v247 = vld [vmem:[%s1 + $0x284] sm:$0xf]
  %v248 = vld [vmem:[%s1 + $0x288] sm:$0xf]
  %v249 = vld [vmem:[%s1 + $0x28c] sm:$0xf]
  %v250 = vld [vmem:[%s1 + $0x290] sm:$0xf]
  %v251 = vld [vmem:[%s1 + $0x294] sm:$0xf]
  %v252 = vld [vmem:[%s1 + $0x298] sm:$0xf]
  %v253 = vld [vmem:[%s1 + $0x29c] sm:$0xf]
  %v254 = vld [vmem:[%s1 + $0x2a0] sm:$0xf]
  %v255 = vld [vmem:[%s1 + $0x2a4] sm:$0xf]
  %v256 = vld [vmem:[%s1 + $0x2a8] sm:$0xf]
  %v257 = vld [vmem:[%s1 + $0x2ac] sm:$0xf]
  %v258 = vld [vmem:[%s1 + $0x2b0] sm:$0xf]
  %v259 = vld [vmem:[%s1 + $0x2b4] sm:$0xf]
  %v260 = vld [vmem:[%s1 + $0x2b8] sm:$0xf]
  %v261 = vld [vmem:[%s1 + $0x2bc] sm:$0xf]
  %v262 = vld [vmem:[%s1 + $0x2c0] sm:$0xf]
  %v263 = vld [vmem:[%s1 + $0x2c4] sm:$0xf]
  %v264 = vld [vmem:[%s1 + $0x2c8] sm:$0xf]
  %v265 = vld [vmem:[%s1 + $0x2cc] sm:$0xf]
  %v266 = vld [vmem:[%s1 + $0x2d0] sm:$0xf]
  %v267 = vld [vmem:[%s1 + $0x2d4] sm:$0xf]
  %v268 = vld [vmem:[%s1 + $0x2d8] sm:$0xf]
  %v269 = vld [vmem:[%s1 + $0x2dc] sm:$0xf]
  %v270 = vld [vmem:[%s1 + $0x2e0] sm:$0xf]
  %v271 = vld [vmem:[%s1 + $0x2e4] sm:$0xf]
  %v272 = vld [vmem:[%s1 + $0x2e8] sm:$0xf]
  %v273 = vld [vmem:[%s1 + $0x2ec] sm:$0xf]
  %v274 = vld [vmem:[%s1 + $0x2f0] sm:$0xf]
  %v275 = vld [vmem:[%s1 + $0x2f4] sm:$0xf]
  %v276 = vld [vmem:[%s1 + $0x2f8] sm:$0xf]
  %v277 = vld [vmem:[%s1 + $0x2fc] sm:$0xf]
  %v278 = vld [vmem:[%s1 + $0x300] sm:$0xf]
  %v279 = vld [vmem:[%s1 + $0x304] sm:$0xf]
  %v280 = vld [vmem:[%s1 + $0x308] sm:$0xf]
  %v281 = vld [vmem:[%s1 + $0x30c] sm:$0xf]
  %v282 = vld [vmem:[%s1 + $0x310] sm:$0xf]
  %v283 = vld [vmem:[%s1 + $0x314] sm:$0xf]
  %v284 = vld [vmem:[%s1 + $0x318] sm:$0xf]
  %v285 = vld [vmem:[%s1 + $0x31c] sm:$0xf]
  %v286 = vld [vmem:[%s1 + $0x320] sm:$0xf]
  %v287 = vld [vmem:[%s1 + $0x324] sm:$0xf]
  %v288 = vld [vmem:[%s1 + $0x328] sm:$0xf]
  %v289 = vld [vmem:[%s1 + $0x32c] sm:$0xf]
  %v290 = vld [vmem:[%s1 + $0x330] sm:$0xf]
  %v291 = vld [vmem:[%s1 + $0x334] sm:$0xf]
  %v292 = vld [vmem:[%s1 + $0x338] sm:$0xf]
  %v293 = vld [vmem:[%s1 + $0x33c] sm:$0xf]
  %v294 = vld [vmem:[%s1 + $0x340] sm:$0xf]
  %v295 = vld [vmem:[%s1 + $0x344] sm:$0xf]
  %v296 = vld [vmem:[%s1 + $0x348] sm:$0xf]
  %v297 = vld [vmem:[%s1 + $0x34c] sm:$0xf]
  %v298 = vld [vmem:[%s1 + $0x350] sm:$0xf]
  %v299 = vld [vmem:[%s1 + $0x354] sm:$0xf]
  %v300 = vld [vmem:[%s1 + $0x358] sm:$0xf]
  %v301 = vld [vmem:[%s1 + $0x35c] sm:$0xf]
  %v302 = vld [vmem:[%s1 + $0x360] sm:$0xf]
  %v303 = vld [vmem:[%s1 + $0x364] sm:$0xf]
  %v304 = vld [vmem:[%s1 + $0x368] sm:$0xf]
  %v305 = vld [vmem:[%s1 + $0x36c] sm:$0xf]
  %v306 = vld [vmem:[%s1 + $0x370] sm:$0xf]
  %v307 = vld [vmem:[%s1 + $0x374] sm:$0xf]
  %v308 = vld [vmem:[%s1 + $0x378] sm:$0xf]
  %v309 = vld [vmem:[%s1 + $0x37c] sm:$0xf]
  %v310 = vld [vmem:[%s1 + $0x380] sm:$0xf]
  %v311 = vld [vmem:[%s1 + $0x384] sm:$0xf]
  %v312 = vld [vmem:[%s1 + $0x388] sm:$0xf]
  %v313 = vld [vmem:[%s1 + $0x38c] sm:$0xf]
  %v314 = vld [vmem:[%s1 + $0x390] sm:$0xf]
  %v315 = vld [vmem:[%s1 + $0x394] sm:$0xf]
  %v316 = vld [vmem:[%s1 + $0x398] sm:$0xf]
  %v317 = vld [vmem:[%s1 + $0x39c] sm:$0xf]
  %v318 = vld [vmem:[%s1 + $0x3a0] sm:$0xf]
  %v319 = vld [vmem:[%s1 + $0x3a4] sm:$0xf]
  %v320 = vld [vmem:[%s1 + $0x3a8] sm:$0xf]
  %v321 = vld [vmem:[%s1 + $0x3ac] sm:$0xf]
  %v322 = vld [vmem:[%s1 + $0x3b0] sm:$0xf]
  %v323 = vld [vmem:[%s1 + $0x3b4] sm:$0xf]
  %v324 = vld [vmem:[%s1 + $0x3b8] sm:$0xf]
  %v325 = vld [vmem:[%s1 + $0x3bc] sm:$0xf]
  %v326 = vld [vmem:[%s1 + $0x3c0] sm:$0xf]
  %v327 = vld [vmem:[%s1 + $0x3c4] sm:$0xf]
  %v328 = vld [vmem:[%s1 + $0x3c8] sm:$0xf]
  %v329 = vld [vmem:[%s1 + $0x3cc] sm:$0xf]
  %v330 = vld [vmem:[%s1 + $0x3d0] sm:$0xf]
  %v331 = vld [vmem:[%s1 + $0x3d4] sm:$0xf]
  %v332 = vld [vmem:[%s1 + $0x3d8] sm:$0xf]
  %v333 = vld [vmem:[%s1 + $0x3dc] sm:$0xf]
  %v334 = vld [vmem:[%s1 + $0x3e0] sm:$0xf]
  %v335 = vld [vmem:[%s1 + $0x3e4] sm:$0xf]
  %v336 = vld [vmem:[%s1 + $0x3e8] sm:$0xf]
  %v337 = vld [vmem:[%s1 + $0x3ec] sm:$0xf]
  %v338 = vld [vmem:[%s1 + $0x3f0] sm:$0xf]
  %v339 = vld [vmem:[%s1 + $0x3f4] sm:$0xf]
  %v340 = vld [vmem:[%s1 + $0x3f8] sm:$0xf]
  %v341 = vld [vmem:[%s1 + $0x3fc] sm:$0xf]
  %v342 = vld [vmem:[%s2] sm:$0x1]
  %v344 = vperm.slane %v342, 0
  %v418 = vunpack.c.l.b16 %v14
  %v419 = vunpack.c.h.b16 %v14
  %v420 = vunpack.c.l.b16 %v15
  %v421 = vunpack.c.h.b16 %v15
  %v422 = vunpack.c.l.b16 %v16
  %v423 = vunpack.c.h.b16 %v16
  %v424 = vunpack.c.l.b16 %v17
  %v425 = vunpack.c.h.b16 %v17
  %v426 = vunpack.c.l.b16 %v18
  %v427 = vunpack.c.h.b16 %v18
  %v428 = vunpack.c.l.b16 %v19
  %v429 = vunpack.c.h.b16 %v19
  %v430 = vunpack.c.l.b16 %v20
  %v431 = vunpack.c.h.b16 %v20
  %v432 = vunpack.c.l.b16 %v21
  %v433 = vunpack.c.h.b16 %v21
  %v434 = vunpack.c.l.b16 %v22
  %v435 = vunpack.c.h.b16 %v22
  %v436 = vunpack.c.l.b16 %v23
  %v437 = vunpack.c.h.b16 %v23
  %v438 = vunpack.c.l.b16 %v24
  %v439 = vunpack.c.h.b16 %v24
  %v440 = vunpack.c.l.b16 %v25
  %v441 = vunpack.c.h.b16 %v25
  %v442 = vunpack.c.l.b16 %v26
  %v443 = vunpack.c.h.b16 %v26
  %v444 = vunpack.c.l.b16 %v27
  %v445 = vunpack.c.h.b16 %v27
  %v446 = vunpack.c.l.b16 %v28
  %v447 = vunpack.c.h.b16 %v28
  %v448 = vunpack.c.l.b16 %v29
  %v449 = vunpack.c.h.b16 %v29
  %v450 = vunpack.c.l.b16 %v30
  %v451 = vunpack.c.h.b16 %v30
  %v452 = vunpack.c.l.b16 %v31
  %v453 = vunpack.c.h.b16 %v31
  %v454 = vunpack.c.l.b16 %v32
  %v455 = vunpack.c.h.b16 %v32
  %v456 = vunpack.c.l.b16 %v33
  %v457 = vunpack.c.h.b16 %v33
  %v458 = vunpack.c.l.b16 %v34
  %v459 = vunpack.c.h.b16 %v34
  %v460 = vunpack.c.l.b16 %v35
  %v461 = vunpack.c.h.b16 %v35
  %v462 = vunpack.c.l.b16 %v36
  %v463 = vunpack.c.h.b16 %v36
  %v464 = vunpack.c.l.b16 %v37
  %v465 = vunpack.c.h.b16 %v37
  %v466 = vunpack.c.l.b16 %v38
  %v467 = vunpack.c.h.b16 %v38
  %v468 = vunpack.c.l.b16 %v39
  %v469 = vunpack.c.h.b16 %v39
  %v470 = vunpack.c.l.b16 %v40
  %v471 = vunpack.c.h.b16 %v40
  %v472 = vunpack.c.l.b16 %v41
  %v473 = vunpack.c.h.b16 %v41
  %v474 = vunpack.c.l.b16 %v42
  %v475 = vunpack.c.h.b16 %v42
  %v476 = vunpack.c.l.b16 %v43
  %v477 = vunpack.c.h.b16 %v43
  %v478 = vunpack.c.l.b16 %v44
  %v479 = vunpack.c.h.b16 %v44
  %v480 = vunpack.c.l.b16 %v45
  %v481 = vunpack.c.h.b16 %v45
  %v482 = vunpack.c.l.b16 %v46
  %v483 = vunpack.c.h.b16 %v46
  %v484 = vunpack.c.l.b16 %v47
  %v485 = vunpack.c.h.b16 %v47
  %v486 = vunpack.c.l.b16 %v48
  %v487 = vunpack.c.h.b16 %v48
  %v488 = vunpack.c.l.b16 %v49
  %v489 = vunpack.c.h.b16 %v49
  %v490 = vunpack.c.l.b16 %v50
  %v491 = vunpack.c.h.b16 %v50
  %v492 = vunpack.c.l.b16 %v51
  %v493 = vunpack.c.h.b16 %v51
  %v494 = vunpack.c.l.b16 %v52
  %v495 = vunpack.c.h.b16 %v52
  %v496 = vunpack.c.l.b16 %v53
  %v497 = vunpack.c.h.b16 %v53
  %v498 = vunpack.c.l.b16 %v54
  %v499 = vunpack.c.h.b16 %v54
  %v500 = vunpack.c.l.b16 %v55
  %v501 = vunpack.c.h.b16 %v55
  %v502 = vunpack.c.l.b16 %v56
  %v503 = vunpack.c.h.b16 %v56
  %v504 = vunpack.c.l.b16 %v57
  %v505 = vunpack.c.h.b16 %v57
  %v506 = vunpack.c.l.b16 %v58
  %v507 = vunpack.c.h.b16 %v58
  %v508 = vunpack.c.l.b16 %v59
  %v509 = vunpack.c.h.b16 %v59
  %v510 = vunpack.c.l.b16 %v60
  %v511 = vunpack.c.h.b16 %v60
  %v512 = vunpack.c.l.b16 %v61
  %v513 = vunpack.c.h.b16 %v61
  %v514 = vunpack.c.l.b16 %v62
  %v515 = vunpack.c.h.b16 %v62
  %v516 = vunpack.c.l.b16 %v63
  %v517 = vunpack.c.h.b16 %v63
  %v518 = vunpack.c.l.b16 %v64
  %v519 = vunpack.c.h.b16 %v64
  %v520 = vunpack.c.l.b16 %v65
  %v521 = vunpack.c.h.b16 %v65
  %v522 = vunpack.c.l.b16 %v66
  %v523 = vunpack.c.h.b16 %v66
  %v524 = vunpack.c.l.b16 %v67
  %v525 = vunpack.c.h.b16 %v67
  %v526 = vunpack.c.l.b16 %v68
  %v527 = vunpack.c.h.b16 %v68
  %v528 = vunpack.c.l.b16 %v69
  %v529 = vunpack.c.h.b16 %v69
  %v530 = vunpack.c.l.b16 %v70
  %v531 = vunpack.c.h.b16 %v70
  %v532 = vunpack.c.l.b16 %v71
  %v533 = vunpack.c.h.b16 %v71
  %v534 = vunpack.c.l.b16 %v72
  %v535 = vunpack.c.h.b16 %v72
  %v536 = vunpack.c.l.b16 %v73
  %v537 = vunpack.c.h.b16 %v73
  %v538 = vunpack.c.l.b16 %v74
  %v539 = vunpack.c.h.b16 %v74
  %v540 = vunpack.c.l.b16 %v75
  %v541 = vunpack.c.h.b16 %v75
  %v542 = vunpack.c.l.b16 %v76
  %v543 = vunpack.c.h.b16 %v76
  %v544 = vunpack.c.l.b16 %v77
  %v545 = vunpack.c.h.b16 %v77
  %v546 = vunpack.c.l.b16 %v78
  %v547 = vunpack.c.h.b16 %v78
  %v548 = vunpack.c.l.b16 %v79
  %v549 = vunpack.c.h.b16 %v79
  %v550 = vunpack.c.l.b16 %v80
  %v551 = vunpack.c.h.b16 %v80
  %v552 = vunpack.c.l.b16 %v81
  %v553 = vunpack.c.h.b16 %v81
  %v554 = vunpack.c.l.b16 %v82
  %v555 = vunpack.c.h.b16 %v82
  %v556 = vunpack.c.l.b16 %v83
  %v557 = vunpack.c.h.b16 %v83
  %v558 = vunpack.c.l.b16 %v84
  %v559 = vunpack.c.h.b16 %v84
  %v560 = vunpack.c.l.b16 %v85
  %v561 = vunpack.c.h.b16 %v85
  %v562 = vpack.c.b16 %v434, %v418
  %v563 = vpack.c.b16 %v435, %v419
  %v564 = vpack.c.b16 %v436, %v420
  %v565 = vpack.c.b16 %v437, %v421
  %v566 = vpack.c.b16 %v438, %v422
  %v567 = vpack.c.b16 %v439, %v423
  %v568 = vpack.c.b16 %v440, %v424
  %v569 = vpack.c.b16 %v441, %v425
  %v570 = vpack.c.b16 %v442, %v426
  %v571 = vpack.c.b16 %v443, %v427
  %v572 = vpack.c.b16 %v444, %v428
  %v573 = vpack.c.b16 %v445, %v429
  %v574 = vpack.c.b16 %v446, %v430
  %v575 = vpack.c.b16 %v447, %v431
  %v576 = vpack.c.b16 %v448, %v432
  %v577 = vpack.c.b16 %v449, %v433
  %v578 = vpack.c.b16 %v466, %v450
  %v579 = vpack.c.b16 %v467, %v451
  %v580 = vpack.c.b16 %v468, %v452
  %v581 = vpack.c.b16 %v469, %v453
  %v582 = vpack.c.b16 %v470, %v454
  %v583 = vpack.c.b16 %v471, %v455
  %v584 = vpack.c.b16 %v472, %v456
  %v585 = vpack.c.b16 %v473, %v457
  %v586 = vpack.c.b16 %v474, %v458
  %v587 = vpack.c.b16 %v475, %v459
  %v588 = vpack.c.b16 %v476, %v460
  %v589 = vpack.c.b16 %v477, %v461
  %v590 = vpack.c.b16 %v478, %v462
  %v591 = vpack.c.b16 %v479, %v463
  %v592 = vpack.c.b16 %v480, %v464
  %v593 = vpack.c.b16 %v481, %v465
  %v594 = vpack.c.b16 %v498, %v482
  %v595 = vpack.c.b16 %v499, %v483
  %v596 = vpack.c.b16 %v500, %v484
  %v597 = vpack.c.b16 %v501, %v485
  %v598 = vpack.c.b16 %v502, %v486
  %v599 = vpack.c.b16 %v503, %v487
  %v600 = vpack.c.b16 %v504, %v488
  %v601 = vpack.c.b16 %v505, %v489
  %v602 = vpack.c.b16 %v506, %v490
  %v603 = vpack.c.b16 %v507, %v491
  %v604 = vpack.c.b16 %v508, %v492
  %v605 = vpack.c.b16 %v509, %v493
  %v606 = vpack.c.b16 %v510, %v494
  %v607 = vpack.c.b16 %v511, %v495
  %v608 = vpack.c.b16 %v512, %v496
  %v609 = vpack.c.b16 %v513, %v497
  %v610 = vpack.c.b16 %v530, %v514
  %v611 = vpack.c.b16 %v531, %v515
  %v612 = vpack.c.b16 %v532, %v516
  %v613 = vpack.c.b16 %v533, %v517
  %v614 = vpack.c.b16 %v534, %v518
  %v615 = vpack.c.b16 %v535, %v519
  %v616 = vpack.c.b16 %v536, %v520
  %v617 = vpack.c.b16 %v537, %v521
  %v618 = vpack.c.b16 %v538, %v522
  %v619 = vpack.c.b16 %v539, %v523
  %v620 = vpack.c.b16 %v540, %v524
  %v621 = vpack.c.b16 %v541, %v525
  %v622 = vpack.c.b16 %v542, %v526
  %v623 = vpack.c.b16 %v543, %v527
  %v624 = vpack.c.b16 %v544, %v528
  %v625 = vpack.c.b16 %v545, %v529
  %v626 = vpack.c.b16 %v546, %v546
  %v627 = vpack.c.b16 %v547, %v547
  %v628 = vpack.c.b16 %v548, %v548
  %v629 = vpack.c.b16 %v549, %v549
  %v630 = vpack.c.b16 %v550, %v550
  %v631 = vpack.c.b16 %v551, %v551
  %v632 = vpack.c.b16 %v552, %v552
  %v633 = vpack.c.b16 %v553, %v553
  %v634 = vpack.c.b16 %v554, %v554
  %v635 = vpack.c.b16 %v555, %v555
  %v636 = vpack.c.b16 %v556, %v556
  %v637 = vpack.c.b16 %v557, %v557
  %v638 = vpack.c.b16 %v558, %v558
  %v639 = vpack.c.b16 %v559, %v559
  %v640 = vpack.c.b16 %v560, %v560
  %v641 = vpack.c.b16 %v561, %v561
  %v978 = vunpack.c.l.b16 %v86
  %v979 = vunpack.c.l.b16 %v87
  %v980 = vunpack.c.l.b16 %v88
  %v981 = vunpack.c.l.b16 %v89
  %v982 = vunpack.c.l.b16 %v90
  %v983 = vunpack.c.l.b16 %v91
  %v984 = vunpack.c.l.b16 %v92
  %v985 = vunpack.c.l.b16 %v93
  %v986 = vunpack.c.l.b16 %v94
  %v987 = vunpack.c.l.b16 %v95
  %v988 = vunpack.c.l.b16 %v96
  %v989 = vunpack.c.l.b16 %v97
  %v990 = vunpack.c.l.b16 %v98
  %v991 = vunpack.c.l.b16 %v99
  %v992 = vunpack.c.l.b16 %v100
  %v993 = vunpack.c.l.b16 %v101
  %v994 = vunpack.c.l.b16 %v102
  %v995 = vunpack.c.l.b16 %v103
  %v996 = vunpack.c.l.b16 %v104
  %v997 = vunpack.c.l.b16 %v105
  %v998 = vunpack.c.l.b16 %v106
  %v999 = vunpack.c.l.b16 %v107
  %v1000 = vunpack.c.l.b16 %v108
  %v1001 = vunpack.c.l.b16 %v109
  %v1002 = vunpack.c.l.b16 %v110
  %v1003 = vunpack.c.l.b16 %v111
  %v1004 = vunpack.c.l.b16 %v112
  %v1005 = vunpack.c.l.b16 %v113
  %v1006 = vunpack.c.l.b16 %v114
  %v1007 = vunpack.c.l.b16 %v115
  %v1008 = vunpack.c.l.b16 %v116
  %v1009 = vunpack.c.l.b16 %v117
  %v1010 = vunpack.c.l.b16 %v118
  %v1011 = vunpack.c.l.b16 %v119
  %v1012 = vunpack.c.l.b16 %v120
  %v1013 = vunpack.c.l.b16 %v121
  %v1014 = vunpack.c.l.b16 %v122
  %v1015 = vunpack.c.l.b16 %v123
  %v1016 = vunpack.c.l.b16 %v124
  %v1017 = vunpack.c.l.b16 %v125
  %v1018 = vunpack.c.l.b16 %v126
  %v1019 = vunpack.c.l.b16 %v127
  %v1020 = vunpack.c.l.b16 %v128
  %v1021 = vunpack.c.l.b16 %v129
  %v1022 = vunpack.c.l.b16 %v130
  %v1023 = vunpack.c.l.b16 %v131
  %v1024 = vunpack.c.l.b16 %v132
  %v1025 = vunpack.c.l.b16 %v133
  %v1026 = vunpack.c.l.b16 %v134
  %v1027 = vunpack.c.l.b16 %v135
  %v1028 = vunpack.c.l.b16 %v136
  %v1029 = vunpack.c.l.b16 %v137
  %v1030 = vunpack.c.l.b16 %v138
  %v1031 = vunpack.c.l.b16 %v139
  %v1032 = vunpack.c.l.b16 %v140
  %v1033 = vunpack.c.l.b16 %v141
  %v1034 = vunpack.c.l.b16 %v142
  %v1035 = vunpack.c.l.b16 %v143
  %v1036 = vunpack.c.l.b16 %v144
  %v1037 = vunpack.c.l.b16 %v145
  %v1038 = vunpack.c.l.b16 %v146
  %v1039 = vunpack.c.l.b16 %v147
  %v1040 = vunpack.c.l.b16 %v148
  %v1041 = vunpack.c.l.b16 %v149
  %v1042 = vunpack.c.l.b16 %v150
  %v1043 = vunpack.c.l.b16 %v151
  %v1044 = vunpack.c.l.b16 %v152
  %v1045 = vunpack.c.l.b16 %v153
  %v1046 = vunpack.c.l.b16 %v154
  %v1047 = vunpack.c.l.b16 %v155
  %v1048 = vunpack.c.l.b16 %v156
  %v1049 = vunpack.c.l.b16 %v157
  %v1050 = vunpack.c.l.b16 %v158
  %v1051 = vunpack.c.l.b16 %v159
  %v1052 = vunpack.c.l.b16 %v160
  %v1053 = vunpack.c.l.b16 %v161
  %v1054 = vunpack.c.l.b16 %v162
  %v1055 = vunpack.c.l.b16 %v163
  %v1056 = vunpack.c.l.b16 %v164
  %v1057 = vunpack.c.l.b16 %v165
  %v1058 = vunpack.c.l.b16 %v166
  %v1059 = vunpack.c.l.b16 %v167
  %v1060 = vunpack.c.l.b16 %v168
  %v1061 = vunpack.c.l.b16 %v169
  %v1062 = vunpack.c.l.b16 %v170
  %v1063 = vunpack.c.l.b16 %v171
  %v1064 = vunpack.c.l.b16 %v172
  %v1065 = vunpack.c.l.b16 %v173
  %v1066 = vunpack.c.l.b16 %v174
  %v1067 = vunpack.c.l.b16 %v175
  %v1068 = vunpack.c.l.b16 %v176
  %v1069 = vunpack.c.l.b16 %v177
  %v1070 = vunpack.c.l.b16 %v178
  %v1071 = vunpack.c.l.b16 %v179
  %v1072 = vunpack.c.l.b16 %v180
  %v1073 = vunpack.c.l.b16 %v181
  %v1074 = vunpack.c.l.b16 %v182
  %v1075 = vunpack.c.l.b16 %v183
  %v1076 = vunpack.c.l.b16 %v184
  %v1077 = vunpack.c.l.b16 %v185
  %v1078 = vunpack.c.l.b16 %v186
  %v1079 = vunpack.c.l.b16 %v187
  %v1080 = vunpack.c.l.b16 %v188
  %v1081 = vunpack.c.l.b16 %v189
  %v1082 = vunpack.c.l.b16 %v190
  %v1083 = vunpack.c.l.b16 %v191
  %v1084 = vunpack.c.l.b16 %v192
  %v1085 = vunpack.c.l.b16 %v193
  %v1086 = vunpack.c.l.b16 %v194
  %v1087 = vunpack.c.l.b16 %v195
  %v1088 = vunpack.c.l.b16 %v196
  %v1089 = vunpack.c.l.b16 %v197
  %v1090 = vunpack.c.l.b16 %v198
  %v1091 = vunpack.c.l.b16 %v199
  %v1092 = vunpack.c.l.b16 %v200
  %v1093 = vunpack.c.l.b16 %v201
  %v1094 = vunpack.c.l.b16 %v202
  %v1095 = vunpack.c.l.b16 %v203
  %v1096 = vunpack.c.l.b16 %v204
  %v1097 = vunpack.c.l.b16 %v205
  %v1098 = vunpack.c.l.b16 %v206
  %v1099 = vunpack.c.l.b16 %v207
  %v1100 = vunpack.c.l.b16 %v208
  %v1101 = vunpack.c.l.b16 %v209
  %v1102 = vunpack.c.l.b16 %v210
  %v1103 = vunpack.c.l.b16 %v211
  %v1104 = vunpack.c.l.b16 %v212
  %v1105 = vunpack.c.l.b16 %v213
  %v1106 = vunpack.c.l.b16 %v214
  %v1107 = vunpack.c.l.b16 %v215
  %v1108 = vunpack.c.l.b16 %v216
  %v1109 = vunpack.c.l.b16 %v217
  %v1110 = vunpack.c.l.b16 %v218
  %v1111 = vunpack.c.l.b16 %v219
  %v1112 = vunpack.c.l.b16 %v220
  %v1113 = vunpack.c.l.b16 %v221
  %v1114 = vunpack.c.l.b16 %v222
  %v1115 = vunpack.c.l.b16 %v223
  %v1116 = vunpack.c.l.b16 %v224
  %v1117 = vunpack.c.l.b16 %v225
  %v1118 = vunpack.c.l.b16 %v226
  %v1119 = vunpack.c.l.b16 %v227
  %v1120 = vunpack.c.l.b16 %v228
  %v1121 = vunpack.c.l.b16 %v229
  %v1122 = vunpack.c.l.b16 %v230
  %v1123 = vunpack.c.l.b16 %v231
  %v1124 = vunpack.c.l.b16 %v232
  %v1125 = vunpack.c.l.b16 %v233
  %v1126 = vunpack.c.l.b16 %v234
  %v1127 = vunpack.c.l.b16 %v235
  %v1128 = vunpack.c.l.b16 %v236
  %v1129 = vunpack.c.l.b16 %v237
  %v1130 = vunpack.c.l.b16 %v238
  %v1131 = vunpack.c.l.b16 %v239
  %v1132 = vunpack.c.l.b16 %v240
  %v1133 = vunpack.c.l.b16 %v241
  %v1134 = vunpack.c.l.b16 %v242
  %v1135 = vunpack.c.l.b16 %v243
  %v1136 = vunpack.c.l.b16 %v244
  %v1137 = vunpack.c.l.b16 %v245
  %v1138 = vunpack.c.l.b16 %v246
  %v1139 = vunpack.c.l.b16 %v247
  %v1140 = vunpack.c.l.b16 %v248
  %v1141 = vunpack.c.l.b16 %v249
  %v1142 = vunpack.c.l.b16 %v250
  %v1143 = vunpack.c.l.b16 %v251
  %v1144 = vunpack.c.l.b16 %v252
  %v1145 = vunpack.c.l.b16 %v253
  %v1146 = vunpack.c.l.b16 %v254
  %v1147 = vunpack.c.l.b16 %v255
  %v1148 = vunpack.c.l.b16 %v256
  %v1149 = vunpack.c.l.b16 %v257
  %v1150 = vunpack.c.l.b16 %v258
  %v1151 = vunpack.c.l.b16 %v259
  %v1152 = vunpack.c.l.b16 %v260
  %v1153 = vunpack.c.l.b16 %v261
  %v1154 = vunpack.c.l.b16 %v262
  %v1155 = vunpack.c.l.b16 %v263
  %v1156 = vunpack.c.l.b16 %v264
  %v1157 = vunpack.c.l.b16 %v265
  %v1158 = vunpack.c.l.b16 %v266
  %v1159 = vunpack.c.l.b16 %v267
  %v1160 = vunpack.c.l.b16 %v268
  %v1161 = vunpack.c.l.b16 %v269
  %v1162 = vunpack.c.l.b16 %v270
  %v1163 = vunpack.c.l.b16 %v271
  %v1164 = vunpack.c.l.b16 %v272
  %v1165 = vunpack.c.l.b16 %v273
  %v1166 = vunpack.c.l.b16 %v274
  %v1167 = vunpack.c.l.b16 %v275
  %v1168 = vunpack.c.l.b16 %v276
  %v1169 = vunpack.c.l.b16 %v277
  %v1170 = vunpack.c.l.b16 %v278
  %v1171 = vunpack.c.l.b16 %v279
  %v1172 = vunpack.c.l.b16 %v280
  %v1173 = vunpack.c.l.b16 %v281
  %v1174 = vunpack.c.l.b16 %v282
  %v1175 = vunpack.c.l.b16 %v283
  %v1176 = vunpack.c.l.b16 %v284
  %v1177 = vunpack.c.l.b16 %v285
  %v1178 = vunpack.c.l.b16 %v286
  %v1179 = vunpack.c.l.b16 %v287
  %v1180 = vunpack.c.l.b16 %v288
  %v1181 = vunpack.c.l.b16 %v289
  %v1182 = vunpack.c.l.b16 %v290
  %v1183 = vunpack.c.l.b16 %v291
  %v1184 = vunpack.c.l.b16 %v292
  %v1185 = vunpack.c.l.b16 %v293
  %v1186 = vunpack.c.l.b16 %v294
  %v1187 = vunpack.c.l.b16 %v295
  %v1188 = vunpack.c.l.b16 %v296
  %v1189 = vunpack.c.l.b16 %v297
  %v1190 = vunpack.c.l.b16 %v298
  %v1191 = vunpack.c.l.b16 %v299
  %v1192 = vunpack.c.l.b16 %v300
  %v1193 = vunpack.c.l.b16 %v301
  %v1194 = vunpack.c.l.b16 %v302
  %v1195 = vunpack.c.l.b16 %v303
  %v1196 = vunpack.c.l.b16 %v304
  %v1197 = vunpack.c.l.b16 %v305
  %v1198 = vunpack.c.l.b16 %v306
  %v1199 = vunpack.c.l.b16 %v307
  %v1200 = vunpack.c.l.b16 %v308
  %v1201 = vunpack.c.l.b16 %v309
  %v1202 = vunpack.c.l.b16 %v310
  %v1203 = vunpack.c.l.b16 %v311
  %v1204 = vunpack.c.l.b16 %v312
  %v1205 = vunpack.c.l.b16 %v313
  %v1206 = vunpack.c.l.b16 %v314
  %v1207 = vunpack.c.l.b16 %v315
  %v1208 = vunpack.c.l.b16 %v316
  %v1209 = vunpack.c.l.b16 %v317
  %v1210 = vunpack.c.l.b16 %v318
  %v1211 = vunpack.c.l.b16 %v319
  %v1212 = vunpack.c.l.b16 %v320
  %v1213 = vunpack.c.l.b16 %v321
  %v1214 = vunpack.c.l.b16 %v322
  %v1215 = vunpack.c.l.b16 %v323
  %v1216 = vunpack.c.l.b16 %v324
  %v1217 = vunpack.c.l.b16 %v325
  %v1218 = vunpack.c.l.b16 %v326
  %v1219 = vunpack.c.l.b16 %v327
  %v1220 = vunpack.c.l.b16 %v328
  %v1221 = vunpack.c.l.b16 %v329
  %v1222 = vunpack.c.l.b16 %v330
  %v1223 = vunpack.c.l.b16 %v331
  %v1224 = vunpack.c.l.b16 %v332
  %v1225 = vunpack.c.l.b16 %v333
  %v1226 = vunpack.c.l.b16 %v334
  %v1227 = vunpack.c.l.b16 %v335
  %v1228 = vunpack.c.l.b16 %v336
  %v1229 = vunpack.c.l.b16 %v337
  %v1230 = vunpack.c.l.b16 %v338
  %v1231 = vunpack.c.l.b16 %v339
  %v1232 = vunpack.c.l.b16 %v340
  %v1233 = vunpack.c.l.b16 %v341
  %v1234 = vpack.c.b16 %v979, %v978
  %v1235 = vpack.c.b16 %v981, %v980
  %v1236 = vpack.c.b16 %v983, %v982
  %v1237 = vpack.c.b16 %v985, %v984
  %v1238 = vpack.c.b16 %v987, %v986
  %v1239 = vpack.c.b16 %v989, %v988
  %v1240 = vpack.c.b16 %v991, %v990
  %v1241 = vpack.c.b16 %v993, %v992
  %v1242 = vpack.c.b16 %v995, %v994
  %v1243 = vpack.c.b16 %v997, %v996
  %v1244 = vpack.c.b16 %v999, %v998
  %v1245 = vpack.c.b16 %v1001, %v1000
  %v1246 = vpack.c.b16 %v1003, %v1002
  %v1247 = vpack.c.b16 %v1005, %v1004
  %v1248 = vpack.c.b16 %v1007, %v1006
  %v1249 = vpack.c.b16 %v1009, %v1008
  %v1250 = vpack.c.b16 %v1011, %v1010
  %v1251 = vpack.c.b16 %v1013, %v1012
  %v1252 = vpack.c.b16 %v1015, %v1014
  %v1253 = vpack.c.b16 %v1017, %v1016
  %v1254 = vpack.c.b16 %v1019, %v1018
  %v1255 = vpack.c.b16 %v1021, %v1020
  %v1256 = vpack.c.b16 %v1023, %v1022
  %v1257 = vpack.c.b16 %v1025, %v1024
  %v1258 = vpack.c.b16 %v1027, %v1026
  %v1259 = vpack.c.b16 %v1029, %v1028
  %v1260 = vpack.c.b16 %v1031, %v1030
  %v1261 = vpack.c.b16 %v1033, %v1032
  %v1262 = vpack.c.b16 %v1035, %v1034
  %v1263 = vpack.c.b16 %v1037, %v1036
  %v1264 = vpack.c.b16 %v1039, %v1038
  %v1265 = vpack.c.b16 %v1041, %v1040
  %v1266 = vpack.c.b16 %v1043, %v1042
  %v1267 = vpack.c.b16 %v1045, %v1044
  %v1268 = vpack.c.b16 %v1047, %v1046
  %v1269 = vpack.c.b16 %v1049, %v1048
  %v1270 = vpack.c.b16 %v1051, %v1050
  %v1271 = vpack.c.b16 %v1053, %v1052
  %v1272 = vpack.c.b16 %v1055, %v1054
  %v1273 = vpack.c.b16 %v1057, %v1056
  %v1274 = vpack.c.b16 %v1059, %v1058
  %v1275 = vpack.c.b16 %v1061, %v1060
  %v1276 = vpack.c.b16 %v1063, %v1062
  %v1277 = vpack.c.b16 %v1065, %v1064
  %v1278 = vpack.c.b16 %v1067, %v1066
  %v1279 = vpack.c.b16 %v1069, %v1068
  %v1280 = vpack.c.b16 %v1071, %v1070
  %v1281 = vpack.c.b16 %v1073, %v1072
  %v1282 = vpack.c.b16 %v1075, %v1074
  %v1283 = vpack.c.b16 %v1077, %v1076
  %v1284 = vpack.c.b16 %v1079, %v1078
  %v1285 = vpack.c.b16 %v1081, %v1080
  %v1286 = vpack.c.b16 %v1083, %v1082
  %v1287 = vpack.c.b16 %v1085, %v1084
  %v1288 = vpack.c.b16 %v1087, %v1086
  %v1289 = vpack.c.b16 %v1089, %v1088
  %v1290 = vpack.c.b16 %v1091, %v1090
  %v1291 = vpack.c.b16 %v1093, %v1092
  %v1292 = vpack.c.b16 %v1095, %v1094
  %v1293 = vpack.c.b16 %v1097, %v1096
  %v1294 = vpack.c.b16 %v1099, %v1098
  %v1295 = vpack.c.b16 %v1101, %v1100
  %v1296 = vpack.c.b16 %v1103, %v1102
  %v1297 = vpack.c.b16 %v1105, %v1104
  %v1298 = vpack.c.b16 %v1107, %v1106
  %v1299 = vpack.c.b16 %v1109, %v1108
  %v1300 = vpack.c.b16 %v1111, %v1110
  %v1301 = vpack.c.b16 %v1113, %v1112
  %v1302 = vpack.c.b16 %v1115, %v1114
  %v1303 = vpack.c.b16 %v1117, %v1116
  %v1304 = vpack.c.b16 %v1119, %v1118
  %v1305 = vpack.c.b16 %v1121, %v1120
  %v1306 = vpack.c.b16 %v1123, %v1122
  %v1307 = vpack.c.b16 %v1125, %v1124
  %v1308 = vpack.c.b16 %v1127, %v1126
  %v1309 = vpack.c.b16 %v1129, %v1128
  %v1310 = vpack.c.b16 %v1131, %v1130
  %v1311 = vpack.c.b16 %v1133, %v1132
  %v1312 = vpack.c.b16 %v1135, %v1134
  %v1313 = vpack.c.b16 %v1137, %v1136
  %v1314 = vpack.c.b16 %v1139, %v1138
  %v1315 = vpack.c.b16 %v1141, %v1140
  %v1316 = vpack.c.b16 %v1143, %v1142
  %v1317 = vpack.c.b16 %v1145, %v1144
  %v1318 = vpack.c.b16 %v1147, %v1146
  %v1319 = vpack.c.b16 %v1149, %v1148
  %v1320 = vpack.c.b16 %v1151, %v1150
  %v1321 = vpack.c.b16 %v1153, %v1152
  %v1322 = vpack.c.b16 %v1155, %v1154
  %v1323 = vpack.c.b16 %v1157, %v1156
  %v1324 = vpack.c.b16 %v1159, %v1158
  %v1325 = vpack.c.b16 %v1161, %v1160
  %v1326 = vpack.c.b16 %v1163, %v1162
  %v1327 = vpack.c.b16 %v1165, %v1164
  %v1328 = vpack.c.b16 %v1167, %v1166
  %v1329 = vpack.c.b16 %v1169, %v1168
  %v1330 = vpack.c.b16 %v1171, %v1170
  %v1331 = vpack.c.b16 %v1173, %v1172
  %v1332 = vpack.c.b16 %v1175, %v1174
  %v1333 = vpack.c.b16 %v1177, %v1176
  %v1334 = vpack.c.b16 %v1179, %v1178
  %v1335 = vpack.c.b16 %v1181, %v1180
  %v1336 = vpack.c.b16 %v1183, %v1182
  %v1337 = vpack.c.b16 %v1185, %v1184
  %v1338 = vpack.c.b16 %v1187, %v1186
  %v1339 = vpack.c.b16 %v1189, %v1188
  %v1340 = vpack.c.b16 %v1191, %v1190
  %v1341 = vpack.c.b16 %v1193, %v1192
  %v1342 = vpack.c.b16 %v1195, %v1194
  %v1343 = vpack.c.b16 %v1197, %v1196
  %v1344 = vpack.c.b16 %v1199, %v1198
  %v1345 = vpack.c.b16 %v1201, %v1200
  %v1346 = vpack.c.b16 %v1203, %v1202
  %v1347 = vpack.c.b16 %v1205, %v1204
  %v1348 = vpack.c.b16 %v1207, %v1206
  %v1349 = vpack.c.b16 %v1209, %v1208
  %v1350 = vpack.c.b16 %v1211, %v1210
  %v1351 = vpack.c.b16 %v1213, %v1212
  %v1352 = vpack.c.b16 %v1215, %v1214
  %v1353 = vpack.c.b16 %v1217, %v1216
  %v1354 = vpack.c.b16 %v1219, %v1218
  %v1355 = vpack.c.b16 %v1221, %v1220
  %v1356 = vpack.c.b16 %v1223, %v1222
  %v1357 = vpack.c.b16 %v1225, %v1224
  %v1358 = vpack.c.b16 %v1227, %v1226
  %v1359 = vpack.c.b16 %v1229, %v1228
  %v1360 = vpack.c.b16 %v1231, %v1230
  %v1361 = vpack.c.b16 %v1233, %v1232
  %1490 = vmatpush.bf16.msra.mxu0 %v1241
  %1491 = vmatpush.bf16.msra.mxu0 %v1240
  %1492 = vmatpush.bf16.msra.mxu0 %v1239
  %1493 = vmatpush.bf16.msra.mxu0 %v1238
  %1494 = vmatpush.bf16.msra.mxu0 %v1237
  %1495 = vmatpush.bf16.msra.mxu0 %v1236
  %1496 = vmatpush.bf16.msra.mxu0 %v1235
  %1497 = vmatpush.bf16.msra.mxu0 %v1234
  %1498 = vmatmul.bf16.gmra.mxu0 %v562
  %v1499 = vpop.f32.mrf.mxu0
  %v1500 = vadd.f32 %v344, %v1499
  %v1501 = vpop.f32.mrf.mxu0
  %v1502 = vadd.f32 %v344, %v1501
  %1503 = vmatmul.bf16.gmra.mxu0 %v578
  %v1504 = vpop.f32.mrf.mxu0
  %v1505 = vadd.f32 %v344, %v1504
  %v1506 = vpop.f32.mrf.mxu0
  %v1507 = vadd.f32 %v344, %v1506
  %1508 = vmatmul.bf16.gmra.mxu0 %v594
  %v1509 = vpop.f32.mrf.mxu0
  %v1510 = vadd.f32 %v344, %v1509
  %v1511 = vpop.f32.mrf.mxu0
  %v1512 = vadd.f32 %v344, %v1511
  %1513 = vmatmul.bf16.gmra.mxu0 %v610
  %v1514 = vpop.f32.mrf.mxu0
  %v1515 = vadd.f32 %v344, %v1514
  %v1516 = vpop.f32.mrf.mxu0
  %v1517 = vadd.f32 %v344, %v1516
  %1518 = vmatmul.bf16.gmra.mxu0 %v626
  %v1519 = vpop.f32.mrf.mxu0
  %v1520 = vadd.f32 %v344, %v1519
  %v1521 = vpop.f32.mrf.mxu0
  %1522 = vdwg.mxu0
  %1523 = vmatpush.bf16.msra.mxu0 %v1249
  %1524 = vmatpush.bf16.msra.mxu0 %v1248
  %1525 = vmatpush.bf16.msra.mxu0 %v1247
  %1526 = vmatpush.bf16.msra.mxu0 %v1246
  %1527 = vmatpush.bf16.msra.mxu0 %v1245
  %1528 = vmatpush.bf16.msra.mxu0 %v1244
  %1529 = vmatpush.bf16.msra.mxu0 %v1243
  %1530 = vmatpush.bf16.msra.mxu0 %v1242
  %1531 = vmatmul.bf16.gmra.mxu0 %v563
  %v1532 = vpop.f32.mrf.mxu0
  %v1533 = vadd.f32 %v1500, %v1532
  %v1534 = vpop.f32.mrf.mxu0
  %v1535 = vadd.f32 %v1502, %v1534
  %1536 = vmatmul.bf16.gmra.mxu0 %v579
  %v1537 = vpop.f32.mrf.mxu0
  %v1538 = vadd.f32 %v1505, %v1537
  %v1539 = vpop.f32.mrf.mxu0
  %v1540 = vadd.f32 %v1507, %v1539
  %1541 = vmatmul.bf16.gmra.mxu0 %v595
  %v1542 = vpop.f32.mrf.mxu0
  %v1543 = vadd.f32 %v1510, %v1542
  %v1544 = vpop.f32.mrf.mxu0
  %v1545 = vadd.f32 %v1512, %v1544
  %1546 = vmatmul.bf16.gmra.mxu0 %v611
  %v1547 = vpop.f32.mrf.mxu0
  %v1548 = vadd.f32 %v1515, %v1547
  %v1549 = vpop.f32.mrf.mxu0
  %v1550 = vadd.f32 %v1517, %v1549
  %1551 = vmatmul.bf16.gmra.mxu0 %v627
  %v1552 = vpop.f32.mrf.mxu0
  %v1553 = vadd.f32 %v1520, %v1552
  %v1554 = vpop.f32.mrf.mxu0
  %1555 = vdwg.mxu0
  %1556 = vmatpush.bf16.msra.mxu0 %v1257
  %1557 = vmatpush.bf16.msra.mxu0 %v1256
  %1558 = vmatpush.bf16.msra.mxu0 %v1255
  %1559 = vmatpush.bf16.msra.mxu0 %v1254
  %1560 = vmatpush.bf16.msra.mxu0 %v1253
  %1561 = vmatpush.bf16.msra.mxu0 %v1252
  %1562 = vmatpush.bf16.msra.mxu0 %v1251
  %1563 = vmatpush.bf16.msra.mxu0 %v1250
  %1564 = vmatmul.bf16.gmra.mxu0 %v564
  %v1565 = vpop.f32.mrf.mxu0
  %v1566 = vadd.f32 %v1533, %v1565
  %v1567 = vpop.f32.mrf.mxu0
  %v1568 = vadd.f32 %v1535, %v1567
  %1569 = vmatmul.bf16.gmra.mxu0 %v580
  %v1570 = vpop.f32.mrf.mxu0
  %v1571 = vadd.f32 %v1538, %v1570
  %v1572 = vpop.f32.mrf.mxu0
  %v1573 = vadd.f32 %v1540, %v1572
  %1574 = vmatmul.bf16.gmra.mxu0 %v596
  %v1575 = vpop.f32.mrf.mxu0
  %v1576 = vadd.f32 %v1543, %v1575
  %v1577 = vpop.f32.mrf.mxu0
  %v1578 = vadd.f32 %v1545, %v1577
  %1579 = vmatmul.bf16.gmra.mxu0 %v612
  %v1580 = vpop.f32.mrf.mxu0
  %v1581 = vadd.f32 %v1548, %v1580
  %v1582 = vpop.f32.mrf.mxu0
  %v1583 = vadd.f32 %v1550, %v1582
  %1584 = vmatmul.bf16.gmra.mxu0 %v628
  %v1585 = vpop.f32.mrf.mxu0
  %v1586 = vadd.f32 %v1553, %v1585
  %v1587 = vpop.f32.mrf.mxu0
  %1588 = vdwg.mxu0
  %1589 = vmatpush.bf16.msra.mxu0 %v1265
  %1590 = vmatpush.bf16.msra.mxu0 %v1264
  %1591 = vmatpush.bf16.msra.mxu0 %v1263
  %1592 = vmatpush.bf16.msra.mxu0 %v1262
  %1593 = vmatpush.bf16.msra.mxu0 %v1261
  %1594 = vmatpush.bf16.msra.mxu0 %v1260
  %1595 = vmatpush.bf16.msra.mxu0 %v1259
  %1596 = vmatpush.bf16.msra.mxu0 %v1258
  %1597 = vmatmul.bf16.gmra.mxu0 %v565
  %v1598 = vpop.f32.mrf.mxu0
  %v1599 = vadd.f32 %v1566, %v1598
  %v1600 = vpop.f32.mrf.mxu0
  %v1601 = vadd.f32 %v1568, %v1600
  %1602 = vmatmul.bf16.gmra.mxu0 %v581
  %v1603 = vpop.f32.mrf.mxu0
  %v1604 = vadd.f32 %v1571, %v1603
  %v1605 = vpop.f32.mrf.mxu0
  %v1606 = vadd.f32 %v1573, %v1605
  %1607 = vmatmul.bf16.gmra.mxu0 %v597
  %v1608 = vpop.f32.mrf.mxu0
  %v1609 = vadd.f32 %v1576, %v1608
  %v1610 = vpop.f32.mrf.mxu0
  %v1611 = vadd.f32 %v1578, %v1610
  %1612 = vmatmul.bf16.gmra.mxu0 %v613
  %v1613 = vpop.f32.mrf.mxu0
  %v1614 = vadd.f32 %v1581, %v1613
  %v1615 = vpop.f32.mrf.mxu0
  %v1616 = vadd.f32 %v1583, %v1615
  %1617 = vmatmul.bf16.gmra.mxu0 %v629
  %v1618 = vpop.f32.mrf.mxu0
  %v1619 = vadd.f32 %v1586, %v1618
  %v1620 = vpop.f32.mrf.mxu0
  %1621 = vdwg.mxu0
  %1622 = vmatpush.bf16.msra.mxu0 %v1273
  %1623 = vmatpush.bf16.msra.mxu0 %v1272
  %1624 = vmatpush.bf16.msra.mxu0 %v1271
  %1625 = vmatpush.bf16.msra.mxu0 %v1270
  %1626 = vmatpush.bf16.msra.mxu0 %v1269
  %1627 = vmatpush.bf16.msra.mxu0 %v1268
  %1628 = vmatpush.bf16.msra.mxu0 %v1267
  %1629 = vmatpush.bf16.msra.mxu0 %v1266
  %1630 = vmatmul.bf16.gmra.mxu0 %v566
  %v1631 = vpop.f32.mrf.mxu0
  %v1632 = vadd.f32 %v1599, %v1631
  %v1633 = vpop.f32.mrf.mxu0
  %v1634 = vadd.f32 %v1601, %v1633
  %1635 = vmatmul.bf16.gmra.mxu0 %v582
  %v1636 = vpop.f32.mrf.mxu0
  %v1637 = vadd.f32 %v1604, %v1636
  %v1638 = vpop.f32.mrf.mxu0
  %v1639 = vadd.f32 %v1606, %v1638
  %1640 = vmatmul.bf16.gmra.mxu0 %v598
  %v1641 = vpop.f32.mrf.mxu0
  %v1642 = vadd.f32 %v1609, %v1641
  %v1643 = vpop.f32.mrf.mxu0
  %v1644 = vadd.f32 %v1611, %v1643
  %1645 = vmatmul.bf16.gmra.mxu0 %v614
  %v1646 = vpop.f32.mrf.mxu0
  %v1647 = vadd.f32 %v1614, %v1646
  %v1648 = vpop.f32.mrf.mxu0
  %v1649 = vadd.f32 %v1616, %v1648
  %1650 = vmatmul.bf16.gmra.mxu0 %v630
  %v1651 = vpop.f32.mrf.mxu0
  %v1652 = vadd.f32 %v1619, %v1651
  %v1653 = vpop.f32.mrf.mxu0
  %1654 = vdwg.mxu0
  %1655 = vmatpush.bf16.msra.mxu0 %v1281
  %1656 = vmatpush.bf16.msra.mxu0 %v1280
  %1657 = vmatpush.bf16.msra.mxu0 %v1279
  %1658 = vmatpush.bf16.msra.mxu0 %v1278
  %1659 = vmatpush.bf16.msra.mxu0 %v1277
  %1660 = vmatpush.bf16.msra.mxu0 %v1276
  %1661 = vmatpush.bf16.msra.mxu0 %v1275
  %1662 = vmatpush.bf16.msra.mxu0 %v1274
  %1663 = vmatmul.bf16.gmra.mxu0 %v567
  %v1664 = vpop.f32.mrf.mxu0
  %v1665 = vadd.f32 %v1632, %v1664
  %v1666 = vpop.f32.mrf.mxu0
  %v1667 = vadd.f32 %v1634, %v1666
  %1668 = vmatmul.bf16.gmra.mxu0 %v583
  %v1669 = vpop.f32.mrf.mxu0
  %v1670 = vadd.f32 %v1637, %v1669
  %v1671 = vpop.f32.mrf.mxu0
  %v1672 = vadd.f32 %v1639, %v1671
  %1673 = vmatmul.bf16.gmra.mxu0 %v599
  %v1674 = vpop.f32.mrf.mxu0
  %v1675 = vadd.f32 %v1642, %v1674
  %v1676 = vpop.f32.mrf.mxu0
  %v1677 = vadd.f32 %v1644, %v1676
  %1678 = vmatmul.bf16.gmra.mxu0 %v615
  %v1679 = vpop.f32.mrf.mxu0
  %v1680 = vadd.f32 %v1647, %v1679
  %v1681 = vpop.f32.mrf.mxu0
  %v1682 = vadd.f32 %v1649, %v1681
  %1683 = vmatmul.bf16.gmra.mxu0 %v631
  %v1684 = vpop.f32.mrf.mxu0
  %v1685 = vadd.f32 %v1652, %v1684
  %v1686 = vpop.f32.mrf.mxu0
  %1687 = vdwg.mxu0
  %1688 = vmatpush.bf16.msra.mxu0 %v1289
  %1689 = vmatpush.bf16.msra.mxu0 %v1288
  %1690 = vmatpush.bf16.msra.mxu0 %v1287
  %1691 = vmatpush.bf16.msra.mxu0 %v1286
  %1692 = vmatpush.bf16.msra.mxu0 %v1285
  %1693 = vmatpush.bf16.msra.mxu0 %v1284
  %1694 = vmatpush.bf16.msra.mxu0 %v1283
  %1695 = vmatpush.bf16.msra.mxu0 %v1282
  %1696 = vmatmul.bf16.gmra.mxu0 %v568
  %v1697 = vpop.f32.mrf.mxu0
  %v1698 = vadd.f32 %v1665, %v1697
  %v1699 = vpop.f32.mrf.mxu0
  %v1700 = vadd.f32 %v1667, %v1699
  %1701 = vmatmul.bf16.gmra.mxu0 %v584
  %v1702 = vpop.f32.mrf.mxu0
  %v1703 = vadd.f32 %v1670, %v1702
  %v1704 = vpop.f32.mrf.mxu0
  %v1705 = vadd.f32 %v1672, %v1704
  %1706 = vmatmul.bf16.gmra.mxu0 %v600
  %v1707 = vpop.f32.mrf.mxu0
  %v1708 = vadd.f32 %v1675, %v1707
  %v1709 = vpop.f32.mrf.mxu0
  %v1710 = vadd.f32 %v1677, %v1709
  %1711 = vmatmul.bf16.gmra.mxu0 %v616
  %v1712 = vpop.f32.mrf.mxu0
  %v1713 = vadd.f32 %v1680, %v1712
  %v1714 = vpop.f32.mrf.mxu0
  %v1715 = vadd.f32 %v1682, %v1714
  %1716 = vmatmul.bf16.gmra.mxu0 %v632
  %v1717 = vpop.f32.mrf.mxu0
  %v1718 = vadd.f32 %v1685, %v1717
  %v1719 = vpop.f32.mrf.mxu0
  %1720 = vdwg.mxu0
  %1721 = vmatpush.bf16.msra.mxu0 %v1297
  %1722 = vmatpush.bf16.msra.mxu0 %v1296
  %1723 = vmatpush.bf16.msra.mxu0 %v1295
  %1724 = vmatpush.bf16.msra.mxu0 %v1294
  %1725 = vmatpush.bf16.msra.mxu0 %v1293
  %1726 = vmatpush.bf16.msra.mxu0 %v1292
  %1727 = vmatpush.bf16.msra.mxu0 %v1291
  %1728 = vmatpush.bf16.msra.mxu0 %v1290
  %1729 = vmatmul.bf16.gmra.mxu0 %v569
  %v1730 = vpop.f32.mrf.mxu0
  %v1731 = vadd.f32 %v1698, %v1730
  %v1732 = vpop.f32.mrf.mxu0
  %v1733 = vadd.f32 %v1700, %v1732
  %1734 = vmatmul.bf16.gmra.mxu0 %v585
  %v1735 = vpop.f32.mrf.mxu0
  %v1736 = vadd.f32 %v1703, %v1735
  %v1737 = vpop.f32.mrf.mxu0
  %v1738 = vadd.f32 %v1705, %v1737
  %1739 = vmatmul.bf16.gmra.mxu0 %v601
  %v1740 = vpop.f32.mrf.mxu0
  %v1741 = vadd.f32 %v1708, %v1740
  %v1742 = vpop.f32.mrf.mxu0
  %v1743 = vadd.f32 %v1710, %v1742
  %1744 = vmatmul.bf16.gmra.mxu0 %v617
  %v1745 = vpop.f32.mrf.mxu0
  %v1746 = vadd.f32 %v1713, %v1745
  %v1747 = vpop.f32.mrf.mxu0
  %v1748 = vadd.f32 %v1715, %v1747
  %1749 = vmatmul.bf16.gmra.mxu0 %v633
  %v1750 = vpop.f32.mrf.mxu0
  %v1751 = vadd.f32 %v1718, %v1750
  %v1752 = vpop.f32.mrf.mxu0
  %1753 = vdwg.mxu0
  %1754 = vmatpush.bf16.msra.mxu0 %v1305
  %1755 = vmatpush.bf16.msra.mxu0 %v1304
  %1756 = vmatpush.bf16.msra.mxu0 %v1303
  %1757 = vmatpush.bf16.msra.mxu0 %v1302
  %1758 = vmatpush.bf16.msra.mxu0 %v1301
  %1759 = vmatpush.bf16.msra.mxu0 %v1300
  %1760 = vmatpush.bf16.msra.mxu0 %v1299
  %1761 = vmatpush.bf16.msra.mxu0 %v1298
  %1762 = vmatmul.bf16.gmra.mxu0 %v570
  %v1763 = vpop.f32.mrf.mxu0
  %v1764 = vadd.f32 %v1731, %v1763
  %v1765 = vpop.f32.mrf.mxu0
  %v1766 = vadd.f32 %v1733, %v1765
  %1767 = vmatmul.bf16.gmra.mxu0 %v586
  %v1768 = vpop.f32.mrf.mxu0
  %v1769 = vadd.f32 %v1736, %v1768
  %v1770 = vpop.f32.mrf.mxu0
  %v1771 = vadd.f32 %v1738, %v1770
  %1772 = vmatmul.bf16.gmra.mxu0 %v602
  %v1773 = vpop.f32.mrf.mxu0
  %v1774 = vadd.f32 %v1741, %v1773
  %v1775 = vpop.f32.mrf.mxu0
  %v1776 = vadd.f32 %v1743, %v1775
  %1777 = vmatmul.bf16.gmra.mxu0 %v618
  %v1778 = vpop.f32.mrf.mxu0
  %v1779 = vadd.f32 %v1746, %v1778
  %v1780 = vpop.f32.mrf.mxu0
  %v1781 = vadd.f32 %v1748, %v1780
  %1782 = vmatmul.bf16.gmra.mxu0 %v634
  %v1783 = vpop.f32.mrf.mxu0
  %v1784 = vadd.f32 %v1751, %v1783
  %v1785 = vpop.f32.mrf.mxu0
  %1786 = vdwg.mxu0
  %1787 = vmatpush.bf16.msra.mxu0 %v1313
  %1788 = vmatpush.bf16.msra.mxu0 %v1312
  %1789 = vmatpush.bf16.msra.mxu0 %v1311
  %1790 = vmatpush.bf16.msra.mxu0 %v1310
  %1791 = vmatpush.bf16.msra.mxu0 %v1309
  %1792 = vmatpush.bf16.msra.mxu0 %v1308
  %1793 = vmatpush.bf16.msra.mxu0 %v1307
  %1794 = vmatpush.bf16.msra.mxu0 %v1306
  %1795 = vmatmul.bf16.gmra.mxu0 %v571
  %v1796 = vpop.f32.mrf.mxu0
  %v1797 = vadd.f32 %v1764, %v1796
  %v1798 = vpop.f32.mrf.mxu0
  %v1799 = vadd.f32 %v1766, %v1798
  %1800 = vmatmul.bf16.gmra.mxu0 %v587
  %v1801 = vpop.f32.mrf.mxu0
  %v1802 = vadd.f32 %v1769, %v1801
  %v1803 = vpop.f32.mrf.mxu0
  %v1804 = vadd.f32 %v1771, %v1803
  %1805 = vmatmul.bf16.gmra.mxu0 %v603
  %v1806 = vpop.f32.mrf.mxu0
  %v1807 = vadd.f32 %v1774, %v1806
  %v1808 = vpop.f32.mrf.mxu0
  %v1809 = vadd.f32 %v1776, %v1808
  %1810 = vmatmul.bf16.gmra.mxu0 %v619
  %v1811 = vpop.f32.mrf.mxu0
  %v1812 = vadd.f32 %v1779, %v1811
  %v1813 = vpop.f32.mrf.mxu0
  %v1814 = vadd.f32 %v1781, %v1813
  %1815 = vmatmul.bf16.gmra.mxu0 %v635
  %v1816 = vpop.f32.mrf.mxu0
  %v1817 = vadd.f32 %v1784, %v1816
  %v1818 = vpop.f32.mrf.mxu0
  %1819 = vdwg.mxu0
  %1820 = vmatpush.bf16.msra.mxu0 %v1321
  %1821 = vmatpush.bf16.msra.mxu0 %v1320
  %1822 = vmatpush.bf16.msra.mxu0 %v1319
  %1823 = vmatpush.bf16.msra.mxu0 %v1318
  %1824 = vmatpush.bf16.msra.mxu0 %v1317
  %1825 = vmatpush.bf16.msra.mxu0 %v1316
  %1826 = vmatpush.bf16.msra.mxu0 %v1315
  %1827 = vmatpush.bf16.msra.mxu0 %v1314
  %1828 = vmatmul.bf16.gmra.mxu0 %v572
  %v1829 = vpop.f32.mrf.mxu0
  %v1830 = vadd.f32 %v1797, %v1829
  %v1831 = vpop.f32.mrf.mxu0
  %v1832 = vadd.f32 %v1799, %v1831
  %1833 = vmatmul.bf16.gmra.mxu0 %v588
  %v1834 = vpop.f32.mrf.mxu0
  %v1835 = vadd.f32 %v1802, %v1834
  %v1836 = vpop.f32.mrf.mxu0
  %v1837 = vadd.f32 %v1804, %v1836
  %1838 = vmatmul.bf16.gmra.mxu0 %v604
  %v1839 = vpop.f32.mrf.mxu0
  %v1840 = vadd.f32 %v1807, %v1839
  %v1841 = vpop.f32.mrf.mxu0
  %v1842 = vadd.f32 %v1809, %v1841
  %1843 = vmatmul.bf16.gmra.mxu0 %v620
  %v1844 = vpop.f32.mrf.mxu0
  %v1845 = vadd.f32 %v1812, %v1844
  %v1846 = vpop.f32.mrf.mxu0
  %v1847 = vadd.f32 %v1814, %v1846
  %1848 = vmatmul.bf16.gmra.mxu0 %v636
  %v1849 = vpop.f32.mrf.mxu0
  %v1850 = vadd.f32 %v1817, %v1849
  %v1851 = vpop.f32.mrf.mxu0
  %1852 = vdwg.mxu0
  %1853 = vmatpush.bf16.msra.mxu0 %v1329
  %1854 = vmatpush.bf16.msra.mxu0 %v1328
  %1855 = vmatpush.bf16.msra.mxu0 %v1327
  %1856 = vmatpush.bf16.msra.mxu0 %v1326
  %1857 = vmatpush.bf16.msra.mxu0 %v1325
  %1858 = vmatpush.bf16.msra.mxu0 %v1324
  %1859 = vmatpush.bf16.msra.mxu0 %v1323
  %1860 = vmatpush.bf16.msra.mxu0 %v1322
  %1861 = vmatmul.bf16.gmra.mxu0 %v573
  %v1862 = vpop.f32.mrf.mxu0
  %v1863 = vadd.f32 %v1830, %v1862
  %v1864 = vpop.f32.mrf.mxu0
  %v1865 = vadd.f32 %v1832, %v1864
  %1866 = vmatmul.bf16.gmra.mxu0 %v589
  %v1867 = vpop.f32.mrf.mxu0
  %v1868 = vadd.f32 %v1835, %v1867
  %v1869 = vpop.f32.mrf.mxu0
  %v1870 = vadd.f32 %v1837, %v1869
  %1871 = vmatmul.bf16.gmra.mxu0 %v605
  %v1872 = vpop.f32.mrf.mxu0
  %v1873 = vadd.f32 %v1840, %v1872
  %v1874 = vpop.f32.mrf.mxu0
  %v1875 = vadd.f32 %v1842, %v1874
  %1876 = vmatmul.bf16.gmra.mxu0 %v621
  %v1877 = vpop.f32.mrf.mxu0
  %v1878 = vadd.f32 %v1845, %v1877
  %v1879 = vpop.f32.mrf.mxu0
  %v1880 = vadd.f32 %v1847, %v1879
  %1881 = vmatmul.bf16.gmra.mxu0 %v637
  %v1882 = vpop.f32.mrf.mxu0
  %v1883 = vadd.f32 %v1850, %v1882
  %v1884 = vpop.f32.mrf.mxu0
  %1885 = vdwg.mxu0
  %1886 = vmatpush.bf16.msra.mxu0 %v1337
  %1887 = vmatpush.bf16.msra.mxu0 %v1336
  %1888 = vmatpush.bf16.msra.mxu0 %v1335
  %1889 = vmatpush.bf16.msra.mxu0 %v1334
  %1890 = vmatpush.bf16.msra.mxu0 %v1333
  %1891 = vmatpush.bf16.msra.mxu0 %v1332
  %1892 = vmatpush.bf16.msra.mxu0 %v1331
  %1893 = vmatpush.bf16.msra.mxu0 %v1330
  %1894 = vmatmul.bf16.gmra.mxu0 %v574
  %v1895 = vpop.f32.mrf.mxu0
  %v1896 = vadd.f32 %v1863, %v1895
  %v1897 = vpop.f32.mrf.mxu0
  %v1898 = vadd.f32 %v1865, %v1897
  %1899 = vmatmul.bf16.gmra.mxu0 %v590
  %v1900 = vpop.f32.mrf.mxu0
  %v1901 = vadd.f32 %v1868, %v1900
  %v1902 = vpop.f32.mrf.mxu0
  %v1903 = vadd.f32 %v1870, %v1902
  %1904 = vmatmul.bf16.gmra.mxu0 %v606
  %v1905 = vpop.f32.mrf.mxu0
  %v1906 = vadd.f32 %v1873, %v1905
  %v1907 = vpop.f32.mrf.mxu0
  %v1908 = vadd.f32 %v1875, %v1907
  %1909 = vmatmul.bf16.gmra.mxu0 %v622
  %v1910 = vpop.f32.mrf.mxu0
  %v1911 = vadd.f32 %v1878, %v1910
  %v1912 = vpop.f32.mrf.mxu0
  %v1913 = vadd.f32 %v1880, %v1912
  %1914 = vmatmul.bf16.gmra.mxu0 %v638
  %v1915 = vpop.f32.mrf.mxu0
  %v1916 = vadd.f32 %v1883, %v1915
  %v1917 = vpop.f32.mrf.mxu0
  %1918 = vdwg.mxu0
  %1919 = vmatpush.bf16.msra.mxu0 %v1345
  %1920 = vmatpush.bf16.msra.mxu0 %v1344
  %1921 = vmatpush.bf16.msra.mxu0 %v1343
  %1922 = vmatpush.bf16.msra.mxu0 %v1342
  %1923 = vmatpush.bf16.msra.mxu0 %v1341
  %1924 = vmatpush.bf16.msra.mxu0 %v1340
  %1925 = vmatpush.bf16.msra.mxu0 %v1339
  %1926 = vmatpush.bf16.msra.mxu0 %v1338
  %1927 = vmatmul.bf16.gmra.mxu0 %v575
  %v1928 = vpop.f32.mrf.mxu0
  %v1929 = vadd.f32 %v1896, %v1928
  %v1930 = vpop.f32.mrf.mxu0
  %v1931 = vadd.f32 %v1898, %v1930
  %1932 = vmatmul.bf16.gmra.mxu0 %v591
  %v1933 = vpop.f32.mrf.mxu0
  %v1934 = vadd.f32 %v1901, %v1933
  %v1935 = vpop.f32.mrf.mxu0
  %v1936 = vadd.f32 %v1903, %v1935
  %1937 = vmatmul.bf16.gmra.mxu0 %v607
  %v1938 = vpop.f32.mrf.mxu0
  %v1939 = vadd.f32 %v1906, %v1938
  %v1940 = vpop.f32.mrf.mxu0
  %v1941 = vadd.f32 %v1908, %v1940
  %1942 = vmatmul.bf16.gmra.mxu0 %v623
  %v1943 = vpop.f32.mrf.mxu0
  %v1944 = vadd.f32 %v1911, %v1943
  %v1945 = vpop.f32.mrf.mxu0
  %v1946 = vadd.f32 %v1913, %v1945
  %1947 = vmatmul.bf16.gmra.mxu0 %v639
  %v1948 = vpop.f32.mrf.mxu0
  %v1949 = vadd.f32 %v1916, %v1948
  %v1950 = vpop.f32.mrf.mxu0
  %1951 = vdwg.mxu0
  %1952 = vmatpush.bf16.msra.mxu0 %v1353
  %1953 = vmatpush.bf16.msra.mxu0 %v1352
  %1954 = vmatpush.bf16.msra.mxu0 %v1351
  %1955 = vmatpush.bf16.msra.mxu0 %v1350
  %1956 = vmatpush.bf16.msra.mxu0 %v1349
  %1957 = vmatpush.bf16.msra.mxu0 %v1348
  %1958 = vmatpush.bf16.msra.mxu0 %v1347
  %1959 = vmatpush.bf16.msra.mxu0 %v1346
  %1960 = vmatmul.bf16.gmra.mxu0 %v576
  %v1961 = vpop.f32.mrf.mxu0
  %v1962 = vadd.f32 %v1929, %v1961
  %v1963 = vpop.f32.mrf.mxu0
  %v1964 = vadd.f32 %v1931, %v1963
  %1965 = vmatmul.bf16.gmra.mxu0 %v592
  %v1966 = vpop.f32.mrf.mxu0
  %v1967 = vadd.f32 %v1934, %v1966
  %v1968 = vpop.f32.mrf.mxu0
  %v1969 = vadd.f32 %v1936, %v1968
  %1970 = vmatmul.bf16.gmra.mxu0 %v608
  %v1971 = vpop.f32.mrf.mxu0
  %v1972 = vadd.f32 %v1939, %v1971
  %v1973 = vpop.f32.mrf.mxu0
  %v1974 = vadd.f32 %v1941, %v1973
  %1975 = vmatmul.bf16.gmra.mxu0 %v624
  %v1976 = vpop.f32.mrf.mxu0
  %v1977 = vadd.f32 %v1944, %v1976
  %v1978 = vpop.f32.mrf.mxu0
  %v1979 = vadd.f32 %v1946, %v1978
  %1980 = vmatmul.bf16.gmra.mxu0 %v640
  %v1981 = vpop.f32.mrf.mxu0
  %v1982 = vadd.f32 %v1949, %v1981
  %v1983 = vpop.f32.mrf.mxu0
  %1984 = vdwg.mxu0
  %1985 = vmatpush.bf16.msra.mxu0 %v1361
  %1986 = vmatpush.bf16.msra.mxu0 %v1360
  %1987 = vmatpush.bf16.msra.mxu0 %v1359
  %1988 = vmatpush.bf16.msra.mxu0 %v1358
  %1989 = vmatpush.bf16.msra.mxu0 %v1357
  %1990 = vmatpush.bf16.msra.mxu0 %v1356
  %1991 = vmatpush.bf16.msra.mxu0 %v1355
  %1992 = vmatpush.bf16.msra.mxu0 %v1354
  %1993 = vmatmul.bf16.gmra.mxu0 %v577
  %v1994 = vpop.f32.mrf.mxu0
  %v1995 = vadd.f32 %v1962, %v1994
  %v1996 = vpop.f32.mrf.mxu0
  %v1997 = vadd.f32 %v1964, %v1996
  %1998 = vmatmul.bf16.gmra.mxu0 %v593
  %v1999 = vpop.f32.mrf.mxu0
  %v2000 = vadd.f32 %v1967, %v1999
  %v2001 = vpop.f32.mrf.mxu0
  %v2002 = vadd.f32 %v1969, %v2001
  %2003 = vmatmul.bf16.gmra.mxu0 %v609
  %v2004 = vpop.f32.mrf.mxu0
  %v2005 = vadd.f32 %v1972, %v2004
  %v2006 = vpop.f32.mrf.mxu0
  %v2007 = vadd.f32 %v1974, %v2006
  %2008 = vmatmul.bf16.gmra.mxu0 %v625
  %v2009 = vpop.f32.mrf.mxu0
  %v2010 = vadd.f32 %v1977, %v2009
  %v2011 = vpop.f32.mrf.mxu0
  %v2012 = vadd.f32 %v1979, %v2011
  %2013 = vmatmul.bf16.gmra.mxu0 %v641
  %v2014 = vpop.f32.mrf.mxu0
  %v2015 = vadd.f32 %v1982, %v2014
  %v2016 = vpop.f32.mrf.mxu0
  %2017 = vdwg.mxu0
  %v2018 = vmax.f32 %v1995, 0.0
  %v2019 = vmax.f32 %v1997, 0.0
  %v2020 = vmax.f32 %v2000, 0.0
  %v2021 = vmax.f32 %v2002, 0.0
  %v2022 = vmax.f32 %v2005, 0.0
  %v2023 = vmax.f32 %v2007, 0.0
  %v2024 = vmax.f32 %v2010, 0.0
  %v2025 = vmax.f32 %v2012, 0.0
  %v2026 = vmax.f32 %v2015, 0.0
  %v2027 = vpack.c.bf16 %v2018, %v2018
  %v2028 = vpack.c.bf16 %v2019, %v2019
  %v2029 = vpack.c.bf16 %v2020, %v2020
  %v2030 = vpack.c.bf16 %v2021, %v2021
  %v2031 = vpack.c.bf16 %v2022, %v2022
  %v2032 = vpack.c.bf16 %v2023, %v2023
  %v2033 = vpack.c.bf16 %v2024, %v2024
  %v2034 = vpack.c.bf16 %v2025, %v2025
  %v2035 = vpack.c.bf16 %v2026, %v2026
  %2036 = vst [vmem:[%s3] sm:$0xf] %v2027
  %2037 = vst [vmem:[%s3 + $0x4] sm:$0xf] %v2028
  %2038 = vst [vmem:[%s3 + $0x8] sm:$0xf] %v2029
  %2039 = vst [vmem:[%s3 + $0xc] sm:$0xf] %v2030
  %2040 = vst [vmem:[%s3 + $0x10] sm:$0xf] %v2031
  %2041 = vst [vmem:[%s3 + $0x14] sm:$0xf] %v2032
  %2042 = vst [vmem:[%s3 + $0x18] sm:$0xf] %v2033
  %2043 = vst [vmem:[%s3 + $0x1c] sm:$0xf] %v2034
  %2044 = vst [vmem:[%s3 + $0x20] sm:$0xf] %v2035
  // Predicated region
  $region14: #{dueling_dqn_forward.5} parent=0 // pred_check
    _
  $region15: #{dueling_dqn_forward.5} parent=0 // pred_check_branch
    %2046 = sbr.rel (0) target = $region17
  $region16: #{dueling_dqn_forward.5} parent=0 // pred_region
    _
  $region17: #{dueling_dqn_forward.5} parent=0 // pred_fallthru
    _
  // Predicated region
  $region18: #{dueling_dqn_forward.5} parent=0 // pred_check
    _
  $region19: #{dueling_dqn_forward.5} parent=0 // pred_check_branch
    %2048 = sbr.rel (0) target = $region21
  $region20: #{dueling_dqn_forward.5} parent=0 // pred_region
    _
  $region21: #{dueling_dqn_forward.5} parent=0 // pred_fallthru
    _

// kernel: dueling_dqn_forward.6
$region0: #{dueling_dqn_forward.6}
  #allocation0 [shape = 'u32[]', space=smem, size = 0x4, offset = 0x4, fixed_abs, tag = 'smem constant byte address 0x4 - core index']
  #allocation1 [shape = 'u32[72,128]{1,0:T(1,128)}', space=vmem, size = 0x9000, scoped, tag = 'internal scratch']
  %s0 = inlined_call_operand.vmem [shape: bf16[32,1152], index: 0, kind: input, shape index: {}]
  %s1 = inlined_call_operand.vmem [shape: bf16[1152,128], index: 1, kind: input, shape index: {}]
  %s2 = inlined_call_operand.vmem [shape: f32[1,128], index: 2, kind: input, shape index: {}]
  %s3 = inlined_call_operand.vmem [shape: bf16[32,128], index: 3, kind: output, shape index: {}]
  %s4 = sld [smem:[#allocation0]]
  $region22: #{dueling_dqn_forward.6} parent=0
    _
  %s6 = ssub.s32 1, %s4
  %s7 = scalar_select 0, %s6, %s4
  // Predicated region
  $region2: #{dueling_dqn_forward.6} parent=0 // pred_check
    _
  $region3: #{dueling_dqn_forward.6} parent=0 // pred_check_branch
    %9 = sbr.rel (0) target = $region5
  $region4: #{dueling_dqn_forward.6} parent=0 // pred_region
    _
  $region5: #{dueling_dqn_forward.6} parent=0 // pred_fallthru
    _
  // Predicated region
  $region6: #{dueling_dqn_forward.6} parent=0 // pred_check
    _
  $region7: #{dueling_dqn_forward.6} parent=0 // pred_check_branch
    %11 = sbr.rel (0) target = $region9
  $region8: #{dueling_dqn_forward.6} parent=0 // pred_region
    _
  $region9: #{dueling_dqn_forward.6} parent=0 // pred_fallthru
    _
  // Predicated region
  $region10: #{dueling_dqn_forward.6} parent=0 // pred_check
    _
  $region11: #{dueling_dqn_forward.6} parent=0 // pred_check_branch
    %13 = sbr.rel (0) target = $region13
  $region12: #{dueling_dqn_forward.6} parent=0 // pred_region
    _
  $region13: #{dueling_dqn_forward.6} parent=0 // pred_fallthru
    _
  %v14 = vld [vmem:[%s0] sm:$0xff]
  %v15 = vld [vmem:[%s0 + $0x8] sm:$0xff]
  %v16 = vld [vmem:[%s0 + $0x10] sm:$0xff]
  %v17 = vld [vmem:[%s0 + $0x18] sm:$0xff]
  %v18 = vld [vmem:[%s0 + $0x20] sm:$0xf]
  %v19 = vld [vmem:[%s0 + $0x24] sm:$0xff]
  %v20 = vld [vmem:[%s0 + $0x2c] sm:$0xff]
  %v21 = vld [vmem:[%s0 + $0x34] sm:$0xff]
  %v22 = vld [vmem:[%s0 + $0x3c] sm:$0xff]
  %v23 = vld [vmem:[%s0 + $0x44] sm:$0xf]
  %v24 = vld [vmem:[%s0 + $0x48] sm:$0xff]
  %v25 = vld [vmem:[%s0 + $0x50] sm:$0xff]
  %v26 = vld [vmem:[%s0 + $0x58] sm:$0xff]
  %v27 = vld [vmem:[%s0 + $0x60] sm:$0xff]
  %v28 = vld [vmem:[%s0 + $0x68] sm:$0xf]
  %v29 = vld [vmem:[%s0 + $0x6c] sm:$0xff]
  %v30 = vld [vmem:[%s0 + $0x74] sm:$0xff]
  %v31 = vld [vmem:[%s0 + $0x7c] sm:$0xff]
  %v32 = vld [vmem:[%s0 + $0x84] sm:$0xff]
  %v33 = vld [vmem:[%s0 + $0x8c] sm:$0xf]
  %v34 = vld [vmem:[%s1] sm:$0xf]
  %v35 = vld [vmem:[%s1 + $0x4] sm:$0xf]
  %v36 = vld [vmem:[%s1 + $0x8] sm:$0xf]
  %v37 = vld [vmem:[%s1 + $0xc] sm:$0xf]
  %v38 = vld [vmem:[%s1 + $0x10] sm:$0xf]
  %v39 = vld [vmem:[%s1 + $0x14] sm:$0xf]
  %v40 = vld [vmem:[%s1 + $0x18] sm:$0xf]
  %v41 = vld [vmem:[%s1 + $0x1c] sm:$0xf]
  %v42 = vld [vmem:[%s1 + $0x20] sm:$0xf]
  %v43 = vld [vmem:[%s1 + $0x24] sm:$0xf]
  %v44 = vld [vmem:[%s1 + $0x28] sm:$0xf]
  %v45 = vld [vmem:[%s1 + $0x2c] sm:$0xf]
  %v46 = vld [vmem:[%s1 + $0x30] sm:$0xf]
  %v47 = vld [vmem:[%s1 + $0x34] sm:$0xf]
  %v48 = vld [vmem:[%s1 + $0x38] sm:$0xf]
  %v49 = vld [vmem:[%s1 + $0x3c] sm:$0xf]
  %v50 = vld [vmem:[%s1 + $0x40] sm:$0xf]
  %v51 = vld [vmem:[%s1 + $0x44] sm:$0xf]
  %v52 = vld [vmem:[%s1 + $0x48] sm:$0xf]
  %v53 = vld [vmem:[%s1 + $0x4c] sm:$0xf]
  %v54 = vld [vmem:[%s1 + $0x50] sm:$0xf]
  %v55 = vld [vmem:[%s1 + $0x54] sm:$0xf]
  %v56 = vld [vmem:[%s1 + $0x58] sm:$0xf]
  %v57 = vld [vmem:[%s1 + $0x5c] sm:$0xf]
  %v58 = vld [vmem:[%s1 + $0x60] sm:$0xf]
  %v59 = vld [vmem:[%s1 + $0x64] sm:$0xf]
  %v60 = vld [vmem:[%s1 + $0x68] sm:$0xf]
  %v61 = vld [vmem:[%s1 + $0x6c] sm:$0xf]
  %v62 = vld [vmem:[%s1 + $0x70] sm:$0xf]
  %v63 = vld [vmem:[%s1 + $0x74] sm:$0xf]
  %v64 = vld [vmem:[%s1 + $0x78] sm:$0xf]
  %v65 = vld [vmem:[%s1 + $0x7c] sm:$0xf]
  %v66 = vld [vmem:[%s1 + $0x80] sm:$0xf]
  %v67 = vld [vmem:[%s1 + $0x84] sm:$0xf]
  %v68 = vld [vmem:[%s1 + $0x88] sm:$0xf]
  %v69 = vld [vmem:[%s1 + $0x8c] sm:$0xf]
  %v70 = vld [vmem:[%s1 + $0x90] sm:$0xf]
  %v71 = vld [vmem:[%s1 + $0x94] sm:$0xf]
  %v72 = vld [vmem:[%s1 + $0x98] sm:$0xf]
  %v73 = vld [vmem:[%s1 + $0x9c] sm:$0xf]
  %v74 = vld [vmem:[%s1 + $0xa0] sm:$0xf]
  %v75 = vld [vmem:[%s1 + $0xa4] sm:$0xf]
  %v76 = vld [vmem:[%s1 + $0xa8] sm:$0xf]
  %v77 = vld [vmem:[%s1 + $0xac] sm:$0xf]
  %v78 = vld [vmem:[%s1 + $0xb0] sm:$0xf]
  %v79 = vld [vmem:[%s1 + $0xb4] sm:$0xf]
  %v80 = vld [vmem:[%s1 + $0xb8] sm:$0xf]
  %v81 = vld [vmem:[%s1 + $0xbc] sm:$0xf]
  %v82 = vld [vmem:[%s1 + $0xc0] sm:$0xf]
  %v83 = vld [vmem:[%s1 + $0xc4] sm:$0xf]
  %v84 = vld [vmem:[%s1 + $0xc8] sm:$0xf]
  %v85 = vld [vmem:[%s1 + $0xcc] sm:$0xf]
  %v86 = vld [vmem:[%s1 + $0xd0] sm:$0xf]
  %v87 = vld [vmem:[%s1 + $0xd4] sm:$0xf]
  %v88 = vld [vmem:[%s1 + $0xd8] sm:$0xf]
  %v89 = vld [vmem:[%s1 + $0xdc] sm:$0xf]
  %v90 = vld [vmem:[%s1 + $0xe0] sm:$0xf]
  %v91 = vld [vmem:[%s1 + $0xe4] sm:$0xf]
  %v92 = vld [vmem:[%s1 + $0xe8] sm:$0xf]
  %v93 = vld [vmem:[%s1 + $0xec] sm:$0xf]
  %v94 = vld [vmem:[%s1 + $0xf0] sm:$0xf]
  %v95 = vld [vmem:[%s1 + $0xf4] sm:$0xf]
  %v96 = vld [vmem:[%s1 + $0xf8] sm:$0xf]
  %v97 = vld [vmem:[%s1 + $0xfc] sm:$0xf]
  %v98 = vld [vmem:[%s1 + $0x100] sm:$0xf]
  %v99 = vld [vmem:[%s1 + $0x104] sm:$0xf]
  %v100 = vld [vmem:[%s1 + $0x108] sm:$0xf]
  %v101 = vld [vmem:[%s1 + $0x10c] sm:$0xf]
  %v102 = vld [vmem:[%s1 + $0x110] sm:$0xf]
  %v103 = vld [vmem:[%s1 + $0x114] sm:$0xf]
  %v104 = vld [vmem:[%s1 + $0x118] sm:$0xf]
  %v105 = vld [vmem:[%s1 + $0x11c] sm:$0xf]
  %v106 = vld [vmem:[%s1 + $0x120] sm:$0xf]
  %v107 = vld [vmem:[%s1 + $0x124] sm:$0xf]
  %v108 = vld [vmem:[%s1 + $0x128] sm:$0xf]
  %v109 = vld [vmem:[%s1 + $0x12c] sm:$0xf]
  %v110 = vld [vmem:[%s1 + $0x130] sm:$0xf]
  %v111 = vld [vmem:[%s1 + $0x134] sm:$0xf]
  %v112 = vld [vmem:[%s1 + $0x138] sm:$0xf]
  %v113 = vld [vmem:[%s1 + $0x13c] sm:$0xf]
  %v114 = vld [vmem:[%s1 + $0x140] sm:$0xf]
  %v115 = vld [vmem:[%s1 + $0x144] sm:$0xf]
  %v116 = vld [vmem:[%s1 + $0x148] sm:$0xf]
  %v117 = vld [vmem:[%s1 + $0x14c] sm:$0xf]
  %v118 = vld [vmem:[%s1 + $0x150] sm:$0xf]
  %v119 = vld [vmem:[%s1 + $0x154] sm:$0xf]
  %v120 = vld [vmem:[%s1 + $0x158] sm:$0xf]
  %v121 = vld [vmem:[%s1 + $0x15c] sm:$0xf]
  %v122 = vld [vmem:[%s1 + $0x160] sm:$0xf]
  %v123 = vld [vmem:[%s1 + $0x164] sm:$0xf]
  %v124 = vld [vmem:[%s1 + $0x168] sm:$0xf]
  %v125 = vld [vmem:[%s1 + $0x16c] sm:$0xf]
  %v126 = vld [vmem:[%s1 + $0x170] sm:$0xf]
  %v127 = vld [vmem:[%s1 + $0x174] sm:$0xf]
  %v128 = vld [vmem:[%s1 + $0x178] sm:$0xf]
  %v129 = vld [vmem:[%s1 + $0x17c] sm:$0xf]
  %v130 = vld [vmem:[%s1 + $0x180] sm:$0xf]
  %v131 = vld [vmem:[%s1 + $0x184] sm:$0xf]
  %v132 = vld [vmem:[%s1 + $0x188] sm:$0xf]
  %v133 = vld [vmem:[%s1 + $0x18c] sm:$0xf]
  %v134 = vld [vmem:[%s1 + $0x190] sm:$0xf]
  %v135 = vld [vmem:[%s1 + $0x194] sm:$0xf]
  %v136 = vld [vmem:[%s1 + $0x198] sm:$0xf]
  %v137 = vld [vmem:[%s1 + $0x19c] sm:$0xf]
  %v138 = vld [vmem:[%s1 + $0x1a0] sm:$0xf]
  %v139 = vld [vmem:[%s1 + $0x1a4] sm:$0xf]
  %v140 = vld [vmem:[%s1 + $0x1a8] sm:$0xf]
  %v141 = vld [vmem:[%s1 + $0x1ac] sm:$0xf]
  %v142 = vld [vmem:[%s1 + $0x1b0] sm:$0xf]
  %v143 = vld [vmem:[%s1 + $0x1b4] sm:$0xf]
  %v144 = vld [vmem:[%s1 + $0x1b8] sm:$0xf]
  %v145 = vld [vmem:[%s1 + $0x1bc] sm:$0xf]
  %v146 = vld [vmem:[%s1 + $0x1c0] sm:$0xf]
  %v147 = vld [vmem:[%s1 + $0x1c4] sm:$0xf]
  %v148 = vld [vmem:[%s1 + $0x1c8] sm:$0xf]
  %v149 = vld [vmem:[%s1 + $0x1cc] sm:$0xf]
  %v150 = vld [vmem:[%s1 + $0x1d0] sm:$0xf]
  %v151 = vld [vmem:[%s1 + $0x1d4] sm:$0xf]
  %v152 = vld [vmem:[%s1 + $0x1d8] sm:$0xf]
  %v153 = vld [vmem:[%s1 + $0x1dc] sm:$0xf]
  %v154 = vld [vmem:[%s1 + $0x1e0] sm:$0xf]
  %v155 = vld [vmem:[%s1 + $0x1e4] sm:$0xf]
  %v156 = vld [vmem:[%s1 + $0x1e8] sm:$0xf]
  %v157 = vld [vmem:[%s1 + $0x1ec] sm:$0xf]
  %v158 = vld [vmem:[%s1 + $0x1f0] sm:$0xf]
  %v159 = vld [vmem:[%s1 + $0x1f4] sm:$0xf]
  %v160 = vld [vmem:[%s1 + $0x1f8] sm:$0xf]
  %v161 = vld [vmem:[%s1 + $0x1fc] sm:$0xf]
  %v162 = vld [vmem:[%s1 + $0x200] sm:$0xf]
  %v163 = vld [vmem:[%s1 + $0x204] sm:$0xf]
  %v164 = vld [vmem:[%s1 + $0x208] sm:$0xf]
  %v165 = vld [vmem:[%s1 + $0x20c] sm:$0xf]
  %v166 = vld [vmem:[%s1 + $0x210] sm:$0xf]
  %v167 = vld [vmem:[%s1 + $0x214] sm:$0xf]
  %v168 = vld [vmem:[%s1 + $0x218] sm:$0xf]
  %v169 = vld [vmem:[%s1 + $0x21c] sm:$0xf]
  %v170 = vld [vmem:[%s1 + $0x220] sm:$0xf]
  %v171 = vld [vmem:[%s1 + $0x224] sm:$0xf]
  %v172 = vld [vmem:[%s1 + $0x228] sm:$0xf]
  %v173 = vld [vmem:[%s1 + $0x22c] sm:$0xf]
  %v174 = vld [vmem:[%s1 + $0x230] sm:$0xf]
  %v175 = vld [vmem:[%s1 + $0x234] sm:$0xf]
  %v176 = vld [vmem:[%s1 + $0x238] sm:$0xf]
  %v177 = vld [vmem:[%s1 + $0x23c] sm:$0xf]
  %v178 = vld [vmem:[%s2] sm:$0x1]
  %v180 = vperm.slane %v178, 0
  %v202 = vunpack.c.l.b16 %v14
  %v203 = vunpack.c.h.b16 %v14
  %v204 = vunpack.c.l.b16 %v15
  %v205 = vunpack.c.h.b16 %v15
  %v206 = vunpack.c.l.b16 %v16
  %v207 = vunpack.c.h.b16 %v16
  %v208 = vunpack.c.l.b16 %v17
  %v209 = vunpack.c.h.b16 %v17
  %v210 = vunpack.c.l.b16 %v18
  %v211 = vunpack.c.l.b16 %v19
  %v212 = vunpack.c.h.b16 %v19
  %v213 = vunpack.c.l.b16 %v20
  %v214 = vunpack.c.h.b16 %v20
  %v215 = vunpack.c.l.b16 %v21
  %v216 = vunpack.c.h.b16 %v21
  %v217 = vunpack.c.l.b16 %v22
  %v218 = vunpack.c.h.b16 %v22
  %v219 = vunpack.c.l.b16 %v23
  %v220 = vunpack.c.l.b16 %v24
  %v221 = vunpack.c.h.b16 %v24
  %v222 = vunpack.c.l.b16 %v25
  %v223 = vunpack.c.h.b16 %v25
  %v224 = vunpack.c.l.b16 %v26
  %v225 = vunpack.c.h.b16 %v26
  %v226 = vunpack.c.l.b16 %v27
  %v227 = vunpack.c.h.b16 %v27
  %v228 = vunpack.c.l.b16 %v28
  %v229 = vunpack.c.l.b16 %v29
  %v230 = vunpack.c.h.b16 %v29
  %v231 = vunpack.c.l.b16 %v30
  %v232 = vunpack.c.h.b16 %v30
  %v233 = vunpack.c.l.b16 %v31
  %v234 = vunpack.c.h.b16 %v31
  %v235 = vunpack.c.l.b16 %v32
  %v236 = vunpack.c.h.b16 %v32
  %v237 = vunpack.c.l.b16 %v33
  %v238 = vpack.c.b16 %v211, %v202
  %v239 = vpack.c.b16 %v212, %v203
  %v240 = vpack.c.b16 %v213, %v204
  %v241 = vpack.c.b16 %v214, %v205
  %v242 = vpack.c.b16 %v215, %v206
  %v243 = vpack.c.b16 %v216, %v207
  %v244 = vpack.c.b16 %v217, %v208
  %v245 = vpack.c.b16 %v218, %v209
  %v246 = vpack.c.b16 %v219, %v210
  %v247 = vpack.c.b16 %v229, %v220
  %v248 = vpack.c.b16 %v230, %v221
  %v249 = vpack.c.b16 %v231, %v222
  %v250 = vpack.c.b16 %v232, %v223
  %v251 = vpack.c.b16 %v233, %v224
  %v252 = vpack.c.b16 %v234, %v225
  %v253 = vpack.c.b16 %v235, %v226
  %v254 = vpack.c.b16 %v236, %v227
  %v255 = vpack.c.b16 %v237, %v228
  %v418 = vunpack.c.l.b16 %v34
  %v419 = vunpack.c.l.b16 %v35
  %v420 = vunpack.c.l.b16 %v36
  %v421 = vunpack.c.l.b16 %v37
  %v422 = vunpack.c.l.b16 %v38
  %v423 = vunpack.c.l.b16 %v39
  %v424 = vunpack.c.l.b16 %v40
  %v425 = vunpack.c.l.b16 %v41
  %v426 = vunpack.c.l.b16 %v42
  %v427 = vunpack.c.l.b16 %v43
  %v428 = vunpack.c.l.b16 %v44
  %v429 = vunpack.c.l.b16 %v45
  %v430 = vunpack.c.l.b16 %v46
  %v431 = vunpack.c.l.b16 %v47
  %v432 = vunpack.c.l.b16 %v48
  %v433 = vunpack.c.l.b16 %v49
  %v434 = vunpack.c.l.b16 %v50
  %v435 = vunpack.c.l.b16 %v51
  %v436 = vunpack.c.l.b16 %v52
  %v437 = vunpack.c.l.b16 %v53
  %v438 = vunpack.c.l.b16 %v54
  %v439 = vunpack.c.l.b16 %v55
  %v440 = vunpack.c.l.b16 %v56
  %v441 = vunpack.c.l.b16 %v57
  %v442 = vunpack.c.l.b16 %v58
  %v443 = vunpack.c.l.b16 %v59
  %v444 = vunpack.c.l.b16 %v60
  %v445 = vunpack.c.l.b16 %v61
  %v446 = vunpack.c.l.b16 %v62
  %v447 = vunpack.c.l.b16 %v63
  %v448 = vunpack.c.l.b16 %v64
  %v449 = vunpack.c.l.b16 %v65
  %v450 = vunpack.c.l.b16 %v66
  %v451 = vunpack.c.l.b16 %v67
  %v452 = vunpack.c.l.b16 %v68
  %v453 = vunpack.c.l.b16 %v69
  %v454 = vunpack.c.l.b16 %v70
  %v455 = vunpack.c.l.b16 %v71
  %v456 = vunpack.c.l.b16 %v72
  %v457 = vunpack.c.l.b16 %v73
  %v458 = vunpack.c.l.b16 %v74
  %v459 = vunpack.c.l.b16 %v75
  %v460 = vunpack.c.l.b16 %v76
  %v461 = vunpack.c.l.b16 %v77
  %v462 = vunpack.c.l.b16 %v78
  %v463 = vunpack.c.l.b16 %v79
  %v464 = vunpack.c.l.b16 %v80
  %v465 = vunpack.c.l.b16 %v81
  %v466 = vunpack.c.l.b16 %v82
  %v467 = vunpack.c.l.b16 %v83
  %v468 = vunpack.c.l.b16 %v84
  %v469 = vunpack.c.l.b16 %v85
  %v470 = vunpack.c.l.b16 %v86
  %v471 = vunpack.c.l.b16 %v87
  %v472 = vunpack.c.l.b16 %v88
  %v473 = vunpack.c.l.b16 %v89
  %v474 = vunpack.c.l.b16 %v90
  %v475 = vunpack.c.l.b16 %v91
  %v476 = vunpack.c.l.b16 %v92
  %v477 = vunpack.c.l.b16 %v93
  %v478 = vunpack.c.l.b16 %v94
  %v479 = vunpack.c.l.b16 %v95
  %v480 = vunpack.c.l.b16 %v96
  %v481 = vunpack.c.l.b16 %v97
  %v482 = vunpack.c.l.b16 %v98
  %v483 = vunpack.c.l.b16 %v99
  %v484 = vunpack.c.l.b16 %v100
  %v485 = vunpack.c.l.b16 %v101
  %v486 = vunpack.c.l.b16 %v102
  %v487 = vunpack.c.l.b16 %v103
  %v488 = vunpack.c.l.b16 %v104
  %v489 = vunpack.c.l.b16 %v105
  %v490 = vunpack.c.l.b16 %v106
  %v491 = vunpack.c.l.b16 %v107
  %v492 = vunpack.c.l.b16 %v108
  %v493 = vunpack.c.l.b16 %v109
  %v494 = vunpack.c.l.b16 %v110
  %v495 = vunpack.c.l.b16 %v111
  %v496 = vunpack.c.l.b16 %v112
  %v497 = vunpack.c.l.b16 %v113
  %v498 = vunpack.c.l.b16 %v114
  %v499 = vunpack.c.l.b16 %v115
  %v500 = vunpack.c.l.b16 %v116
  %v501 = vunpack.c.l.b16 %v117
  %v502 = vunpack.c.l.b16 %v118
  %v503 = vunpack.c.l.b16 %v119
  %v504 = vunpack.c.l.b16 %v120
  %v505 = vunpack.c.l.b16 %v121
  %v506 = vunpack.c.l.b16 %v122
  %v507 = vunpack.c.l.b16 %v123
  %v508 = vunpack.c.l.b16 %v124
  %v509 = vunpack.c.l.b16 %v125
  %v510 = vunpack.c.l.b16 %v126
  %v511 = vunpack.c.l.b16 %v127
  %v512 = vunpack.c.l.b16 %v128
  %v513 = vunpack.c.l.b16 %v129
  %v514 = vunpack.c.l.b16 %v130
  %v515 = vunpack.c.l.b16 %v131
  %v516 = vunpack.c.l.b16 %v132
  %v517 = vunpack.c.l.b16 %v133
  %v518 = vunpack.c.l.b16 %v134
  %v519 = vunpack.c.l.b16 %v135
  %v520 = vunpack.c.l.b16 %v136
  %v521 = vunpack.c.l.b16 %v137
  %v522 = vunpack.c.l.b16 %v138
  %v523 = vunpack.c.l.b16 %v139
  %v524 = vunpack.c.l.b16 %v140
  %v525 = vunpack.c.l.b16 %v141
  %v526 = vunpack.c.l.b16 %v142
  %v527 = vunpack.c.l.b16 %v143
  %v528 = vunpack.c.l.b16 %v144
  %v529 = vunpack.c.l.b16 %v145
  %v530 = vunpack.c.l.b16 %v146
  %v531 = vunpack.c.l.b16 %v147
  %v532 = vunpack.c.l.b16 %v148
  %v533 = vunpack.c.l.b16 %v149
  %v534 = vunpack.c.l.b16 %v150
  %v535 = vunpack.c.l.b16 %v151
  %v536 = vunpack.c.l.b16 %v152
  %v537 = vunpack.c.l.b16 %v153
  %v538 = vunpack.c.l.b16 %v154
  %v539 = vunpack.c.l.b16 %v155
  %v540 = vunpack.c.l.b16 %v156
  %v541 = vunpack.c.l.b16 %v157
  %v542 = vunpack.c.l.b16 %v158
  %v543 = vunpack.c.l.b16 %v159
  %v544 = vunpack.c.l.b16 %v160
  %v545 = vunpack.c.l.b16 %v161
  %v546 = vunpack.c.l.b16 %v162
  %v547 = vunpack.c.l.b16 %v163
  %v548 = vunpack.c.l.b16 %v164
  %v549 = vunpack.c.l.b16 %v165
  %v550 = vunpack.c.l.b16 %v166
  %v551 = vunpack.c.l.b16 %v167
  %v552 = vunpack.c.l.b16 %v168
  %v553 = vunpack.c.l.b16 %v169
  %v554 = vunpack.c.l.b16 %v170
  %v555 = vunpack.c.l.b16 %v171
  %v556 = vunpack.c.l.b16 %v172
  %v557 = vunpack.c.l.b16 %v173
  %v558 = vunpack.c.l.b16 %v174
  %v559 = vunpack.c.l.b16 %v175
  %v560 = vunpack.c.l.b16 %v176
  %v561 = vunpack.c.l.b16 %v177
  %v562 = vpack.c.b16 %v419, %v418
  %v563 = vpack.c.b16 %v421, %v420
  %v564 = vpack.c.b16 %v423, %v422
  %v565 = vpack.c.b16 %v425, %v424
  %v566 = vpack.c.b16 %v427, %v426
  %v567 = vpack.c.b16 %v429, %v428
  %v568 = vpack.c.b16 %v431, %v430
  %v569 = vpack.c.b16 %v433, %v432
  %v570 = vpack.c.b16 %v435, %v434
  %v571 = vpack.c.b16 %v437, %v436
  %v572 = vpack.c.b16 %v439, %v438
  %v573 = vpack.c.b16 %v441, %v440
  %v574 = vpack.c.b16 %v443, %v442
  %v575 = vpack.c.b16 %v445, %v444
  %v576 = vpack.c.b16 %v447, %v446
  %v577 = vpack.c.b16 %v449, %v448
  %v578 = vpack.c.b16 %v451, %v450
  %v579 = vpack.c.b16 %v453, %v452
  %v580 = vpack.c.b16 %v455, %v454
  %v581 = vpack.c.b16 %v457, %v456
  %v582 = vpack.c.b16 %v459, %v458
  %v583 = vpack.c.b16 %v461, %v460
  %v584 = vpack.c.b16 %v463, %v462
  %v585 = vpack.c.b16 %v465, %v464
  %v586 = vpack.c.b16 %v467, %v466
  %v587 = vpack.c.b16 %v469, %v468
  %v588 = vpack.c.b16 %v471, %v470
  %v589 = vpack.c.b16 %v473, %v472
  %v590 = vpack.c.b16 %v475, %v474
  %v591 = vpack.c.b16 %v477, %v476
  %v592 = vpack.c.b16 %v479, %v478
  %v593 = vpack.c.b16 %v481, %v480
  %v594 = vpack.c.b16 %v483, %v482
  %v595 = vpack.c.b16 %v485, %v484
  %v596 = vpack.c.b16 %v487, %v486
  %v597 = vpack.c.b16 %v489, %v488
  %v598 = vpack.c.b16 %v491, %v490
  %v599 = vpack.c.b16 %v493, %v492
  %v600 = vpack.c.b16 %v495, %v494
  %v601 = vpack.c.b16 %v497, %v496
  %v602 = vpack.c.b16 %v499, %v498
  %v603 = vpack.c.b16 %v501, %v500
  %v604 = vpack.c.b16 %v503, %v502
  %v605 = vpack.c.b16 %v505, %v504
  %v606 = vpack.c.b16 %v507, %v506
  %v607 = vpack.c.b16 %v509, %v508
  %v608 = vpack.c.b16 %v511, %v510
  %v609 = vpack.c.b16 %v513, %v512
  %v610 = vpack.c.b16 %v515, %v514
  %v611 = vpack.c.b16 %v517, %v516
  %v612 = vpack.c.b16 %v519, %v518
  %v613 = vpack.c.b16 %v521, %v520
  %v614 = vpack.c.b16 %v523, %v522
  %v615 = vpack.c.b16 %v525, %v524
  %v616 = vpack.c.b16 %v527, %v526
  %v617 = vpack.c.b16 %v529, %v528
  %v618 = vpack.c.b16 %v531, %v530
  %v619 = vpack.c.b16 %v533, %v532
  %v620 = vpack.c.b16 %v535, %v534
  %v621 = vpack.c.b16 %v537, %v536
  %v622 = vpack.c.b16 %v539, %v538
  %v623 = vpack.c.b16 %v541, %v540
  %v624 = vpack.c.b16 %v543, %v542
  %v625 = vpack.c.b16 %v545, %v544
  %v626 = vpack.c.b16 %v547, %v546
  %v627 = vpack.c.b16 %v549, %v548
  %v628 = vpack.c.b16 %v551, %v550
  %v629 = vpack.c.b16 %v553, %v552
  %v630 = vpack.c.b16 %v555, %v554
  %v631 = vpack.c.b16 %v557, %v556
  %v632 = vpack.c.b16 %v559, %v558
  %v633 = vpack.c.b16 %v561, %v560
  %706 = vmatpush.bf16.msra.mxu0 %v569
  %707 = vmatpush.bf16.msra.mxu0 %v568
  %708 = vmatpush.bf16.msra.mxu0 %v567
  %709 = vmatpush.bf16.msra.mxu0 %v566
  %710 = vmatpush.bf16.msra.mxu0 %v565
  %711 = vmatpush.bf16.msra.mxu0 %v564
  %712 = vmatpush.bf16.msra.mxu0 %v563
  %713 = vmatpush.bf16.msra.mxu0 %v562
  %714 = vmatmul.bf16.gmra.mxu0 %v238
  %v715 = vpop.f32.mrf.mxu0
  %v716 = vadd.f32 %v180, %v715
  %v717 = vpop.f32.mrf.mxu0
  %v718 = vadd.f32 %v180, %v717
  %719 = vmatmul.bf16.gmra.mxu0 %v247
  %v720 = vpop.f32.mrf.mxu0
  %v721 = vadd.f32 %v180, %v720
  %v722 = vpop.f32.mrf.mxu0
  %v723 = vadd.f32 %v180, %v722
  %724 = vdwg.mxu0
  %725 = vmatpush.bf16.msra.mxu0 %v577
  %726 = vmatpush.bf16.msra.mxu0 %v576
  %727 = vmatpush.bf16.msra.mxu0 %v575
  %728 = vmatpush.bf16.msra.mxu0 %v574
  %729 = vmatpush.bf16.msra.mxu0 %v573
  %730 = vmatpush.bf16.msra.mxu0 %v572
  %731 = vmatpush.bf16.msra.mxu0 %v571
  %732 = vmatpush.bf16.msra.mxu0 %v570
  %733 = vmatmul.bf16.gmra.mxu0 %v239
  %v734 = vpop.f32.mrf.mxu0
  %v735 = vadd.f32 %v716, %v734
  %v736 = vpop.f32.mrf.mxu0
  %v737 = vadd.f32 %v718, %v736
  %738 = vmatmul.bf16.gmra.mxu0 %v248
  %v739 = vpop.f32.mrf.mxu0
  %v740 = vadd.f32 %v721, %v739
  %v741 = vpop.f32.mrf.mxu0
  %v742 = vadd.f32 %v723, %v741
  %743 = vdwg.mxu0
  %744 = vmatpush.bf16.msra.mxu0 %v585
  %745 = vmatpush.bf16.msra.mxu0 %v584
  %746 = vmatpush.bf16.msra.mxu0 %v583
  %747 = vmatpush.bf16.msra.mxu0 %v582
  %748 = vmatpush.bf16.msra.mxu0 %v581
  %749 = vmatpush.bf16.msra.mxu0 %v580
  %750 = vmatpush.bf16.msra.mxu0 %v579
  %751 = vmatpush.bf16.msra.mxu0 %v578
  %752 = vmatmul.bf16.gmra.mxu0 %v240
  %v753 = vpop.f32.mrf.mxu0
  %v754 = vadd.f32 %v735, %v753
  %v755 = vpop.f32.mrf.mxu0
  %v756 = vadd.f32 %v737, %v755
  %757 = vmatmul.bf16.gmra.mxu0 %v249
  %v758 = vpop.f32.mrf.mxu0
  %v759 = vadd.f32 %v740, %v758
  %v760 = vpop.f32.mrf.mxu0
  %v761 = vadd.f32 %v742, %v760
  %762 = vdwg.mxu0
  %763 = vmatpush.bf16.msra.mxu0 %v593
  %764 = vmatpush.bf16.msra.mxu0 %v592
  %765 = vmatpush.bf16.msra.mxu0 %v591
  %766 = vmatpush.bf16.msra.mxu0 %v590
  %767 = vmatpush.bf16.msra.mxu0 %v589
  %768 = vmatpush.bf16.msra.mxu0 %v588
  %769 = vmatpush.bf16.msra.mxu0 %v587
  %770 = vmatpush.bf16.msra.mxu0 %v586
  %771 = vmatmul.bf16.gmra.mxu0 %v241
  %v772 = vpop.f32.mrf.mxu0
  %v773 = vadd.f32 %v754, %v772
  %v774 = vpop.f32.mrf.mxu0
  %v775 = vadd.f32 %v756, %v774
  %776 = vmatmul.bf16.gmra.mxu0 %v250
  %v777 = vpop.f32.mrf.mxu0
  %v778 = vadd.f32 %v759, %v777
  %v779 = vpop.f32.mrf.mxu0
  %v780 = vadd.f32 %v761, %v779
  %781 = vdwg.mxu0
  %782 = vmatpush.bf16.msra.mxu0 %v601
  %783 = vmatpush.bf16.msra.mxu0 %v600
  %784 = vmatpush.bf16.msra.mxu0 %v599
  %785 = vmatpush.bf16.msra.mxu0 %v598
  %786 = vmatpush.bf16.msra.mxu0 %v597
  %787 = vmatpush.bf16.msra.mxu0 %v596
  %788 = vmatpush.bf16.msra.mxu0 %v595
  %789 = vmatpush.bf16.msra.mxu0 %v594
  %790 = vmatmul.bf16.gmra.mxu0 %v242
  %v791 = vpop.f32.mrf.mxu0
  %v792 = vadd.f32 %v773, %v791
  %v793 = vpop.f32.mrf.mxu0
  %v794 = vadd.f32 %v775, %v793
  %795 = vmatmul.bf16.gmra.mxu0 %v251
  %v796 = vpop.f32.mrf.mxu0
  %v797 = vadd.f32 %v778, %v796
  %v798 = vpop.f32.mrf.mxu0
  %v799 = vadd.f32 %v780, %v798
  %800 = vdwg.mxu0
  %801 = vmatpush.bf16.msra.mxu0 %v609
  %802 = vmatpush.bf16.msra.mxu0 %v608
  %803 = vmatpush.bf16.msra.mxu0 %v607
  %804 = vmatpush.bf16.msra.mxu0 %v606
  %805 = vmatpush.bf16.msra.mxu0 %v605
  %806 = vmatpush.bf16.msra.mxu0 %v604
  %807 = vmatpush.bf16.msra.mxu0 %v603
  %808 = vmatpush.bf16.msra.mxu0 %v602
  %809 = vmatmul.bf16.gmra.mxu0 %v243
  %v810 = vpop.f32.mrf.mxu0
  %v811 = vadd.f32 %v792, %v810
  %v812 = vpop.f32.mrf.mxu0
  %v813 = vadd.f32 %v794, %v812
  %814 = vmatmul.bf16.gmra.mxu0 %v252
  %v815 = vpop.f32.mrf.mxu0
  %v816 = vadd.f32 %v797, %v815
  %v817 = vpop.f32.mrf.mxu0
  %v818 = vadd.f32 %v799, %v817
  %819 = vdwg.mxu0
  %820 = vmatpush.bf16.msra.mxu0 %v617
  %821 = vmatpush.bf16.msra.mxu0 %v616
  %822 = vmatpush.bf16.msra.mxu0 %v615
  %823 = vmatpush.bf16.msra.mxu0 %v614
  %824 = vmatpush.bf16.msra.mxu0 %v613
  %825 = vmatpush.bf16.msra.mxu0 %v612
  %826 = vmatpush.bf16.msra.mxu0 %v611
  %827 = vmatpush.bf16.msra.mxu0 %v610
  %828 = vmatmul.bf16.gmra.mxu0 %v244
  %v829 = vpop.f32.mrf.mxu0
  %v830 = vadd.f32 %v811, %v829
  %v831 = vpop.f32.mrf.mxu0
  %v832 = vadd.f32 %v813, %v831
  %833 = vmatmul.bf16.gmra.mxu0 %v253
  %v834 = vpop.f32.mrf.mxu0
  %v835 = vadd.f32 %v816, %v834
  %v836 = vpop.f32.mrf.mxu0
  %v837 = vadd.f32 %v818, %v836
  %838 = vdwg.mxu0
  %839 = vmatpush.bf16.msra.mxu0 %v625
  %840 = vmatpush.bf16.msra.mxu0 %v624
  %841 = vmatpush.bf16.msra.mxu0 %v623
  %842 = vmatpush.bf16.msra.mxu0 %v622
  %843 = vmatpush.bf16.msra.mxu0 %v621
  %844 = vmatpush.bf16.msra.mxu0 %v620
  %845 = vmatpush.bf16.msra.mxu0 %v619
  %846 = vmatpush.bf16.msra.mxu0 %v618
  %847 = vmatmul.bf16.gmra.mxu0 %v245
  %v848 = vpop.f32.mrf.mxu0
  %v849 = vadd.f32 %v830, %v848
  %v850 = vpop.f32.mrf.mxu0
  %v851 = vadd.f32 %v832, %v850
  %852 = vmatmul.bf16.gmra.mxu0 %v254
  %v853 = vpop.f32.mrf.mxu0
  %v854 = vadd.f32 %v835, %v853
  %v855 = vpop.f32.mrf.mxu0
  %v856 = vadd.f32 %v837, %v855
  %857 = vdwg.mxu0
  %858 = vmatpush.bf16.msra.mxu0 %v633
  %859 = vmatpush.bf16.msra.mxu0 %v632
  %860 = vmatpush.bf16.msra.mxu0 %v631
  %861 = vmatpush.bf16.msra.mxu0 %v630
  %862 = vmatpush.bf16.msra.mxu0 %v629
  %863 = vmatpush.bf16.msra.mxu0 %v628
  %864 = vmatpush.bf16.msra.mxu0 %v627
  %865 = vmatpush.bf16.msra.mxu0 %v626
  %866 = vmatmul.bf16.gmra.mxu0 %v246
  %v867 = vpop.f32.mrf.mxu0
  %v868 = vadd.f32 %v849, %v867
  %v869 = vpop.f32.mrf.mxu0
  %v870 = vadd.f32 %v851, %v869
  %871 = vmatmul.bf16.gmra.mxu0 %v255
  %v872 = vpop.f32.mrf.mxu0
  %v873 = vadd.f32 %v854, %v872
  %v874 = vpop.f32.mrf.mxu0
  %v875 = vadd.f32 %v856, %v874
  %876 = vdwg.mxu0
  %v877 = vmax.f32 %v868, 0.0
  %v878 = vmax.f32 %v870, 0.0
  %v879 = vmax.f32 %v873, 0.0
  %v880 = vmax.f32 %v875, 0.0
  %v881 = vpack.c.bf16 %v877, %v877
  %v882 = vpack.c.bf16 %v878, %v878
  %v883 = vpack.c.bf16 %v879, %v879
  %v884 = vpack.c.bf16 %v880, %v880
  %885 = vst [vmem:[%s3] sm:$0xf] %v881
  %886 = vst [vmem:[%s3 + $0x4] sm:$0xf] %v882
  %887 = vst [vmem:[%s3 + $0x8] sm:$0xf] %v883
  %888 = vst [vmem:[%s3 + $0xc] sm:$0xf] %v884
  // Predicated region
  $region14: #{dueling_dqn_forward.6} parent=0 // pred_check
    _
  $region15: #{dueling_dqn_forward.6} parent=0 // pred_check_branch
    %890 = sbr.rel (0) target = $region17
  $region16: #{dueling_dqn_forward.6} parent=0 // pred_region
    _
  $region17: #{dueling_dqn_forward.6} parent=0 // pred_fallthru
    _
  // Predicated region
  $region18: #{dueling_dqn_forward.6} parent=0 // pred_check
    _
  $region19: #{dueling_dqn_forward.6} parent=0 // pred_check_branch
    %892 = sbr.rel (0) target = $region21
  $region20: #{dueling_dqn_forward.6} parent=0 // pred_region
    _
  $region21: #{dueling_dqn_forward.6} parent=0 // pred_fallthru
    _

// kernel: dueling_dqn_forward.7
$region0: #{dueling_dqn_forward.7}
  #allocation0 [shape = 'u32[]', space=smem, size = 0x4, offset = 0x4, fixed_abs, tag = 'smem constant byte address 0x4 - core index']
  #allocation1 [shape = 'u32[72,128]{1,0:T(1,128)}', space=vmem, size = 0x9000, scoped, tag = 'internal scratch']
  #allocation2 [shape = 'f32[1,1]{1,0:T(1,128)S(1)}', space=vmem, size = 0x200, scoped, tag = 'scoped memory for dueling_dqn_forward.7']
  %s0 = inlined_call_operand.vmem [shape: bf16[2,2048], index: 0, kind: input, shape index: {}]
  %s1 = inlined_call_operand.vmem [shape: bf16[2048,1024], index: 1, kind: input, shape index: {}]
  %s2 = inlined_call_operand.vmem [shape: f32[1,1024], index: 2, kind: input, shape index: {}]
  %s3 = inlined_call_operand.vmem [shape: bf16[512,4], index: 3, kind: input, shape index: {}]
  %s4 = inlined_call_operand.vmem [shape: f32[1,4], index: 4, kind: input, shape index: {}]
  %s5 = inlined_call_operand.vmem [shape: bf16[512,1], index: 5, kind: input, shape index: {}]
  %s6 = inlined_call_operand.<no memory space> [shape: f32[1,1], index: 6, kind: input, shape index: {}]
  %s7 = inlined_call_operand.hbm [shape: f32[2,4], index: 7, kind: output, shape index: {}]
  %s8 = sld [smem:[#allocation0]]
  $region38: #{dueling_dqn_forward.7} parent=0
    _
  %s10 = ssub.s32 1, %s8
  %s11 = scalar_select 0, %s10, %s8
  %v12 = vstv %s6
  %13 = vst [vmem:[#allocation2] sm:$0x1] %v12
  $region1: #{dueling_dqn_forward.7} parent=0
    #allocation3 [shape = 'u8[1024]{0}', space=vmem, size = 0x400, scoped, tag = 'output window, operand 0, single buffered']
    #allocation4 [shape = 's32[1]{0}', space=sflag, size = 0x4, scoped, tag = 'scoped memory for dueling_dqn_forward.7']
    %14 = vsyncpa [#allocation4], 0
    // Predicated region
    $region2: #{dueling_dqn_forward.7} parent=1 // pred_check
      _
    $region3: #{dueling_dqn_forward.7} parent=1 // pred_check_branch
      %16 = sbr.rel (0) target = $region5
    $region4: #{dueling_dqn_forward.7} parent=1 // pred_region
      _
    $region5: #{dueling_dqn_forward.7} parent=1 // pred_fallthru
      _
    // Predicated region
    $region6: #{dueling_dqn_forward.7} parent=1 // pred_check
      _
    $region7: #{dueling_dqn_forward.7} parent=1 // pred_check_branch
      %18 = sbr.rel (0) target = $region9
    $region8: #{dueling_dqn_forward.7} parent=1 // pred_region
      _
    $region9: #{dueling_dqn_forward.7} parent=1 // pred_fallthru
      _
    // Predicated region
    $region10: #{dueling_dqn_forward.7} parent=1 // pred_check
      _
    $region11: #{dueling_dqn_forward.7} parent=1 // pred_check_branch
      %20 = sbr.rel (0) target = $region13
    $region12: #{dueling_dqn_forward.7} parent=1 // pred_region
      _
    $region13: #{dueling_dqn_forward.7} parent=1 // pred_fallthru
      _
    // Predicated region
    $region14: #{dueling_dqn_forward.7} parent=1 // pred_check
      _
    $region15: #{dueling_dqn_forward.7} parent=1 // pred_check_branch
      %22 = sbr.rel (0) target = $region17
    $region16: #{dueling_dqn_forward.7} parent=1 // pred_region
      _
    $region17: #{dueling_dqn_forward.7} parent=1 // pred_fallthru
      _
    // Predicated region
    $region18: #{dueling_dqn_forward.7} parent=1 // pred_check
      _
    $region19: #{dueling_dqn_forward.7} parent=1 // pred_check_branch
      %24 = sbr.rel (0) target = $region21
    $region20: #{dueling_dqn_forward.7} parent=1 // pred_region
      _
    $region21: #{dueling_dqn_forward.7} parent=1 // pred_fallthru
      _
    // Predicated region
    $region22: #{dueling_dqn_forward.7} parent=1 // pred_check
      _
    $region23: #{dueling_dqn_forward.7} parent=1 // pred_check_branch
      %26 = sbr.rel (0) target = $region25
    $region24: #{dueling_dqn_forward.7} parent=1 // pred_region
      _
    $region25: #{dueling_dqn_forward.7} parent=1 // pred_fallthru
      _
    // Predicated region
    $region26: #{dueling_dqn_forward.7} parent=1 // pred_check
      _
    $region27: #{dueling_dqn_forward.7} parent=1 // pred_check_branch
      %28 = sbr.rel (0) target = $region29
    $region28: #{dueling_dqn_forward.7} parent=1 // pred_region
      _
    $region29: #{dueling_dqn_forward.7} parent=1 // pred_fallthru
      _
    %v29 = vld [vmem:[%s0] sm:$0xff]
    %v30 = vld [vmem:[%s0 + $0x8] sm:$0xff]
    %v31 = vld [vmem:[%s1] sm:$0xff]
    %v32 = vld [vmem:[%s1 + $0x8] sm:$0xff]
    %v33 = vld [vmem:[%s1 + $0x10] sm:$0xff]
    %v34 = vld [vmem:[%s1 + $0x18] sm:$0xff]
    %v35 = vld [vmem:[%s1 + $0x20] sm:$0xff]
    %v36 = vld [vmem:[%s1 + $0x28] sm:$0xff]
    %v37 = vld [vmem:[%s1 + $0x30] sm:$0xff]
    %v38 = vld [vmem:[%s1 + $0x38] sm:$0xff]
    %v39 = vld [vmem:[%s1 + $0x40] sm:$0xff]
    %v40 = vld [vmem:[%s1 + $0x48] sm:$0xff]
    %v41 = vld [vmem:[%s1 + $0x50] sm:$0xff]
    %v42 = vld [vmem:[%s1 + $0x58] sm:$0xff]
    %v43 = vld [vmem:[%s1 + $0x60] sm:$0xff]
    %v44 = vld [vmem:[%s1 + $0x68] sm:$0xff]
    %v45 = vld [vmem:[%s1 + $0x70] sm:$0xff]
    %v46 = vld [vmem:[%s1 + $0x78] sm:$0xff]
    %v47 = vld [vmem:[%s1 + $0x80] sm:$0xff]
    %v48 = vld [vmem:[%s1 + $0x88] sm:$0xff]
    %v49 = vld [vmem:[%s1 + $0x90] sm:$0xff]
    %v50 = vld [vmem:[%s1 + $0x98] sm:$0xff]
    %v51 = vld [vmem:[%s1 + $0xa0] sm:$0xff]
    %v52 = vld [vmem:[%s1 + $0xa8] sm:$0xff]
    %v53 = vld [vmem:[%s1 + $0xb0] sm:$0xff]
    %v54 = vld [vmem:[%s1 + $0xb8] sm:$0xff]
    %v55 = vld [vmem:[%s1 + $0xc0] sm:$0xff]
    %v56 = vld [vmem:[%s1 + $0xc8] sm:$0xff]
    %v57 = vld [vmem:[%s1 + $0xd0] sm:$0xff]
    %v58 = vld [vmem:[%s1 + $0xd8] sm:$0xff]
    %v59 = vld [vmem:[%s1 + $0xe0] sm:$0xff]
    %v60 = vld [vmem:[%s1 + $0xe8] sm:$0xff]
    %v61 = vld [vmem:[%s1 + $0xf0] sm:$0xff]
    %v62 = vld [vmem:[%s1 + $0xf8] sm:$0xff]
    %v63 = vld [vmem:[%s1 + $0x100] sm:$0xff]
    %v64 = vld [vmem:[%s1 + $0x108] sm:$0xff]
    %v65 = vld [vmem:[%s1 + $0x110] sm:$0xff]
    %v66 = vld [vmem:[%s1 + $0x118] sm:$0xff]
    %v67 = vld [vmem:[%s1 + $0x120] sm:$0xff]
    %v68 = vld [vmem:[%s1 + $0x128] sm:$0xff]
    %v69 = vld [vmem:[%s1 + $0x130] sm:$0xff]
    %v70 = vld [vmem:[%s1 + $0x138] sm:$0xff]
    %v71 = vld [vmem:[%s1 + $0x140] sm:$0xff]
    %v72 = vld [vmem:[%s1 + $0x148] sm:$0xff]
    %v73 = vld [vmem:[%s1 + $0x150] sm:$0xff]
    %v74 = vld [vmem:[%s1 + $0x158] sm:$0xff]
    %v75 = vld [vmem:[%s1 + $0x160] sm:$0xff]
    %v76 = vld [vmem:[%s1 + $0x168] sm:$0xff]
    %v77 = vld [vmem:[%s1 + $0x170] sm:$0xff]
    %v78 = vld [vmem:[%s1 + $0x178] sm:$0xff]
    %v79 = vld [vmem:[%s1 + $0x180] sm:$0xff]
    %v80 = vld [vmem:[%s1 + $0x188] sm:$0xff]
    %v81 = vld [vmem:[%s1 + $0x190] sm:$0xff]
    %v82 = vld [vmem:[%s1 + $0x198] sm:$0xff]
    %v83 = vld [vmem:[%s1 + $0x1a0] sm:$0xff]
    %v84 = vld [vmem:[%s1 + $0x1a8] sm:$0xff]
    %v85 = vld [vmem:[%s1 + $0x1b0] sm:$0xff]
    %v86 = vld [vmem:[%s1 + $0x1b8] sm:$0xff]
    %v87 = vld [vmem:[%s1 + $0x1c0] sm:$0xff]
    %v88 = vld [vmem:[%s1 + $0x1c8] sm:$0xff]
    %v89 = vld [vmem:[%s1 + $0x1d0] sm:$0xff]
    %v90 = vld [vmem:[%s1 + $0x1d8] sm:$0xff]
    %v91 = vld [vmem:[%s1 + $0x1e0] sm:$0xff]
    %v92 = vld [vmem:[%s1 + $0x1e8] sm:$0xff]
    %v93 = vld [vmem:[%s1 + $0x1f0] sm:$0xff]
    %v94 = vld [vmem:[%s1 + $0x1f8] sm:$0xff]
    %v95 = vld [vmem:[%s1 + $0x200] sm:$0xff]
    %v96 = vld [vmem:[%s1 + $0x208] sm:$0xff]
    %v97 = vld [vmem:[%s1 + $0x210] sm:$0xff]
    %v98 = vld [vmem:[%s1 + $0x218] sm:$0xff]
    %v99 = vld [vmem:[%s1 + $0x220] sm:$0xff]
    %v100 = vld [vmem:[%s1 + $0x228] sm:$0xff]
    %v101 = vld [vmem:[%s1 + $0x230] sm:$0xff]
    %v102 = vld [vmem:[%s1 + $0x238] sm:$0xff]
    %v103 = vld [vmem:[%s1 + $0x240] sm:$0xff]
    %v104 = vld [vmem:[%s1 + $0x248] sm:$0xff]
    %v105 = vld [vmem:[%s1 + $0x250] sm:$0xff]
    %v106 = vld [vmem:[%s1 + $0x258] sm:$0xff]
    %v107 = vld [vmem:[%s1 + $0x260] sm:$0xff]
    %v108 = vld [vmem:[%s1 + $0x268] sm:$0xff]
    %v109 = vld [vmem:[%s1 + $0x270] sm:$0xff]
    %v110 = vld [vmem:[%s1 + $0x278] sm:$0xff]
    %v111 = vld [vmem:[%s1 + $0x280] sm:$0xff]
    %v112 = vld [vmem:[%s1 + $0x288] sm:$0xff]
    %v113 = vld [vmem:[%s1 + $0x290] sm:$0xff]
    %v114 = vld [vmem:[%s1 + $0x298] sm:$0xff]
    %v115 = vld [vmem:[%s1 + $0x2a0] sm:$0xff]
    %v116 = vld [vmem:[%s1 + $0x2a8] sm:$0xff]
    %v117 = vld [vmem:[%s1 + $0x2b0] sm:$0xff]
    %v118 = vld [vmem:[%s1 + $0x2b8] sm:$0xff]
    %v119 = vld [vmem:[%s1 + $0x2c0] sm:$0xff]
    %v120 = vld [vmem:[%s1 + $0x2c8] sm:$0xff]
    %v121 = vld [vmem:[%s1 + $0x2d0] sm:$0xff]
    %v122 = vld [vmem:[%s1 + $0x2d8] sm:$0xff]
    %v123 = vld [vmem:[%s1 + $0x2e0] sm:$0xff]
    %v124 = vld [vmem:[%s1 + $0x2e8] sm:$0xff]
    %v125 = vld [vmem:[%s1 + $0x2f0] sm:$0xff]
    %v126 = vld [vmem:[%s1 + $0x2f8] sm:$0xff]
    %v127 = vld [vmem:[%s1 + $0x300] sm:$0xff]
    %v128 = vld [vmem:[%s1 + $0x308] sm:$0xff]
    %v129 = vld [vmem:[%s1 + $0x310] sm:$0xff]
    %v130 = vld [vmem:[%s1 + $0x318] sm:$0xff]
    %v131 = vld [vmem:[%s1 + $0x320] sm:$0xff]
    %v132 = vld [vmem:[%s1 + $0x328] sm:$0xff]
    %v133 = vld [vmem:[%s1 + $0x330] sm:$0xff]
    %v134 = vld [vmem:[%s1 + $0x338] sm:$0xff]
    %v135 = vld [vmem:[%s1 + $0x340] sm:$0xff]
    %v136 = vld [vmem:[%s1 + $0x348] sm:$0xff]
    %v137 = vld [vmem:[%s1 + $0x350] sm:$0xff]
    %v138 = vld [vmem:[%s1 + $0x358] sm:$0xff]
    %v139 = vld [vmem:[%s1 + $0x360] sm:$0xff]
    %v140 = vld [vmem:[%s1 + $0x368] sm:$0xff]
    %v141 = vld [vmem:[%s1 + $0x370] sm:$0xff]
    %v142 = vld [vmem:[%s1 + $0x378] sm:$0xff]
    %v143 = vld [vmem:[%s1 + $0x380] sm:$0xff]
    %v144 = vld [vmem:[%s1 + $0x388] sm:$0xff]
    %v145 = vld [vmem:[%s1 + $0x390] sm:$0xff]
    %v146 = vld [vmem:[%s1 + $0x398] sm:$0xff]
    %v147 = vld [vmem:[%s1 + $0x3a0] sm:$0xff]
    %v148 = vld [vmem:[%s1 + $0x3a8] sm:$0xff]
    %v149 = vld [vmem:[%s1 + $0x3b0] sm:$0xff]
    %v150 = vld [vmem:[%s1 + $0x3b8] sm:$0xff]
    %v151 = vld [vmem:[%s1 + $0x3c0] sm:$0xff]
    %v152 = vld [vmem:[%s1 + $0x3c8] sm:$0xff]
    %v153 = vld [vmem:[%s1 + $0x3d0] sm:$0xff]
    %v154 = vld [vmem:[%s1 + $0x3d8] sm:$0xff]
    %v155 = vld [vmem:[%s1 + $0x3e0] sm:$0xff]
    %v156 = vld [vmem:[%s1 + $0x3e8] sm:$0xff]
    %v157 = vld [vmem:[%s1 + $0x3f0] sm:$0xff]
    %v158 = vld [vmem:[%s1 + $0x3f8] sm:$0xff]
    %v159 = vld [vmem:[%s1 + $0x400] sm:$0xff]
    %v160 = vld [vmem:[%s1 + $0x408] sm:$0xff]
    %v161 = vld [vmem:[%s1 + $0x410] sm:$0xff]
    %v162 = vld [vmem:[%s1 + $0x418] sm:$0xff]
    %v163 = vld [vmem:[%s1 + $0x420] sm:$0xff]
    %v164 = vld [vmem:[%s1 + $0x428] sm:$0xff]
    %v165 = vld [vmem:[%s1 + $0x430] sm:$0xff]
    %v166 = vld [vmem:[%s1 + $0x438] sm:$0xff]
    %v167 = vld [vmem:[%s1 + $0x440] sm:$0xff]
    %v168 = vld [vmem:[%s1 + $0x448] sm:$0xff]
    %v169 = vld [vmem:[%s1 + $0x450] sm:$0xff]
    %v170 = vld [vmem:[%s1 + $0x458] sm:$0xff]
    %v171 = vld [vmem:[%s1 + $0x460] sm:$0xff]
    %v172 = vld [vmem:[%s1 + $0x468] sm:$0xff]
    %v173 = vld [vmem:[%s1 + $0x470] sm:$0xff]
    %v174 = vld [vmem:[%s1 + $0x478] sm:$0xff]
    %v175 = vld [vmem:[%s1 + $0x480] sm:$0xff]
    %v176 = vld [vmem:[%s1 + $0x488] sm:$0xff]
    %v177 = vld [vmem:[%s1 + $0x490] sm:$0xff]
    %v178 = vld [vmem:[%s1 + $0x498] sm:$0xff]
    %v179 = vld [vmem:[%s1 + $0x4a0] sm:$0xff]
    %v180 = vld [vmem:[%s1 + $0x4a8] sm:$0xff]
    %v181 = vld [vmem:[%s1 + $0x4b0] sm:$0xff]
    %v182 = vld [vmem:[%s1 + $0x4b8] sm:$0xff]
    %v183 = vld [vmem:[%s1 + $0x4c0] sm:$0xff]
    %v184 = vld [vmem:[%s1 + $0x4c8] sm:$0xff]
    %v185 = vld [vmem:[%s1 + $0x4d0] sm:$0xff]
    %v186 = vld [vmem:[%s1 + $0x4d8] sm:$0xff]
    %v187 = vld [vmem:[%s1 + $0x4e0] sm:$0xff]
    %v188 = vld [vmem:[%s1 + $0x4e8] sm:$0xff]
    %v189 = vld [vmem:[%s1 + $0x4f0] sm:$0xff]
    %v190 = vld [vmem:[%s1 + $0x4f8] sm:$0xff]
    %v191 = vld [vmem:[%s1 + $0x500] sm:$0xff]
    %v192 = vld [vmem:[%s1 + $0x508] sm:$0xff]
    %v193 = vld [vmem:[%s1 + $0x510] sm:$0xff]
    %v194 = vld [vmem:[%s1 + $0x518] sm:$0xff]
    %v195 = vld [vmem:[%s1 + $0x520] sm:$0xff]
    %v196 = vld [vmem:[%s1 + $0x528] sm:$0xff]
    %v197 = vld [vmem:[%s1 + $0x530] sm:$0xff]
    %v198 = vld [vmem:[%s1 + $0x538] sm:$0xff]
    %v199 = vld [vmem:[%s1 + $0x540] sm:$0xff]
    %v200 = vld [vmem:[%s1 + $0x548] sm:$0xff]
    %v201 = vld [vmem:[%s1 + $0x550] sm:$0xff]
    %v202 = vld [vmem:[%s1 + $0x558] sm:$0xff]
    %v203 = vld [vmem:[%s1 + $0x560] sm:$0xff]
    %v204 = vld [vmem:[%s1 + $0x568] sm:$0xff]
    %v205 = vld [vmem:[%s1 + $0x570] sm:$0xff]
    %v206 = vld [vmem:[%s1 + $0x578] sm:$0xff]
    %v207 = vld [vmem:[%s1 + $0x580] sm:$0xff]
    %v208 = vld [vmem:[%s1 + $0x588] sm:$0xff]
    %v209 = vld [vmem:[%s1 + $0x590] sm:$0xff]
    %v210 = vld [vmem:[%s1 + $0x598] sm:$0xff]
    %v211 = vld [vmem:[%s1 + $0x5a0] sm:$0xff]
    %v212 = vld [vmem:[%s1 + $0x5a8] sm:$0xff]
    %v213 = vld [vmem:[%s1 + $0x5b0] sm:$0xff]
    %v214 = vld [vmem:[%s1 + $0x5b8] sm:$0xff]
    %v215 = vld [vmem:[%s1 + $0x5c0] sm:$0xff]
    %v216 = vld [vmem:[%s1 + $0x5c8] sm:$0xff]
    %v217 = vld [vmem:[%s1 + $0x5d0] sm:$0xff]
    %v218 = vld [vmem:[%s1 + $0x5d8] sm:$0xff]
    %v219 = vld [vmem:[%s1 + $0x5e0] sm:$0xff]
    %v220 = vld [vmem:[%s1 + $0x5e8] sm:$0xff]
    %v221 = vld [vmem:[%s1 + $0x5f0] sm:$0xff]
    %v222 = vld [vmem:[%s1 + $0x5f8] sm:$0xff]
    %v223 = vld [vmem:[%s1 + $0x600] sm:$0xff]
    %v224 = vld [vmem:[%s1 + $0x608] sm:$0xff]
    %v225 = vld [vmem:[%s1 + $0x610] sm:$0xff]
    %v226 = vld [vmem:[%s1 + $0x618] sm:$0xff]
    %v227 = vld [vmem:[%s1 + $0x620] sm:$0xff]
    %v228 = vld [vmem:[%s1 + $0x628] sm:$0xff]
    %v229 = vld [vmem:[%s1 + $0x630] sm:$0xff]
    %v230 = vld [vmem:[%s1 + $0x638] sm:$0xff]
    %v231 = vld [vmem:[%s1 + $0x640] sm:$0xff]
    %v232 = vld [vmem:[%s1 + $0x648] sm:$0xff]
    %v233 = vld [vmem:[%s1 + $0x650] sm:$0xff]
    %v234 = vld [vmem:[%s1 + $0x658] sm:$0xff]
    %v235 = vld [vmem:[%s1 + $0x660] sm:$0xff]
    %v236 = vld [vmem:[%s1 + $0x668] sm:$0xff]
    %v237 = vld [vmem:[%s1 + $0x670] sm:$0xff]
    %v238 = vld [vmem:[%s1 + $0x678] sm:$0xff]
    %v239 = vld [vmem:[%s1 + $0x680] sm:$0xff]
    %v240 = vld [vmem:[%s1 + $0x688] sm:$0xff]
    %v241 = vld [vmem:[%s1 + $0x690] sm:$0xff]
    %v242 = vld [vmem:[%s1 + $0x698] sm:$0xff]
    %v243 = vld [vmem:[%s1 + $0x6a0] sm:$0xff]
    %v244 = vld [vmem:[%s1 + $0x6a8] sm:$0xff]
    %v245 = vld [vmem:[%s1 + $0x6b0] sm:$0xff]
    %v246 = vld [vmem:[%s1 + $0x6b8] sm:$0xff]
    %v247 = vld [vmem:[%s1 + $0x6c0] sm:$0xff]
    %v248 = vld [vmem:[%s1 + $0x6c8] sm:$0xff]
    %v249 = vld [vmem:[%s1 + $0x6d0] sm:$0xff]
    %v250 = vld [vmem:[%s1 + $0x6d8] sm:$0xff]
    %v251 = vld [vmem:[%s1 + $0x6e0] sm:$0xff]
    %v252 = vld [vmem:[%s1 + $0x6e8] sm:$0xff]
    %v253 = vld [vmem:[%s1 + $0x6f0] sm:$0xff]
    %v254 = vld [vmem:[%s1 + $0x6f8] sm:$0xff]
    %v255 = vld [vmem:[%s1 + $0x700] sm:$0xff]
    %v256 = vld [vmem:[%s1 + $0x708] sm:$0xff]
    %v257 = vld [vmem:[%s1 + $0x710] sm:$0xff]
    %v258 = vld [vmem:[%s1 + $0x718] sm:$0xff]
    %v259 = vld [vmem:[%s1 + $0x720] sm:$0xff]
    %v260 = vld [vmem:[%s1 + $0x728] sm:$0xff]
    %v261 = vld [vmem:[%s1 + $0x730] sm:$0xff]
    %v262 = vld [vmem:[%s1 + $0x738] sm:$0xff]
    %v263 = vld [vmem:[%s1 + $0x740] sm:$0xff]
    %v264 = vld [vmem:[%s1 + $0x748] sm:$0xff]
    %v265 = vld [vmem:[%s1 + $0x750] sm:$0xff]
    %v266 = vld [vmem:[%s1 + $0x758] sm:$0xff]
    %v267 = vld [vmem:[%s1 + $0x760] sm:$0xff]
    %v268 = vld [vmem:[%s1 + $0x768] sm:$0xff]
    %v269 = vld [vmem:[%s1 + $0x770] sm:$0xff]
    %v270 = vld [vmem:[%s1 + $0x778] sm:$0xff]
    %v271 = vld [vmem:[%s1 + $0x780] sm:$0xff]
    %v272 = vld [vmem:[%s1 + $0x788] sm:$0xff]
    %v273 = vld [vmem:[%s1 + $0x790] sm:$0xff]
    %v274 = vld [vmem:[%s1 + $0x798] sm:$0xff]
    %v275 = vld [vmem:[%s1 + $0x7a0] sm:$0xff]
    %v276 = vld [vmem:[%s1 + $0x7a8] sm:$0xff]
    %v277 = vld [vmem:[%s1 + $0x7b0] sm:$0xff]
    %v278 = vld [vmem:[%s1 + $0x7b8] sm:$0xff]
    %v279 = vld [vmem:[%s1 + $0x7c0] sm:$0xff]
    %v280 = vld [vmem:[%s1 + $0x7c8] sm:$0xff]
    %v281 = vld [vmem:[%s1 + $0x7d0] sm:$0xff]
    %v282 = vld [vmem:[%s1 + $0x7d8] sm:$0xff]
    %v283 = vld [vmem:[%s1 + $0x7e0] sm:$0xff]
    %v284 = vld [vmem:[%s1 + $0x7e8] sm:$0xff]
    %v285 = vld [vmem:[%s1 + $0x7f0] sm:$0xff]
    %v286 = vld [vmem:[%s1 + $0x7f8] sm:$0xff]
    %v287 = vld [vmem:[%s1 + $0x800] sm:$0xff]
    %v288 = vld [vmem:[%s1 + $0x808] sm:$0xff]
    %v289 = vld [vmem:[%s1 + $0x810] sm:$0xff]
    %v290 = vld [vmem:[%s1 + $0x818] sm:$0xff]
    %v291 = vld [vmem:[%s1 + $0x820] sm:$0xff]
    %v292 = vld [vmem:[%s1 + $0x828] sm:$0xff]
    %v293 = vld [vmem:[%s1 + $0x830] sm:$0xff]
    %v294 = vld [vmem:[%s1 + $0x838] sm:$0xff]
    %v295 = vld [vmem:[%s1 + $0x840] sm:$0xff]
    %v296 = vld [vmem:[%s1 + $0x848] sm:$0xff]
    %v297 = vld [vmem:[%s1 + $0x850] sm:$0xff]
    %v298 = vld [vmem:[%s1 + $0x858] sm:$0xff]
    %v299 = vld [vmem:[%s1 + $0x860] sm:$0xff]
    %v300 = vld [vmem:[%s1 + $0x868] sm:$0xff]
    %v301 = vld [vmem:[%s1 + $0x870] sm:$0xff]
    %v302 = vld [vmem:[%s1 + $0x878] sm:$0xff]
    %v303 = vld [vmem:[%s1 + $0x880] sm:$0xff]
    %v304 = vld [vmem:[%s1 + $0x888] sm:$0xff]
    %v305 = vld [vmem:[%s1 + $0x890] sm:$0xff]
    %v306 = vld [vmem:[%s1 + $0x898] sm:$0xff]
    %v307 = vld [vmem:[%s1 + $0x8a0] sm:$0xff]
    %v308 = vld [vmem:[%s1 + $0x8a8] sm:$0xff]
    %v309 = vld [vmem:[%s1 + $0x8b0] sm:$0xff]
    %v310 = vld [vmem:[%s1 + $0x8b8] sm:$0xff]
    %v311 = vld [vmem:[%s1 + $0x8c0] sm:$0xff]
    %v312 = vld [vmem:[%s1 + $0x8c8] sm:$0xff]
    %v313 = vld [vmem:[%s1 + $0x8d0] sm:$0xff]
    %v314 = vld [vmem:[%s1 + $0x8d8] sm:$0xff]
    %v315 = vld [vmem:[%s1 + $0x8e0] sm:$0xff]
    %v316 = vld [vmem:[%s1 + $0x8e8] sm:$0xff]
    %v317 = vld [vmem:[%s1 + $0x8f0] sm:$0xff]
    %v318 = vld [vmem:[%s1 + $0x8f8] sm:$0xff]
    %v319 = vld [vmem:[%s1 + $0x900] sm:$0xff]
    %v320 = vld [vmem:[%s1 + $0x908] sm:$0xff]
    %v321 = vld [vmem:[%s1 + $0x910] sm:$0xff]
    %v322 = vld [vmem:[%s1 + $0x918] sm:$0xff]
    %v323 = vld [vmem:[%s1 + $0x920] sm:$0xff]
    %v324 = vld [vmem:[%s1 + $0x928] sm:$0xff]
    %v325 = vld [vmem:[%s1 + $0x930] sm:$0xff]
    %v326 = vld [vmem:[%s1 + $0x938] sm:$0xff]
    %v327 = vld [vmem:[%s1 + $0x940] sm:$0xff]
    %v328 = vld [vmem:[%s1 + $0x948] sm:$0xff]
    %v329 = vld [vmem:[%s1 + $0x950] sm:$0xff]
    %v330 = vld [vmem:[%s1 + $0x958] sm:$0xff]
    %v331 = vld [vmem:[%s1 + $0x960] sm:$0xff]
    %v332 = vld [vmem:[%s1 + $0x968] sm:$0xff]
    %v333 = vld [vmem:[%s1 + $0x970] sm:$0xff]
    %v334 = vld [vmem:[%s1 + $0x978] sm:$0xff]
    %v335 = vld [vmem:[%s1 + $0x980] sm:$0xff]
    %v336 = vld [vmem:[%s1 + $0x988] sm:$0xff]
    %v337 = vld [vmem:[%s1 + $0x990] sm:$0xff]
    %v338 = vld [vmem:[%s1 + $0x998] sm:$0xff]
    %v339 = vld [vmem:[%s1 + $0x9a0] sm:$0xff]
    %v340 = vld [vmem:[%s1 + $0x9a8] sm:$0xff]
    %v341 = vld [vmem:[%s1 + $0x9b0] sm:$0xff]
    %v342 = vld [vmem:[%s1 + $0x9b8] sm:$0xff]
    %v343 = vld [vmem:[%s1 + $0x9c0] sm:$0xff]
    %v344 = vld [vmem:[%s1 + $0x9c8] sm:$0xff]
    %v345 = vld [vmem:[%s1 + $0x9d0] sm:$0xff]
    %v346 = vld [vmem:[%s1 + $0x9d8] sm:$0xff]
    %v347 = vld [vmem:[%s1 + $0x9e0] sm:$0xff]
    %v348 = vld [vmem:[%s1 + $0x9e8] sm:$0xff]
    %v349 = vld [vmem:[%s1 + $0x9f0] sm:$0xff]
    %v350 = vld [vmem:[%s1 + $0x9f8] sm:$0xff]
    %v351 = vld [vmem:[%s1 + $0xa00] sm:$0xff]
    %v352 = vld [vmem:[%s1 + $0xa08] sm:$0xff]
    %v353 = vld [vmem:[%s1 + $0xa10] sm:$0xff]
    %v354 = vld [vmem:[%s1 + $0xa18] sm:$0xff]
    %v355 = vld [vmem:[%s1 + $0xa20] sm:$0xff]
    %v356 = vld [vmem:[%s1 + $0xa28] sm:$0xff]
    %v357 = vld [vmem:[%s1 + $0xa30] sm:$0xff]
    %v358 = vld [vmem:[%s1 + $0xa38] sm:$0xff]
    %v359 = vld [vmem:[%s1 + $0xa40] sm:$0xff]
    %v360 = vld [vmem:[%s1 + $0xa48] sm:$0xff]
    %v361 = vld [vmem:[%s1 + $0xa50] sm:$0xff]
    %v362 = vld [vmem:[%s1 + $0xa58] sm:$0xff]
    %v363 = vld [vmem:[%s1 + $0xa60] sm:$0xff]
    %v364 = vld [vmem:[%s1 + $0xa68] sm:$0xff]
    %v365 = vld [vmem:[%s1 + $0xa70] sm:$0xff]
    %v366 = vld [vmem:[%s1 + $0xa78] sm:$0xff]
    %v367 = vld [vmem:[%s1 + $0xa80] sm:$0xff]
    %v368 = vld [vmem:[%s1 + $0xa88] sm:$0xff]
    %v369 = vld [vmem:[%s1 + $0xa90] sm:$0xff]
    %v370 = vld [vmem:[%s1 + $0xa98] sm:$0xff]
    %v371 = vld [vmem:[%s1 + $0xaa0] sm:$0xff]
    %v372 = vld [vmem:[%s1 + $0xaa8] sm:$0xff]
    %v373 = vld [vmem:[%s1 + $0xab0] sm:$0xff]
    %v374 = vld [vmem:[%s1 + $0xab8] sm:$0xff]
    %v375 = vld [vmem:[%s1 + $0xac0] sm:$0xff]
    %v376 = vld [vmem:[%s1 + $0xac8] sm:$0xff]
    %v377 = vld [vmem:[%s1 + $0xad0] sm:$0xff]
    %v378 = vld [vmem:[%s1 + $0xad8] sm:$0xff]
    %v379 = vld [vmem:[%s1 + $0xae0] sm:$0xff]
    %v380 = vld [vmem:[%s1 + $0xae8] sm:$0xff]
    %v381 = vld [vmem:[%s1 + $0xaf0] sm:$0xff]
    %v382 = vld [vmem:[%s1 + $0xaf8] sm:$0xff]
    %v383 = vld [vmem:[%s1 + $0xb00] sm:$0xff]
    %v384 = vld [vmem:[%s1 + $0xb08] sm:$0xff]
    %v385 = vld [vmem:[%s1 + $0xb10] sm:$0xff]
    %v386 = vld [vmem:[%s1 + $0xb18] sm:$0xff]
    %v387 = vld [vmem:[%s1 + $0xb20] sm:$0xff]
    %v388 = vld [vmem:[%s1 + $0xb28] sm:$0xff]
    %v389 = vld [vmem:[%s1 + $0xb30] sm:$0xff]
    %v390 = vld [vmem:[%s1 + $0xb38] sm:$0xff]
    %v391 = vld [vmem:[%s1 + $0xb40] sm:$0xff]
    %v392 = vld [vmem:[%s1 + $0xb48] sm:$0xff]
    %v393 = vld [vmem:[%s1 + $0xb50] sm:$0xff]
    %v394 = vld [vmem:[%s1 + $0xb58] sm:$0xff]
    %v395 = vld [vmem:[%s1 + $0xb60] sm:$0xff]
    %v396 = vld [vmem:[%s1 + $0xb68] sm:$0xff]
    %v397 = vld [vmem:[%s1 + $0xb70] sm:$0xff]
    %v398 = vld [vmem:[%s1 + $0xb78] sm:$0xff]
    %v399 = vld [vmem:[%s1 + $0xb80] sm:$0xff]
    %v400 = vld [vmem:[%s1 + $0xb88] sm:$0xff]
    %v401 = vld [vmem:[%s1 + $0xb90] sm:$0xff]
    %v402 = vld [vmem:[%s1 + $0xb98] sm:$0xff]
    %v403 = vld [vmem:[%s1 + $0xba0] sm:$0xff]
    %v404 = vld [vmem:[%s1 + $0xba8] sm:$0xff]
    %v405 = vld [vmem:[%s1 + $0xbb0] sm:$0xff]
    %v406 = vld [vmem:[%s1 + $0xbb8] sm:$0xff]
    %v407 = vld [vmem:[%s1 + $0xbc0] sm:$0xff]
    %v408 = vld [vmem:[%s1 + $0xbc8] sm:$0xff]
    %v409 = vld [vmem:[%s1 + $0xbd0] sm:$0xff]
    %v410 = vld [vmem:[%s1 + $0xbd8] sm:$0xff]
    %v411 = vld [vmem:[%s1 + $0xbe0] sm:$0xff]
    %v412 = vld [vmem:[%s1 + $0xbe8] sm:$0xff]
    %v413 = vld [vmem:[%s1 + $0xbf0] sm:$0xff]
    %v414 = vld [vmem:[%s1 + $0xbf8] sm:$0xff]
    %v415 = vld [vmem:[%s1 + $0xc00] sm:$0xff]
    %v416 = vld [vmem:[%s1 + $0xc08] sm:$0xff]
    %v417 = vld [vmem:[%s1 + $0xc10] sm:$0xff]
    %v418 = vld [vmem:[%s1 + $0xc18] sm:$0xff]
    %v419 = vld [vmem:[%s1 + $0xc20] sm:$0xff]
    %v420 = vld [vmem:[%s1 + $0xc28] sm:$0xff]
    %v421 = vld [vmem:[%s1 + $0xc30] sm:$0xff]
    %v422 = vld [vmem:[%s1 + $0xc38] sm:$0xff]
    %v423 = vld [vmem:[%s1 + $0xc40] sm:$0xff]
    %v424 = vld [vmem:[%s1 + $0xc48] sm:$0xff]
    %v425 = vld [vmem:[%s1 + $0xc50] sm:$0xff]
    %v426 = vld [vmem:[%s1 + $0xc58] sm:$0xff]
    %v427 = vld [vmem:[%s1 + $0xc60] sm:$0xff]
    %v428 = vld [vmem:[%s1 + $0xc68] sm:$0xff]
    %v429 = vld [vmem:[%s1 + $0xc70] sm:$0xff]
    %v430 = vld [vmem:[%s1 + $0xc78] sm:$0xff]
    %v431 = vld [vmem:[%s1 + $0xc80] sm:$0xff]
    %v432 = vld [vmem:[%s1 + $0xc88] sm:$0xff]
    %v433 = vld [vmem:[%s1 + $0xc90] sm:$0xff]
    %v434 = vld [vmem:[%s1 + $0xc98] sm:$0xff]
    %v435 = vld [vmem:[%s1 + $0xca0] sm:$0xff]
    %v436 = vld [vmem:[%s1 + $0xca8] sm:$0xff]
    %v437 = vld [vmem:[%s1 + $0xcb0] sm:$0xff]
    %v438 = vld [vmem:[%s1 + $0xcb8] sm:$0xff]
    %v439 = vld [vmem:[%s1 + $0xcc0] sm:$0xff]
    %v440 = vld [vmem:[%s1 + $0xcc8] sm:$0xff]
    %v441 = vld [vmem:[%s1 + $0xcd0] sm:$0xff]
    %v442 = vld [vmem:[%s1 + $0xcd8] sm:$0xff]
    %v443 = vld [vmem:[%s1 + $0xce0] sm:$0xff]
    %v444 = vld [vmem:[%s1 + $0xce8] sm:$0xff]
    %v445 = vld [vmem:[%s1 + $0xcf0] sm:$0xff]
    %v446 = vld [vmem:[%s1 + $0xcf8] sm:$0xff]
    %v447 = vld [vmem:[%s1 + $0xd00] sm:$0xff]
    %v448 = vld [vmem:[%s1 + $0xd08] sm:$0xff]
    %v449 = vld [vmem:[%s1 + $0xd10] sm:$0xff]
    %v450 = vld [vmem:[%s1 + $0xd18] sm:$0xff]
    %v451 = vld [vmem:[%s1 + $0xd20] sm:$0xff]
    %v452 = vld [vmem:[%s1 + $0xd28] sm:$0xff]
    %v453 = vld [vmem:[%s1 + $0xd30] sm:$0xff]
    %v454 = vld [vmem:[%s1 + $0xd38] sm:$0xff]
    %v455 = vld [vmem:[%s1 + $0xd40] sm:$0xff]
    %v456 = vld [vmem:[%s1 + $0xd48] sm:$0xff]
    %v457 = vld [vmem:[%s1 + $0xd50] sm:$0xff]
    %v458 = vld [vmem:[%s1 + $0xd58] sm:$0xff]
    %v459 = vld [vmem:[%s1 + $0xd60] sm:$0xff]
    %v460 = vld [vmem:[%s1 + $0xd68] sm:$0xff]
    %v461 = vld [vmem:[%s1 + $0xd70] sm:$0xff]
    %v462 = vld [vmem:[%s1 + $0xd78] sm:$0xff]
    %v463 = vld [vmem:[%s1 + $0xd80] sm:$0xff]
    %v464 = vld [vmem:[%s1 + $0xd88] sm:$0xff]
    %v465 = vld [vmem:[%s1 + $0xd90] sm:$0xff]
    %v466 = vld [vmem:[%s1 + $0xd98] sm:$0xff]
    %v467 = vld [vmem:[%s1 + $0xda0] sm:$0xff]
    %v468 = vld [vmem:[%s1 + $0xda8] sm:$0xff]
    %v469 = vld [vmem:[%s1 + $0xdb0] sm:$0xff]
    %v470 = vld [vmem:[%s1 + $0xdb8] sm:$0xff]
    %v471 = vld [vmem:[%s1 + $0xdc0] sm:$0xff]
    %v472 = vld [vmem:[%s1 + $0xdc8] sm:$0xff]
    %v473 = vld [vmem:[%s1 + $0xdd0] sm:$0xff]
    %v474 = vld [vmem:[%s1 + $0xdd8] sm:$0xff]
    %v475 = vld [vmem:[%s1 + $0xde0] sm:$0xff]
    %v476 = vld [vmem:[%s1 + $0xde8] sm:$0xff]
    %v477 = vld [vmem:[%s1 + $0xdf0] sm:$0xff]
    %v478 = vld [vmem:[%s1 + $0xdf8] sm:$0xff]
    %v479 = vld [vmem:[%s1 + $0xe00] sm:$0xff]
    %v480 = vld [vmem:[%s1 + $0xe08] sm:$0xff]
    %v481 = vld [vmem:[%s1 + $0xe10] sm:$0xff]
    %v482 = vld [vmem:[%s1 + $0xe18] sm:$0xff]
    %v483 = vld [vmem:[%s1 + $0xe20] sm:$0xff]
    %v484 = vld [vmem:[%s1 + $0xe28] sm:$0xff]
    %v485 = vld [vmem:[%s1 + $0xe30] sm:$0xff]
    %v486 = vld [vmem:[%s1 + $0xe38] sm:$0xff]
    %v487 = vld [vmem:[%s1 + $0xe40] sm:$0xff]
    %v488 = vld [vmem:[%s1 + $0xe48] sm:$0xff]
    %v489 = vld [vmem:[%s1 + $0xe50] sm:$0xff]
    %v490 = vld [vmem:[%s1 + $0xe58] sm:$0xff]
    %v491 = vld [vmem:[%s1 + $0xe60] sm:$0xff]
    %v492 = vld [vmem:[%s1 + $0xe68] sm:$0xff]
    %v493 = vld [vmem:[%s1 + $0xe70] sm:$0xff]
    %v494 = vld [vmem:[%s1 + $0xe78] sm:$0xff]
    %v495 = vld [vmem:[%s1 + $0xe80] sm:$0xff]
    %v496 = vld [vmem:[%s1 + $0xe88] sm:$0xff]
    %v497 = vld [vmem:[%s1 + $0xe90] sm:$0xff]
    %v498 = vld [vmem:[%s1 + $0xe98] sm:$0xff]
    %v499 = vld [vmem:[%s1 + $0xea0] sm:$0xff]
    %v500 = vld [vmem:[%s1 + $0xea8] sm:$0xff]
    %v501 = vld [vmem:[%s1 + $0xeb0] sm:$0xff]
    %v502 = vld [vmem:[%s1 + $0xeb8] sm:$0xff]
    %v503 = vld [vmem:[%s1 + $0xec0] sm:$0xff]
    %v504 = vld [vmem:[%s1 + $0xec8] sm:$0xff]
    %v505 = vld [vmem:[%s1 + $0xed0] sm:$0xff]
    %v506 = vld [vmem:[%s1 + $0xed8] sm:$0xff]
    %v507 = vld [vmem:[%s1 + $0xee0] sm:$0xff]
    %v508 = vld [vmem:[%s1 + $0xee8] sm:$0xff]
    %v509 = vld [vmem:[%s1 + $0xef0] sm:$0xff]
    %v510 = vld [vmem:[%s1 + $0xef8] sm:$0xff]
    %v511 = vld [vmem:[%s1 + $0xf00] sm:$0xff]
    %v512 = vld [vmem:[%s1 + $0xf08] sm:$0xff]
    %v513 = vld [vmem:[%s1 + $0xf10] sm:$0xff]
    %v514 = vld [vmem:[%s1 + $0xf18] sm:$0xff]
    %v515 = vld [vmem:[%s1 + $0xf20] sm:$0xff]
    %v516 = vld [vmem:[%s1 + $0xf28] sm:$0xff]
    %v517 = vld [vmem:[%s1 + $0xf30] sm:$0xff]
    %v518 = vld [vmem:[%s1 + $0xf38] sm:$0xff]
    %v519 = vld [vmem:[%s1 + $0xf40] sm:$0xff]
    %v520 = vld [vmem:[%s1 + $0xf48] sm:$0xff]
    %v521 = vld [vmem:[%s1 + $0xf50] sm:$0xff]
    %v522 = vld [vmem:[%s1 + $0xf58] sm:$0xff]
    %v523 = vld [vmem:[%s1 + $0xf60] sm:$0xff]
    %v524 = vld [vmem:[%s1 + $0xf68] sm:$0xff]
    %v525 = vld [vmem:[%s1 + $0xf70] sm:$0xff]
    %v526 = vld [vmem:[%s1 + $0xf78] sm:$0xff]
    %v527 = vld [vmem:[%s1 + $0xf80] sm:$0xff]
    %v528 = vld [vmem:[%s1 + $0xf88] sm:$0xff]
    %v529 = vld [vmem:[%s1 + $0xf90] sm:$0xff]
    %v530 = vld [vmem:[%s1 + $0xf98] sm:$0xff]
    %v531 = vld [vmem:[%s1 + $0xfa0] sm:$0xff]
    %v532 = vld [vmem:[%s1 + $0xfa8] sm:$0xff]
    %v533 = vld [vmem:[%s1 + $0xfb0] sm:$0xff]
    %v534 = vld [vmem:[%s1 + $0xfb8] sm:$0xff]
    %v535 = vld [vmem:[%s1 + $0xfc0] sm:$0xff]
    %v536 = vld [vmem:[%s1 + $0xfc8] sm:$0xff]
    %v537 = vld [vmem:[%s1 + $0xfd0] sm:$0xff]
    %v538 = vld [vmem:[%s1 + $0xfd8] sm:$0xff]
    %v539 = vld [vmem:[%s1 + $0xfe0] sm:$0xff]
    %v540 = vld [vmem:[%s1 + $0xfe8] sm:$0xff]
    %v541 = vld [vmem:[%s1 + $0xff0] sm:$0xff]
    %v542 = vld [vmem:[%s1 + $0xff8] sm:$0xff]
    %v543 = vld [vmem:[%s1 + $0x1000] sm:$0xff]
    %v544 = vld [vmem:[%s1 + $0x1008] sm:$0xff]
    %v545 = vld [vmem:[%s1 + $0x1010] sm:$0xff]
    %v546 = vld [vmem:[%s1 + $0x1018] sm:$0xff]
    %v547 = vld [vmem:[%s1 + $0x1020] sm:$0xff]
    %v548 = vld [vmem:[%s1 + $0x1028] sm:$0xff]
    %v549 = vld [vmem:[%s1 + $0x1030] sm:$0xff]
    %v550 = vld [vmem:[%s1 + $0x1038] sm:$0xff]
    %v551 = vld [vmem:[%s1 + $0x1040] sm:$0xff]
    %v552 = vld [vmem:[%s1 + $0x1048] sm:$0xff]
    %v553 = vld [vmem:[%s1 + $0x1050] sm:$0xff]
    %v554 = vld [vmem:[%s1 + $0x1058] sm:$0xff]
    %v555 = vld [vmem:[%s1 + $0x1060] sm:$0xff]
    %v556 = vld [vmem:[%s1 + $0x1068] sm:$0xff]
    %v557 = vld [vmem:[%s1 + $0x1070] sm:$0xff]
    %v558 = vld [vmem:[%s1 + $0x1078] sm:$0xff]
    %v559 = vld [vmem:[%s1 + $0x1080] sm:$0xff]
    %v560 = vld [vmem:[%s1 + $0x1088] sm:$0xff]
    %v561 = vld [vmem:[%s1 + $0x1090] sm:$0xff]
    %v562 = vld [vmem:[%s1 + $0x1098] sm:$0xff]
    %v563 = vld [vmem:[%s1 + $0x10a0] sm:$0xff]
    %v564 = vld [vmem:[%s1 + $0x10a8] sm:$0xff]
    %v565 = vld [vmem:[%s1 + $0x10b0] sm:$0xff]
    %v566 = vld [vmem:[%s1 + $0x10b8] sm:$0xff]
    %v567 = vld [vmem:[%s1 + $0x10c0] sm:$0xff]
    %v568 = vld [vmem:[%s1 + $0x10c8] sm:$0xff]
    %v569 = vld [vmem:[%s1 + $0x10d0] sm:$0xff]
    %v570 = vld [vmem:[%s1 + $0x10d8] sm:$0xff]
    %v571 = vld [vmem:[%s1 + $0x10e0] sm:$0xff]
    %v572 = vld [vmem:[%s1 + $0x10e8] sm:$0xff]
    %v573 = vld [vmem:[%s1 + $0x10f0] sm:$0xff]
    %v574 = vld [vmem:[%s1 + $0x10f8] sm:$0xff]
    %v575 = vld [vmem:[%s1 + $0x1100] sm:$0xff]
    %v576 = vld [vmem:[%s1 + $0x1108] sm:$0xff]
    %v577 = vld [vmem:[%s1 + $0x1110] sm:$0xff]
    %v578 = vld [vmem:[%s1 + $0x1118] sm:$0xff]
    %v579 = vld [vmem:[%s1 + $0x1120] sm:$0xff]
    %v580 = vld [vmem:[%s1 + $0x1128] sm:$0xff]
    %v581 = vld [vmem:[%s1 + $0x1130] sm:$0xff]
    %v582 = vld [vmem:[%s1 + $0x1138] sm:$0xff]
    %v583 = vld [vmem:[%s1 + $0x1140] sm:$0xff]
    %v584 = vld [vmem:[%s1 + $0x1148] sm:$0xff]
    %v585 = vld [vmem:[%s1 + $0x1150] sm:$0xff]
    %v586 = vld [vmem:[%s1 + $0x1158] sm:$0xff]
    %v587 = vld [vmem:[%s1 + $0x1160] sm:$0xff]
    %v588 = vld [vmem:[%s1 + $0x1168] sm:$0xff]
    %v589 = vld [vmem:[%s1 + $0x1170] sm:$0xff]
    %v590 = vld [vmem:[%s1 + $0x1178] sm:$0xff]
    %v591 = vld [vmem:[%s1 + $0x1180] sm:$0xff]
    %v592 = vld [vmem:[%s1 + $0x1188] sm:$0xff]
    %v593 = vld [vmem:[%s1 + $0x1190] sm:$0xff]
    %v594 = vld [vmem:[%s1 + $0x1198] sm:$0xff]
    %v595 = vld [vmem:[%s1 + $0x11a0] sm:$0xff]
    %v596 = vld [vmem:[%s1 + $0x11a8] sm:$0xff]
    %v597 = vld [vmem:[%s1 + $0x11b0] sm:$0xff]
    %v598 = vld [vmem:[%s1 + $0x11b8] sm:$0xff]
    %v599 = vld [vmem:[%s1 + $0x11c0] sm:$0xff]
    %v600 = vld [vmem:[%s1 + $0x11c8] sm:$0xff]
    %v601 = vld [vmem:[%s1 + $0x11d0] sm:$0xff]
    %v602 = vld [vmem:[%s1 + $0x11d8] sm:$0xff]
    %v603 = vld [vmem:[%s1 + $0x11e0] sm:$0xff]
    %v604 = vld [vmem:[%s1 + $0x11e8] sm:$0xff]
    %v605 = vld [vmem:[%s1 + $0x11f0] sm:$0xff]
    %v606 = vld [vmem:[%s1 + $0x11f8] sm:$0xff]
    %v607 = vld [vmem:[%s1 + $0x1200] sm:$0xff]
    %v608 = vld [vmem:[%s1 + $0x1208] sm:$0xff]
    %v609 = vld [vmem:[%s1 + $0x1210] sm:$0xff]
    %v610 = vld [vmem:[%s1 + $0x1218] sm:$0xff]
    %v611 = vld [vmem:[%s1 + $0x1220] sm:$0xff]
    %v612 = vld [vmem:[%s1 + $0x1228] sm:$0xff]
    %v613 = vld [vmem:[%s1 + $0x1230] sm:$0xff]
    %v614 = vld [vmem:[%s1 + $0x1238] sm:$0xff]
    %v615 = vld [vmem:[%s1 + $0x1240] sm:$0xff]
    %v616 = vld [vmem:[%s1 + $0x1248] sm:$0xff]
    %v617 = vld [vmem:[%s1 + $0x1250] sm:$0xff]
    %v618 = vld [vmem:[%s1 + $0x1258] sm:$0xff]
    %v619 = vld [vmem:[%s1 + $0x1260] sm:$0xff]
    %v620 = vld [vmem:[%s1 + $0x1268] sm:$0xff]
    %v621 = vld [vmem:[%s1 + $0x1270] sm:$0xff]
    %v622 = vld [vmem:[%s1 + $0x1278] sm:$0xff]
    %v623 = vld [vmem:[%s1 + $0x1280] sm:$0xff]
    %v624 = vld [vmem:[%s1 + $0x1288] sm:$0xff]
    %v625 = vld [vmem:[%s1 + $0x1290] sm:$0xff]
    %v626 = vld [vmem:[%s1 + $0x1298] sm:$0xff]
    %v627 = vld [vmem:[%s1 + $0x12a0] sm:$0xff]
    %v628 = vld [vmem:[%s1 + $0x12a8] sm:$0xff]
    %v629 = vld [vmem:[%s1 + $0x12b0] sm:$0xff]
    %v630 = vld [vmem:[%s1 + $0x12b8] sm:$0xff]
    %v631 = vld [vmem:[%s1 + $0x12c0] sm:$0xff]
    %v632 = vld [vmem:[%s1 + $0x12c8] sm:$0xff]
    %v633 = vld [vmem:[%s1 + $0x12d0] sm:$0xff]
    %v634 = vld [vmem:[%s1 + $0x12d8] sm:$0xff]
    %v635 = vld [vmem:[%s1 + $0x12e0] sm:$0xff]
    %v636 = vld [vmem:[%s1 + $0x12e8] sm:$0xff]
    %v637 = vld [vmem:[%s1 + $0x12f0] sm:$0xff]
    %v638 = vld [vmem:[%s1 + $0x12f8] sm:$0xff]
    %v639 = vld [vmem:[%s1 + $0x1300] sm:$0xff]
    %v640 = vld [vmem:[%s1 + $0x1308] sm:$0xff]
    %v641 = vld [vmem:[%s1 + $0x1310] sm:$0xff]
    %v642 = vld [vmem:[%s1 + $0x1318] sm:$0xff]
    %v643 = vld [vmem:[%s1 + $0x1320] sm:$0xff]
    %v644 = vld [vmem:[%s1 + $0x1328] sm:$0xff]
    %v645 = vld [vmem:[%s1 + $0x1330] sm:$0xff]
    %v646 = vld [vmem:[%s1 + $0x1338] sm:$0xff]
    %v647 = vld [vmem:[%s1 + $0x1340] sm:$0xff]
    %v648 = vld [vmem:[%s1 + $0x1348] sm:$0xff]
    %v649 = vld [vmem:[%s1 + $0x1350] sm:$0xff]
    %v650 = vld [vmem:[%s1 + $0x1358] sm:$0xff]
    %v651 = vld [vmem:[%s1 + $0x1360] sm:$0xff]
    %v652 = vld [vmem:[%s1 + $0x1368] sm:$0xff]
    %v653 = vld [vmem:[%s1 + $0x1370] sm:$0xff]
    %v654 = vld [vmem:[%s1 + $0x1378] sm:$0xff]
    %v655 = vld [vmem:[%s1 + $0x1380] sm:$0xff]
    %v656 = vld [vmem:[%s1 + $0x1388] sm:$0xff]
    %v657 = vld [vmem:[%s1 + $0x1390] sm:$0xff]
    %v658 = vld [vmem:[%s1 + $0x1398] sm:$0xff]
    %v659 = vld [vmem:[%s1 + $0x13a0] sm:$0xff]
    %v660 = vld [vmem:[%s1 + $0x13a8] sm:$0xff]
    %v661 = vld [vmem:[%s1 + $0x13b0] sm:$0xff]
    %v662 = vld [vmem:[%s1 + $0x13b8] sm:$0xff]
    %v663 = vld [vmem:[%s1 + $0x13c0] sm:$0xff]
    %v664 = vld [vmem:[%s1 + $0x13c8] sm:$0xff]
    %v665 = vld [vmem:[%s1 + $0x13d0] sm:$0xff]
    %v666 = vld [vmem:[%s1 + $0x13d8] sm:$0xff]
    %v667 = vld [vmem:[%s1 + $0x13e0] sm:$0xff]
    %v668 = vld [vmem:[%s1 + $0x13e8] sm:$0xff]
    %v669 = vld [vmem:[%s1 + $0x13f0] sm:$0xff]
    %v670 = vld [vmem:[%s1 + $0x13f8] sm:$0xff]
    %v671 = vld [vmem:[%s1 + $0x1400] sm:$0xff]
    %v672 = vld [vmem:[%s1 + $0x1408] sm:$0xff]
    %v673 = vld [vmem:[%s1 + $0x1410] sm:$0xff]
    %v674 = vld [vmem:[%s1 + $0x1418] sm:$0xff]
    %v675 = vld [vmem:[%s1 + $0x1420] sm:$0xff]
    %v676 = vld [vmem:[%s1 + $0x1428] sm:$0xff]
    %v677 = vld [vmem:[%s1 + $0x1430] sm:$0xff]
    %v678 = vld [vmem:[%s1 + $0x1438] sm:$0xff]
    %v679 = vld [vmem:[%s1 + $0x1440] sm:$0xff]
    %v680 = vld [vmem:[%s1 + $0x1448] sm:$0xff]
    %v681 = vld [vmem:[%s1 + $0x1450] sm:$0xff]
    %v682 = vld [vmem:[%s1 + $0x1458] sm:$0xff]
    %v683 = vld [vmem:[%s1 + $0x1460] sm:$0xff]
    %v684 = vld [vmem:[%s1 + $0x1468] sm:$0xff]
    %v685 = vld [vmem:[%s1 + $0x1470] sm:$0xff]
    %v686 = vld [vmem:[%s1 + $0x1478] sm:$0xff]
    %v687 = vld [vmem:[%s1 + $0x1480] sm:$0xff]
    %v688 = vld [vmem:[%s1 + $0x1488] sm:$0xff]
    %v689 = vld [vmem:[%s1 + $0x1490] sm:$0xff]
    %v690 = vld [vmem:[%s1 + $0x1498] sm:$0xff]
    %v691 = vld [vmem:[%s1 + $0x14a0] sm:$0xff]
    %v692 = vld [vmem:[%s1 + $0x14a8] sm:$0xff]
    %v693 = vld [vmem:[%s1 + $0x14b0] sm:$0xff]
    %v694 = vld [vmem:[%s1 + $0x14b8] sm:$0xff]
    %v695 = vld [vmem:[%s1 + $0x14c0] sm:$0xff]
    %v696 = vld [vmem:[%s1 + $0x14c8] sm:$0xff]
    %v697 = vld [vmem:[%s1 + $0x14d0] sm:$0xff]
    %v698 = vld [vmem:[%s1 + $0x14d8] sm:$0xff]
    %v699 = vld [vmem:[%s1 + $0x14e0] sm:$0xff]
    %v700 = vld [vmem:[%s1 + $0x14e8] sm:$0xff]
    %v701 = vld [vmem:[%s1 + $0x14f0] sm:$0xff]
    %v702 = vld [vmem:[%s1 + $0x14f8] sm:$0xff]
    %v703 = vld [vmem:[%s1 + $0x1500] sm:$0xff]
    %v704 = vld [vmem:[%s1 + $0x1508] sm:$0xff]
    %v705 = vld [vmem:[%s1 + $0x1510] sm:$0xff]
    %v706 = vld [vmem:[%s1 + $0x1518] sm:$0xff]
    %v707 = vld [vmem:[%s1 + $0x1520] sm:$0xff]
    %v708 = vld [vmem:[%s1 + $0x1528] sm:$0xff]
    %v709 = vld [vmem:[%s1 + $0x1530] sm:$0xff]
    %v710 = vld [vmem:[%s1 + $0x1538] sm:$0xff]
    %v711 = vld [vmem:[%s1 + $0x1540] sm:$0xff]
    %v712 = vld [vmem:[%s1 + $0x1548] sm:$0xff]
    %v713 = vld [vmem:[%s1 + $0x1550] sm:$0xff]
    %v714 = vld [vmem:[%s1 + $0x1558] sm:$0xff]
    %v715 = vld [vmem:[%s1 + $0x1560] sm:$0xff]
    %v716 = vld [vmem:[%s1 + $0x1568] sm:$0xff]
    %v717 = vld [vmem:[%s1 + $0x1570] sm:$0xff]
    %v718 = vld [vmem:[%s1 + $0x1578] sm:$0xff]
    %v719 = vld [vmem:[%s1 + $0x1580] sm:$0xff]
    %v720 = vld [vmem:[%s1 + $0x1588] sm:$0xff]
    %v721 = vld [vmem:[%s1 + $0x1590] sm:$0xff]
    %v722 = vld [vmem:[%s1 + $0x1598] sm:$0xff]
    %v723 = vld [vmem:[%s1 + $0x15a0] sm:$0xff]
    %v724 = vld [vmem:[%s1 + $0x15a8] sm:$0xff]
    %v725 = vld [vmem:[%s1 + $0x15b0] sm:$0xff]
    %v726 = vld [vmem:[%s1 + $0x15b8] sm:$0xff]
    %v727 = vld [vmem:[%s1 + $0x15c0] sm:$0xff]
    %v728 = vld [vmem:[%s1 + $0x15c8] sm:$0xff]
    %v729 = vld [vmem:[%s1 + $0x15d0] sm:$0xff]
    %v730 = vld [vmem:[%s1 + $0x15d8] sm:$0xff]
    %v731 = vld [vmem:[%s1 + $0x15e0] sm:$0xff]
    %v732 = vld [vmem:[%s1 + $0x15e8] sm:$0xff]
    %v733 = vld [vmem:[%s1 + $0x15f0] sm:$0xff]
    %v734 = vld [vmem:[%s1 + $0x15f8] sm:$0xff]
    %v735 = vld [vmem:[%s1 + $0x1600] sm:$0xff]
    %v736 = vld [vmem:[%s1 + $0x1608] sm:$0xff]
    %v737 = vld [vmem:[%s1 + $0x1610] sm:$0xff]
    %v738 = vld [vmem:[%s1 + $0x1618] sm:$0xff]
    %v739 = vld [vmem:[%s1 + $0x1620] sm:$0xff]
    %v740 = vld [vmem:[%s1 + $0x1628] sm:$0xff]
    %v741 = vld [vmem:[%s1 + $0x1630] sm:$0xff]
    %v742 = vld [vmem:[%s1 + $0x1638] sm:$0xff]
    %v743 = vld [vmem:[%s1 + $0x1640] sm:$0xff]
    %v744 = vld [vmem:[%s1 + $0x1648] sm:$0xff]
    %v745 = vld [vmem:[%s1 + $0x1650] sm:$0xff]
    %v746 = vld [vmem:[%s1 + $0x1658] sm:$0xff]
    %v747 = vld [vmem:[%s1 + $0x1660] sm:$0xff]
    %v748 = vld [vmem:[%s1 + $0x1668] sm:$0xff]
    %v749 = vld [vmem:[%s1 + $0x1670] sm:$0xff]
    %v750 = vld [vmem:[%s1 + $0x1678] sm:$0xff]
    %v751 = vld [vmem:[%s1 + $0x1680] sm:$0xff]
    %v752 = vld [vmem:[%s1 + $0x1688] sm:$0xff]
    %v753 = vld [vmem:[%s1 + $0x1690] sm:$0xff]
    %v754 = vld [vmem:[%s1 + $0x1698] sm:$0xff]
    %v755 = vld [vmem:[%s1 + $0x16a0] sm:$0xff]
    %v756 = vld [vmem:[%s1 + $0x16a8] sm:$0xff]
    %v757 = vld [vmem:[%s1 + $0x16b0] sm:$0xff]
    %v758 = vld [vmem:[%s1 + $0x16b8] sm:$0xff]
    %v759 = vld [vmem:[%s1 + $0x16c0] sm:$0xff]
    %v760 = vld [vmem:[%s1 + $0x16c8] sm:$0xff]
    %v761 = vld [vmem:[%s1 + $0x16d0] sm:$0xff]
    %v762 = vld [vmem:[%s1 + $0x16d8] sm:$0xff]
    %v763 = vld [vmem:[%s1 + $0x16e0] sm:$0xff]
    %v764 = vld [vmem:[%s1 + $0x16e8] sm:$0xff]
    %v765 = vld [vmem:[%s1 + $0x16f0] sm:$0xff]
    %v766 = vld [vmem:[%s1 + $0x16f8] sm:$0xff]
    %v767 = vld [vmem:[%s1 + $0x1700] sm:$0xff]
    %v768 = vld [vmem:[%s1 + $0x1708] sm:$0xff]
    %v769 = vld [vmem:[%s1 + $0x1710] sm:$0xff]
    %v770 = vld [vmem:[%s1 + $0x1718] sm:$0xff]
    %v771 = vld [vmem:[%s1 + $0x1720] sm:$0xff]
    %v772 = vld [vmem:[%s1 + $0x1728] sm:$0xff]
    %v773 = vld [vmem:[%s1 + $0x1730] sm:$0xff]
    %v774 = vld [vmem:[%s1 + $0x1738] sm:$0xff]
    %v775 = vld [vmem:[%s1 + $0x1740] sm:$0xff]
    %v776 = vld [vmem:[%s1 + $0x1748] sm:$0xff]
    %v777 = vld [vmem:[%s1 + $0x1750] sm:$0xff]
    %v778 = vld [vmem:[%s1 + $0x1758] sm:$0xff]
    %v779 = vld [vmem:[%s1 + $0x1760] sm:$0xff]
    %v780 = vld [vmem:[%s1 + $0x1768] sm:$0xff]
    %v781 = vld [vmem:[%s1 + $0x1770] sm:$0xff]
    %v782 = vld [vmem:[%s1 + $0x1778] sm:$0xff]
    %v783 = vld [vmem:[%s1 + $0x1780] sm:$0xff]
    %v784 = vld [vmem:[%s1 + $0x1788] sm:$0xff]
    %v785 = vld [vmem:[%s1 + $0x1790] sm:$0xff]
    %v786 = vld [vmem:[%s1 + $0x1798] sm:$0xff]
    %v787 = vld [vmem:[%s1 + $0x17a0] sm:$0xff]
    %v788 = vld [vmem:[%s1 + $0x17a8] sm:$0xff]
    %v789 = vld [vmem:[%s1 + $0x17b0] sm:$0xff]
    %v790 = vld [vmem:[%s1 + $0x17b8] sm:$0xff]
    %v791 = vld [vmem:[%s1 + $0x17c0] sm:$0xff]
    %v792 = vld [vmem:[%s1 + $0x17c8] sm:$0xff]
    %v793 = vld [vmem:[%s1 + $0x17d0] sm:$0xff]
    %v794 = vld [vmem:[%s1 + $0x17d8] sm:$0xff]
    %v795 = vld [vmem:[%s1 + $0x17e0] sm:$0xff]
    %v796 = vld [vmem:[%s1 + $0x17e8] sm:$0xff]
    %v797 = vld [vmem:[%s1 + $0x17f0] sm:$0xff]
    %v798 = vld [vmem:[%s1 + $0x17f8] sm:$0xff]
    %v799 = vld [vmem:[%s1 + $0x1800] sm:$0xff]
    %v800 = vld [vmem:[%s1 + $0x1808] sm:$0xff]
    %v801 = vld [vmem:[%s1 + $0x1810] sm:$0xff]
    %v802 = vld [vmem:[%s1 + $0x1818] sm:$0xff]
    %v803 = vld [vmem:[%s1 + $0x1820] sm:$0xff]
    %v804 = vld [vmem:[%s1 + $0x1828] sm:$0xff]
    %v805 = vld [vmem:[%s1 + $0x1830] sm:$0xff]
    %v806 = vld [vmem:[%s1 + $0x1838] sm:$0xff]
    %v807 = vld [vmem:[%s1 + $0x1840] sm:$0xff]
    %v808 = vld [vmem:[%s1 + $0x1848] sm:$0xff]
    %v809 = vld [vmem:[%s1 + $0x1850] sm:$0xff]
    %v810 = vld [vmem:[%s1 + $0x1858] sm:$0xff]
    %v811 = vld [vmem:[%s1 + $0x1860] sm:$0xff]
    %v812 = vld [vmem:[%s1 + $0x1868] sm:$0xff]
    %v813 = vld [vmem:[%s1 + $0x1870] sm:$0xff]
    %v814 = vld [vmem:[%s1 + $0x1878] sm:$0xff]
    %v815 = vld [vmem:[%s1 + $0x1880] sm:$0xff]
    %v816 = vld [vmem:[%s1 + $0x1888] sm:$0xff]
    %v817 = vld [vmem:[%s1 + $0x1890] sm:$0xff]
    %v818 = vld [vmem:[%s1 + $0x1898] sm:$0xff]
    %v819 = vld [vmem:[%s1 + $0x18a0] sm:$0xff]
    %v820 = vld [vmem:[%s1 + $0x18a8] sm:$0xff]
    %v821 = vld [vmem:[%s1 + $0x18b0] sm:$0xff]
    %v822 = vld [vmem:[%s1 + $0x18b8] sm:$0xff]
    %v823 = vld [vmem:[%s1 + $0x18c0] sm:$0xff]
    %v824 = vld [vmem:[%s1 + $0x18c8] sm:$0xff]
    %v825 = vld [vmem:[%s1 + $0x18d0] sm:$0xff]
    %v826 = vld [vmem:[%s1 + $0x18d8] sm:$0xff]
    %v827 = vld [vmem:[%s1 + $0x18e0] sm:$0xff]
    %v828 = vld [vmem:[%s1 + $0x18e8] sm:$0xff]
    %v829 = vld [vmem:[%s1 + $0x18f0] sm:$0xff]
    %v830 = vld [vmem:[%s1 + $0x18f8] sm:$0xff]
    %v831 = vld [vmem:[%s1 + $0x1900] sm:$0xff]
    %v832 = vld [vmem:[%s1 + $0x1908] sm:$0xff]
    %v833 = vld [vmem:[%s1 + $0x1910] sm:$0xff]
    %v834 = vld [vmem:[%s1 + $0x1918] sm:$0xff]
    %v835 = vld [vmem:[%s1 + $0x1920] sm:$0xff]
    %v836 = vld [vmem:[%s1 + $0x1928] sm:$0xff]
    %v837 = vld [vmem:[%s1 + $0x1930] sm:$0xff]
    %v838 = vld [vmem:[%s1 + $0x1938] sm:$0xff]
    %v839 = vld [vmem:[%s1 + $0x1940] sm:$0xff]
    %v840 = vld [vmem:[%s1 + $0x1948] sm:$0xff]
    %v841 = vld [vmem:[%s1 + $0x1950] sm:$0xff]
    %v842 = vld [vmem:[%s1 + $0x1958] sm:$0xff]
    %v843 = vld [vmem:[%s1 + $0x1960] sm:$0xff]
    %v844 = vld [vmem:[%s1 + $0x1968] sm:$0xff]
    %v845 = vld [vmem:[%s1 + $0x1970] sm:$0xff]
    %v846 = vld [vmem:[%s1 + $0x1978] sm:$0xff]
    %v847 = vld [vmem:[%s1 + $0x1980] sm:$0xff]
    %v848 = vld [vmem:[%s1 + $0x1988] sm:$0xff]
    %v849 = vld [vmem:[%s1 + $0x1990] sm:$0xff]
    %v850 = vld [vmem:[%s1 + $0x1998] sm:$0xff]
    %v851 = vld [vmem:[%s1 + $0x19a0] sm:$0xff]
    %v852 = vld [vmem:[%s1 + $0x19a8] sm:$0xff]
    %v853 = vld [vmem:[%s1 + $0x19b0] sm:$0xff]
    %v854 = vld [vmem:[%s1 + $0x19b8] sm:$0xff]
    %v855 = vld [vmem:[%s1 + $0x19c0] sm:$0xff]
    %v856 = vld [vmem:[%s1 + $0x19c8] sm:$0xff]
    %v857 = vld [vmem:[%s1 + $0x19d0] sm:$0xff]
    %v858 = vld [vmem:[%s1 + $0x19d8] sm:$0xff]
    %v859 = vld [vmem:[%s1 + $0x19e0] sm:$0xff]
    %v860 = vld [vmem:[%s1 + $0x19e8] sm:$0xff]
    %v861 = vld [vmem:[%s1 + $0x19f0] sm:$0xff]
    %v862 = vld [vmem:[%s1 + $0x19f8] sm:$0xff]
    %v863 = vld [vmem:[%s1 + $0x1a00] sm:$0xff]
    %v864 = vld [vmem:[%s1 + $0x1a08] sm:$0xff]
    %v865 = vld [vmem:[%s1 + $0x1a10] sm:$0xff]
    %v866 = vld [vmem:[%s1 + $0x1a18] sm:$0xff]
    %v867 = vld [vmem:[%s1 + $0x1a20] sm:$0xff]
    %v868 = vld [vmem:[%s1 + $0x1a28] sm:$0xff]
    %v869 = vld [vmem:[%s1 + $0x1a30] sm:$0xff]
    %v870 = vld [vmem:[%s1 + $0x1a38] sm:$0xff]
    %v871 = vld [vmem:[%s1 + $0x1a40] sm:$0xff]
    %v872 = vld [vmem:[%s1 + $0x1a48] sm:$0xff]
    %v873 = vld [vmem:[%s1 + $0x1a50] sm:$0xff]
    %v874 = vld [vmem:[%s1 + $0x1a58] sm:$0xff]
    %v875 = vld [vmem:[%s1 + $0x1a60] sm:$0xff]
    %v876 = vld [vmem:[%s1 + $0x1a68] sm:$0xff]
    %v877 = vld [vmem:[%s1 + $0x1a70] sm:$0xff]
    %v878 = vld [vmem:[%s1 + $0x1a78] sm:$0xff]
    %v879 = vld [vmem:[%s1 + $0x1a80] sm:$0xff]
    %v880 = vld [vmem:[%s1 + $0x1a88] sm:$0xff]
    %v881 = vld [vmem:[%s1 + $0x1a90] sm:$0xff]
    %v882 = vld [vmem:[%s1 + $0x1a98] sm:$0xff]
    %v883 = vld [vmem:[%s1 + $0x1aa0] sm:$0xff]
    %v884 = vld [vmem:[%s1 + $0x1aa8] sm:$0xff]
    %v885 = vld [vmem:[%s1 + $0x1ab0] sm:$0xff]
    %v886 = vld [vmem:[%s1 + $0x1ab8] sm:$0xff]
    %v887 = vld [vmem:[%s1 + $0x1ac0] sm:$0xff]
    %v888 = vld [vmem:[%s1 + $0x1ac8] sm:$0xff]
    %v889 = vld [vmem:[%s1 + $0x1ad0] sm:$0xff]
    %v890 = vld [vmem:[%s1 + $0x1ad8] sm:$0xff]
    %v891 = vld [vmem:[%s1 + $0x1ae0] sm:$0xff]
    %v892 = vld [vmem:[%s1 + $0x1ae8] sm:$0xff]
    %v893 = vld [vmem:[%s1 + $0x1af0] sm:$0xff]
    %v894 = vld [vmem:[%s1 + $0x1af8] sm:$0xff]
    %v895 = vld [vmem:[%s1 + $0x1b00] sm:$0xff]
    %v896 = vld [vmem:[%s1 + $0x1b08] sm:$0xff]
    %v897 = vld [vmem:[%s1 + $0x1b10] sm:$0xff]
    %v898 = vld [vmem:[%s1 + $0x1b18] sm:$0xff]
    %v899 = vld [vmem:[%s1 + $0x1b20] sm:$0xff]
    %v900 = vld [vmem:[%s1 + $0x1b28] sm:$0xff]
    %v901 = vld [vmem:[%s1 + $0x1b30] sm:$0xff]
    %v902 = vld [vmem:[%s1 + $0x1b38] sm:$0xff]
    %v903 = vld [vmem:[%s1 + $0x1b40] sm:$0xff]
    %v904 = vld [vmem:[%s1 + $0x1b48] sm:$0xff]
    %v905 = vld [vmem:[%s1 + $0x1b50] sm:$0xff]
    %v906 = vld [vmem:[%s1 + $0x1b58] sm:$0xff]
    %v907 = vld [vmem:[%s1 + $0x1b60] sm:$0xff]
    %v908 = vld [vmem:[%s1 + $0x1b68] sm:$0xff]
    %v909 = vld [vmem:[%s1 + $0x1b70] sm:$0xff]
    %v910 = vld [vmem:[%s1 + $0x1b78] sm:$0xff]
    %v911 = vld [vmem:[%s1 + $0x1b80] sm:$0xff]
    %v912 = vld [vmem:[%s1 + $0x1b88] sm:$0xff]
    %v913 = vld [vmem:[%s1 + $0x1b90] sm:$0xff]
    %v914 = vld [vmem:[%s1 + $0x1b98] sm:$0xff]
    %v915 = vld [vmem:[%s1 + $0x1ba0] sm:$0xff]
    %v916 = vld [vmem:[%s1 + $0x1ba8] sm:$0xff]
    %v917 = vld [vmem:[%s1 + $0x1bb0] sm:$0xff]
    %v918 = vld [vmem:[%s1 + $0x1bb8] sm:$0xff]
    %v919 = vld [vmem:[%s1 + $0x1bc0] sm:$0xff]
    %v920 = vld [vmem:[%s1 + $0x1bc8] sm:$0xff]
    %v921 = vld [vmem:[%s1 + $0x1bd0] sm:$0xff]
    %v922 = vld [vmem:[%s1 + $0x1bd8] sm:$0xff]
    %v923 = vld [vmem:[%s1 + $0x1be0] sm:$0xff]
    %v924 = vld [vmem:[%s1 + $0x1be8] sm:$0xff]
    %v925 = vld [vmem:[%s1 + $0x1bf0] sm:$0xff]
    %v926 = vld [vmem:[%s1 + $0x1bf8] sm:$0xff]
    %v927 = vld [vmem:[%s1 + $0x1c00] sm:$0xff]
    %v928 = vld [vmem:[%s1 + $0x1c08] sm:$0xff]
    %v929 = vld [vmem:[%s1 + $0x1c10] sm:$0xff]
    %v930 = vld [vmem:[%s1 + $0x1c18] sm:$0xff]
    %v931 = vld [vmem:[%s1 + $0x1c20] sm:$0xff]
    %v932 = vld [vmem:[%s1 + $0x1c28] sm:$0xff]
    %v933 = vld [vmem:[%s1 + $0x1c30] sm:$0xff]
    %v934 = vld [vmem:[%s1 + $0x1c38] sm:$0xff]
    %v935 = vld [vmem:[%s1 + $0x1c40] sm:$0xff]
    %v936 = vld [vmem:[%s1 + $0x1c48] sm:$0xff]
    %v937 = vld [vmem:[%s1 + $0x1c50] sm:$0xff]
    %v938 = vld [vmem:[%s1 + $0x1c58] sm:$0xff]
    %v939 = vld [vmem:[%s1 + $0x1c60] sm:$0xff]
    %v940 = vld [vmem:[%s1 + $0x1c68] sm:$0xff]
    %v941 = vld [vmem:[%s1 + $0x1c70] sm:$0xff]
    %v942 = vld [vmem:[%s1 + $0x1c78] sm:$0xff]
    %v943 = vld [vmem:[%s1 + $0x1c80] sm:$0xff]
    %v944 = vld [vmem:[%s1 + $0x1c88] sm:$0xff]
    %v945 = vld [vmem:[%s1 + $0x1c90] sm:$0xff]
    %v946 = vld [vmem:[%s1 + $0x1c98] sm:$0xff]
    %v947 = vld [vmem:[%s1 + $0x1ca0] sm:$0xff]
    %v948 = vld [vmem:[%s1 + $0x1ca8] sm:$0xff]
    %v949 = vld [vmem:[%s1 + $0x1cb0] sm:$0xff]
    %v950 = vld [vmem:[%s1 + $0x1cb8] sm:$0xff]
    %v951 = vld [vmem:[%s1 + $0x1cc0] sm:$0xff]
    %v952 = vld [vmem:[%s1 + $0x1cc8] sm:$0xff]
    %v953 = vld [vmem:[%s1 + $0x1cd0] sm:$0xff]
    %v954 = vld [vmem:[%s1 + $0x1cd8] sm:$0xff]
    %v955 = vld [vmem:[%s1 + $0x1ce0] sm:$0xff]
    %v956 = vld [vmem:[%s1 + $0x1ce8] sm:$0xff]
    %v957 = vld [vmem:[%s1 + $0x1cf0] sm:$0xff]
    %v958 = vld [vmem:[%s1 + $0x1cf8] sm:$0xff]
    %v959 = vld [vmem:[%s1 + $0x1d00] sm:$0xff]
    %v960 = vld [vmem:[%s1 + $0x1d08] sm:$0xff]
    %v961 = vld [vmem:[%s1 + $0x1d10] sm:$0xff]
    %v962 = vld [vmem:[%s1 + $0x1d18] sm:$0xff]
    %v963 = vld [vmem:[%s1 + $0x1d20] sm:$0xff]
    %v964 = vld [vmem:[%s1 + $0x1d28] sm:$0xff]
    %v965 = vld [vmem:[%s1 + $0x1d30] sm:$0xff]
    %v966 = vld [vmem:[%s1 + $0x1d38] sm:$0xff]
    %v967 = vld [vmem:[%s1 + $0x1d40] sm:$0xff]
    %v968 = vld [vmem:[%s1 + $0x1d48] sm:$0xff]
    %v969 = vld [vmem:[%s1 + $0x1d50] sm:$0xff]
    %v970 = vld [vmem:[%s1 + $0x1d58] sm:$0xff]
    %v971 = vld [vmem:[%s1 + $0x1d60] sm:$0xff]
    %v972 = vld [vmem:[%s1 + $0x1d68] sm:$0xff]
    %v973 = vld [vmem:[%s1 + $0x1d70] sm:$0xff]
    %v974 = vld [vmem:[%s1 + $0x1d78] sm:$0xff]
    %v975 = vld [vmem:[%s1 + $0x1d80] sm:$0xff]
    %v976 = vld [vmem:[%s1 + $0x1d88] sm:$0xff]
    %v977 = vld [vmem:[%s1 + $0x1d90] sm:$0xff]
    %v978 = vld [vmem:[%s1 + $0x1d98] sm:$0xff]
    %v979 = vld [vmem:[%s1 + $0x1da0] sm:$0xff]
    %v980 = vld [vmem:[%s1 + $0x1da8] sm:$0xff]
    %v981 = vld [vmem:[%s1 + $0x1db0] sm:$0xff]
    %v982 = vld [vmem:[%s1 + $0x1db8] sm:$0xff]
    %v983 = vld [vmem:[%s1 + $0x1dc0] sm:$0xff]
    %v984 = vld [vmem:[%s1 + $0x1dc8] sm:$0xff]
    %v985 = vld [vmem:[%s1 + $0x1dd0] sm:$0xff]
    %v986 = vld [vmem:[%s1 + $0x1dd8] sm:$0xff]
    %v987 = vld [vmem:[%s1 + $0x1de0] sm:$0xff]
    %v988 = vld [vmem:[%s1 + $0x1de8] sm:$0xff]
    %v989 = vld [vmem:[%s1 + $0x1df0] sm:$0xff]
    %v990 = vld [vmem:[%s1 + $0x1df8] sm:$0xff]
    %v991 = vld [vmem:[%s1 + $0x1e00] sm:$0xff]
    %v992 = vld [vmem:[%s1 + $0x1e08] sm:$0xff]
    %v993 = vld [vmem:[%s1 + $0x1e10] sm:$0xff]
    %v994 = vld [vmem:[%s1 + $0x1e18] sm:$0xff]
    %v995 = vld [vmem:[%s1 + $0x1e20] sm:$0xff]
    %v996 = vld [vmem:[%s1 + $0x1e28] sm:$0xff]
    %v997 = vld [vmem:[%s1 + $0x1e30] sm:$0xff]
    %v998 = vld [vmem:[%s1 + $0x1e38] sm:$0xff]
    %v999 = vld [vmem:[%s1 + $0x1e40] sm:$0xff]
    %v1000 = vld [vmem:[%s1 + $0x1e48] sm:$0xff]
    %v1001 = vld [vmem:[%s1 + $0x1e50] sm:$0xff]
    %v1002 = vld [vmem:[%s1 + $0x1e58] sm:$0xff]
    %v1003 = vld [vmem:[%s1 + $0x1e60] sm:$0xff]
    %v1004 = vld [vmem:[%s1 + $0x1e68] sm:$0xff]
    %v1005 = vld [vmem:[%s1 + $0x1e70] sm:$0xff]
    %v1006 = vld [vmem:[%s1 + $0x1e78] sm:$0xff]
    %v1007 = vld [vmem:[%s1 + $0x1e80] sm:$0xff]
    %v1008 = vld [vmem:[%s1 + $0x1e88] sm:$0xff]
    %v1009 = vld [vmem:[%s1 + $0x1e90] sm:$0xff]
    %v1010 = vld [vmem:[%s1 + $0x1e98] sm:$0xff]
    %v1011 = vld [vmem:[%s1 + $0x1ea0] sm:$0xff]
    %v1012 = vld [vmem:[%s1 + $0x1ea8] sm:$0xff]
    %v1013 = vld [vmem:[%s1 + $0x1eb0] sm:$0xff]
    %v1014 = vld [vmem:[%s1 + $0x1eb8] sm:$0xff]
    %v1015 = vld [vmem:[%s1 + $0x1ec0] sm:$0xff]
    %v1016 = vld [vmem:[%s1 + $0x1ec8] sm:$0xff]
    %v1017 = vld [vmem:[%s1 + $0x1ed0] sm:$0xff]
    %v1018 = vld [vmem:[%s1 + $0x1ed8] sm:$0xff]
    %v1019 = vld [vmem:[%s1 + $0x1ee0] sm:$0xff]
    %v1020 = vld [vmem:[%s1 + $0x1ee8] sm:$0xff]
    %v1021 = vld [vmem:[%s1 + $0x1ef0] sm:$0xff]
    %v1022 = vld [vmem:[%s1 + $0x1ef8] sm:$0xff]
    %v1023 = vld [vmem:[%s1 + $0x1f00] sm:$0xff]
    %v1024 = vld [vmem:[%s1 + $0x1f08] sm:$0xff]
    %v1025 = vld [vmem:[%s1 + $0x1f10] sm:$0xff]
    %v1026 = vld [vmem:[%s1 + $0x1f18] sm:$0xff]
    %v1027 = vld [vmem:[%s1 + $0x1f20] sm:$0xff]
    %v1028 = vld [vmem:[%s1 + $0x1f28] sm:$0xff]
    %v1029 = vld [vmem:[%s1 + $0x1f30] sm:$0xff]
    %v1030 = vld [vmem:[%s1 + $0x1f38] sm:$0xff]
    %v1031 = vld [vmem:[%s1 + $0x1f40] sm:$0xff]
    %v1032 = vld [vmem:[%s1 + $0x1f48] sm:$0xff]
    %v1033 = vld [vmem:[%s1 + $0x1f50] sm:$0xff]
    %v1034 = vld [vmem:[%s1 + $0x1f58] sm:$0xff]
    %v1035 = vld [vmem:[%s1 + $0x1f60] sm:$0xff]
    %v1036 = vld [vmem:[%s1 + $0x1f68] sm:$0xff]
    %v1037 = vld [vmem:[%s1 + $0x1f70] sm:$0xff]
    %v1038 = vld [vmem:[%s1 + $0x1f78] sm:$0xff]
    %v1039 = vld [vmem:[%s1 + $0x1f80] sm:$0xff]
    %v1040 = vld [vmem:[%s1 + $0x1f88] sm:$0xff]
    %v1041 = vld [vmem:[%s1 + $0x1f90] sm:$0xff]
    %v1042 = vld [vmem:[%s1 + $0x1f98] sm:$0xff]
    %v1043 = vld [vmem:[%s1 + $0x1fa0] sm:$0xff]
    %v1044 = vld [vmem:[%s1 + $0x1fa8] sm:$0xff]
    %v1045 = vld [vmem:[%s1 + $0x1fb0] sm:$0xff]
    %v1046 = vld [vmem:[%s1 + $0x1fb8] sm:$0xff]
    %v1047 = vld [vmem:[%s1 + $0x1fc0] sm:$0xff]
    %v1048 = vld [vmem:[%s1 + $0x1fc8] sm:$0xff]
    %v1049 = vld [vmem:[%s1 + $0x1fd0] sm:$0xff]
    %v1050 = vld [vmem:[%s1 + $0x1fd8] sm:$0xff]
    %v1051 = vld [vmem:[%s1 + $0x1fe0] sm:$0xff]
    %v1052 = vld [vmem:[%s1 + $0x1fe8] sm:$0xff]
    %v1053 = vld [vmem:[%s1 + $0x1ff0] sm:$0xff]
    %v1054 = vld [vmem:[%s1 + $0x1ff8] sm:$0xff]
    %v1055 = vld [vmem:[%s2] sm:$0xff]
    %v1057 = vperm.slane %v1055, 0
    %v1058 = vperm.slane %v1055, 1
    %v1059 = vperm.slane %v1055, 2
    %v1060 = vperm.slane %v1055, 3
    %v1061 = vperm.slane %v1055, 4
    %v1062 = vperm.slane %v1055, 5
    %v1063 = vperm.slane %v1055, 6
    %v1064 = vperm.slane %v1055, 7
    %1074 = vst [vmem:[#allocation1] ss:$9 sm:$0xff] %v29
    %v1075 = vld [vmem:[#allocation1] sm:$0xff]
    %v1076 = vld [vmem:[#allocation1 + $0x9] sm:$0xff]
    %v1077 = vld [vmem:[#allocation1 + $0x12] sm:$0xff]
    %v1078 = vld [vmem:[#allocation1 + $0x1b] sm:$0xff]
    %v1079 = vld [vmem:[#allocation1 + $0x24] sm:$0xff]
    %v1080 = vld [vmem:[#allocation1 + $0x2d] sm:$0xff]
    %v1081 = vld [vmem:[#allocation1 + $0x36] sm:$0xff]
    %v1082 = vld [vmem:[#allocation1 + $0x3f] sm:$0xff]
    %1084 = vst [vmem:[#allocation1] ss:$9 sm:$0xff] %v30
    %v1085 = vld [vmem:[#allocation1] sm:$0xff]
    %v1086 = vld [vmem:[#allocation1 + $0x9] sm:$0xff]
    %v1087 = vld [vmem:[#allocation1 + $0x12] sm:$0xff]
    %v1088 = vld [vmem:[#allocation1 + $0x1b] sm:$0xff]
    %v1089 = vld [vmem:[#allocation1 + $0x24] sm:$0xff]
    %v1090 = vld [vmem:[#allocation1 + $0x2d] sm:$0xff]
    %v1091 = vld [vmem:[#allocation1 + $0x36] sm:$0xff]
    %v1092 = vld [vmem:[#allocation1 + $0x3f] sm:$0xff]
    %v2133 = vunpack.c.l.b16 %v31
    %v2134 = vunpack.c.h.b16 %v31
    %v2135 = vunpack.c.l.b16 %v32
    %v2136 = vunpack.c.h.b16 %v32
    %v2137 = vunpack.c.l.b16 %v33
    %v2138 = vunpack.c.h.b16 %v33
    %v2139 = vunpack.c.l.b16 %v34
    %v2140 = vunpack.c.h.b16 %v34
    %v2141 = vunpack.c.l.b16 %v35
    %v2142 = vunpack.c.h.b16 %v35
    %v2143 = vunpack.c.l.b16 %v36
    %v2144 = vunpack.c.h.b16 %v36
    %v2145 = vunpack.c.l.b16 %v37
    %v2146 = vunpack.c.h.b16 %v37
    %v2147 = vunpack.c.l.b16 %v38
    %v2148 = vunpack.c.h.b16 %v38
    %v2149 = vunpack.c.l.b16 %v39
    %v2150 = vunpack.c.h.b16 %v39
    %v2151 = vunpack.c.l.b16 %v40
    %v2152 = vunpack.c.h.b16 %v40
    %v2153 = vunpack.c.l.b16 %v41
    %v2154 = vunpack.c.h.b16 %v41
    %v2155 = vunpack.c.l.b16 %v42
    %v2156 = vunpack.c.h.b16 %v42
    %v2157 = vunpack.c.l.b16 %v43
    %v2158 = vunpack.c.h.b16 %v43
    %v2159 = vunpack.c.l.b16 %v44
    %v2160 = vunpack.c.h.b16 %v44
    %v2161 = vunpack.c.l.b16 %v45
    %v2162 = vunpack.c.h.b16 %v45
    %v2163 = vunpack.c.l.b16 %v46
    %v2164 = vunpack.c.h.b16 %v46
    %v2165 = vunpack.c.l.b16 %v47
    %v2166 = vunpack.c.h.b16 %v47
    %v2167 = vunpack.c.l.b16 %v48
    %v2168 = vunpack.c.h.b16 %v48
    %v2169 = vunpack.c.l.b16 %v49
    %v2170 = vunpack.c.h.b16 %v49
    %v2171 = vunpack.c.l.b16 %v50
    %v2172 = vunpack.c.h.b16 %v50
    %v2173 = vunpack.c.l.b16 %v51
    %v2174 = vunpack.c.h.b16 %v51
    %v2175 = vunpack.c.l.b16 %v52
    %v2176 = vunpack.c.h.b16 %v52
    %v2177 = vunpack.c.l.b16 %v53
    %v2178 = vunpack.c.h.b16 %v53
    %v2179 = vunpack.c.l.b16 %v54
    %v2180 = vunpack.c.h.b16 %v54
    %v2181 = vunpack.c.l.b16 %v55
    %v2182 = vunpack.c.h.b16 %v55
    %v2183 = vunpack.c.l.b16 %v56
    %v2184 = vunpack.c.h.b16 %v56
    %v2185 = vunpack.c.l.b16 %v57
    %v2186 = vunpack.c.h.b16 %v57
    %v2187 = vunpack.c.l.b16 %v58
    %v2188 = vunpack.c.h.b16 %v58
    %v2189 = vunpack.c.l.b16 %v59
    %v2190 = vunpack.c.h.b16 %v59
    %v2191 = vunpack.c.l.b16 %v60
    %v2192 = vunpack.c.h.b16 %v60
    %v2193 = vunpack.c.l.b16 %v61
    %v2194 = vunpack.c.h.b16 %v61
    %v2195 = vunpack.c.l.b16 %v62
    %v2196 = vunpack.c.h.b16 %v62
    %v2197 = vunpack.c.l.b16 %v63
    %v2198 = vunpack.c.h.b16 %v63
    %v2199 = vunpack.c.l.b16 %v64
    %v2200 = vunpack.c.h.b16 %v64
    %v2201 = vunpack.c.l.b16 %v65
    %v2202 = vunpack.c.h.b16 %v65
    %v2203 = vunpack.c.l.b16 %v66
    %v2204 = vunpack.c.h.b16 %v66
    %v2205 = vunpack.c.l.b16 %v67
    %v2206 = vunpack.c.h.b16 %v67
    %v2207 = vunpack.c.l.b16 %v68
    %v2208 = vunpack.c.h.b16 %v68
    %v2209 = vunpack.c.l.b16 %v69
    %v2210 = vunpack.c.h.b16 %v69
    %v2211 = vunpack.c.l.b16 %v70
    %v2212 = vunpack.c.h.b16 %v70
    %v2213 = vunpack.c.l.b16 %v71
    %v2214 = vunpack.c.h.b16 %v71
    %v2215 = vunpack.c.l.b16 %v72
    %v2216 = vunpack.c.h.b16 %v72
    %v2217 = vunpack.c.l.b16 %v73
    %v2218 = vunpack.c.h.b16 %v73
    %v2219 = vunpack.c.l.b16 %v74
    %v2220 = vunpack.c.h.b16 %v74
    %v2221 = vunpack.c.l.b16 %v75
    %v2222 = vunpack.c.h.b16 %v75
    %v2223 = vunpack.c.l.b16 %v76
    %v2224 = vunpack.c.h.b16 %v76
    %v2225 = vunpack.c.l.b16 %v77
    %v2226 = vunpack.c.h.b16 %v77
    %v2227 = vunpack.c.l.b16 %v78
    %v2228 = vunpack.c.h.b16 %v78
    %v2229 = vunpack.c.l.b16 %v79
    %v2230 = vunpack.c.h.b16 %v79
    %v2231 = vunpack.c.l.b16 %v80
    %v2232 = vunpack.c.h.b16 %v80
    %v2233 = vunpack.c.l.b16 %v81
    %v2234 = vunpack.c.h.b16 %v81
    %v2235 = vunpack.c.l.b16 %v82
    %v2236 = vunpack.c.h.b16 %v82
    %v2237 = vunpack.c.l.b16 %v83
    %v2238 = vunpack.c.h.b16 %v83
    %v2239 = vunpack.c.l.b16 %v84
    %v2240 = vunpack.c.h.b16 %v84
    %v2241 = vunpack.c.l.b16 %v85
    %v2242 = vunpack.c.h.b16 %v85
    %v2243 = vunpack.c.l.b16 %v86
    %v2244 = vunpack.c.h.b16 %v86
    %v2245 = vunpack.c.l.b16 %v87
    %v2246 = vunpack.c.h.b16 %v87
    %v2247 = vunpack.c.l.b16 %v88
    %v2248 = vunpack.c.h.b16 %v88
    %v2249 = vunpack.c.l.b16 %v89
    %v2250 = vunpack.c.h.b16 %v89
    %v2251 = vunpack.c.l.b16 %v90
    %v2252 = vunpack.c.h.b16 %v90
    %v2253 = vunpack.c.l.b16 %v91
    %v2254 = vunpack.c.h.b16 %v91
    %v2255 = vunpack.c.l.b16 %v92
    %v2256 = vunpack.c.h.b16 %v92
    %v2257 = vunpack.c.l.b16 %v93
    %v2258 = vunpack.c.h.b16 %v93
    %v2259 = vunpack.c.l.b16 %v94
    %v2260 = vunpack.c.h.b16 %v94
    %v2261 = vunpack.c.l.b16 %v95
    %v2262 = vunpack.c.h.b16 %v95
    %v2263 = vunpack.c.l.b16 %v96
    %v2264 = vunpack.c.h.b16 %v96
    %v2265 = vunpack.c.l.b16 %v97
    %v2266 = vunpack.c.h.b16 %v97
    %v2267 = vunpack.c.l.b16 %v98
    %v2268 = vunpack.c.h.b16 %v98
    %v2269 = vunpack.c.l.b16 %v99
    %v2270 = vunpack.c.h.b16 %v99
    %v2271 = vunpack.c.l.b16 %v100
    %v2272 = vunpack.c.h.b16 %v100
    %v2273 = vunpack.c.l.b16 %v101
    %v2274 = vunpack.c.h.b16 %v101
    %v2275 = vunpack.c.l.b16 %v102
    %v2276 = vunpack.c.h.b16 %v102
    %v2277 = vunpack.c.l.b16 %v103
    %v2278 = vunpack.c.h.b16 %v103
    %v2279 = vunpack.c.l.b16 %v104
    %v2280 = vunpack.c.h.b16 %v104
    %v2281 = vunpack.c.l.b16 %v105
    %v2282 = vunpack.c.h.b16 %v105
    %v2283 = vunpack.c.l.b16 %v106
    %v2284 = vunpack.c.h.b16 %v106
    %v2285 = vunpack.c.l.b16 %v107
    %v2286 = vunpack.c.h.b16 %v107
    %v2287 = vunpack.c.l.b16 %v108
    %v2288 = vunpack.c.h.b16 %v108
    %v2289 = vunpack.c.l.b16 %v109
    %v2290 = vunpack.c.h.b16 %v109
    %v2291 = vunpack.c.l.b16 %v110
    %v2292 = vunpack.c.h.b16 %v110
    %v2293 = vunpack.c.l.b16 %v111
    %v2294 = vunpack.c.h.b16 %v111
    %v2295 = vunpack.c.l.b16 %v112
    %v2296 = vunpack.c.h.b16 %v112
    %v2297 = vunpack.c.l.b16 %v113
    %v2298 = vunpack.c.h.b16 %v113
    %v2299 = vunpack.c.l.b16 %v114
    %v2300 = vunpack.c.h.b16 %v114
    %v2301 = vunpack.c.l.b16 %v115
    %v2302 = vunpack.c.h.b16 %v115
    %v2303 = vunpack.c.l.b16 %v116
    %v2304 = vunpack.c.h.b16 %v116
    %v2305 = vunpack.c.l.b16 %v117
    %v2306 = vunpack.c.h.b16 %v117
    %v2307 = vunpack.c.l.b16 %v118
    %v2308 = vunpack.c.h.b16 %v118
    %v2309 = vunpack.c.l.b16 %v119
    %v2310 = vunpack.c.h.b16 %v119
    %v2311 = vunpack.c.l.b16 %v120
    %v2312 = vunpack.c.h.b16 %v120
    %v2313 = vunpack.c.l.b16 %v121
    %v2314 = vunpack.c.h.b16 %v121
    %v2315 = vunpack.c.l.b16 %v122
    %v2316 = vunpack.c.h.b16 %v122
    %v2317 = vunpack.c.l.b16 %v123
    %v2318 = vunpack.c.h.b16 %v123
    %v2319 = vunpack.c.l.b16 %v124
    %v2320 = vunpack.c.h.b16 %v124
    %v2321 = vunpack.c.l.b16 %v125
    %v2322 = vunpack.c.h.b16 %v125
    %v2323 = vunpack.c.l.b16 %v126
    %v2324 = vunpack.c.h.b16 %v126
    %v2325 = vunpack.c.l.b16 %v127
    %v2326 = vunpack.c.h.b16 %v127
    %v2327 = vunpack.c.l.b16 %v128
    %v2328 = vunpack.c.h.b16 %v128
    %v2329 = vunpack.c.l.b16 %v129
    %v2330 = vunpack.c.h.b16 %v129
    %v2331 = vunpack.c.l.b16 %v130
    %v2332 = vunpack.c.h.b16 %v130
    %v2333 = vunpack.c.l.b16 %v131
    %v2334 = vunpack.c.h.b16 %v131
    %v2335 = vunpack.c.l.b16 %v132
    %v2336 = vunpack.c.h.b16 %v132
    %v2337 = vunpack.c.l.b16 %v133
    %v2338 = vunpack.c.h.b16 %v133
    %v2339 = vunpack.c.l.b16 %v134
    %v2340 = vunpack.c.h.b16 %v134
    %v2341 = vunpack.c.l.b16 %v135
    %v2342 = vunpack.c.h.b16 %v135
    %v2343 = vunpack.c.l.b16 %v136
    %v2344 = vunpack.c.h.b16 %v136
    %v2345 = vunpack.c.l.b16 %v137
    %v2346 = vunpack.c.h.b16 %v137
    %v2347 = vunpack.c.l.b16 %v138
    %v2348 = vunpack.c.h.b16 %v138
    %v2349 = vunpack.c.l.b16 %v139
    %v2350 = vunpack.c.h.b16 %v139
    %v2351 = vunpack.c.l.b16 %v140
    %v2352 = vunpack.c.h.b16 %v140
    %v2353 = vunpack.c.l.b16 %v141
    %v2354 = vunpack.c.h.b16 %v141
    %v2355 = vunpack.c.l.b16 %v142
    %v2356 = vunpack.c.h.b16 %v142
    %v2357 = vunpack.c.l.b16 %v143
    %v2358 = vunpack.c.h.b16 %v143
    %v2359 = vunpack.c.l.b16 %v144
    %v2360 = vunpack.c.h.b16 %v144
    %v2361 = vunpack.c.l.b16 %v145
    %v2362 = vunpack.c.h.b16 %v145
    %v2363 = vunpack.c.l.b16 %v146
    %v2364 = vunpack.c.h.b16 %v146
    %v2365 = vunpack.c.l.b16 %v147
    %v2366 = vunpack.c.h.b16 %v147
    %v2367 = vunpack.c.l.b16 %v148
    %v2368 = vunpack.c.h.b16 %v148
    %v2369 = vunpack.c.l.b16 %v149
    %v2370 = vunpack.c.h.b16 %v149
    %v2371 = vunpack.c.l.b16 %v150
    %v2372 = vunpack.c.h.b16 %v150
    %v2373 = vunpack.c.l.b16 %v151
    %v2374 = vunpack.c.h.b16 %v151
    %v2375 = vunpack.c.l.b16 %v152
    %v2376 = vunpack.c.h.b16 %v152
    %v2377 = vunpack.c.l.b16 %v153
    %v2378 = vunpack.c.h.b16 %v153
    %v2379 = vunpack.c.l.b16 %v154
    %v2380 = vunpack.c.h.b16 %v154
    %v2381 = vunpack.c.l.b16 %v155
    %v2382 = vunpack.c.h.b16 %v155
    %v2383 = vunpack.c.l.b16 %v156
    %v2384 = vunpack.c.h.b16 %v156
    %v2385 = vunpack.c.l.b16 %v157
    %v2386 = vunpack.c.h.b16 %v157
    %v2387 = vunpack.c.l.b16 %v158
    %v2388 = vunpack.c.h.b16 %v158
    %v2389 = vunpack.c.l.b16 %v159
    %v2390 = vunpack.c.h.b16 %v159
    %v2391 = vunpack.c.l.b16 %v160
    %v2392 = vunpack.c.h.b16 %v160
    %v2393 = vunpack.c.l.b16 %v161
    %v2394 = vunpack.c.h.b16 %v161
    %v2395 = vunpack.c.l.b16 %v162
    %v2396 = vunpack.c.h.b16 %v162
    %v2397 = vunpack.c.l.b16 %v163
    %v2398 = vunpack.c.h.b16 %v163
    %v2399 = vunpack.c.l.b16 %v164
    %v2400 = vunpack.c.h.b16 %v164
    %v2401 = vunpack.c.l.b16 %v165
    %v2402 = vunpack.c.h.b16 %v165
    %v2403 = vunpack.c.l.b16 %v166
    %v2404 = vunpack.c.h.b16 %v166
    %v2405 = vunpack.c.l.b16 %v167
    %v2406 = vunpack.c.h.b16 %v167
    %v2407 = vunpack.c.l.b16 %v168
    %v2408 = vunpack.c.h.b16 %v168
    %v2409 = vunpack.c.l.b16 %v169
    %v2410 = vunpack.c.h.b16 %v169
    %v2411 = vunpack.c.l.b16 %v170
    %v2412 = vunpack.c.h.b16 %v170
    %v2413 = vunpack.c.l.b16 %v171
    %v2414 = vunpack.c.h.b16 %v171
    %v2415 = vunpack.c.l.b16 %v172
    %v2416 = vunpack.c.h.b16 %v172
    %v2417 = vunpack.c.l.b16 %v173
    %v2418 = vunpack.c.h.b16 %v173
    %v2419 = vunpack.c.l.b16 %v174
    %v2420 = vunpack.c.h.b16 %v174
    %v2421 = vunpack.c.l.b16 %v175
    %v2422 = vunpack.c.h.b16 %v175
    %v2423 = vunpack.c.l.b16 %v176
    %v2424 = vunpack.c.h.b16 %v176
    %v2425 = vunpack.c.l.b16 %v177
    %v2426 = vunpack.c.h.b16 %v177
    %v2427 = vunpack.c.l.b16 %v178
    %v2428 = vunpack.c.h.b16 %v178
    %v2429 = vunpack.c.l.b16 %v179
    %v2430 = vunpack.c.h.b16 %v179
    %v2431 = vunpack.c.l.b16 %v180
    %v2432 = vunpack.c.h.b16 %v180
    %v2433 = vunpack.c.l.b16 %v181
    %v2434 = vunpack.c.h.b16 %v181
    %v2435 = vunpack.c.l.b16 %v182
    %v2436 = vunpack.c.h.b16 %v182
    %v2437 = vunpack.c.l.b16 %v183
    %v2438 = vunpack.c.h.b16 %v183
    %v2439 = vunpack.c.l.b16 %v184
    %v2440 = vunpack.c.h.b16 %v184
    %v2441 = vunpack.c.l.b16 %v185
    %v2442 = vunpack.c.h.b16 %v185
    %v2443 = vunpack.c.l.b16 %v186
    %v2444 = vunpack.c.h.b16 %v186
    %v2445 = vunpack.c.l.b16 %v187
    %v2446 = vunpack.c.h.b16 %v187
    %v2447 = vunpack.c.l.b16 %v188
    %v2448 = vunpack.c.h.b16 %v188
    %v2449 = vunpack.c.l.b16 %v189
    %v2450 = vunpack.c.h.b16 %v189
    %v2451 = vunpack.c.l.b16 %v190
    %v2452 = vunpack.c.h.b16 %v190
    %v2453 = vunpack.c.l.b16 %v191
    %v2454 = vunpack.c.h.b16 %v191
    %v2455 = vunpack.c.l.b16 %v192
    %v2456 = vunpack.c.h.b16 %v192
    %v2457 = vunpack.c.l.b16 %v193
    %v2458 = vunpack.c.h.b16 %v193
    %v2459 = vunpack.c.l.b16 %v194
    %v2460 = vunpack.c.h.b16 %v194
    %v2461 = vunpack.c.l.b16 %v195
    %v2462 = vunpack.c.h.b16 %v195
    %v2463 = vunpack.c.l.b16 %v196
    %v2464 = vunpack.c.h.b16 %v196
    %v2465 = vunpack.c.l.b16 %v197
    %v2466 = vunpack.c.h.b16 %v197
    %v2467 = vunpack.c.l.b16 %v198
    %v2468 = vunpack.c.h.b16 %v198
    %v2469 = vunpack.c.l.b16 %v199
    %v2470 = vunpack.c.h.b16 %v199
    %v2471 = vunpack.c.l.b16 %v200
    %v2472 = vunpack.c.h.b16 %v200
    %v2473 = vunpack.c.l.b16 %v201
    %v2474 = vunpack.c.h.b16 %v201
    %v2475 = vunpack.c.l.b16 %v202
    %v2476 = vunpack.c.h.b16 %v202
    %v2477 = vunpack.c.l.b16 %v203
    %v2478 = vunpack.c.h.b16 %v203
    %v2479 = vunpack.c.l.b16 %v204
    %v2480 = vunpack.c.h.b16 %v204
    %v2481 = vunpack.c.l.b16 %v205
    %v2482 = vunpack.c.h.b16 %v205
    %v2483 = vunpack.c.l.b16 %v206
    %v2484 = vunpack.c.h.b16 %v206
    %v2485 = vunpack.c.l.b16 %v207
    %v2486 = vunpack.c.h.b16 %v207
    %v2487 = vunpack.c.l.b16 %v208
    %v2488 = vunpack.c.h.b16 %v208
    %v2489 = vunpack.c.l.b16 %v209
    %v2490 = vunpack.c.h.b16 %v209
    %v2491 = vunpack.c.l.b16 %v210
    %v2492 = vunpack.c.h.b16 %v210
    %v2493 = vunpack.c.l.b16 %v211
    %v2494 = vunpack.c.h.b16 %v211
    %v2495 = vunpack.c.l.b16 %v212
    %v2496 = vunpack.c.h.b16 %v212
    %v2497 = vunpack.c.l.b16 %v213
    %v2498 = vunpack.c.h.b16 %v213
    %v2499 = vunpack.c.l.b16 %v214
    %v2500 = vunpack.c.h.b16 %v214
    %v2501 = vunpack.c.l.b16 %v215
    %v2502 = vunpack.c.h.b16 %v215
    %v2503 = vunpack.c.l.b16 %v216
    %v2504 = vunpack.c.h.b16 %v216
    %v2505 = vunpack.c.l.b16 %v217
    %v2506 = vunpack.c.h.b16 %v217
    %v2507 = vunpack.c.l.b16 %v218
    %v2508 = vunpack.c.h.b16 %v218
    %v2509 = vunpack.c.l.b16 %v219
    %v2510 = vunpack.c.h.b16 %v219
    %v2511 = vunpack.c.l.b16 %v220
    %v2512 = vunpack.c.h.b16 %v220
    %v2513 = vunpack.c.l.b16 %v221
    %v2514 = vunpack.c.h.b16 %v221
    %v2515 = vunpack.c.l.b16 %v222
    %v2516 = vunpack.c.h.b16 %v222
    %v2517 = vunpack.c.l.b16 %v223
    %v2518 = vunpack.c.h.b16 %v223
    %v2519 = vunpack.c.l.b16 %v224
    %v2520 = vunpack.c.h.b16 %v224
    %v2521 = vunpack.c.l.b16 %v225
    %v2522 = vunpack.c.h.b16 %v225
    %v2523 = vunpack.c.l.b16 %v226
    %v2524 = vunpack.c.h.b16 %v226
    %v2525 = vunpack.c.l.b16 %v227
    %v2526 = vunpack.c.h.b16 %v227
    %v2527 = vunpack.c.l.b16 %v228
    %v2528 = vunpack.c.h.b16 %v228
    %v2529 = vunpack.c.l.b16 %v229
    %v2530 = vunpack.c.h.b16 %v229
    %v2531 = vunpack.c.l.b16 %v230
    %v2532 = vunpack.c.h.b16 %v230
    %v2533 = vunpack.c.l.b16 %v231
    %v2534 = vunpack.c.h.b16 %v231
    %v2535 = vunpack.c.l.b16 %v232
    %v2536 = vunpack.c.h.b16 %v232
    %v2537 = vunpack.c.l.b16 %v233
    %v2538 = vunpack.c.h.b16 %v233
    %v2539 = vunpack.c.l.b16 %v234
    %v2540 = vunpack.c.h.b16 %v234
    %v2541 = vunpack.c.l.b16 %v235
    %v2542 = vunpack.c.h.b16 %v235
    %v2543 = vunpack.c.l.b16 %v236
    %v2544 = vunpack.c.h.b16 %v236
    %v2545 = vunpack.c.l.b16 %v237
    %v2546 = vunpack.c.h.b16 %v237
    %v2547 = vunpack.c.l.b16 %v238
    %v2548 = vunpack.c.h.b16 %v238
    %v2549 = vunpack.c.l.b16 %v239
    %v2550 = vunpack.c.h.b16 %v239
    %v2551 = vunpack.c.l.b16 %v240
    %v2552 = vunpack.c.h.b16 %v240
    %v2553 = vunpack.c.l.b16 %v241
    %v2554 = vunpack.c.h.b16 %v241
    %v2555 = vunpack.c.l.b16 %v242
    %v2556 = vunpack.c.h.b16 %v242
    %v2557 = vunpack.c.l.b16 %v243
    %v2558 = vunpack.c.h.b16 %v243
    %v2559 = vunpack.c.l.b16 %v244
    %v2560 = vunpack.c.h.b16 %v244
    %v2561 = vunpack.c.l.b16 %v245
    %v2562 = vunpack.c.h.b16 %v245
    %v2563 = vunpack.c.l.b16 %v246
    %v2564 = vunpack.c.h.b16 %v246
    %v2565 = vunpack.c.l.b16 %v247
    %v2566 = vunpack.c.h.b16 %v247
    %v2567 = vunpack.c.l.b16 %v248
    %v2568 = vunpack.c.h.b16 %v248
    %v2569 = vunpack.c.l.b16 %v249
    %v2570 = vunpack.c.h.b16 %v249
    %v2571 = vunpack.c.l.b16 %v250
    %v2572 = vunpack.c.h.b16 %v250
    %v2573 = vunpack.c.l.b16 %v251
    %v2574 = vunpack.c.h.b16 %v251
    %v2575 = vunpack.c.l.b16 %v252
    %v2576 = vunpack.c.h.b16 %v252
    %v2577 = vunpack.c.l.b16 %v253
    %v2578 = vunpack.c.h.b16 %v253
    %v2579 = vunpack.c.l.b16 %v254
    %v2580 = vunpack.c.h.b16 %v254
    %v2581 = vunpack.c.l.b16 %v255
    %v2582 = vunpack.c.h.b16 %v255
    %v2583 = vunpack.c.l.b16 %v256
    %v2584 = vunpack.c.h.b16 %v256
    %v2585 = vunpack.c.l.b16 %v257
    %v2586 = vunpack.c.h.b16 %v257
    %v2587 = vunpack.c.l.b16 %v258
    %v2588 = vunpack.c.h.b16 %v258
    %v2589 = vunpack.c.l.b16 %v259
    %v2590 = vunpack.c.h.b16 %v259
    %v2591 = vunpack.c.l.b16 %v260
    %v2592 = vunpack.c.h.b16 %v260
    %v2593 = vunpack.c.l.b16 %v261
    %v2594 = vunpack.c.h.b16 %v261
    %v2595 = vunpack.c.l.b16 %v262
    %v2596 = vunpack.c.h.b16 %v262
    %v2597 = vunpack.c.l.b16 %v263
    %v2598 = vunpack.c.h.b16 %v263
    %v2599 = vunpack.c.l.b16 %v264
    %v2600 = vunpack.c.h.b16 %v264
    %v2601 = vunpack.c.l.b16 %v265
    %v2602 = vunpack.c.h.b16 %v265
    %v2603 = vunpack.c.l.b16 %v266
    %v2604 = vunpack.c.h.b16 %v266
    %v2605 = vunpack.c.l.b16 %v267
    %v2606 = vunpack.c.h.b16 %v267
    %v2607 = vunpack.c.l.b16 %v268
    %v2608 = vunpack.c.h.b16 %v268
    %v2609 = vunpack.c.l.b16 %v269
    %v2610 = vunpack.c.h.b16 %v269
    %v2611 = vunpack.c.l.b16 %v270
    %v2612 = vunpack.c.h.b16 %v270
    %v2613 = vunpack.c.l.b16 %v271
    %v2614 = vunpack.c.h.b16 %v271
    %v2615 = vunpack.c.l.b16 %v272
    %v2616 = vunpack.c.h.b16 %v272
    %v2617 = vunpack.c.l.b16 %v273
    %v2618 = vunpack.c.h.b16 %v273
    %v2619 = vunpack.c.l.b16 %v274
    %v2620 = vunpack.c.h.b16 %v274
    %v2621 = vunpack.c.l.b16 %v275
    %v2622 = vunpack.c.h.b16 %v275
    %v2623 = vunpack.c.l.b16 %v276
    %v2624 = vunpack.c.h.b16 %v276
    %v2625 = vunpack.c.l.b16 %v277
    %v2626 = vunpack.c.h.b16 %v277
    %v2627 = vunpack.c.l.b16 %v278
    %v2628 = vunpack.c.h.b16 %v278
    %v2629 = vunpack.c.l.b16 %v279
    %v2630 = vunpack.c.h.b16 %v279
    %v2631 = vunpack.c.l.b16 %v280
    %v2632 = vunpack.c.h.b16 %v280
    %v2633 = vunpack.c.l.b16 %v281
    %v2634 = vunpack.c.h.b16 %v281
    %v2635 = vunpack.c.l.b16 %v282
    %v2636 = vunpack.c.h.b16 %v282
    %v2637 = vunpack.c.l.b16 %v283
    %v2638 = vunpack.c.h.b16 %v283
    %v2639 = vunpack.c.l.b16 %v284
    %v2640 = vunpack.c.h.b16 %v284
    %v2641 = vunpack.c.l.b16 %v285
    %v2642 = vunpack.c.h.b16 %v285
    %v2643 = vunpack.c.l.b16 %v286
    %v2644 = vunpack.c.h.b16 %v286
    %v2645 = vunpack.c.l.b16 %v287
    %v2646 = vunpack.c.h.b16 %v287
    %v2647 = vunpack.c.l.b16 %v288
    %v2648 = vunpack.c.h.b16 %v288
    %v2649 = vunpack.c.l.b16 %v289
    %v2650 = vunpack.c.h.b16 %v289
    %v2651 = vunpack.c.l.b16 %v290
    %v2652 = vunpack.c.h.b16 %v290
    %v2653 = vunpack.c.l.b16 %v291
    %v2654 = vunpack.c.h.b16 %v291
    %v2655 = vunpack.c.l.b16 %v292
    %v2656 = vunpack.c.h.b16 %v292
    %v2657 = vunpack.c.l.b16 %v293
    %v2658 = vunpack.c.h.b16 %v293
    %v2659 = vunpack.c.l.b16 %v294
    %v2660 = vunpack.c.h.b16 %v294
    %v2661 = vunpack.c.l.b16 %v295
    %v2662 = vunpack.c.h.b16 %v295
    %v2663 = vunpack.c.l.b16 %v296
    %v2664 = vunpack.c.h.b16 %v296
    %v2665 = vunpack.c.l.b16 %v297
    %v2666 = vunpack.c.h.b16 %v297
    %v2667 = vunpack.c.l.b16 %v298
    %v2668 = vunpack.c.h.b16 %v298
    %v2669 = vunpack.c.l.b16 %v299
    %v2670 = vunpack.c.h.b16 %v299
    %v2671 = vunpack.c.l.b16 %v300
    %v2672 = vunpack.c.h.b16 %v300
    %v2673 = vunpack.c.l.b16 %v301
    %v2674 = vunpack.c.h.b16 %v301
    %v2675 = vunpack.c.l.b16 %v302
    %v2676 = vunpack.c.h.b16 %v302
    %v2677 = vunpack.c.l.b16 %v303
    %v2678 = vunpack.c.h.b16 %v303
    %v2679 = vunpack.c.l.b16 %v304
    %v2680 = vunpack.c.h.b16 %v304
    %v2681 = vunpack.c.l.b16 %v305
    %v2682 = vunpack.c.h.b16 %v305
    %v2683 = vunpack.c.l.b16 %v306
    %v2684 = vunpack.c.h.b16 %v306
    %v2685 = vunpack.c.l.b16 %v307
    %v2686 = vunpack.c.h.b16 %v307
    %v2687 = vunpack.c.l.b16 %v308
    %v2688 = vunpack.c.h.b16 %v308
    %v2689 = vunpack.c.l.b16 %v309
    %v2690 = vunpack.c.h.b16 %v309
    %v2691 = vunpack.c.l.b16 %v310
    %v2692 = vunpack.c.h.b16 %v310
    %v2693 = vunpack.c.l.b16 %v311
    %v2694 = vunpack.c.h.b16 %v311
    %v2695 = vunpack.c.l.b16 %v312
    %v2696 = vunpack.c.h.b16 %v312
    %v2697 = vunpack.c.l.b16 %v313
    %v2698 = vunpack.c.h.b16 %v313
    %v2699 = vunpack.c.l.b16 %v314
    %v2700 = vunpack.c.h.b16 %v314
    %v2701 = vunpack.c.l.b16 %v315
    %v2702 = vunpack.c.h.b16 %v315
    %v2703 = vunpack.c.l.b16 %v316
    %v2704 = vunpack.c.h.b16 %v316
    %v2705 = vunpack.c.l.b16 %v317
    %v2706 = vunpack.c.h.b16 %v317
    %v2707 = vunpack.c.l.b16 %v318
    %v2708 = vunpack.c.h.b16 %v318
    %v2709 = vunpack.c.l.b16 %v319
    %v2710 = vunpack.c.h.b16 %v319
    %v2711 = vunpack.c.l.b16 %v320
    %v2712 = vunpack.c.h.b16 %v320
    %v2713 = vunpack.c.l.b16 %v321
    %v2714 = vunpack.c.h.b16 %v321
    %v2715 = vunpack.c.l.b16 %v322
    %v2716 = vunpack.c.h.b16 %v322
    %v2717 = vunpack.c.l.b16 %v323
    %v2718 = vunpack.c.h.b16 %v323
    %v2719 = vunpack.c.l.b16 %v324
    %v2720 = vunpack.c.h.b16 %v324
    %v2721 = vunpack.c.l.b16 %v325
    %v2722 = vunpack.c.h.b16 %v325
    %v2723 = vunpack.c.l.b16 %v326
    %v2724 = vunpack.c.h.b16 %v326
    %v2725 = vunpack.c.l.b16 %v327
    %v2726 = vunpack.c.h.b16 %v327
    %v2727 = vunpack.c.l.b16 %v328
    %v2728 = vunpack.c.h.b16 %v328
    %v2729 = vunpack.c.l.b16 %v329
    %v2730 = vunpack.c.h.b16 %v329
    %v2731 = vunpack.c.l.b16 %v330
    %v2732 = vunpack.c.h.b16 %v330
    %v2733 = vunpack.c.l.b16 %v331
    %v2734 = vunpack.c.h.b16 %v331
    %v2735 = vunpack.c.l.b16 %v332
    %v2736 = vunpack.c.h.b16 %v332
    %v2737 = vunpack.c.l.b16 %v333
    %v2738 = vunpack.c.h.b16 %v333
    %v2739 = vunpack.c.l.b16 %v334
    %v2740 = vunpack.c.h.b16 %v334
    %v2741 = vunpack.c.l.b16 %v335
    %v2742 = vunpack.c.h.b16 %v335
    %v2743 = vunpack.c.l.b16 %v336
    %v2744 = vunpack.c.h.b16 %v336
    %v2745 = vunpack.c.l.b16 %v337
    %v2746 = vunpack.c.h.b16 %v337
    %v2747 = vunpack.c.l.b16 %v338
    %v2748 = vunpack.c.h.b16 %v338
    %v2749 = vunpack.c.l.b16 %v339
    %v2750 = vunpack.c.h.b16 %v339
    %v2751 = vunpack.c.l.b16 %v340
    %v2752 = vunpack.c.h.b16 %v340
    %v2753 = vunpack.c.l.b16 %v341
    %v2754 = vunpack.c.h.b16 %v341
    %v2755 = vunpack.c.l.b16 %v342
    %v2756 = vunpack.c.h.b16 %v342
    %v2757 = vunpack.c.l.b16 %v343
    %v2758 = vunpack.c.h.b16 %v343
    %v2759 = vunpack.c.l.b16 %v344
    %v2760 = vunpack.c.h.b16 %v344
    %v2761 = vunpack.c.l.b16 %v345
    %v2762 = vunpack.c.h.b16 %v345
    %v2763 = vunpack.c.l.b16 %v346
    %v2764 = vunpack.c.h.b16 %v346
    %v2765 = vunpack.c.l.b16 %v347
    %v2766 = vunpack.c.h.b16 %v347
    %v2767 = vunpack.c.l.b16 %v348
    %v2768 = vunpack.c.h.b16 %v348
    %v2769 = vunpack.c.l.b16 %v349
    %v2770 = vunpack.c.h.b16 %v349
    %v2771 = vunpack.c.l.b16 %v350
    %v2772 = vunpack.c.h.b16 %v350
    %v2773 = vunpack.c.l.b16 %v351
    %v2774 = vunpack.c.h.b16 %v351
    %v2775 = vunpack.c.l.b16 %v352
    %v2776 = vunpack.c.h.b16 %v352
    %v2777 = vunpack.c.l.b16 %v353
    %v2778 = vunpack.c.h.b16 %v353
    %v2779 = vunpack.c.l.b16 %v354
    %v2780 = vunpack.c.h.b16 %v354
    %v2781 = vunpack.c.l.b16 %v355
    %v2782 = vunpack.c.h.b16 %v355
    %v2783 = vunpack.c.l.b16 %v356
    %v2784 = vunpack.c.h.b16 %v356
    %v2785 = vunpack.c.l.b16 %v357
    %v2786 = vunpack.c.h.b16 %v357
    %v2787 = vunpack.c.l.b16 %v358
    %v2788 = vunpack.c.h.b16 %v358
    %v2789 = vunpack.c.l.b16 %v359
    %v2790 = vunpack.c.h.b16 %v359
    %v2791 = vunpack.c.l.b16 %v360
    %v2792 = vunpack.c.h.b16 %v360
    %v2793 = vunpack.c.l.b16 %v361
    %v2794 = vunpack.c.h.b16 %v361
    %v2795 = vunpack.c.l.b16 %v362
    %v2796 = vunpack.c.h.b16 %v362
    %v2797 = vunpack.c.l.b16 %v363
    %v2798 = vunpack.c.h.b16 %v363
    %v2799 = vunpack.c.l.b16 %v364
    %v2800 = vunpack.c.h.b16 %v364
    %v2801 = vunpack.c.l.b16 %v365
    %v2802 = vunpack.c.h.b16 %v365
    %v2803 = vunpack.c.l.b16 %v366
    %v2804 = vunpack.c.h.b16 %v366
    %v2805 = vunpack.c.l.b16 %v367
    %v2806 = vunpack.c.h.b16 %v367
    %v2807 = vunpack.c.l.b16 %v368
    %v2808 = vunpack.c.h.b16 %v368
    %v2809 = vunpack.c.l.b16 %v369
    %v2810 = vunpack.c.h.b16 %v369
    %v2811 = vunpack.c.l.b16 %v370
    %v2812 = vunpack.c.h.b16 %v370
    %v2813 = vunpack.c.l.b16 %v371
    %v2814 = vunpack.c.h.b16 %v371
    %v2815 = vunpack.c.l.b16 %v372
    %v2816 = vunpack.c.h.b16 %v372
    %v2817 = vunpack.c.l.b16 %v373
    %v2818 = vunpack.c.h.b16 %v373
    %v2819 = vunpack.c.l.b16 %v374
    %v2820 = vunpack.c.h.b16 %v374
    %v2821 = vunpack.c.l.b16 %v375
    %v2822 = vunpack.c.h.b16 %v375
    %v2823 = vunpack.c.l.b16 %v376
    %v2824 = vunpack.c.h.b16 %v376
    %v2825 = vunpack.c.l.b16 %v377
    %v2826 = vunpack.c.h.b16 %v377
    %v2827 = vunpack.c.l.b16 %v378
    %v2828 = vunpack.c.h.b16 %v378
    %v2829 = vunpack.c.l.b16 %v379
    %v2830 = vunpack.c.h.b16 %v379
    %v2831 = vunpack.c.l.b16 %v380
    %v2832 = vunpack.c.h.b16 %v380
    %v2833 = vunpack.c.l.b16 %v381
    %v2834 = vunpack.c.h.b16 %v381
    %v2835 = vunpack.c.l.b16 %v382
    %v2836 = vunpack.c.h.b16 %v382
    %v2837 = vunpack.c.l.b16 %v383
    %v2838 = vunpack.c.h.b16 %v383
    %v2839 = vunpack.c.l.b16 %v384
    %v2840 = vunpack.c.h.b16 %v384
    %v2841 = vunpack.c.l.b16 %v385
    %v2842 = vunpack.c.h.b16 %v385
    %v2843 = vunpack.c.l.b16 %v386
    %v2844 = vunpack.c.h.b16 %v386
    %v2845 = vunpack.c.l.b16 %v387
    %v2846 = vunpack.c.h.b16 %v387
    %v2847 = vunpack.c.l.b16 %v388
    %v2848 = vunpack.c.h.b16 %v388
    %v2849 = vunpack.c.l.b16 %v389
    %v2850 = vunpack.c.h.b16 %v389
    %v2851 = vunpack.c.l.b16 %v390
    %v2852 = vunpack.c.h.b16 %v390
    %v2853 = vunpack.c.l.b16 %v391
    %v2854 = vunpack.c.h.b16 %v391
    %v2855 = vunpack.c.l.b16 %v392
    %v2856 = vunpack.c.h.b16 %v392
    %v2857 = vunpack.c.l.b16 %v393
    %v2858 = vunpack.c.h.b16 %v393
    %v2859 = vunpack.c.l.b16 %v394
    %v2860 = vunpack.c.h.b16 %v394
    %v2861 = vunpack.c.l.b16 %v395
    %v2862 = vunpack.c.h.b16 %v395
    %v2863 = vunpack.c.l.b16 %v396
    %v2864 = vunpack.c.h.b16 %v396
    %v2865 = vunpack.c.l.b16 %v397
    %v2866 = vunpack.c.h.b16 %v397
    %v2867 = vunpack.c.l.b16 %v398
    %v2868 = vunpack.c.h.b16 %v398
    %v2869 = vunpack.c.l.b16 %v399
    %v2870 = vunpack.c.h.b16 %v399
    %v2871 = vunpack.c.l.b16 %v400
    %v2872 = vunpack.c.h.b16 %v400
    %v2873 = vunpack.c.l.b16 %v401
    %v2874 = vunpack.c.h.b16 %v401
    %v2875 = vunpack.c.l.b16 %v402
    %v2876 = vunpack.c.h.b16 %v402
    %v2877 = vunpack.c.l.b16 %v403
    %v2878 = vunpack.c.h.b16 %v403
    %v2879 = vunpack.c.l.b16 %v404
    %v2880 = vunpack.c.h.b16 %v404
    %v2881 = vunpack.c.l.b16 %v405
    %v2882 = vunpack.c.h.b16 %v405
    %v2883 = vunpack.c.l.b16 %v406
    %v2884 = vunpack.c.h.b16 %v406
    %v2885 = vunpack.c.l.b16 %v407
    %v2886 = vunpack.c.h.b16 %v407
    %v2887 = vunpack.c.l.b16 %v408
    %v2888 = vunpack.c.h.b16 %v408
    %v2889 = vunpack.c.l.b16 %v409
    %v2890 = vunpack.c.h.b16 %v409
    %v2891 = vunpack.c.l.b16 %v410
    %v2892 = vunpack.c.h.b16 %v410
    %v2893 = vunpack.c.l.b16 %v411
    %v2894 = vunpack.c.h.b16 %v411
    %v2895 = vunpack.c.l.b16 %v412
    %v2896 = vunpack.c.h.b16 %v412
    %v2897 = vunpack.c.l.b16 %v413
    %v2898 = vunpack.c.h.b16 %v413
    %v2899 = vunpack.c.l.b16 %v414
    %v2900 = vunpack.c.h.b16 %v414
    %v2901 = vunpack.c.l.b16 %v415
    %v2902 = vunpack.c.h.b16 %v415
    %v2903 = vunpack.c.l.b16 %v416
    %v2904 = vunpack.c.h.b16 %v416
    %v2905 = vunpack.c.l.b16 %v417
    %v2906 = vunpack.c.h.b16 %v417
    %v2907 = vunpack.c.l.b16 %v418
    %v2908 = vunpack.c.h.b16 %v418
    %v2909 = vunpack.c.l.b16 %v419
    %v2910 = vunpack.c.h.b16 %v419
    %v2911 = vunpack.c.l.b16 %v420
    %v2912 = vunpack.c.h.b16 %v420
    %v2913 = vunpack.c.l.b16 %v421
    %v2914 = vunpack.c.h.b16 %v421
    %v2915 = vunpack.c.l.b16 %v422
    %v2916 = vunpack.c.h.b16 %v422
    %v2917 = vunpack.c.l.b16 %v423
    %v2918 = vunpack.c.h.b16 %v423
    %v2919 = vunpack.c.l.b16 %v424
    %v2920 = vunpack.c.h.b16 %v424
    %v2921 = vunpack.c.l.b16 %v425
    %v2922 = vunpack.c.h.b16 %v425
    %v2923 = vunpack.c.l.b16 %v426
    %v2924 = vunpack.c.h.b16 %v426
    %v2925 = vunpack.c.l.b16 %v427
    %v2926 = vunpack.c.h.b16 %v427
    %v2927 = vunpack.c.l.b16 %v428
    %v2928 = vunpack.c.h.b16 %v428
    %v2929 = vunpack.c.l.b16 %v429
    %v2930 = vunpack.c.h.b16 %v429
    %v2931 = vunpack.c.l.b16 %v430
    %v2932 = vunpack.c.h.b16 %v430
    %v2933 = vunpack.c.l.b16 %v431
    %v2934 = vunpack.c.h.b16 %v431
    %v2935 = vunpack.c.l.b16 %v432
    %v2936 = vunpack.c.h.b16 %v432
    %v2937 = vunpack.c.l.b16 %v433
    %v2938 = vunpack.c.h.b16 %v433
    %v2939 = vunpack.c.l.b16 %v434
    %v2940 = vunpack.c.h.b16 %v434
    %v2941 = vunpack.c.l.b16 %v435
    %v2942 = vunpack.c.h.b16 %v435
    %v2943 = vunpack.c.l.b16 %v436
    %v2944 = vunpack.c.h.b16 %v436
    %v2945 = vunpack.c.l.b16 %v437
    %v2946 = vunpack.c.h.b16 %v437
    %v2947 = vunpack.c.l.b16 %v438
    %v2948 = vunpack.c.h.b16 %v438
    %v2949 = vunpack.c.l.b16 %v439
    %v2950 = vunpack.c.h.b16 %v439
    %v2951 = vunpack.c.l.b16 %v440
    %v2952 = vunpack.c.h.b16 %v440
    %v2953 = vunpack.c.l.b16 %v441
    %v2954 = vunpack.c.h.b16 %v441
    %v2955 = vunpack.c.l.b16 %v442
    %v2956 = vunpack.c.h.b16 %v442
    %v2957 = vunpack.c.l.b16 %v443
    %v2958 = vunpack.c.h.b16 %v443
    %v2959 = vunpack.c.l.b16 %v444
    %v2960 = vunpack.c.h.b16 %v444
    %v2961 = vunpack.c.l.b16 %v445
    %v2962 = vunpack.c.h.b16 %v445
    %v2963 = vunpack.c.l.b16 %v446
    %v2964 = vunpack.c.h.b16 %v446
    %v2965 = vunpack.c.l.b16 %v447
    %v2966 = vunpack.c.h.b16 %v447
    %v2967 = vunpack.c.l.b16 %v448
    %v2968 = vunpack.c.h.b16 %v448
    %v2969 = vunpack.c.l.b16 %v449
    %v2970 = vunpack.c.h.b16 %v449
    %v2971 = vunpack.c.l.b16 %v450
    %v2972 = vunpack.c.h.b16 %v450
    %v2973 = vunpack.c.l.b16 %v451
    %v2974 = vunpack.c.h.b16 %v451
    %v2975 = vunpack.c.l.b16 %v452
    %v2976 = vunpack.c.h.b16 %v452
    %v2977 = vunpack.c.l.b16 %v453
    %v2978 = vunpack.c.h.b16 %v453
    %v2979 = vunpack.c.l.b16 %v454
    %v2980 = vunpack.c.h.b16 %v454
    %v2981 = vunpack.c.l.b16 %v455
    %v2982 = vunpack.c.h.b16 %v455
    %v2983 = vunpack.c.l.b16 %v456
    %v2984 = vunpack.c.h.b16 %v456
    %v2985 = vunpack.c.l.b16 %v457
    %v2986 = vunpack.c.h.b16 %v457
    %v2987 = vunpack.c.l.b16 %v458
    %v2988 = vunpack.c.h.b16 %v458
    %v2989 = vunpack.c.l.b16 %v459
    %v2990 = vunpack.c.h.b16 %v459
    %v2991 = vunpack.c.l.b16 %v460
    %v2992 = vunpack.c.h.b16 %v460
    %v2993 = vunpack.c.l.b16 %v461
    %v2994 = vunpack.c.h.b16 %v461
    %v2995 = vunpack.c.l.b16 %v462
    %v2996 = vunpack.c.h.b16 %v462
    %v2997 = vunpack.c.l.b16 %v463
    %v2998 = vunpack.c.h.b16 %v463
    %v2999 = vunpack.c.l.b16 %v464
    %v3000 = vunpack.c.h.b16 %v464
    %v3001 = vunpack.c.l.b16 %v465
    %v3002 = vunpack.c.h.b16 %v465
    %v3003 = vunpack.c.l.b16 %v466
    %v3004 = vunpack.c.h.b16 %v466
    %v3005 = vunpack.c.l.b16 %v467
    %v3006 = vunpack.c.h.b16 %v467
    %v3007 = vunpack.c.l.b16 %v468
    %v3008 = vunpack.c.h.b16 %v468
    %v3009 = vunpack.c.l.b16 %v469
    %v3010 = vunpack.c.h.b16 %v469
    %v3011 = vunpack.c.l.b16 %v470
    %v3012 = vunpack.c.h.b16 %v470
    %v3013 = vunpack.c.l.b16 %v471
    %v3014 = vunpack.c.h.b16 %v471
    %v3015 = vunpack.c.l.b16 %v472
    %v3016 = vunpack.c.h.b16 %v472
    %v3017 = vunpack.c.l.b16 %v473
    %v3018 = vunpack.c.h.b16 %v473
    %v3019 = vunpack.c.l.b16 %v474
    %v3020 = vunpack.c.h.b16 %v474
    %v3021 = vunpack.c.l.b16 %v475
    %v3022 = vunpack.c.h.b16 %v475
    %v3023 = vunpack.c.l.b16 %v476
    %v3024 = vunpack.c.h.b16 %v476
    %v3025 = vunpack.c.l.b16 %v477
    %v3026 = vunpack.c.h.b16 %v477
    %v3027 = vunpack.c.l.b16 %v478
    %v3028 = vunpack.c.h.b16 %v478
    %v3029 = vunpack.c.l.b16 %v479
    %v3030 = vunpack.c.h.b16 %v479
    %v3031 = vunpack.c.l.b16 %v480
    %v3032 = vunpack.c.h.b16 %v480
    %v3033 = vunpack.c.l.b16 %v481
    %v3034 = vunpack.c.h.b16 %v481
    %v3035 = vunpack.c.l.b16 %v482
    %v3036 = vunpack.c.h.b16 %v482
    %v3037 = vunpack.c.l.b16 %v483
    %v3038 = vunpack.c.h.b16 %v483
    %v3039 = vunpack.c.l.b16 %v484
    %v3040 = vunpack.c.h.b16 %v484
    %v3041 = vunpack.c.l.b16 %v485
    %v3042 = vunpack.c.h.b16 %v485
    %v3043 = vunpack.c.l.b16 %v486
    %v3044 = vunpack.c.h.b16 %v486
    %v3045 = vunpack.c.l.b16 %v487
    %v3046 = vunpack.c.h.b16 %v487
    %v3047 = vunpack.c.l.b16 %v488
    %v3048 = vunpack.c.h.b16 %v488
    %v3049 = vunpack.c.l.b16 %v489
    %v3050 = vunpack.c.h.b16 %v489
    %v3051 = vunpack.c.l.b16 %v490
    %v3052 = vunpack.c.h.b16 %v490
    %v3053 = vunpack.c.l.b16 %v491
    %v3054 = vunpack.c.h.b16 %v491
    %v3055 = vunpack.c.l.b16 %v492
    %v3056 = vunpack.c.h.b16 %v492
    %v3057 = vunpack.c.l.b16 %v493
    %v3058 = vunpack.c.h.b16 %v493
    %v3059 = vunpack.c.l.b16 %v494
    %v3060 = vunpack.c.h.b16 %v494
    %v3061 = vunpack.c.l.b16 %v495
    %v3062 = vunpack.c.h.b16 %v495
    %v3063 = vunpack.c.l.b16 %v496
    %v3064 = vunpack.c.h.b16 %v496
    %v3065 = vunpack.c.l.b16 %v497
    %v3066 = vunpack.c.h.b16 %v497
    %v3067 = vunpack.c.l.b16 %v498
    %v3068 = vunpack.c.h.b16 %v498
    %v3069 = vunpack.c.l.b16 %v499
    %v3070 = vunpack.c.h.b16 %v499
    %v3071 = vunpack.c.l.b16 %v500
    %v3072 = vunpack.c.h.b16 %v500
    %v3073 = vunpack.c.l.b16 %v501
    %v3074 = vunpack.c.h.b16 %v501
    %v3075 = vunpack.c.l.b16 %v502
    %v3076 = vunpack.c.h.b16 %v502
    %v3077 = vunpack.c.l.b16 %v503
    %v3078 = vunpack.c.h.b16 %v503
    %v3079 = vunpack.c.l.b16 %v504
    %v3080 = vunpack.c.h.b16 %v504
    %v3081 = vunpack.c.l.b16 %v505
    %v3082 = vunpack.c.h.b16 %v505
    %v3083 = vunpack.c.l.b16 %v506
    %v3084 = vunpack.c.h.b16 %v506
    %v3085 = vunpack.c.l.b16 %v507
    %v3086 = vunpack.c.h.b16 %v507
    %v3087 = vunpack.c.l.b16 %v508
    %v3088 = vunpack.c.h.b16 %v508
    %v3089 = vunpack.c.l.b16 %v509
    %v3090 = vunpack.c.h.b16 %v509
    %v3091 = vunpack.c.l.b16 %v510
    %v3092 = vunpack.c.h.b16 %v510
    %v3093 = vunpack.c.l.b16 %v511
    %v3094 = vunpack.c.h.b16 %v511
    %v3095 = vunpack.c.l.b16 %v512
    %v3096 = vunpack.c.h.b16 %v512
    %v3097 = vunpack.c.l.b16 %v513
    %v3098 = vunpack.c.h.b16 %v513
    %v3099 = vunpack.c.l.b16 %v514
    %v3100 = vunpack.c.h.b16 %v514
    %v3101 = vunpack.c.l.b16 %v515
    %v3102 = vunpack.c.h.b16 %v515
    %v3103 = vunpack.c.l.b16 %v516
    %v3104 = vunpack.c.h.b16 %v516
    %v3105 = vunpack.c.l.b16 %v517
    %v3106 = vunpack.c.h.b16 %v517
    %v3107 = vunpack.c.l.b16 %v518
    %v3108 = vunpack.c.h.b16 %v518
    %v3109 = vunpack.c.l.b16 %v519
    %v3110 = vunpack.c.h.b16 %v519
    %v3111 = vunpack.c.l.b16 %v520
    %v3112 = vunpack.c.h.b16 %v520
    %v3113 = vunpack.c.l.b16 %v521
    %v3114 = vunpack.c.h.b16 %v521
    %v3115 = vunpack.c.l.b16 %v522
    %v3116 = vunpack.c.h.b16 %v522
    %v3117 = vunpack.c.l.b16 %v523
    %v3118 = vunpack.c.h.b16 %v523
    %v3119 = vunpack.c.l.b16 %v524
    %v3120 = vunpack.c.h.b16 %v524
    %v3121 = vunpack.c.l.b16 %v525
    %v3122 = vunpack.c.h.b16 %v525
    %v3123 = vunpack.c.l.b16 %v526
    %v3124 = vunpack.c.h.b16 %v526
    %v3125 = vunpack.c.l.b16 %v527
    %v3126 = vunpack.c.h.b16 %v527
    %v3127 = vunpack.c.l.b16 %v528
    %v3128 = vunpack.c.h.b16 %v528
    %v3129 = vunpack.c.l.b16 %v529
    %v3130 = vunpack.c.h.b16 %v529
    %v3131 = vunpack.c.l.b16 %v530
    %v3132 = vunpack.c.h.b16 %v530
    %v3133 = vunpack.c.l.b16 %v531
    %v3134 = vunpack.c.h.b16 %v531
    %v3135 = vunpack.c.l.b16 %v532
    %v3136 = vunpack.c.h.b16 %v532
    %v3137 = vunpack.c.l.b16 %v533
    %v3138 = vunpack.c.h.b16 %v533
    %v3139 = vunpack.c.l.b16 %v534
    %v3140 = vunpack.c.h.b16 %v534
    %v3141 = vunpack.c.l.b16 %v535
    %v3142 = vunpack.c.h.b16 %v535
    %v3143 = vunpack.c.l.b16 %v536
    %v3144 = vunpack.c.h.b16 %v536
    %v3145 = vunpack.c.l.b16 %v537
    %v3146 = vunpack.c.h.b16 %v537
    %v3147 = vunpack.c.l.b16 %v538
    %v3148 = vunpack.c.h.b16 %v538
    %v3149 = vunpack.c.l.b16 %v539
    %v3150 = vunpack.c.h.b16 %v539
    %v3151 = vunpack.c.l.b16 %v540
    %v3152 = vunpack.c.h.b16 %v540
    %v3153 = vunpack.c.l.b16 %v541
    %v3154 = vunpack.c.h.b16 %v541
    %v3155 = vunpack.c.l.b16 %v542
    %v3156 = vunpack.c.h.b16 %v542
    %v3157 = vunpack.c.l.b16 %v543
    %v3158 = vunpack.c.h.b16 %v543
    %v3159 = vunpack.c.l.b16 %v544
    %v3160 = vunpack.c.h.b16 %v544
    %v3161 = vunpack.c.l.b16 %v545
    %v3162 = vunpack.c.h.b16 %v545
    %v3163 = vunpack.c.l.b16 %v546
    %v3164 = vunpack.c.h.b16 %v546
    %v3165 = vunpack.c.l.b16 %v547
    %v3166 = vunpack.c.h.b16 %v547
    %v3167 = vunpack.c.l.b16 %v548
    %v3168 = vunpack.c.h.b16 %v548
    %v3169 = vunpack.c.l.b16 %v549
    %v3170 = vunpack.c.h.b16 %v549
    %v3171 = vunpack.c.l.b16 %v550
    %v3172 = vunpack.c.h.b16 %v550
    %v3173 = vunpack.c.l.b16 %v551
    %v3174 = vunpack.c.h.b16 %v551
    %v3175 = vunpack.c.l.b16 %v552
    %v3176 = vunpack.c.h.b16 %v552
    %v3177 = vunpack.c.l.b16 %v553
    %v3178 = vunpack.c.h.b16 %v553
    %v3179 = vunpack.c.l.b16 %v554
    %v3180 = vunpack.c.h.b16 %v554
    %v3181 = vunpack.c.l.b16 %v555
    %v3182 = vunpack.c.h.b16 %v555
    %v3183 = vunpack.c.l.b16 %v556
    %v3184 = vunpack.c.h.b16 %v556
    %v3185 = vunpack.c.l.b16 %v557
    %v3186 = vunpack.c.h.b16 %v557
    %v3187 = vunpack.c.l.b16 %v558
    %v3188 = vunpack.c.h.b16 %v558
    %v3189 = vunpack.c.l.b16 %v559
    %v3190 = vunpack.c.h.b16 %v559
    %v3191 = vunpack.c.l.b16 %v560
    %v3192 = vunpack.c.h.b16 %v560
    %v3193 = vunpack.c.l.b16 %v561
    %v3194 = vunpack.c.h.b16 %v561
    %v3195 = vunpack.c.l.b16 %v562
    %v3196 = vunpack.c.h.b16 %v562
    %v3197 = vunpack.c.l.b16 %v563
    %v3198 = vunpack.c.h.b16 %v563
    %v3199 = vunpack.c.l.b16 %v564
    %v3200 = vunpack.c.h.b16 %v564
    %v3201 = vunpack.c.l.b16 %v565
    %v3202 = vunpack.c.h.b16 %v565
    %v3203 = vunpack.c.l.b16 %v566
    %v3204 = vunpack.c.h.b16 %v566
    %v3205 = vunpack.c.l.b16 %v567
    %v3206 = vunpack.c.h.b16 %v567
    %v3207 = vunpack.c.l.b16 %v568
    %v3208 = vunpack.c.h.b16 %v568
    %v3209 = vunpack.c.l.b16 %v569
    %v3210 = vunpack.c.h.b16 %v569
    %v3211 = vunpack.c.l.b16 %v570
    %v3212 = vunpack.c.h.b16 %v570
    %v3213 = vunpack.c.l.b16 %v571
    %v3214 = vunpack.c.h.b16 %v571
    %v3215 = vunpack.c.l.b16 %v572
    %v3216 = vunpack.c.h.b16 %v572
    %v3217 = vunpack.c.l.b16 %v573
    %v3218 = vunpack.c.h.b16 %v573
    %v3219 = vunpack.c.l.b16 %v574
    %v3220 = vunpack.c.h.b16 %v574
    %v3221 = vunpack.c.l.b16 %v575
    %v3222 = vunpack.c.h.b16 %v575
    %v3223 = vunpack.c.l.b16 %v576
    %v3224 = vunpack.c.h.b16 %v576
    %v3225 = vunpack.c.l.b16 %v577
    %v3226 = vunpack.c.h.b16 %v577
    %v3227 = vunpack.c.l.b16 %v578
    %v3228 = vunpack.c.h.b16 %v578
    %v3229 = vunpack.c.l.b16 %v579
    %v3230 = vunpack.c.h.b16 %v579
    %v3231 = vunpack.c.l.b16 %v580
    %v3232 = vunpack.c.h.b16 %v580
    %v3233 = vunpack.c.l.b16 %v581
    %v3234 = vunpack.c.h.b16 %v581
    %v3235 = vunpack.c.l.b16 %v582
    %v3236 = vunpack.c.h.b16 %v582
    %v3237 = vunpack.c.l.b16 %v583
    %v3238 = vunpack.c.h.b16 %v583
    %v3239 = vunpack.c.l.b16 %v584
    %v3240 = vunpack.c.h.b16 %v584
    %v3241 = vunpack.c.l.b16 %v585
    %v3242 = vunpack.c.h.b16 %v585
    %v3243 = vunpack.c.l.b16 %v586
    %v3244 = vunpack.c.h.b16 %v586
    %v3245 = vunpack.c.l.b16 %v587
    %v3246 = vunpack.c.h.b16 %v587
    %v3247 = vunpack.c.l.b16 %v588
    %v3248 = vunpack.c.h.b16 %v588
    %v3249 = vunpack.c.l.b16 %v589
    %v3250 = vunpack.c.h.b16 %v589
    %v3251 = vunpack.c.l.b16 %v590
    %v3252 = vunpack.c.h.b16 %v590
    %v3253 = vunpack.c.l.b16 %v591
    %v3254 = vunpack.c.h.b16 %v591
    %v3255 = vunpack.c.l.b16 %v592
    %v3256 = vunpack.c.h.b16 %v592
    %v3257 = vunpack.c.l.b16 %v593
    %v3258 = vunpack.c.h.b16 %v593
    %v3259 = vunpack.c.l.b16 %v594
    %v3260 = vunpack.c.h.b16 %v594
    %v3261 = vunpack.c.l.b16 %v595
    %v3262 = vunpack.c.h.b16 %v595
    %v3263 = vunpack.c.l.b16 %v596
    %v3264 = vunpack.c.h.b16 %v596
    %v3265 = vunpack.c.l.b16 %v597
    %v3266 = vunpack.c.h.b16 %v597
    %v3267 = vunpack.c.l.b16 %v598
    %v3268 = vunpack.c.h.b16 %v598
    %v3269 = vunpack.c.l.b16 %v599
    %v3270 = vunpack.c.h.b16 %v599
    %v3271 = vunpack.c.l.b16 %v600
    %v3272 = vunpack.c.h.b16 %v600
    %v3273 = vunpack.c.l.b16 %v601
    %v3274 = vunpack.c.h.b16 %v601
    %v3275 = vunpack.c.l.b16 %v602
    %v3276 = vunpack.c.h.b16 %v602
    %v3277 = vunpack.c.l.b16 %v603
    %v3278 = vunpack.c.h.b16 %v603
    %v3279 = vunpack.c.l.b16 %v604
    %v3280 = vunpack.c.h.b16 %v604
    %v3281 = vunpack.c.l.b16 %v605
    %v3282 = vunpack.c.h.b16 %v605
    %v3283 = vunpack.c.l.b16 %v606
    %v3284 = vunpack.c.h.b16 %v606
    %v3285 = vunpack.c.l.b16 %v607
    %v3286 = vunpack.c.h.b16 %v607
    %v3287 = vunpack.c.l.b16 %v608
    %v3288 = vunpack.c.h.b16 %v608
    %v3289 = vunpack.c.l.b16 %v609
    %v3290 = vunpack.c.h.b16 %v609
    %v3291 = vunpack.c.l.b16 %v610
    %v3292 = vunpack.c.h.b16 %v610
    %v3293 = vunpack.c.l.b16 %v611
    %v3294 = vunpack.c.h.b16 %v611
    %v3295 = vunpack.c.l.b16 %v612
    %v3296 = vunpack.c.h.b16 %v612
    %v3297 = vunpack.c.l.b16 %v613
    %v3298 = vunpack.c.h.b16 %v613
    %v3299 = vunpack.c.l.b16 %v614
    %v3300 = vunpack.c.h.b16 %v614
    %v3301 = vunpack.c.l.b16 %v615
    %v3302 = vunpack.c.h.b16 %v615
    %v3303 = vunpack.c.l.b16 %v616
    %v3304 = vunpack.c.h.b16 %v616
    %v3305 = vunpack.c.l.b16 %v617
    %v3306 = vunpack.c.h.b16 %v617
    %v3307 = vunpack.c.l.b16 %v618
    %v3308 = vunpack.c.h.b16 %v618
    %v3309 = vunpack.c.l.b16 %v619
    %v3310 = vunpack.c.h.b16 %v619
    %v3311 = vunpack.c.l.b16 %v620
    %v3312 = vunpack.c.h.b16 %v620
    %v3313 = vunpack.c.l.b16 %v621
    %v3314 = vunpack.c.h.b16 %v621
    %v3315 = vunpack.c.l.b16 %v622
    %v3316 = vunpack.c.h.b16 %v622
    %v3317 = vunpack.c.l.b16 %v623
    %v3318 = vunpack.c.h.b16 %v623
    %v3319 = vunpack.c.l.b16 %v624
    %v3320 = vunpack.c.h.b16 %v624
    %v3321 = vunpack.c.l.b16 %v625
    %v3322 = vunpack.c.h.b16 %v625
    %v3323 = vunpack.c.l.b16 %v626
    %v3324 = vunpack.c.h.b16 %v626
    %v3325 = vunpack.c.l.b16 %v627
    %v3326 = vunpack.c.h.b16 %v627
    %v3327 = vunpack.c.l.b16 %v628
    %v3328 = vunpack.c.h.b16 %v628
    %v3329 = vunpack.c.l.b16 %v629
    %v3330 = vunpack.c.h.b16 %v629
    %v3331 = vunpack.c.l.b16 %v630
    %v3332 = vunpack.c.h.b16 %v630
    %v3333 = vunpack.c.l.b16 %v631
    %v3334 = vunpack.c.h.b16 %v631
    %v3335 = vunpack.c.l.b16 %v632
    %v3336 = vunpack.c.h.b16 %v632
    %v3337 = vunpack.c.l.b16 %v633
    %v3338 = vunpack.c.h.b16 %v633
    %v3339 = vunpack.c.l.b16 %v634
    %v3340 = vunpack.c.h.b16 %v634
    %v3341 = vunpack.c.l.b16 %v635
    %v3342 = vunpack.c.h.b16 %v635
    %v3343 = vunpack.c.l.b16 %v636
    %v3344 = vunpack.c.h.b16 %v636
    %v3345 = vunpack.c.l.b16 %v637
    %v3346 = vunpack.c.h.b16 %v637
    %v3347 = vunpack.c.l.b16 %v638
    %v3348 = vunpack.c.h.b16 %v638
    %v3349 = vunpack.c.l.b16 %v639
    %v3350 = vunpack.c.h.b16 %v639
    %v3351 = vunpack.c.l.b16 %v640
    %v3352 = vunpack.c.h.b16 %v640
    %v3353 = vunpack.c.l.b16 %v641
    %v3354 = vunpack.c.h.b16 %v641
    %v3355 = vunpack.c.l.b16 %v642
    %v3356 = vunpack.c.h.b16 %v642
    %v3357 = vunpack.c.l.b16 %v643
    %v3358 = vunpack.c.h.b16 %v643
    %v3359 = vunpack.c.l.b16 %v644
    %v3360 = vunpack.c.h.b16 %v644
    %v3361 = vunpack.c.l.b16 %v645
    %v3362 = vunpack.c.h.b16 %v645
    %v3363 = vunpack.c.l.b16 %v646
    %v3364 = vunpack.c.h.b16 %v646
    %v3365 = vunpack.c.l.b16 %v647
    %v3366 = vunpack.c.h.b16 %v647
    %v3367 = vunpack.c.l.b16 %v648
    %v3368 = vunpack.c.h.b16 %v648
    %v3369 = vunpack.c.l.b16 %v649
    %v3370 = vunpack.c.h.b16 %v649
    %v3371 = vunpack.c.l.b16 %v650
    %v3372 = vunpack.c.h.b16 %v650
    %v3373 = vunpack.c.l.b16 %v651
    %v3374 = vunpack.c.h.b16 %v651
    %v3375 = vunpack.c.l.b16 %v652
    %v3376 = vunpack.c.h.b16 %v652
    %v3377 = vunpack.c.l.b16 %v653
    %v3378 = vunpack.c.h.b16 %v653
    %v3379 = vunpack.c.l.b16 %v654
    %v3380 = vunpack.c.h.b16 %v654
    %v3381 = vunpack.c.l.b16 %v655
    %v3382 = vunpack.c.h.b16 %v655
    %v3383 = vunpack.c.l.b16 %v656
    %v3384 = vunpack.c.h.b16 %v656
    %v3385 = vunpack.c.l.b16 %v657
    %v3386 = vunpack.c.h.b16 %v657
    %v3387 = vunpack.c.l.b16 %v658
    %v3388 = vunpack.c.h.b16 %v658
    %v3389 = vunpack.c.l.b16 %v659
    %v3390 = vunpack.c.h.b16 %v659
    %v3391 = vunpack.c.l.b16 %v660
    %v3392 = vunpack.c.h.b16 %v660
    %v3393 = vunpack.c.l.b16 %v661
    %v3394 = vunpack.c.h.b16 %v661
    %v3395 = vunpack.c.l.b16 %v662
    %v3396 = vunpack.c.h.b16 %v662
    %v3397 = vunpack.c.l.b16 %v663
    %v3398 = vunpack.c.h.b16 %v663
    %v3399 = vunpack.c.l.b16 %v664
    %v3400 = vunpack.c.h.b16 %v664
    %v3401 = vunpack.c.l.b16 %v665
    %v3402 = vunpack.c.h.b16 %v665
    %v3403 = vunpack.c.l.b16 %v666
    %v3404 = vunpack.c.h.b16 %v666
    %v3405 = vunpack.c.l.b16 %v667
    %v3406 = vunpack.c.h.b16 %v667
    %v3407 = vunpack.c.l.b16 %v668
    %v3408 = vunpack.c.h.b16 %v668
    %v3409 = vunpack.c.l.b16 %v669
    %v3410 = vunpack.c.h.b16 %v669
    %v3411 = vunpack.c.l.b16 %v670
    %v3412 = vunpack.c.h.b16 %v670
    %v3413 = vunpack.c.l.b16 %v671
    %v3414 = vunpack.c.h.b16 %v671
    %v3415 = vunpack.c.l.b16 %v672
    %v3416 = vunpack.c.h.b16 %v672
    %v3417 = vunpack.c.l.b16 %v673
    %v3418 = vunpack.c.h.b16 %v673
    %v3419 = vunpack.c.l.b16 %v674
    %v3420 = vunpack.c.h.b16 %v674
    %v3421 = vunpack.c.l.b16 %v675
    %v3422 = vunpack.c.h.b16 %v675
    %v3423 = vunpack.c.l.b16 %v676
    %v3424 = vunpack.c.h.b16 %v676
    %v3425 = vunpack.c.l.b16 %v677
    %v3426 = vunpack.c.h.b16 %v677
    %v3427 = vunpack.c.l.b16 %v678
    %v3428 = vunpack.c.h.b16 %v678
    %v3429 = vunpack.c.l.b16 %v679
    %v3430 = vunpack.c.h.b16 %v679
    %v3431 = vunpack.c.l.b16 %v680
    %v3432 = vunpack.c.h.b16 %v680
    %v3433 = vunpack.c.l.b16 %v681
    %v3434 = vunpack.c.h.b16 %v681
    %v3435 = vunpack.c.l.b16 %v682
    %v3436 = vunpack.c.h.b16 %v682
    %v3437 = vunpack.c.l.b16 %v683
    %v3438 = vunpack.c.h.b16 %v683
    %v3439 = vunpack.c.l.b16 %v684
    %v3440 = vunpack.c.h.b16 %v684
    %v3441 = vunpack.c.l.b16 %v685
    %v3442 = vunpack.c.h.b16 %v685
    %v3443 = vunpack.c.l.b16 %v686
    %v3444 = vunpack.c.h.b16 %v686
    %v3445 = vunpack.c.l.b16 %v687
    %v3446 = vunpack.c.h.b16 %v687
    %v3447 = vunpack.c.l.b16 %v688
    %v3448 = vunpack.c.h.b16 %v688
    %v3449 = vunpack.c.l.b16 %v689
    %v3450 = vunpack.c.h.b16 %v689
    %v3451 = vunpack.c.l.b16 %v690
    %v3452 = vunpack.c.h.b16 %v690
    %v3453 = vunpack.c.l.b16 %v691
    %v3454 = vunpack.c.h.b16 %v691
    %v3455 = vunpack.c.l.b16 %v692
    %v3456 = vunpack.c.h.b16 %v692
    %v3457 = vunpack.c.l.b16 %v693
    %v3458 = vunpack.c.h.b16 %v693
    %v3459 = vunpack.c.l.b16 %v694
    %v3460 = vunpack.c.h.b16 %v694
    %v3461 = vunpack.c.l.b16 %v695
    %v3462 = vunpack.c.h.b16 %v695
    %v3463 = vunpack.c.l.b16 %v696
    %v3464 = vunpack.c.h.b16 %v696
    %v3465 = vunpack.c.l.b16 %v697
    %v3466 = vunpack.c.h.b16 %v697
    %v3467 = vunpack.c.l.b16 %v698
    %v3468 = vunpack.c.h.b16 %v698
    %v3469 = vunpack.c.l.b16 %v699
    %v3470 = vunpack.c.h.b16 %v699
    %v3471 = vunpack.c.l.b16 %v700
    %v3472 = vunpack.c.h.b16 %v700
    %v3473 = vunpack.c.l.b16 %v701
    %v3474 = vunpack.c.h.b16 %v701
    %v3475 = vunpack.c.l.b16 %v702
    %v3476 = vunpack.c.h.b16 %v702
    %v3477 = vunpack.c.l.b16 %v703
    %v3478 = vunpack.c.h.b16 %v703
    %v3479 = vunpack.c.l.b16 %v704
    %v3480 = vunpack.c.h.b16 %v704
    %v3481 = vunpack.c.l.b16 %v705
    %v3482 = vunpack.c.h.b16 %v705
    %v3483 = vunpack.c.l.b16 %v706
    %v3484 = vunpack.c.h.b16 %v706
    %v3485 = vunpack.c.l.b16 %v707
    %v3486 = vunpack.c.h.b16 %v707
    %v3487 = vunpack.c.l.b16 %v708
    %v3488 = vunpack.c.h.b16 %v708
    %v3489 = vunpack.c.l.b16 %v709
    %v3490 = vunpack.c.h.b16 %v709
    %v3491 = vunpack.c.l.b16 %v710
    %v3492 = vunpack.c.h.b16 %v710
    %v3493 = vunpack.c.l.b16 %v711
    %v3494 = vunpack.c.h.b16 %v711
    %v3495 = vunpack.c.l.b16 %v712
    %v3496 = vunpack.c.h.b16 %v712
    %v3497 = vunpack.c.l.b16 %v713
    %v3498 = vunpack.c.h.b16 %v713
    %v3499 = vunpack.c.l.b16 %v714
    %v3500 = vunpack.c.h.b16 %v714
    %v3501 = vunpack.c.l.b16 %v715
    %v3502 = vunpack.c.h.b16 %v715
    %v3503 = vunpack.c.l.b16 %v716
    %v3504 = vunpack.c.h.b16 %v716
    %v3505 = vunpack.c.l.b16 %v717
    %v3506 = vunpack.c.h.b16 %v717
    %v3507 = vunpack.c.l.b16 %v718
    %v3508 = vunpack.c.h.b16 %v718
    %v3509 = vunpack.c.l.b16 %v719
    %v3510 = vunpack.c.h.b16 %v719
    %v3511 = vunpack.c.l.b16 %v720
    %v3512 = vunpack.c.h.b16 %v720
    %v3513 = vunpack.c.l.b16 %v721
    %v3514 = vunpack.c.h.b16 %v721
    %v3515 = vunpack.c.l.b16 %v722
    %v3516 = vunpack.c.h.b16 %v722
    %v3517 = vunpack.c.l.b16 %v723
    %v3518 = vunpack.c.h.b16 %v723
    %v3519 = vunpack.c.l.b16 %v724
    %v3520 = vunpack.c.h.b16 %v724
    %v3521 = vunpack.c.l.b16 %v725
    %v3522 = vunpack.c.h.b16 %v725
    %v3523 = vunpack.c.l.b16 %v726
    %v3524 = vunpack.c.h.b16 %v726
    %v3525 = vunpack.c.l.b16 %v727
    %v3526 = vunpack.c.h.b16 %v727
    %v3527 = vunpack.c.l.b16 %v728
    %v3528 = vunpack.c.h.b16 %v728
    %v3529 = vunpack.c.l.b16 %v729
    %v3530 = vunpack.c.h.b16 %v729
    %v3531 = vunpack.c.l.b16 %v730
    %v3532 = vunpack.c.h.b16 %v730
    %v3533 = vunpack.c.l.b16 %v731
    %v3534 = vunpack.c.h.b16 %v731
    %v3535 = vunpack.c.l.b16 %v732
    %v3536 = vunpack.c.h.b16 %v732
    %v3537 = vunpack.c.l.b16 %v733
    %v3538 = vunpack.c.h.b16 %v733
    %v3539 = vunpack.c.l.b16 %v734
    %v3540 = vunpack.c.h.b16 %v734
    %v3541 = vunpack.c.l.b16 %v735
    %v3542 = vunpack.c.h.b16 %v735
    %v3543 = vunpack.c.l.b16 %v736
    %v3544 = vunpack.c.h.b16 %v736
    %v3545 = vunpack.c.l.b16 %v737
    %v3546 = vunpack.c.h.b16 %v737
    %v3547 = vunpack.c.l.b16 %v738
    %v3548 = vunpack.c.h.b16 %v738
    %v3549 = vunpack.c.l.b16 %v739
    %v3550 = vunpack.c.h.b16 %v739
    %v3551 = vunpack.c.l.b16 %v740
    %v3552 = vunpack.c.h.b16 %v740
    %v3553 = vunpack.c.l.b16 %v741
    %v3554 = vunpack.c.h.b16 %v741
    %v3555 = vunpack.c.l.b16 %v742
    %v3556 = vunpack.c.h.b16 %v742
    %v3557 = vunpack.c.l.b16 %v743
    %v3558 = vunpack.c.h.b16 %v743
    %v3559 = vunpack.c.l.b16 %v744
    %v3560 = vunpack.c.h.b16 %v744
    %v3561 = vunpack.c.l.b16 %v745
    %v3562 = vunpack.c.h.b16 %v745
    %v3563 = vunpack.c.l.b16 %v746
    %v3564 = vunpack.c.h.b16 %v746
    %v3565 = vunpack.c.l.b16 %v747
    %v3566 = vunpack.c.h.b16 %v747
    %v3567 = vunpack.c.l.b16 %v748
    %v3568 = vunpack.c.h.b16 %v748
    %v3569 = vunpack.c.l.b16 %v749
    %v3570 = vunpack.c.h.b16 %v749
    %v3571 = vunpack.c.l.b16 %v750
    %v3572 = vunpack.c.h.b16 %v750
    %v3573 = vunpack.c.l.b16 %v751
    %v3574 = vunpack.c.h.b16 %v751
    %v3575 = vunpack.c.l.b16 %v752
    %v3576 = vunpack.c.h.b16 %v752
    %v3577 = vunpack.c.l.b16 %v753
    %v3578 = vunpack.c.h.b16 %v753
    %v3579 = vunpack.c.l.b16 %v754
    %v3580 = vunpack.c.h.b16 %v754
    %v3581 = vunpack.c.l.b16 %v755
    %v3582 = vunpack.c.h.b16 %v755
    %v3583 = vunpack.c.l.b16 %v756
    %v3584 = vunpack.c.h.b16 %v756
    %v3585 = vunpack.c.l.b16 %v757
    %v3586 = vunpack.c.h.b16 %v757
    %v3587 = vunpack.c.l.b16 %v758
    %v3588 = vunpack.c.h.b16 %v758
    %v3589 = vunpack.c.l.b16 %v759
    %v3590 = vunpack.c.h.b16 %v759
    %v3591 = vunpack.c.l.b16 %v760
    %v3592 = vunpack.c.h.b16 %v760
    %v3593 = vunpack.c.l.b16 %v761
    %v3594 = vunpack.c.h.b16 %v761
    %v3595 = vunpack.c.l.b16 %v762
    %v3596 = vunpack.c.h.b16 %v762
    %v3597 = vunpack.c.l.b16 %v763
    %v3598 = vunpack.c.h.b16 %v763
    %v3599 = vunpack.c.l.b16 %v764
    %v3600 = vunpack.c.h.b16 %v764
    %v3601 = vunpack.c.l.b16 %v765
    %v3602 = vunpack.c.h.b16 %v765
    %v3603 = vunpack.c.l.b16 %v766
    %v3604 = vunpack.c.h.b16 %v766
    %v3605 = vunpack.c.l.b16 %v767
    %v3606 = vunpack.c.h.b16 %v767
    %v3607 = vunpack.c.l.b16 %v768
    %v3608 = vunpack.c.h.b16 %v768
    %v3609 = vunpack.c.l.b16 %v769
    %v3610 = vunpack.c.h.b16 %v769
    %v3611 = vunpack.c.l.b16 %v770
    %v3612 = vunpack.c.h.b16 %v770
    %v3613 = vunpack.c.l.b16 %v771
    %v3614 = vunpack.c.h.b16 %v771
    %v3615 = vunpack.c.l.b16 %v772
    %v3616 = vunpack.c.h.b16 %v772
    %v3617 = vunpack.c.l.b16 %v773
    %v3618 = vunpack.c.h.b16 %v773
    %v3619 = vunpack.c.l.b16 %v774
    %v3620 = vunpack.c.h.b16 %v774
    %v3621 = vunpack.c.l.b16 %v775
    %v3622 = vunpack.c.h.b16 %v775
    %v3623 = vunpack.c.l.b16 %v776
    %v3624 = vunpack.c.h.b16 %v776
    %v3625 = vunpack.c.l.b16 %v777
    %v3626 = vunpack.c.h.b16 %v777
    %v3627 = vunpack.c.l.b16 %v778
    %v3628 = vunpack.c.h.b16 %v778
    %v3629 = vunpack.c.l.b16 %v779
    %v3630 = vunpack.c.h.b16 %v779
    %v3631 = vunpack.c.l.b16 %v780
    %v3632 = vunpack.c.h.b16 %v780
    %v3633 = vunpack.c.l.b16 %v781
    %v3634 = vunpack.c.h.b16 %v781
    %v3635 = vunpack.c.l.b16 %v782
    %v3636 = vunpack.c.h.b16 %v782
    %v3637 = vunpack.c.l.b16 %v783
    %v3638 = vunpack.c.h.b16 %v783
    %v3639 = vunpack.c.l.b16 %v784
    %v3640 = vunpack.c.h.b16 %v784
    %v3641 = vunpack.c.l.b16 %v785
    %v3642 = vunpack.c.h.b16 %v785
    %v3643 = vunpack.c.l.b16 %v786
    %v3644 = vunpack.c.h.b16 %v786
    %v3645 = vunpack.c.l.b16 %v787
    %v3646 = vunpack.c.h.b16 %v787
    %v3647 = vunpack.c.l.b16 %v788
    %v3648 = vunpack.c.h.b16 %v788
    %v3649 = vunpack.c.l.b16 %v789
    %v3650 = vunpack.c.h.b16 %v789
    %v3651 = vunpack.c.l.b16 %v790
    %v3652 = vunpack.c.h.b16 %v790
    %v3653 = vunpack.c.l.b16 %v791
    %v3654 = vunpack.c.h.b16 %v791
    %v3655 = vunpack.c.l.b16 %v792
    %v3656 = vunpack.c.h.b16 %v792
    %v3657 = vunpack.c.l.b16 %v793
    %v3658 = vunpack.c.h.b16 %v793
    %v3659 = vunpack.c.l.b16 %v794
    %v3660 = vunpack.c.h.b16 %v794
    %v3661 = vunpack.c.l.b16 %v795
    %v3662 = vunpack.c.h.b16 %v795
    %v3663 = vunpack.c.l.b16 %v796
    %v3664 = vunpack.c.h.b16 %v796
    %v3665 = vunpack.c.l.b16 %v797
    %v3666 = vunpack.c.h.b16 %v797
    %v3667 = vunpack.c.l.b16 %v798
    %v3668 = vunpack.c.h.b16 %v798
    %v3669 = vunpack.c.l.b16 %v799
    %v3670 = vunpack.c.h.b16 %v799
    %v3671 = vunpack.c.l.b16 %v800
    %v3672 = vunpack.c.h.b16 %v800
    %v3673 = vunpack.c.l.b16 %v801
    %v3674 = vunpack.c.h.b16 %v801
    %v3675 = vunpack.c.l.b16 %v802
    %v3676 = vunpack.c.h.b16 %v802
    %v3677 = vunpack.c.l.b16 %v803
    %v3678 = vunpack.c.h.b16 %v803
    %v3679 = vunpack.c.l.b16 %v804
    %v3680 = vunpack.c.h.b16 %v804
    %v3681 = vunpack.c.l.b16 %v805
    %v3682 = vunpack.c.h.b16 %v805
    %v3683 = vunpack.c.l.b16 %v806
    %v3684 = vunpack.c.h.b16 %v806
    %v3685 = vunpack.c.l.b16 %v807
    %v3686 = vunpack.c.h.b16 %v807
    %v3687 = vunpack.c.l.b16 %v808
    %v3688 = vunpack.c.h.b16 %v808
    %v3689 = vunpack.c.l.b16 %v809
    %v3690 = vunpack.c.h.b16 %v809
    %v3691 = vunpack.c.l.b16 %v810
    %v3692 = vunpack.c.h.b16 %v810
    %v3693 = vunpack.c.l.b16 %v811
    %v3694 = vunpack.c.h.b16 %v811
    %v3695 = vunpack.c.l.b16 %v812
    %v3696 = vunpack.c.h.b16 %v812
    %v3697 = vunpack.c.l.b16 %v813
    %v3698 = vunpack.c.h.b16 %v813
    %v3699 = vunpack.c.l.b16 %v814
    %v3700 = vunpack.c.h.b16 %v814
    %v3701 = vunpack.c.l.b16 %v815
    %v3702 = vunpack.c.h.b16 %v815
    %v3703 = vunpack.c.l.b16 %v816
    %v3704 = vunpack.c.h.b16 %v816
    %v3705 = vunpack.c.l.b16 %v817
    %v3706 = vunpack.c.h.b16 %v817
    %v3707 = vunpack.c.l.b16 %v818
    %v3708 = vunpack.c.h.b16 %v818
    %v3709 = vunpack.c.l.b16 %v819
    %v3710 = vunpack.c.h.b16 %v819
    %v3711 = vunpack.c.l.b16 %v820
    %v3712 = vunpack.c.h.b16 %v820
    %v3713 = vunpack.c.l.b16 %v821
    %v3714 = vunpack.c.h.b16 %v821
    %v3715 = vunpack.c.l.b16 %v822
    %v3716 = vunpack.c.h.b16 %v822
    %v3717 = vunpack.c.l.b16 %v823
    %v3718 = vunpack.c.h.b16 %v823
    %v3719 = vunpack.c.l.b16 %v824
    %v3720 = vunpack.c.h.b16 %v824
    %v3721 = vunpack.c.l.b16 %v825
    %v3722 = vunpack.c.h.b16 %v825
    %v3723 = vunpack.c.l.b16 %v826
    %v3724 = vunpack.c.h.b16 %v826
    %v3725 = vunpack.c.l.b16 %v827
    %v3726 = vunpack.c.h.b16 %v827
    %v3727 = vunpack.c.l.b16 %v828
    %v3728 = vunpack.c.h.b16 %v828
    %v3729 = vunpack.c.l.b16 %v829
    %v3730 = vunpack.c.h.b16 %v829
    %v3731 = vunpack.c.l.b16 %v830
    %v3732 = vunpack.c.h.b16 %v830
    %v3733 = vunpack.c.l.b16 %v831
    %v3734 = vunpack.c.h.b16 %v831
    %v3735 = vunpack.c.l.b16 %v832
    %v3736 = vunpack.c.h.b16 %v832
    %v3737 = vunpack.c.l.b16 %v833
    %v3738 = vunpack.c.h.b16 %v833
    %v3739 = vunpack.c.l.b16 %v834
    %v3740 = vunpack.c.h.b16 %v834
    %v3741 = vunpack.c.l.b16 %v835
    %v3742 = vunpack.c.h.b16 %v835
    %v3743 = vunpack.c.l.b16 %v836
    %v3744 = vunpack.c.h.b16 %v836
    %v3745 = vunpack.c.l.b16 %v837
    %v3746 = vunpack.c.h.b16 %v837
    %v3747 = vunpack.c.l.b16 %v838
    %v3748 = vunpack.c.h.b16 %v838
    %v3749 = vunpack.c.l.b16 %v839
    %v3750 = vunpack.c.h.b16 %v839
    %v3751 = vunpack.c.l.b16 %v840
    %v3752 = vunpack.c.h.b16 %v840
    %v3753 = vunpack.c.l.b16 %v841
    %v3754 = vunpack.c.h.b16 %v841
    %v3755 = vunpack.c.l.b16 %v842
    %v3756 = vunpack.c.h.b16 %v842
    %v3757 = vunpack.c.l.b16 %v843
    %v3758 = vunpack.c.h.b16 %v843
    %v3759 = vunpack.c.l.b16 %v844
    %v3760 = vunpack.c.h.b16 %v844
    %v3761 = vunpack.c.l.b16 %v845
    %v3762 = vunpack.c.h.b16 %v845
    %v3763 = vunpack.c.l.b16 %v846
    %v3764 = vunpack.c.h.b16 %v846
    %v3765 = vunpack.c.l.b16 %v847
    %v3766 = vunpack.c.h.b16 %v847
    %v3767 = vunpack.c.l.b16 %v848
    %v3768 = vunpack.c.h.b16 %v848
    %v3769 = vunpack.c.l.b16 %v849
    %v3770 = vunpack.c.h.b16 %v849
    %v3771 = vunpack.c.l.b16 %v850
    %v3772 = vunpack.c.h.b16 %v850
    %v3773 = vunpack.c.l.b16 %v851
    %v3774 = vunpack.c.h.b16 %v851
    %v3775 = vunpack.c.l.b16 %v852
    %v3776 = vunpack.c.h.b16 %v852
    %v3777 = vunpack.c.l.b16 %v853
    %v3778 = vunpack.c.h.b16 %v853
    %v3779 = vunpack.c.l.b16 %v854
    %v3780 = vunpack.c.h.b16 %v854
    %v3781 = vunpack.c.l.b16 %v855
    %v3782 = vunpack.c.h.b16 %v855
    %v3783 = vunpack.c.l.b16 %v856
    %v3784 = vunpack.c.h.b16 %v856
    %v3785 = vunpack.c.l.b16 %v857
    %v3786 = vunpack.c.h.b16 %v857
    %v3787 = vunpack.c.l.b16 %v858
    %v3788 = vunpack.c.h.b16 %v858
    %v3789 = vunpack.c.l.b16 %v859
    %v3790 = vunpack.c.h.b16 %v859
    %v3791 = vunpack.c.l.b16 %v860
    %v3792 = vunpack.c.h.b16 %v860
    %v3793 = vunpack.c.l.b16 %v861
    %v3794 = vunpack.c.h.b16 %v861
    %v3795 = vunpack.c.l.b16 %v862
    %v3796 = vunpack.c.h.b16 %v862
    %v3797 = vunpack.c.l.b16 %v863
    %v3798 = vunpack.c.h.b16 %v863
    %v3799 = vunpack.c.l.b16 %v864
    %v3800 = vunpack.c.h.b16 %v864
    %v3801 = vunpack.c.l.b16 %v865
    %v3802 = vunpack.c.h.b16 %v865
    %v3803 = vunpack.c.l.b16 %v866
    %v3804 = vunpack.c.h.b16 %v866
    %v3805 = vunpack.c.l.b16 %v867
    %v3806 = vunpack.c.h.b16 %v867
    %v3807 = vunpack.c.l.b16 %v868
    %v3808 = vunpack.c.h.b16 %v868
    %v3809 = vunpack.c.l.b16 %v869
    %v3810 = vunpack.c.h.b16 %v869
    %v3811 = vunpack.c.l.b16 %v870
    %v3812 = vunpack.c.h.b16 %v870
    %v3813 = vunpack.c.l.b16 %v871
    %v3814 = vunpack.c.h.b16 %v871
    %v3815 = vunpack.c.l.b16 %v872
    %v3816 = vunpack.c.h.b16 %v872
    %v3817 = vunpack.c.l.b16 %v873
    %v3818 = vunpack.c.h.b16 %v873
    %v3819 = vunpack.c.l.b16 %v874
    %v3820 = vunpack.c.h.b16 %v874
    %v3821 = vunpack.c.l.b16 %v875
    %v3822 = vunpack.c.h.b16 %v875
    %v3823 = vunpack.c.l.b16 %v876
    %v3824 = vunpack.c.h.b16 %v876
    %v3825 = vunpack.c.l.b16 %v877
    %v3826 = vunpack.c.h.b16 %v877
    %v3827 = vunpack.c.l.b16 %v878
    %v3828 = vunpack.c.h.b16 %v878
    %v3829 = vunpack.c.l.b16 %v879
    %v3830 = vunpack.c.h.b16 %v879
    %v3831 = vunpack.c.l.b16 %v880
    %v3832 = vunpack.c.h.b16 %v880
    %v3833 = vunpack.c.l.b16 %v881
    %v3834 = vunpack.c.h.b16 %v881
    %v3835 = vunpack.c.l.b16 %v882
    %v3836 = vunpack.c.h.b16 %v882
    %v3837 = vunpack.c.l.b16 %v883
    %v3838 = vunpack.c.h.b16 %v883
    %v3839 = vunpack.c.l.b16 %v884
    %v3840 = vunpack.c.h.b16 %v884
    %v3841 = vunpack.c.l.b16 %v885
    %v3842 = vunpack.c.h.b16 %v885
    %v3843 = vunpack.c.l.b16 %v886
    %v3844 = vunpack.c.h.b16 %v886
    %v3845 = vunpack.c.l.b16 %v887
    %v3846 = vunpack.c.h.b16 %v887
    %v3847 = vunpack.c.l.b16 %v888
    %v3848 = vunpack.c.h.b16 %v888
    %v3849 = vunpack.c.l.b16 %v889
    %v3850 = vunpack.c.h.b16 %v889
    %v3851 = vunpack.c.l.b16 %v890
    %v3852 = vunpack.c.h.b16 %v890
    %v3853 = vunpack.c.l.b16 %v891
    %v3854 = vunpack.c.h.b16 %v891
    %v3855 = vunpack.c.l.b16 %v892
    %v3856 = vunpack.c.h.b16 %v892
    %v3857 = vunpack.c.l.b16 %v893
    %v3858 = vunpack.c.h.b16 %v893
    %v3859 = vunpack.c.l.b16 %v894
    %v3860 = vunpack.c.h.b16 %v894
    %v3861 = vunpack.c.l.b16 %v895
    %v3862 = vunpack.c.h.b16 %v895
    %v3863 = vunpack.c.l.b16 %v896
    %v3864 = vunpack.c.h.b16 %v896
    %v3865 = vunpack.c.l.b16 %v897
    %v3866 = vunpack.c.h.b16 %v897
    %v3867 = vunpack.c.l.b16 %v898
    %v3868 = vunpack.c.h.b16 %v898
    %v3869 = vunpack.c.l.b16 %v899
    %v3870 = vunpack.c.h.b16 %v899
    %v3871 = vunpack.c.l.b16 %v900
    %v3872 = vunpack.c.h.b16 %v900
    %v3873 = vunpack.c.l.b16 %v901
    %v3874 = vunpack.c.h.b16 %v901
    %v3875 = vunpack.c.l.b16 %v902
    %v3876 = vunpack.c.h.b16 %v902
    %v3877 = vunpack.c.l.b16 %v903
    %v3878 = vunpack.c.h.b16 %v903
    %v3879 = vunpack.c.l.b16 %v904
    %v3880 = vunpack.c.h.b16 %v904
    %v3881 = vunpack.c.l.b16 %v905
    %v3882 = vunpack.c.h.b16 %v905
    %v3883 = vunpack.c.l.b16 %v906
    %v3884 = vunpack.c.h.b16 %v906
    %v3885 = vunpack.c.l.b16 %v907
    %v3886 = vunpack.c.h.b16 %v907
    %v3887 = vunpack.c.l.b16 %v908
    %v3888 = vunpack.c.h.b16 %v908
    %v3889 = vunpack.c.l.b16 %v909
    %v3890 = vunpack.c.h.b16 %v909
    %v3891 = vunpack.c.l.b16 %v910
    %v3892 = vunpack.c.h.b16 %v910
    %v3893 = vunpack.c.l.b16 %v911
    %v3894 = vunpack.c.h.b16 %v911
    %v3895 = vunpack.c.l.b16 %v912
    %v3896 = vunpack.c.h.b16 %v912
    %v3897 = vunpack.c.l.b16 %v913
    %v3898 = vunpack.c.h.b16 %v913
    %v3899 = vunpack.c.l.b16 %v914
    %v3900 = vunpack.c.h.b16 %v914
    %v3901 = vunpack.c.l.b16 %v915
    %v3902 = vunpack.c.h.b16 %v915
    %v3903 = vunpack.c.l.b16 %v916
    %v3904 = vunpack.c.h.b16 %v916
    %v3905 = vunpack.c.l.b16 %v917
    %v3906 = vunpack.c.h.b16 %v917
    %v3907 = vunpack.c.l.b16 %v918
    %v3908 = vunpack.c.h.b16 %v918
    %v3909 = vunpack.c.l.b16 %v919
    %v3910 = vunpack.c.h.b16 %v919
    %v3911 = vunpack.c.l.b16 %v920
    %v3912 = vunpack.c.h.b16 %v920
    %v3913 = vunpack.c.l.b16 %v921
    %v3914 = vunpack.c.h.b16 %v921
    %v3915 = vunpack.c.l.b16 %v922
    %v3916 = vunpack.c.h.b16 %v922
    %v3917 = vunpack.c.l.b16 %v923
    %v3918 = vunpack.c.h.b16 %v923
    %v3919 = vunpack.c.l.b16 %v924
    %v3920 = vunpack.c.h.b16 %v924
    %v3921 = vunpack.c.l.b16 %v925
    %v3922 = vunpack.c.h.b16 %v925
    %v3923 = vunpack.c.l.b16 %v926
    %v3924 = vunpack.c.h.b16 %v926
    %v3925 = vunpack.c.l.b16 %v927
    %v3926 = vunpack.c.h.b16 %v927
    %v3927 = vunpack.c.l.b16 %v928
    %v3928 = vunpack.c.h.b16 %v928
    %v3929 = vunpack.c.l.b16 %v929
    %v3930 = vunpack.c.h.b16 %v929
    %v3931 = vunpack.c.l.b16 %v930
    %v3932 = vunpack.c.h.b16 %v930
    %v3933 = vunpack.c.l.b16 %v931
    %v3934 = vunpack.c.h.b16 %v931
    %v3935 = vunpack.c.l.b16 %v932
    %v3936 = vunpack.c.h.b16 %v932
    %v3937 = vunpack.c.l.b16 %v933
    %v3938 = vunpack.c.h.b16 %v933
    %v3939 = vunpack.c.l.b16 %v934
    %v3940 = vunpack.c.h.b16 %v934
    %v3941 = vunpack.c.l.b16 %v935
    %v3942 = vunpack.c.h.b16 %v935
    %v3943 = vunpack.c.l.b16 %v936
    %v3944 = vunpack.c.h.b16 %v936
    %v3945 = vunpack.c.l.b16 %v937
    %v3946 = vunpack.c.h.b16 %v937
    %v3947 = vunpack.c.l.b16 %v938
    %v3948 = vunpack.c.h.b16 %v938
    %v3949 = vunpack.c.l.b16 %v939
    %v3950 = vunpack.c.h.b16 %v939
    %v3951 = vunpack.c.l.b16 %v940
    %v3952 = vunpack.c.h.b16 %v940
    %v3953 = vunpack.c.l.b16 %v941
    %v3954 = vunpack.c.h.b16 %v941
    %v3955 = vunpack.c.l.b16 %v942
    %v3956 = vunpack.c.h.b16 %v942
    %v3957 = vunpack.c.l.b16 %v943
    %v3958 = vunpack.c.h.b16 %v943
    %v3959 = vunpack.c.l.b16 %v944
    %v3960 = vunpack.c.h.b16 %v944
    %v3961 = vunpack.c.l.b16 %v945
    %v3962 = vunpack.c.h.b16 %v945
    %v3963 = vunpack.c.l.b16 %v946
    %v3964 = vunpack.c.h.b16 %v946
    %v3965 = vunpack.c.l.b16 %v947
    %v3966 = vunpack.c.h.b16 %v947
    %v3967 = vunpack.c.l.b16 %v948
    %v3968 = vunpack.c.h.b16 %v948
    %v3969 = vunpack.c.l.b16 %v949
    %v3970 = vunpack.c.h.b16 %v949
    %v3971 = vunpack.c.l.b16 %v950
    %v3972 = vunpack.c.h.b16 %v950
    %v3973 = vunpack.c.l.b16 %v951
    %v3974 = vunpack.c.h.b16 %v951
    %v3975 = vunpack.c.l.b16 %v952
    %v3976 = vunpack.c.h.b16 %v952
    %v3977 = vunpack.c.l.b16 %v953
    %v3978 = vunpack.c.h.b16 %v953
    %v3979 = vunpack.c.l.b16 %v954
    %v3980 = vunpack.c.h.b16 %v954
    %v3981 = vunpack.c.l.b16 %v955
    %v3982 = vunpack.c.h.b16 %v955
    %v3983 = vunpack.c.l.b16 %v956
    %v3984 = vunpack.c.h.b16 %v956
    %v3985 = vunpack.c.l.b16 %v957
    %v3986 = vunpack.c.h.b16 %v957
    %v3987 = vunpack.c.l.b16 %v958
    %v3988 = vunpack.c.h.b16 %v958
    %v3989 = vunpack.c.l.b16 %v959
    %v3990 = vunpack.c.h.b16 %v959
    %v3991 = vunpack.c.l.b16 %v960
    %v3992 = vunpack.c.h.b16 %v960
    %v3993 = vunpack.c.l.b16 %v961
    %v3994 = vunpack.c.h.b16 %v961
    %v3995 = vunpack.c.l.b16 %v962
    %v3996 = vunpack.c.h.b16 %v962
    %v3997 = vunpack.c.l.b16 %v963
    %v3998 = vunpack.c.h.b16 %v963
    %v3999 = vunpack.c.l.b16 %v964
    %v4000 = vunpack.c.h.b16 %v964
    %v4001 = vunpack.c.l.b16 %v965
    %v4002 = vunpack.c.h.b16 %v965
    %v4003 = vunpack.c.l.b16 %v966
    %v4004 = vunpack.c.h.b16 %v966
    %v4005 = vunpack.c.l.b16 %v967
    %v4006 = vunpack.c.h.b16 %v967
    %v4007 = vunpack.c.l.b16 %v968
    %v4008 = vunpack.c.h.b16 %v968
    %v4009 = vunpack.c.l.b16 %v969
    %v4010 = vunpack.c.h.b16 %v969
    %v4011 = vunpack.c.l.b16 %v970
    %v4012 = vunpack.c.h.b16 %v970
    %v4013 = vunpack.c.l.b16 %v971
    %v4014 = vunpack.c.h.b16 %v971
    %v4015 = vunpack.c.l.b16 %v972
    %v4016 = vunpack.c.h.b16 %v972
    %v4017 = vunpack.c.l.b16 %v973
    %v4018 = vunpack.c.h.b16 %v973
    %v4019 = vunpack.c.l.b16 %v974
    %v4020 = vunpack.c.h.b16 %v974
    %v4021 = vunpack.c.l.b16 %v975
    %v4022 = vunpack.c.h.b16 %v975
    %v4023 = vunpack.c.l.b16 %v976
    %v4024 = vunpack.c.h.b16 %v976
    %v4025 = vunpack.c.l.b16 %v977
    %v4026 = vunpack.c.h.b16 %v977
    %v4027 = vunpack.c.l.b16 %v978
    %v4028 = vunpack.c.h.b16 %v978
    %v4029 = vunpack.c.l.b16 %v979
    %v4030 = vunpack.c.h.b16 %v979
    %v4031 = vunpack.c.l.b16 %v980
    %v4032 = vunpack.c.h.b16 %v980
    %v4033 = vunpack.c.l.b16 %v981
    %v4034 = vunpack.c.h.b16 %v981
    %v4035 = vunpack.c.l.b16 %v982
    %v4036 = vunpack.c.h.b16 %v982
    %v4037 = vunpack.c.l.b16 %v983
    %v4038 = vunpack.c.h.b16 %v983
    %v4039 = vunpack.c.l.b16 %v984
    %v4040 = vunpack.c.h.b16 %v984
    %v4041 = vunpack.c.l.b16 %v985
    %v4042 = vunpack.c.h.b16 %v985
    %v4043 = vunpack.c.l.b16 %v986
    %v4044 = vunpack.c.h.b16 %v986
    %v4045 = vunpack.c.l.b16 %v987
    %v4046 = vunpack.c.h.b16 %v987
    %v4047 = vunpack.c.l.b16 %v988
    %v4048 = vunpack.c.h.b16 %v988
    %v4049 = vunpack.c.l.b16 %v989
    %v4050 = vunpack.c.h.b16 %v989
    %v4051 = vunpack.c.l.b16 %v990
    %v4052 = vunpack.c.h.b16 %v990
    %v4053 = vunpack.c.l.b16 %v991
    %v4054 = vunpack.c.h.b16 %v991
    %v4055 = vunpack.c.l.b16 %v992
    %v4056 = vunpack.c.h.b16 %v992
    %v4057 = vunpack.c.l.b16 %v993
    %v4058 = vunpack.c.h.b16 %v993
    %v4059 = vunpack.c.l.b16 %v994
    %v4060 = vunpack.c.h.b16 %v994
    %v4061 = vunpack.c.l.b16 %v995
    %v4062 = vunpack.c.h.b16 %v995
    %v4063 = vunpack.c.l.b16 %v996
    %v4064 = vunpack.c.h.b16 %v996
    %v4065 = vunpack.c.l.b16 %v997
    %v4066 = vunpack.c.h.b16 %v997
    %v4067 = vunpack.c.l.b16 %v998
    %v4068 = vunpack.c.h.b16 %v998
    %v4069 = vunpack.c.l.b16 %v999
    %v4070 = vunpack.c.h.b16 %v999
    %v4071 = vunpack.c.l.b16 %v1000
    %v4072 = vunpack.c.h.b16 %v1000
    %v4073 = vunpack.c.l.b16 %v1001
    %v4074 = vunpack.c.h.b16 %v1001
    %v4075 = vunpack.c.l.b16 %v1002
    %v4076 = vunpack.c.h.b16 %v1002
    %v4077 = vunpack.c.l.b16 %v1003
    %v4078 = vunpack.c.h.b16 %v1003
    %v4079 = vunpack.c.l.b16 %v1004
    %v4080 = vunpack.c.h.b16 %v1004
    %v4081 = vunpack.c.l.b16 %v1005
    %v4082 = vunpack.c.h.b16 %v1005
    %v4083 = vunpack.c.l.b16 %v1006
    %v4084 = vunpack.c.h.b16 %v1006
    %v4085 = vunpack.c.l.b16 %v1007
    %v4086 = vunpack.c.h.b16 %v1007
    %v4087 = vunpack.c.l.b16 %v1008
    %v4088 = vunpack.c.h.b16 %v1008
    %v4089 = vunpack.c.l.b16 %v1009
    %v4090 = vunpack.c.h.b16 %v1009
    %v4091 = vunpack.c.l.b16 %v1010
    %v4092 = vunpack.c.h.b16 %v1010
    %v4093 = vunpack.c.l.b16 %v1011
    %v4094 = vunpack.c.h.b16 %v1011
    %v4095 = vunpack.c.l.b16 %v1012
    %v4096 = vunpack.c.h.b16 %v1012
    %v4097 = vunpack.c.l.b16 %v1013
    %v4098 = vunpack.c.h.b16 %v1013
    %v4099 = vunpack.c.l.b16 %v1014
    %v4100 = vunpack.c.h.b16 %v1014
    %v4101 = vunpack.c.l.b16 %v1015
    %v4102 = vunpack.c.h.b16 %v1015
    %v4103 = vunpack.c.l.b16 %v1016
    %v4104 = vunpack.c.h.b16 %v1016
    %v4105 = vunpack.c.l.b16 %v1017
    %v4106 = vunpack.c.h.b16 %v1017
    %v4107 = vunpack.c.l.b16 %v1018
    %v4108 = vunpack.c.h.b16 %v1018
    %v4109 = vunpack.c.l.b16 %v1019
    %v4110 = vunpack.c.h.b16 %v1019
    %v4111 = vunpack.c.l.b16 %v1020
    %v4112 = vunpack.c.h.b16 %v1020
    %v4113 = vunpack.c.l.b16 %v1021
    %v4114 = vunpack.c.h.b16 %v1021
    %v4115 = vunpack.c.l.b16 %v1022
    %v4116 = vunpack.c.h.b16 %v1022
    %v4117 = vunpack.c.l.b16 %v1023
    %v4118 = vunpack.c.h.b16 %v1023
    %v4119 = vunpack.c.l.b16 %v1024
    %v4120 = vunpack.c.h.b16 %v1024
    %v4121 = vunpack.c.l.b16 %v1025
    %v4122 = vunpack.c.h.b16 %v1025
    %v4123 = vunpack.c.l.b16 %v1026
    %v4124 = vunpack.c.h.b16 %v1026
    %v4125 = vunpack.c.l.b16 %v1027
    %v4126 = vunpack.c.h.b16 %v1027
    %v4127 = vunpack.c.l.b16 %v1028
    %v4128 = vunpack.c.h.b16 %v1028
    %v4129 = vunpack.c.l.b16 %v1029
    %v4130 = vunpack.c.h.b16 %v1029
    %v4131 = vunpack.c.l.b16 %v1030
    %v4132 = vunpack.c.h.b16 %v1030
    %v4133 = vunpack.c.l.b16 %v1031
    %v4134 = vunpack.c.h.b16 %v1031
    %v4135 = vunpack.c.l.b16 %v1032
    %v4136 = vunpack.c.h.b16 %v1032
    %v4137 = vunpack.c.l.b16 %v1033
    %v4138 = vunpack.c.h.b16 %v1033
    %v4139 = vunpack.c.l.b16 %v1034
    %v4140 = vunpack.c.h.b16 %v1034
    %v4141 = vunpack.c.l.b16 %v1035
    %v4142 = vunpack.c.h.b16 %v1035
    %v4143 = vunpack.c.l.b16 %v1036
    %v4144 = vunpack.c.h.b16 %v1036
    %v4145 = vunpack.c.l.b16 %v1037
    %v4146 = vunpack.c.h.b16 %v1037
    %v4147 = vunpack.c.l.b16 %v1038
    %v4148 = vunpack.c.h.b16 %v1038
    %v4149 = vunpack.c.l.b16 %v1039
    %v4150 = vunpack.c.h.b16 %v1039
    %v4151 = vunpack.c.l.b16 %v1040
    %v4152 = vunpack.c.h.b16 %v1040
    %v4153 = vunpack.c.l.b16 %v1041
    %v4154 = vunpack.c.h.b16 %v1041
    %v4155 = vunpack.c.l.b16 %v1042
    %v4156 = vunpack.c.h.b16 %v1042
    %v4157 = vunpack.c.l.b16 %v1043
    %v4158 = vunpack.c.h.b16 %v1043
    %v4159 = vunpack.c.l.b16 %v1044
    %v4160 = vunpack.c.h.b16 %v1044
    %v4161 = vunpack.c.l.b16 %v1045
    %v4162 = vunpack.c.h.b16 %v1045
    %v4163 = vunpack.c.l.b16 %v1046
    %v4164 = vunpack.c.h.b16 %v1046
    %v4165 = vunpack.c.l.b16 %v1047
    %v4166 = vunpack.c.h.b16 %v1047
    %v4167 = vunpack.c.l.b16 %v1048
    %v4168 = vunpack.c.h.b16 %v1048
    %v4169 = vunpack.c.l.b16 %v1049
    %v4170 = vunpack.c.h.b16 %v1049
    %v4171 = vunpack.c.l.b16 %v1050
    %v4172 = vunpack.c.h.b16 %v1050
    %v4173 = vunpack.c.l.b16 %v1051
    %v4174 = vunpack.c.h.b16 %v1051
    %v4175 = vunpack.c.l.b16 %v1052
    %v4176 = vunpack.c.h.b16 %v1052
    %v4177 = vunpack.c.l.b16 %v1053
    %v4178 = vunpack.c.h.b16 %v1053
    %v4179 = vunpack.c.l.b16 %v1054
    %v4180 = vunpack.c.h.b16 %v1054
    %v4181 = vpack.c.b16 %v2141, %v2133
    %v4182 = vpack.c.b16 %v2142, %v2134
    %v4183 = vpack.c.b16 %v2143, %v2135
    %v4184 = vpack.c.b16 %v2144, %v2136
    %v4185 = vpack.c.b16 %v2145, %v2137
    %v4186 = vpack.c.b16 %v2146, %v2138
    %v4187 = vpack.c.b16 %v2147, %v2139
    %v4188 = vpack.c.b16 %v2148, %v2140
    %v4189 = vpack.c.b16 %v2157, %v2149
    %v4190 = vpack.c.b16 %v2158, %v2150
    %v4191 = vpack.c.b16 %v2159, %v2151
    %v4192 = vpack.c.b16 %v2160, %v2152
    %v4193 = vpack.c.b16 %v2161, %v2153
    %v4194 = vpack.c.b16 %v2162, %v2154
    %v4195 = vpack.c.b16 %v2163, %v2155
    %v4196 = vpack.c.b16 %v2164, %v2156
    %v4197 = vpack.c.b16 %v2173, %v2165
    %v4198 = vpack.c.b16 %v2174, %v2166
    %v4199 = vpack.c.b16 %v2175, %v2167
    %v4200 = vpack.c.b16 %v2176, %v2168
    %v4201 = vpack.c.b16 %v2177, %v2169
    %v4202 = vpack.c.b16 %v2178, %v2170
    %v4203 = vpack.c.b16 %v2179, %v2171
    %v4204 = vpack.c.b16 %v2180, %v2172
    %v4205 = vpack.c.b16 %v2189, %v2181
    %v4206 = vpack.c.b16 %v2190, %v2182
    %v4207 = vpack.c.b16 %v2191, %v2183
    %v4208 = vpack.c.b16 %v2192, %v2184
    %v4209 = vpack.c.b16 %v2193, %v2185
    %v4210 = vpack.c.b16 %v2194, %v2186
    %v4211 = vpack.c.b16 %v2195, %v2187
    %v4212 = vpack.c.b16 %v2196, %v2188
    %v4213 = vpack.c.b16 %v2205, %v2197
    %v4214 = vpack.c.b16 %v2206, %v2198
    %v4215 = vpack.c.b16 %v2207, %v2199
    %v4216 = vpack.c.b16 %v2208, %v2200
    %v4217 = vpack.c.b16 %v2209, %v2201
    %v4218 = vpack.c.b16 %v2210, %v2202
    %v4219 = vpack.c.b16 %v2211, %v2203
    %v4220 = vpack.c.b16 %v2212, %v2204
    %v4221 = vpack.c.b16 %v2221, %v2213
    %v4222 = vpack.c.b16 %v2222, %v2214
    %v4223 = vpack.c.b16 %v2223, %v2215
    %v4224 = vpack.c.b16 %v2224, %v2216
    %v4225 = vpack.c.b16 %v2225, %v2217
    %v4226 = vpack.c.b16 %v2226, %v2218
    %v4227 = vpack.c.b16 %v2227, %v2219
    %v4228 = vpack.c.b16 %v2228, %v2220
    %v4229 = vpack.c.b16 %v2237, %v2229
    %v4230 = vpack.c.b16 %v2238, %v2230
    %v4231 = vpack.c.b16 %v2239, %v2231
    %v4232 = vpack.c.b16 %v2240, %v2232
    %v4233 = vpack.c.b16 %v2241, %v2233
    %v4234 = vpack.c.b16 %v2242, %v2234
    %v4235 = vpack.c.b16 %v2243, %v2235
    %v4236 = vpack.c.b16 %v2244, %v2236
    %v4237 = vpack.c.b16 %v2253, %v2245
    %v4238 = vpack.c.b16 %v2254, %v2246
    %v4239 = vpack.c.b16 %v2255, %v2247
    %v4240 = vpack.c.b16 %v2256, %v2248
    %v4241 = vpack.c.b16 %v2257, %v2249
    %v4242 = vpack.c.b16 %v2258, %v2250
    %v4243 = vpack.c.b16 %v2259, %v2251
    %v4244 = vpack.c.b16 %v2260, %v2252
    %v4245 = vpack.c.b16 %v2269, %v2261
    %v4246 = vpack.c.b16 %v2270, %v2262
    %v4247 = vpack.c.b16 %v2271, %v2263
    %v4248 = vpack.c.b16 %v2272, %v2264
    %v4249 = vpack.c.b16 %v2273, %v2265
    %v4250 = vpack.c.b16 %v2274, %v2266
    %v4251 = vpack.c.b16 %v2275, %v2267
    %v4252 = vpack.c.b16 %v2276, %v2268
    %v4253 = vpack.c.b16 %v2285, %v2277
    %v4254 = vpack.c.b16 %v2286, %v2278
    %v4255 = vpack.c.b16 %v2287, %v2279
    %v4256 = vpack.c.b16 %v2288, %v2280
    %v4257 = vpack.c.b16 %v2289, %v2281
    %v4258 = vpack.c.b16 %v2290, %v2282
    %v4259 = vpack.c.b16 %v2291, %v2283
    %v4260 = vpack.c.b16 %v2292, %v2284
    %v4261 = vpack.c.b16 %v2301, %v2293
    %v4262 = vpack.c.b16 %v2302, %v2294
    %v4263 = vpack.c.b16 %v2303, %v2295
    %v4264 = vpack.c.b16 %v2304, %v2296
    %v4265 = vpack.c.b16 %v2305, %v2297
    %v4266 = vpack.c.b16 %v2306, %v2298
    %v4267 = vpack.c.b16 %v2307, %v2299
    %v4268 = vpack.c.b16 %v2308, %v2300
    %v4269 = vpack.c.b16 %v2317, %v2309
    %v4270 = vpack.c.b16 %v2318, %v2310
    %v4271 = vpack.c.b16 %v2319, %v2311
    %v4272 = vpack.c.b16 %v2320, %v2312
    %v4273 = vpack.c.b16 %v2321, %v2313
    %v4274 = vpack.c.b16 %v2322, %v2314
    %v4275 = vpack.c.b16 %v2323, %v2315
    %v4276 = vpack.c.b16 %v2324, %v2316
    %v4277 = vpack.c.b16 %v2333, %v2325
    %v4278 = vpack.c.b16 %v2334, %v2326
    %v4279 = vpack.c.b16 %v2335, %v2327
    %v4280 = vpack.c.b16 %v2336, %v2328
    %v4281 = vpack.c.b16 %v2337, %v2329
    %v4282 = vpack.c.b16 %v2338, %v2330
    %v4283 = vpack.c.b16 %v2339, %v2331
    %v4284 = vpack.c.b16 %v2340, %v2332
    %v4285 = vpack.c.b16 %v2349, %v2341
    %v4286 = vpack.c.b16 %v2350, %v2342
    %v4287 = vpack.c.b16 %v2351, %v2343
    %v4288 = vpack.c.b16 %v2352, %v2344
    %v4289 = vpack.c.b16 %v2353, %v2345
    %v4290 = vpack.c.b16 %v2354, %v2346
    %v4291 = vpack.c.b16 %v2355, %v2347
    %v4292 = vpack.c.b16 %v2356, %v2348
    %v4293 = vpack.c.b16 %v2365, %v2357
    %v4294 = vpack.c.b16 %v2366, %v2358
    %v4295 = vpack.c.b16 %v2367, %v2359
    %v4296 = vpack.c.b16 %v2368, %v2360
    %v4297 = vpack.c.b16 %v2369, %v2361
    %v4298 = vpack.c.b16 %v2370, %v2362
    %v4299 = vpack.c.b16 %v2371, %v2363
    %v4300 = vpack.c.b16 %v2372, %v2364
    %v4301 = vpack.c.b16 %v2381, %v2373
    %v4302 = vpack.c.b16 %v2382, %v2374
    %v4303 = vpack.c.b16 %v2383, %v2375
    %v4304 = vpack.c.b16 %v2384, %v2376
    %v4305 = vpack.c.b16 %v2385, %v2377
    %v4306 = vpack.c.b16 %v2386, %v2378
    %v4307 = vpack.c.b16 %v2387, %v2379
    %v4308 = vpack.c.b16 %v2388, %v2380
    %v4309 = vpack.c.b16 %v2397, %v2389
    %v4310 = vpack.c.b16 %v2398, %v2390
    %v4311 = vpack.c.b16 %v2399, %v2391
    %v4312 = vpack.c.b16 %v2400, %v2392
    %v4313 = vpack.c.b16 %v2401, %v2393
    %v4314 = vpack.c.b16 %v2402, %v2394
    %v4315 = vpack.c.b16 %v2403, %v2395
    %v4316 = vpack.c.b16 %v2404, %v2396
    %v4317 = vpack.c.b16 %v2413, %v2405
    %v4318 = vpack.c.b16 %v2414, %v2406
    %v4319 = vpack.c.b16 %v2415, %v2407
    %v4320 = vpack.c.b16 %v2416, %v2408
    %v4321 = vpack.c.b16 %v2417, %v2409
    %v4322 = vpack.c.b16 %v2418, %v2410
    %v4323 = vpack.c.b16 %v2419, %v2411
    %v4324 = vpack.c.b16 %v2420, %v2412
    %v4325 = vpack.c.b16 %v2429, %v2421
    %v4326 = vpack.c.b16 %v2430, %v2422
    %v4327 = vpack.c.b16 %v2431, %v2423
    %v4328 = vpack.c.b16 %v2432, %v2424
    %v4329 = vpack.c.b16 %v2433, %v2425
    %v4330 = vpack.c.b16 %v2434, %v2426
    %v4331 = vpack.c.b16 %v2435, %v2427
    %v4332 = vpack.c.b16 %v2436, %v2428
    %v4333 = vpack.c.b16 %v2445, %v2437
    %v4334 = vpack.c.b16 %v2446, %v2438
    %v4335 = vpack.c.b16 %v2447, %v2439
    %v4336 = vpack.c.b16 %v2448, %v2440
    %v4337 = vpack.c.b16 %v2449, %v2441
    %v4338 = vpack.c.b16 %v2450, %v2442
    %v4339 = vpack.c.b16 %v2451, %v2443
    %v4340 = vpack.c.b16 %v2452, %v2444
    %v4341 = vpack.c.b16 %v2461, %v2453
    %v4342 = vpack.c.b16 %v2462, %v2454
    %v4343 = vpack.c.b16 %v2463, %v2455
    %v4344 = vpack.c.b16 %v2464, %v2456
    %v4345 = vpack.c.b16 %v2465, %v2457
    %v4346 = vpack.c.b16 %v2466, %v2458
    %v4347 = vpack.c.b16 %v2467, %v2459
    %v4348 = vpack.c.b16 %v2468, %v2460
    %v4349 = vpack.c.b16 %v2477, %v2469
    %v4350 = vpack.c.b16 %v2478, %v2470
    %v4351 = vpack.c.b16 %v2479, %v2471
    %v4352 = vpack.c.b16 %v2480, %v2472
    %v4353 = vpack.c.b16 %v2481, %v2473
    %v4354 = vpack.c.b16 %v2482, %v2474
    %v4355 = vpack.c.b16 %v2483, %v2475
    %v4356 = vpack.c.b16 %v2484, %v2476
    %v4357 = vpack.c.b16 %v2493, %v2485
    %v4358 = vpack.c.b16 %v2494, %v2486
    %v4359 = vpack.c.b16 %v2495, %v2487
    %v4360 = vpack.c.b16 %v2496, %v2488
    %v4361 = vpack.c.b16 %v2497, %v2489
    %v4362 = vpack.c.b16 %v2498, %v2490
    %v4363 = vpack.c.b16 %v2499, %v2491
    %v4364 = vpack.c.b16 %v2500, %v2492
    %v4365 = vpack.c.b16 %v2509, %v2501
    %v4366 = vpack.c.b16 %v2510, %v2502
    %v4367 = vpack.c.b16 %v2511, %v2503
    %v4368 = vpack.c.b16 %v2512, %v2504
    %v4369 = vpack.c.b16 %v2513, %v2505
    %v4370 = vpack.c.b16 %v2514, %v2506
    %v4371 = vpack.c.b16 %v2515, %v2507
    %v4372 = vpack.c.b16 %v2516, %v2508
    %v4373 = vpack.c.b16 %v2525, %v2517
    %v4374 = vpack.c.b16 %v2526, %v2518
    %v4375 = vpack.c.b16 %v2527, %v2519
    %v4376 = vpack.c.b16 %v2528, %v2520
    %v4377 = vpack.c.b16 %v2529, %v2521
    %v4378 = vpack.c.b16 %v2530, %v2522
    %v4379 = vpack.c.b16 %v2531, %v2523
    %v4380 = vpack.c.b16 %v2532, %v2524
    %v4381 = vpack.c.b16 %v2541, %v2533
    %v4382 = vpack.c.b16 %v2542, %v2534
    %v4383 = vpack.c.b16 %v2543, %v2535
    %v4384 = vpack.c.b16 %v2544, %v2536
    %v4385 = vpack.c.b16 %v2545, %v2537
    %v4386 = vpack.c.b16 %v2546, %v2538
    %v4387 = vpack.c.b16 %v2547, %v2539
    %v4388 = vpack.c.b16 %v2548, %v2540
    %v4389 = vpack.c.b16 %v2557, %v2549
    %v4390 = vpack.c.b16 %v2558, %v2550
    %v4391 = vpack.c.b16 %v2559, %v2551
    %v4392 = vpack.c.b16 %v2560, %v2552
    %v4393 = vpack.c.b16 %v2561, %v2553
    %v4394 = vpack.c.b16 %v2562, %v2554
    %v4395 = vpack.c.b16 %v2563, %v2555
    %v4396 = vpack.c.b16 %v2564, %v2556
    %v4397 = vpack.c.b16 %v2573, %v2565
    %v4398 = vpack.c.b16 %v2574, %v2566
    %v4399 = vpack.c.b16 %v2575, %v2567
    %v4400 = vpack.c.b16 %v2576, %v2568
    %v4401 = vpack.c.b16 %v2577, %v2569
    %v4402 = vpack.c.b16 %v2578, %v2570
    %v4403 = vpack.c.b16 %v2579, %v2571
    %v4404 = vpack.c.b16 %v2580, %v2572
    %v4405 = vpack.c.b16 %v2589, %v2581
    %v4406 = vpack.c.b16 %v2590, %v2582
    %v4407 = vpack.c.b16 %v2591, %v2583
    %v4408 = vpack.c.b16 %v2592, %v2584
    %v4409 = vpack.c.b16 %v2593, %v2585
    %v4410 = vpack.c.b16 %v2594, %v2586
    %v4411 = vpack.c.b16 %v2595, %v2587
    %v4412 = vpack.c.b16 %v2596, %v2588
    %v4413 = vpack.c.b16 %v2605, %v2597
    %v4414 = vpack.c.b16 %v2606, %v2598
    %v4415 = vpack.c.b16 %v2607, %v2599
    %v4416 = vpack.c.b16 %v2608, %v2600
    %v4417 = vpack.c.b16 %v2609, %v2601
    %v4418 = vpack.c.b16 %v2610, %v2602
    %v4419 = vpack.c.b16 %v2611, %v2603
    %v4420 = vpack.c.b16 %v2612, %v2604
    %v4421 = vpack.c.b16 %v2621, %v2613
    %v4422 = vpack.c.b16 %v2622, %v2614
    %v4423 = vpack.c.b16 %v2623, %v2615
    %v4424 = vpack.c.b16 %v2624, %v2616
    %v4425 = vpack.c.b16 %v2625, %v2617
    %v4426 = vpack.c.b16 %v2626, %v2618
    %v4427 = vpack.c.b16 %v2627, %v2619
    %v4428 = vpack.c.b16 %v2628, %v2620
    %v4429 = vpack.c.b16 %v2637, %v2629
    %v4430 = vpack.c.b16 %v2638, %v2630
    %v4431 = vpack.c.b16 %v2639, %v2631
    %v4432 = vpack.c.b16 %v2640, %v2632
    %v4433 = vpack.c.b16 %v2641, %v2633
    %v4434 = vpack.c.b16 %v2642, %v2634
    %v4435 = vpack.c.b16 %v2643, %v2635
    %v4436 = vpack.c.b16 %v2644, %v2636
    %v4437 = vpack.c.b16 %v2653, %v2645
    %v4438 = vpack.c.b16 %v2654, %v2646
    %v4439 = vpack.c.b16 %v2655, %v2647
    %v4440 = vpack.c.b16 %v2656, %v2648
    %v4441 = vpack.c.b16 %v2657, %v2649
    %v4442 = vpack.c.b16 %v2658, %v2650
    %v4443 = vpack.c.b16 %v2659, %v2651
    %v4444 = vpack.c.b16 %v2660, %v2652
    %v4445 = vpack.c.b16 %v2669, %v2661
    %v4446 = vpack.c.b16 %v2670, %v2662
    %v4447 = vpack.c.b16 %v2671, %v2663
    %v4448 = vpack.c.b16 %v2672, %v2664
    %v4449 = vpack.c.b16 %v2673, %v2665
    %v4450 = vpack.c.b16 %v2674, %v2666
    %v4451 = vpack.c.b16 %v2675, %v2667
    %v4452 = vpack.c.b16 %v2676, %v2668
    %v4453 = vpack.c.b16 %v2685, %v2677
    %v4454 = vpack.c.b16 %v2686, %v2678
    %v4455 = vpack.c.b16 %v2687, %v2679
    %v4456 = vpack.c.b16 %v2688, %v2680
    %v4457 = vpack.c.b16 %v2689, %v2681
    %v4458 = vpack.c.b16 %v2690, %v2682
    %v4459 = vpack.c.b16 %v2691, %v2683
    %v4460 = vpack.c.b16 %v2692, %v2684
    %v4461 = vpack.c.b16 %v2701, %v2693
    %v4462 = vpack.c.b16 %v2702, %v2694
    %v4463 = vpack.c.b16 %v2703, %v2695
    %v4464 = vpack.c.b16 %v2704, %v2696
    %v4465 = vpack.c.b16 %v2705, %v2697
    %v4466 = vpack.c.b16 %v2706, %v2698
    %v4467 = vpack.c.b16 %v2707, %v2699
    %v4468 = vpack.c.b16 %v2708, %v2700
    %v4469 = vpack.c.b16 %v2717, %v2709
    %v4470 = vpack.c.b16 %v2718, %v2710
    %v4471 = vpack.c.b16 %v2719, %v2711
    %v4472 = vpack.c.b16 %v2720, %v2712
    %v4473 = vpack.c.b16 %v2721, %v2713
    %v4474 = vpack.c.b16 %v2722, %v2714
    %v4475 = vpack.c.b16 %v2723, %v2715
    %v4476 = vpack.c.b16 %v2724, %v2716
    %v4477 = vpack.c.b16 %v2733, %v2725
    %v4478 = vpack.c.b16 %v2734, %v2726
    %v4479 = vpack.c.b16 %v2735, %v2727
    %v4480 = vpack.c.b16 %v2736, %v2728
    %v4481 = vpack.c.b16 %v2737, %v2729
    %v4482 = vpack.c.b16 %v2738, %v2730
    %v4483 = vpack.c.b16 %v2739, %v2731
    %v4484 = vpack.c.b16 %v2740, %v2732
    %v4485 = vpack.c.b16 %v2749, %v2741
    %v4486 = vpack.c.b16 %v2750, %v2742
    %v4487 = vpack.c.b16 %v2751, %v2743
    %v4488 = vpack.c.b16 %v2752, %v2744
    %v4489 = vpack.c.b16 %v2753, %v2745
    %v4490 = vpack.c.b16 %v2754, %v2746
    %v4491 = vpack.c.b16 %v2755, %v2747
    %v4492 = vpack.c.b16 %v2756, %v2748
    %v4493 = vpack.c.b16 %v2765, %v2757
    %v4494 = vpack.c.b16 %v2766, %v2758
    %v4495 = vpack.c.b16 %v2767, %v2759
    %v4496 = vpack.c.b16 %v2768, %v2760
    %v4497 = vpack.c.b16 %v2769, %v2761
    %v4498 = vpack.c.b16 %v2770, %v2762
    %v4499 = vpack.c.b16 %v2771, %v2763
    %v4500 = vpack.c.b16 %v2772, %v2764
    %v4501 = vpack.c.b16 %v2781, %v2773
    %v4502 = vpack.c.b16 %v2782, %v2774
    %v4503 = vpack.c.b16 %v2783, %v2775
    %v4504 = vpack.c.b16 %v2784, %v2776
    %v4505 = vpack.c.b16 %v2785, %v2777
    %v4506 = vpack.c.b16 %v2786, %v2778
    %v4507 = vpack.c.b16 %v2787, %v2779
    %v4508 = vpack.c.b16 %v2788, %v2780
    %v4509 = vpack.c.b16 %v2797, %v2789
    %v4510 = vpack.c.b16 %v2798, %v2790
    %v4511 = vpack.c.b16 %v2799, %v2791
    %v4512 = vpack.c.b16 %v2800, %v2792
    %v4513 = vpack.c.b16 %v2801, %v2793
    %v4514 = vpack.c.b16 %v2802, %v2794
    %v4515 = vpack.c.b16 %v2803, %v2795
    %v4516 = vpack.c.b16 %v2804, %v2796
    %v4517 = vpack.c.b16 %v2813, %v2805
    %v4518 = vpack.c.b16 %v2814, %v2806
    %v4519 = vpack.c.b16 %v2815, %v2807
    %v4520 = vpack.c.b16 %v2816, %v2808
    %v4521 = vpack.c.b16 %v2817, %v2809
    %v4522 = vpack.c.b16 %v2818, %v2810
    %v4523 = vpack.c.b16 %v2819, %v2811
    %v4524 = vpack.c.b16 %v2820, %v2812
    %v4525 = vpack.c.b16 %v2829, %v2821
    %v4526 = vpack.c.b16 %v2830, %v2822
    %v4527 = vpack.c.b16 %v2831, %v2823
    %v4528 = vpack.c.b16 %v2832, %v2824
    %v4529 = vpack.c.b16 %v2833, %v2825
    %v4530 = vpack.c.b16 %v2834, %v2826
    %v4531 = vpack.c.b16 %v2835, %v2827
    %v4532 = vpack.c.b16 %v2836, %v2828
    %v4533 = vpack.c.b16 %v2845, %v2837
    %v4534 = vpack.c.b16 %v2846, %v2838
    %v4535 = vpack.c.b16 %v2847, %v2839
    %v4536 = vpack.c.b16 %v2848, %v2840
    %v4537 = vpack.c.b16 %v2849, %v2841
    %v4538 = vpack.c.b16 %v2850, %v2842
    %v4539 = vpack.c.b16 %v2851, %v2843
    %v4540 = vpack.c.b16 %v2852, %v2844
    %v4541 = vpack.c.b16 %v2861, %v2853
    %v4542 = vpack.c.b16 %v2862, %v2854
    %v4543 = vpack.c.b16 %v2863, %v2855
    %v4544 = vpack.c.b16 %v2864, %v2856
    %v4545 = vpack.c.b16 %v2865, %v2857
    %v4546 = vpack.c.b16 %v2866, %v2858
    %v4547 = vpack.c.b16 %v2867, %v2859
    %v4548 = vpack.c.b16 %v2868, %v2860
    %v4549 = vpack.c.b16 %v2877, %v2869
    %v4550 = vpack.c.b16 %v2878, %v2870
    %v4551 = vpack.c.b16 %v2879, %v2871
    %v4552 = vpack.c.b16 %v2880, %v2872
    %v4553 = vpack.c.b16 %v2881, %v2873
    %v4554 = vpack.c.b16 %v2882, %v2874
    %v4555 = vpack.c.b16 %v2883, %v2875
    %v4556 = vpack.c.b16 %v2884, %v2876
    %v4557 = vpack.c.b16 %v2893, %v2885
    %v4558 = vpack.c.b16 %v2894, %v2886
    %v4559 = vpack.c.b16 %v2895, %v2887
    %v4560 = vpack.c.b16 %v2896, %v2888
    %v4561 = vpack.c.b16 %v2897, %v2889
    %v4562 = vpack.c.b16 %v2898, %v2890
    %v4563 = vpack.c.b16 %v2899, %v2891
    %v4564 = vpack.c.b16 %v2900, %v2892
    %v4565 = vpack.c.b16 %v2909, %v2901
    %v4566 = vpack.c.b16 %v2910, %v2902
    %v4567 = vpack.c.b16 %v2911, %v2903
    %v4568 = vpack.c.b16 %v2912, %v2904
    %v4569 = vpack.c.b16 %v2913, %v2905
    %v4570 = vpack.c.b16 %v2914, %v2906
    %v4571 = vpack.c.b16 %v2915, %v2907
    %v4572 = vpack.c.b16 %v2916, %v2908
    %v4573 = vpack.c.b16 %v2925, %v2917
    %v4574 = vpack.c.b16 %v2926, %v2918
    %v4575 = vpack.c.b16 %v2927, %v2919
    %v4576 = vpack.c.b16 %v2928, %v2920
    %v4577 = vpack.c.b16 %v2929, %v2921
    %v4578 = vpack.c.b16 %v2930, %v2922
    %v4579 = vpack.c.b16 %v2931, %v2923
    %v4580 = vpack.c.b16 %v2932, %v2924
    %v4581 = vpack.c.b16 %v2941, %v2933
    %v4582 = vpack.c.b16 %v2942, %v2934
    %v4583 = vpack.c.b16 %v2943, %v2935
    %v4584 = vpack.c.b16 %v2944, %v2936
    %v4585 = vpack.c.b16 %v2945, %v2937
    %v4586 = vpack.c.b16 %v2946, %v2938
    %v4587 = vpack.c.b16 %v2947, %v2939
    %v4588 = vpack.c.b16 %v2948, %v2940
    %v4589 = vpack.c.b16 %v2957, %v2949
    %v4590 = vpack.c.b16 %v2958, %v2950
    %v4591 = vpack.c.b16 %v2959, %v2951
    %v4592 = vpack.c.b16 %v2960, %v2952
    %v4593 = vpack.c.b16 %v2961, %v2953
    %v4594 = vpack.c.b16 %v2962, %v2954
    %v4595 = vpack.c.b16 %v2963, %v2955
    %v4596 = vpack.c.b16 %v2964, %v2956
    %v4597 = vpack.c.b16 %v2973, %v2965
    %v4598 = vpack.c.b16 %v2974, %v2966
    %v4599 = vpack.c.b16 %v2975, %v2967
    %v4600 = vpack.c.b16 %v2976, %v2968
    %v4601 = vpack.c.b16 %v2977, %v2969
    %v4602 = vpack.c.b16 %v2978, %v2970
    %v4603 = vpack.c.b16 %v2979, %v2971
    %v4604 = vpack.c.b16 %v2980, %v2972
    %v4605 = vpack.c.b16 %v2989, %v2981
    %v4606 = vpack.c.b16 %v2990, %v2982
    %v4607 = vpack.c.b16 %v2991, %v2983
    %v4608 = vpack.c.b16 %v2992, %v2984
    %v4609 = vpack.c.b16 %v2993, %v2985
    %v4610 = vpack.c.b16 %v2994, %v2986
    %v4611 = vpack.c.b16 %v2995, %v2987
    %v4612 = vpack.c.b16 %v2996, %v2988
    %v4613 = vpack.c.b16 %v3005, %v2997
    %v4614 = vpack.c.b16 %v3006, %v2998
    %v4615 = vpack.c.b16 %v3007, %v2999
    %v4616 = vpack.c.b16 %v3008, %v3000
    %v4617 = vpack.c.b16 %v3009, %v3001
    %v4618 = vpack.c.b16 %v3010, %v3002
    %v4619 = vpack.c.b16 %v3011, %v3003
    %v4620 = vpack.c.b16 %v3012, %v3004
    %v4621 = vpack.c.b16 %v3021, %v3013
    %v4622 = vpack.c.b16 %v3022, %v3014
    %v4623 = vpack.c.b16 %v3023, %v3015
    %v4624 = vpack.c.b16 %v3024, %v3016
    %v4625 = vpack.c.b16 %v3025, %v3017
    %v4626 = vpack.c.b16 %v3026, %v3018
    %v4627 = vpack.c.b16 %v3027, %v3019
    %v4628 = vpack.c.b16 %v3028, %v3020
    %v4629 = vpack.c.b16 %v3037, %v3029
    %v4630 = vpack.c.b16 %v3038, %v3030
    %v4631 = vpack.c.b16 %v3039, %v3031
    %v4632 = vpack.c.b16 %v3040, %v3032
    %v4633 = vpack.c.b16 %v3041, %v3033
    %v4634 = vpack.c.b16 %v3042, %v3034
    %v4635 = vpack.c.b16 %v3043, %v3035
    %v4636 = vpack.c.b16 %v3044, %v3036
    %v4637 = vpack.c.b16 %v3053, %v3045
    %v4638 = vpack.c.b16 %v3054, %v3046
    %v4639 = vpack.c.b16 %v3055, %v3047
    %v4640 = vpack.c.b16 %v3056, %v3048
    %v4641 = vpack.c.b16 %v3057, %v3049
    %v4642 = vpack.c.b16 %v3058, %v3050
    %v4643 = vpack.c.b16 %v3059, %v3051
    %v4644 = vpack.c.b16 %v3060, %v3052
    %v4645 = vpack.c.b16 %v3069, %v3061
    %v4646 = vpack.c.b16 %v3070, %v3062
    %v4647 = vpack.c.b16 %v3071, %v3063
    %v4648 = vpack.c.b16 %v3072, %v3064
    %v4649 = vpack.c.b16 %v3073, %v3065
    %v4650 = vpack.c.b16 %v3074, %v3066
    %v4651 = vpack.c.b16 %v3075, %v3067
    %v4652 = vpack.c.b16 %v3076, %v3068
    %v4653 = vpack.c.b16 %v3085, %v3077
    %v4654 = vpack.c.b16 %v3086, %v3078
    %v4655 = vpack.c.b16 %v3087, %v3079
    %v4656 = vpack.c.b16 %v3088, %v3080
    %v4657 = vpack.c.b16 %v3089, %v3081
    %v4658 = vpack.c.b16 %v3090, %v3082
    %v4659 = vpack.c.b16 %v3091, %v3083
    %v4660 = vpack.c.b16 %v3092, %v3084
    %v4661 = vpack.c.b16 %v3101, %v3093
    %v4662 = vpack.c.b16 %v3102, %v3094
    %v4663 = vpack.c.b16 %v3103, %v3095
    %v4664 = vpack.c.b16 %v3104, %v3096
    %v4665 = vpack.c.b16 %v3105, %v3097
    %v4666 = vpack.c.b16 %v3106, %v3098
    %v4667 = vpack.c.b16 %v3107, %v3099
    %v4668 = vpack.c.b16 %v3108, %v3100
    %v4669 = vpack.c.b16 %v3117, %v3109
    %v4670 = vpack.c.b16 %v3118, %v3110
    %v4671 = vpack.c.b16 %v3119, %v3111
    %v4672 = vpack.c.b16 %v3120, %v3112
    %v4673 = vpack.c.b16 %v3121, %v3113
    %v4674 = vpack.c.b16 %v3122, %v3114
    %v4675 = vpack.c.b16 %v3123, %v3115
    %v4676 = vpack.c.b16 %v3124, %v3116
    %v4677 = vpack.c.b16 %v3133, %v3125
    %v4678 = vpack.c.b16 %v3134, %v3126
    %v4679 = vpack.c.b16 %v3135, %v3127
    %v4680 = vpack.c.b16 %v3136, %v3128
    %v4681 = vpack.c.b16 %v3137, %v3129
    %v4682 = vpack.c.b16 %v3138, %v3130
    %v4683 = vpack.c.b16 %v3139, %v3131
    %v4684 = vpack.c.b16 %v3140, %v3132
    %v4685 = vpack.c.b16 %v3149, %v3141
    %v4686 = vpack.c.b16 %v3150, %v3142
    %v4687 = vpack.c.b16 %v3151, %v3143
    %v4688 = vpack.c.b16 %v3152, %v3144
    %v4689 = vpack.c.b16 %v3153, %v3145
    %v4690 = vpack.c.b16 %v3154, %v3146
    %v4691 = vpack.c.b16 %v3155, %v3147
    %v4692 = vpack.c.b16 %v3156, %v3148
    %v4693 = vpack.c.b16 %v3165, %v3157
    %v4694 = vpack.c.b16 %v3166, %v3158
    %v4695 = vpack.c.b16 %v3167, %v3159
    %v4696 = vpack.c.b16 %v3168, %v3160
    %v4697 = vpack.c.b16 %v3169, %v3161
    %v4698 = vpack.c.b16 %v3170, %v3162
    %v4699 = vpack.c.b16 %v3171, %v3163
    %v4700 = vpack.c.b16 %v3172, %v3164
    %v4701 = vpack.c.b16 %v3181, %v3173
    %v4702 = vpack.c.b16 %v3182, %v3174
    %v4703 = vpack.c.b16 %v3183, %v3175
    %v4704 = vpack.c.b16 %v3184, %v3176
    %v4705 = vpack.c.b16 %v3185, %v3177
    %v4706 = vpack.c.b16 %v3186, %v3178
    %v4707 = vpack.c.b16 %v3187, %v3179
    %v4708 = vpack.c.b16 %v3188, %v3180
    %v4709 = vpack.c.b16 %v3197, %v3189
    %v4710 = vpack.c.b16 %v3198, %v3190
    %v4711 = vpack.c.b16 %v3199, %v3191
    %v4712 = vpack.c.b16 %v3200, %v3192
    %v4713 = vpack.c.b16 %v3201, %v3193
    %v4714 = vpack.c.b16 %v3202, %v3194
    %v4715 = vpack.c.b16 %v3203, %v3195
    %v4716 = vpack.c.b16 %v3204, %v3196
    %v4717 = vpack.c.b16 %v3213, %v3205
    %v4718 = vpack.c.b16 %v3214, %v3206
    %v4719 = vpack.c.b16 %v3215, %v3207
    %v4720 = vpack.c.b16 %v3216, %v3208
    %v4721 = vpack.c.b16 %v3217, %v3209
    %v4722 = vpack.c.b16 %v3218, %v3210
    %v4723 = vpack.c.b16 %v3219, %v3211
    %v4724 = vpack.c.b16 %v3220, %v3212
    %v4725 = vpack.c.b16 %v3229, %v3221
    %v4726 = vpack.c.b16 %v3230, %v3222
    %v4727 = vpack.c.b16 %v3231, %v3223
    %v4728 = vpack.c.b16 %v3232, %v3224
    %v4729 = vpack.c.b16 %v3233, %v3225
    %v4730 = vpack.c.b16 %v3234, %v3226
    %v4731 = vpack.c.b16 %v3235, %v3227
    %v4732 = vpack.c.b16 %v3236, %v3228
    %v4733 = vpack.c.b16 %v3245, %v3237
    %v4734 = vpack.c.b16 %v3246, %v3238
    %v4735 = vpack.c.b16 %v3247, %v3239
    %v4736 = vpack.c.b16 %v3248, %v3240
    %v4737 = vpack.c.b16 %v3249, %v3241
    %v4738 = vpack.c.b16 %v3250, %v3242
    %v4739 = vpack.c.b16 %v3251, %v3243
    %v4740 = vpack.c.b16 %v3252, %v3244
    %v4741 = vpack.c.b16 %v3261, %v3253
    %v4742 = vpack.c.b16 %v3262, %v3254
    %v4743 = vpack.c.b16 %v3263, %v3255
    %v4744 = vpack.c.b16 %v3264, %v3256
    %v4745 = vpack.c.b16 %v3265, %v3257
    %v4746 = vpack.c.b16 %v3266, %v3258
    %v4747 = vpack.c.b16 %v3267, %v3259
    %v4748 = vpack.c.b16 %v3268, %v3260
    %v4749 = vpack.c.b16 %v3277, %v3269
    %v4750 = vpack.c.b16 %v3278, %v3270
    %v4751 = vpack.c.b16 %v3279, %v3271
    %v4752 = vpack.c.b16 %v3280, %v3272
    %v4753 = vpack.c.b16 %v3281, %v3273
    %v4754 = vpack.c.b16 %v3282, %v3274
    %v4755 = vpack.c.b16 %v3283, %v3275
    %v4756 = vpack.c.b16 %v3284, %v3276
    %v4757 = vpack.c.b16 %v3293, %v3285
    %v4758 = vpack.c.b16 %v3294, %v3286
    %v4759 = vpack.c.b16 %v3295, %v3287
    %v4760 = vpack.c.b16 %v3296, %v3288
    %v4761 = vpack.c.b16 %v3297, %v3289
    %v4762 = vpack.c.b16 %v3298, %v3290
    %v4763 = vpack.c.b16 %v3299, %v3291
    %v4764 = vpack.c.b16 %v3300, %v3292
    %v4765 = vpack.c.b16 %v3309, %v3301
    %v4766 = vpack.c.b16 %v3310, %v3302
    %v4767 = vpack.c.b16 %v3311, %v3303
    %v4768 = vpack.c.b16 %v3312, %v3304
    %v4769 = vpack.c.b16 %v3313, %v3305
    %v4770 = vpack.c.b16 %v3314, %v3306
    %v4771 = vpack.c.b16 %v3315, %v3307
    %v4772 = vpack.c.b16 %v3316, %v3308
    %v4773 = vpack.c.b16 %v3325, %v3317
    %v4774 = vpack.c.b16 %v3326, %v3318
    %v4775 = vpack.c.b16 %v3327, %v3319
    %v4776 = vpack.c.b16 %v3328, %v3320
    %v4777 = vpack.c.b16 %v3329, %v3321
    %v4778 = vpack.c.b16 %v3330, %v3322
    %v4779 = vpack.c.b16 %v3331, %v3323
    %v4780 = vpack.c.b16 %v3332, %v3324
    %v4781 = vpack.c.b16 %v3341, %v3333
    %v4782 = vpack.c.b16 %v3342, %v3334
    %v4783 = vpack.c.b16 %v3343, %v3335
    %v4784 = vpack.c.b16 %v3344, %v3336
    %v4785 = vpack.c.b16 %v3345, %v3337
    %v4786 = vpack.c.b16 %v3346, %v3338
    %v4787 = vpack.c.b16 %v3347, %v3339
    %v4788 = vpack.c.b16 %v3348, %v3340
    %v4789 = vpack.c.b16 %v3357, %v3349
    %v4790 = vpack.c.b16 %v3358, %v3350
    %v4791 = vpack.c.b16 %v3359, %v3351
    %v4792 = vpack.c.b16 %v3360, %v3352
    %v4793 = vpack.c.b16 %v3361, %v3353
    %v4794 = vpack.c.b16 %v3362, %v3354
    %v4795 = vpack.c.b16 %v3363, %v3355
    %v4796 = vpack.c.b16 %v3364, %v3356
    %v4797 = vpack.c.b16 %v3373, %v3365
    %v4798 = vpack.c.b16 %v3374, %v3366
    %v4799 = vpack.c.b16 %v3375, %v3367
    %v4800 = vpack.c.b16 %v3376, %v3368
    %v4801 = vpack.c.b16 %v3377, %v3369
    %v4802 = vpack.c.b16 %v3378, %v3370
    %v4803 = vpack.c.b16 %v3379, %v3371
    %v4804 = vpack.c.b16 %v3380, %v3372
    %v4805 = vpack.c.b16 %v3389, %v3381
    %v4806 = vpack.c.b16 %v3390, %v3382
    %v4807 = vpack.c.b16 %v3391, %v3383
    %v4808 = vpack.c.b16 %v3392, %v3384
    %v4809 = vpack.c.b16 %v3393, %v3385
    %v4810 = vpack.c.b16 %v3394, %v3386
    %v4811 = vpack.c.b16 %v3395, %v3387
    %v4812 = vpack.c.b16 %v3396, %v3388
    %v4813 = vpack.c.b16 %v3405, %v3397
    %v4814 = vpack.c.b16 %v3406, %v3398
    %v4815 = vpack.c.b16 %v3407, %v3399
    %v4816 = vpack.c.b16 %v3408, %v3400
    %v4817 = vpack.c.b16 %v3409, %v3401
    %v4818 = vpack.c.b16 %v3410, %v3402
    %v4819 = vpack.c.b16 %v3411, %v3403
    %v4820 = vpack.c.b16 %v3412, %v3404
    %v4821 = vpack.c.b16 %v3421, %v3413
    %v4822 = vpack.c.b16 %v3422, %v3414
    %v4823 = vpack.c.b16 %v3423, %v3415
    %v4824 = vpack.c.b16 %v3424, %v3416
    %v4825 = vpack.c.b16 %v3425, %v3417
    %v4826 = vpack.c.b16 %v3426, %v3418
    %v4827 = vpack.c.b16 %v3427, %v3419
    %v4828 = vpack.c.b16 %v3428, %v3420
    %v4829 = vpack.c.b16 %v3437, %v3429
    %v4830 = vpack.c.b16 %v3438, %v3430
    %v4831 = vpack.c.b16 %v3439, %v3431
    %v4832 = vpack.c.b16 %v3440, %v3432
    %v4833 = vpack.c.b16 %v3441, %v3433
    %v4834 = vpack.c.b16 %v3442, %v3434
    %v4835 = vpack.c.b16 %v3443, %v3435
    %v4836 = vpack.c.b16 %v3444, %v3436
    %v4837 = vpack.c.b16 %v3453, %v3445
    %v4838 = vpack.c.b16 %v3454, %v3446
    %v4839 = vpack.c.b16 %v3455, %v3447
    %v4840 = vpack.c.b16 %v3456, %v3448
    %v4841 = vpack.c.b16 %v3457, %v3449
    %v4842 = vpack.c.b16 %v3458, %v3450
    %v4843 = vpack.c.b16 %v3459, %v3451
    %v4844 = vpack.c.b16 %v3460, %v3452
    %v4845 = vpack.c.b16 %v3469, %v3461
    %v4846 = vpack.c.b16 %v3470, %v3462
    %v4847 = vpack.c.b16 %v3471, %v3463
    %v4848 = vpack.c.b16 %v3472, %v3464
    %v4849 = vpack.c.b16 %v3473, %v3465
    %v4850 = vpack.c.b16 %v3474, %v3466
    %v4851 = vpack.c.b16 %v3475, %v3467
    %v4852 = vpack.c.b16 %v3476, %v3468
    %v4853 = vpack.c.b16 %v3485, %v3477
    %v4854 = vpack.c.b16 %v3486, %v3478
    %v4855 = vpack.c.b16 %v3487, %v3479
    %v4856 = vpack.c.b16 %v3488, %v3480
    %v4857 = vpack.c.b16 %v3489, %v3481
    %v4858 = vpack.c.b16 %v3490, %v3482
    %v4859 = vpack.c.b16 %v3491, %v3483
    %v4860 = vpack.c.b16 %v3492, %v3484
    %v4861 = vpack.c.b16 %v3501, %v3493
    %v4862 = vpack.c.b16 %v3502, %v3494
    %v4863 = vpack.c.b16 %v3503, %v3495
    %v4864 = vpack.c.b16 %v3504, %v3496
    %v4865 = vpack.c.b16 %v3505, %v3497
    %v4866 = vpack.c.b16 %v3506, %v3498
    %v4867 = vpack.c.b16 %v3507, %v3499
    %v4868 = vpack.c.b16 %v3508, %v3500
    %v4869 = vpack.c.b16 %v3517, %v3509
    %v4870 = vpack.c.b16 %v3518, %v3510
    %v4871 = vpack.c.b16 %v3519, %v3511
    %v4872 = vpack.c.b16 %v3520, %v3512
    %v4873 = vpack.c.b16 %v3521, %v3513
    %v4874 = vpack.c.b16 %v3522, %v3514
    %v4875 = vpack.c.b16 %v3523, %v3515
    %v4876 = vpack.c.b16 %v3524, %v3516
    %v4877 = vpack.c.b16 %v3533, %v3525
    %v4878 = vpack.c.b16 %v3534, %v3526
    %v4879 = vpack.c.b16 %v3535, %v3527
    %v4880 = vpack.c.b16 %v3536, %v3528
    %v4881 = vpack.c.b16 %v3537, %v3529
    %v4882 = vpack.c.b16 %v3538, %v3530
    %v4883 = vpack.c.b16 %v3539, %v3531
    %v4884 = vpack.c.b16 %v3540, %v3532
    %v4885 = vpack.c.b16 %v3549, %v3541
    %v4886 = vpack.c.b16 %v3550, %v3542
    %v4887 = vpack.c.b16 %v3551, %v3543
    %v4888 = vpack.c.b16 %v3552, %v3544
    %v4889 = vpack.c.b16 %v3553, %v3545
    %v4890 = vpack.c.b16 %v3554, %v3546
    %v4891 = vpack.c.b16 %v3555, %v3547
    %v4892 = vpack.c.b16 %v3556, %v3548
    %v4893 = vpack.c.b16 %v3565, %v3557
    %v4894 = vpack.c.b16 %v3566, %v3558
    %v4895 = vpack.c.b16 %v3567, %v3559
    %v4896 = vpack.c.b16 %v3568, %v3560
    %v4897 = vpack.c.b16 %v3569, %v3561
    %v4898 = vpack.c.b16 %v3570, %v3562
    %v4899 = vpack.c.b16 %v3571, %v3563
    %v4900 = vpack.c.b16 %v3572, %v3564
    %v4901 = vpack.c.b16 %v3581, %v3573
    %v4902 = vpack.c.b16 %v3582, %v3574
    %v4903 = vpack.c.b16 %v3583, %v3575
    %v4904 = vpack.c.b16 %v3584, %v3576
    %v4905 = vpack.c.b16 %v3585, %v3577
    %v4906 = vpack.c.b16 %v3586, %v3578
    %v4907 = vpack.c.b16 %v3587, %v3579
    %v4908 = vpack.c.b16 %v3588, %v3580
    %v4909 = vpack.c.b16 %v3597, %v3589
    %v4910 = vpack.c.b16 %v3598, %v3590
    %v4911 = vpack.c.b16 %v3599, %v3591
    %v4912 = vpack.c.b16 %v3600, %v3592
    %v4913 = vpack.c.b16 %v3601, %v3593
    %v4914 = vpack.c.b16 %v3602, %v3594
    %v4915 = vpack.c.b16 %v3603, %v3595
    %v4916 = vpack.c.b16 %v3604, %v3596
    %v4917 = vpack.c.b16 %v3613, %v3605
    %v4918 = vpack.c.b16 %v3614, %v3606
    %v4919 = vpack.c.b16 %v3615, %v3607
    %v4920 = vpack.c.b16 %v3616, %v3608
    %v4921 = vpack.c.b16 %v3617, %v3609
    %v4922 = vpack.c.b16 %v3618, %v3610
    %v4923 = vpack.c.b16 %v3619, %v3611
    %v4924 = vpack.c.b16 %v3620, %v3612
    %v4925 = vpack.c.b16 %v3629, %v3621
    %v4926 = vpack.c.b16 %v3630, %v3622
    %v4927 = vpack.c.b16 %v3631, %v3623
    %v4928 = vpack.c.b16 %v3632, %v3624
    %v4929 = vpack.c.b16 %v3633, %v3625
    %v4930 = vpack.c.b16 %v3634, %v3626
    %v4931 = vpack.c.b16 %v3635, %v3627
    %v4932 = vpack.c.b16 %v3636, %v3628
    %v4933 = vpack.c.b16 %v3645, %v3637
    %v4934 = vpack.c.b16 %v3646, %v3638
    %v4935 = vpack.c.b16 %v3647, %v3639
    %v4936 = vpack.c.b16 %v3648, %v3640
    %v4937 = vpack.c.b16 %v3649, %v3641
    %v4938 = vpack.c.b16 %v3650, %v3642
    %v4939 = vpack.c.b16 %v3651, %v3643
    %v4940 = vpack.c.b16 %v3652, %v3644
    %v4941 = vpack.c.b16 %v3661, %v3653
    %v4942 = vpack.c.b16 %v3662, %v3654
    %v4943 = vpack.c.b16 %v3663, %v3655
    %v4944 = vpack.c.b16 %v3664, %v3656
    %v4945 = vpack.c.b16 %v3665, %v3657
    %v4946 = vpack.c.b16 %v3666, %v3658
    %v4947 = vpack.c.b16 %v3667, %v3659
    %v4948 = vpack.c.b16 %v3668, %v3660
    %v4949 = vpack.c.b16 %v3677, %v3669
    %v4950 = vpack.c.b16 %v3678, %v3670
    %v4951 = vpack.c.b16 %v3679, %v3671
    %v4952 = vpack.c.b16 %v3680, %v3672
    %v4953 = vpack.c.b16 %v3681, %v3673
    %v4954 = vpack.c.b16 %v3682, %v3674
    %v4955 = vpack.c.b16 %v3683, %v3675
    %v4956 = vpack.c.b16 %v3684, %v3676
    %v4957 = vpack.c.b16 %v3693, %v3685
    %v4958 = vpack.c.b16 %v3694, %v3686
    %v4959 = vpack.c.b16 %v3695, %v3687
    %v4960 = vpack.c.b16 %v3696, %v3688
    %v4961 = vpack.c.b16 %v3697, %v3689
    %v4962 = vpack.c.b16 %v3698, %v3690
    %v4963 = vpack.c.b16 %v3699, %v3691
    %v4964 = vpack.c.b16 %v3700, %v3692
    %v4965 = vpack.c.b16 %v3709, %v3701
    %v4966 = vpack.c.b16 %v3710, %v3702
    %v4967 = vpack.c.b16 %v3711, %v3703
    %v4968 = vpack.c.b16 %v3712, %v3704
    %v4969 = vpack.c.b16 %v3713, %v3705
    %v4970 = vpack.c.b16 %v3714, %v3706
    %v4971 = vpack.c.b16 %v3715, %v3707
    %v4972 = vpack.c.b16 %v3716, %v3708
    %v4973 = vpack.c.b16 %v3725, %v3717
    %v4974 = vpack.c.b16 %v3726, %v3718
    %v4975 = vpack.c.b16 %v3727, %v3719
    %v4976 = vpack.c.b16 %v3728, %v3720
    %v4977 = vpack.c.b16 %v3729, %v3721
    %v4978 = vpack.c.b16 %v3730, %v3722
    %v4979 = vpack.c.b16 %v3731, %v3723
    %v4980 = vpack.c.b16 %v3732, %v3724
    %v4981 = vpack.c.b16 %v3741, %v3733
    %v4982 = vpack.c.b16 %v3742, %v3734
    %v4983 = vpack.c.b16 %v3743, %v3735
    %v4984 = vpack.c.b16 %v3744, %v3736
    %v4985 = vpack.c.b16 %v3745, %v3737
    %v4986 = vpack.c.b16 %v3746, %v3738
    %v4987 = vpack.c.b16 %v3747, %v3739
    %v4988 = vpack.c.b16 %v3748, %v3740
    %v4989 = vpack.c.b16 %v3757, %v3749
    %v4990 = vpack.c.b16 %v3758, %v3750
    %v4991 = vpack.c.b16 %v3759, %v3751
    %v4992 = vpack.c.b16 %v3760, %v3752
    %v4993 = vpack.c.b16 %v3761, %v3753
    %v4994 = vpack.c.b16 %v3762, %v3754
    %v4995 = vpack.c.b16 %v3763, %v3755
    %v4996 = vpack.c.b16 %v3764, %v3756
    %v4997 = vpack.c.b16 %v3773, %v3765
    %v4998 = vpack.c.b16 %v3774, %v3766
    %v4999 = vpack.c.b16 %v3775, %v3767
    %v5000 = vpack.c.b16 %v3776, %v3768
    %v5001 = vpack.c.b16 %v3777, %v3769
    %v5002 = vpack.c.b16 %v3778, %v3770
    %v5003 = vpack.c.b16 %v3779, %v3771
    %v5004 = vpack.c.b16 %v3780, %v3772
    %v5005 = vpack.c.b16 %v3789, %v3781
    %v5006 = vpack.c.b16 %v3790, %v3782
    %v5007 = vpack.c.b16 %v3791, %v3783
    %v5008 = vpack.c.b16 %v3792, %v3784
    %v5009 = vpack.c.b16 %v3793, %v3785
    %v5010 = vpack.c.b16 %v3794, %v3786
    %v5011 = vpack.c.b16 %v3795, %v3787
    %v5012 = vpack.c.b16 %v3796, %v3788
    %v5013 = vpack.c.b16 %v3805, %v3797
    %v5014 = vpack.c.b16 %v3806, %v3798
    %v5015 = vpack.c.b16 %v3807, %v3799
    %v5016 = vpack.c.b16 %v3808, %v3800
    %v5017 = vpack.c.b16 %v3809, %v3801
    %v5018 = vpack.c.b16 %v3810, %v3802
    %v5019 = vpack.c.b16 %v3811, %v3803
    %v5020 = vpack.c.b16 %v3812, %v3804
    %v5021 = vpack.c.b16 %v3821, %v3813
    %v5022 = vpack.c.b16 %v3822, %v3814
    %v5023 = vpack.c.b16 %v3823, %v3815
    %v5024 = vpack.c.b16 %v3824, %v3816
    %v5025 = vpack.c.b16 %v3825, %v3817
    %v5026 = vpack.c.b16 %v3826, %v3818
    %v5027 = vpack.c.b16 %v3827, %v3819
    %v5028 = vpack.c.b16 %v3828, %v3820
    %v5029 = vpack.c.b16 %v3837, %v3829
    %v5030 = vpack.c.b16 %v3838, %v3830
    %v5031 = vpack.c.b16 %v3839, %v3831
    %v5032 = vpack.c.b16 %v3840, %v3832
    %v5033 = vpack.c.b16 %v3841, %v3833
    %v5034 = vpack.c.b16 %v3842, %v3834
    %v5035 = vpack.c.b16 %v3843, %v3835
    %v5036 = vpack.c.b16 %v3844, %v3836
    %v5037 = vpack.c.b16 %v3853, %v3845
    %v5038 = vpack.c.b16 %v3854, %v3846
    %v5039 = vpack.c.b16 %v3855, %v3847
    %v5040 = vpack.c.b16 %v3856, %v3848
    %v5041 = vpack.c.b16 %v3857, %v3849
    %v5042 = vpack.c.b16 %v3858, %v3850
    %v5043 = vpack.c.b16 %v3859, %v3851
    %v5044 = vpack.c.b16 %v3860, %v3852
    %v5045 = vpack.c.b16 %v3869, %v3861
    %v5046 = vpack.c.b16 %v3870, %v3862
    %v5047 = vpack.c.b16 %v3871, %v3863
    %v5048 = vpack.c.b16 %v3872, %v3864
    %v5049 = vpack.c.b16 %v3873, %v3865
    %v5050 = vpack.c.b16 %v3874, %v3866
    %v5051 = vpack.c.b16 %v3875, %v3867
    %v5052 = vpack.c.b16 %v3876, %v3868
    %v5053 = vpack.c.b16 %v3885, %v3877
    %v5054 = vpack.c.b16 %v3886, %v3878
    %v5055 = vpack.c.b16 %v3887, %v3879
    %v5056 = vpack.c.b16 %v3888, %v3880
    %v5057 = vpack.c.b16 %v3889, %v3881
    %v5058 = vpack.c.b16 %v3890, %v3882
    %v5059 = vpack.c.b16 %v3891, %v3883
    %v5060 = vpack.c.b16 %v3892, %v3884
    %v5061 = vpack.c.b16 %v3901, %v3893
    %v5062 = vpack.c.b16 %v3902, %v3894
    %v5063 = vpack.c.b16 %v3903, %v3895
    %v5064 = vpack.c.b16 %v3904, %v3896
    %v5065 = vpack.c.b16 %v3905, %v3897
    %v5066 = vpack.c.b16 %v3906, %v3898
    %v5067 = vpack.c.b16 %v3907, %v3899
    %v5068 = vpack.c.b16 %v3908, %v3900
    %v5069 = vpack.c.b16 %v3917, %v3909
    %v5070 = vpack.c.b16 %v3918, %v3910
    %v5071 = vpack.c.b16 %v3919, %v3911
    %v5072 = vpack.c.b16 %v3920, %v3912
    %v5073 = vpack.c.b16 %v3921, %v3913
    %v5074 = vpack.c.b16 %v3922, %v3914
    %v5075 = vpack.c.b16 %v3923, %v3915
    %v5076 = vpack.c.b16 %v3924, %v3916
    %v5077 = vpack.c.b16 %v3933, %v3925
    %v5078 = vpack.c.b16 %v3934, %v3926
    %v5079 = vpack.c.b16 %v3935, %v3927
    %v5080 = vpack.c.b16 %v3936, %v3928
    %v5081 = vpack.c.b16 %v3937, %v3929
    %v5082 = vpack.c.b16 %v3938, %v3930
    %v5083 = vpack.c.b16 %v3939, %v3931
    %v5084 = vpack.c.b16 %v3940, %v3932
    %v5085 = vpack.c.b16 %v3949, %v3941
    %v5086 = vpack.c.b16 %v3950, %v3942
    %v5087 = vpack.c.b16 %v3951, %v3943
    %v5088 = vpack.c.b16 %v3952, %v3944
    %v5089 = vpack.c.b16 %v3953, %v3945
    %v5090 = vpack.c.b16 %v3954, %v3946
    %v5091 = vpack.c.b16 %v3955, %v3947
    %v5092 = vpack.c.b16 %v3956, %v3948
    %v5093 = vpack.c.b16 %v3965, %v3957
    %v5094 = vpack.c.b16 %v3966, %v3958
    %v5095 = vpack.c.b16 %v3967, %v3959
    %v5096 = vpack.c.b16 %v3968, %v3960
    %v5097 = vpack.c.b16 %v3969, %v3961
    %v5098 = vpack.c.b16 %v3970, %v3962
    %v5099 = vpack.c.b16 %v3971, %v3963
    %v5100 = vpack.c.b16 %v3972, %v3964
    %v5101 = vpack.c.b16 %v3981, %v3973
    %v5102 = vpack.c.b16 %v3982, %v3974
    %v5103 = vpack.c.b16 %v3983, %v3975
    %v5104 = vpack.c.b16 %v3984, %v3976
    %v5105 = vpack.c.b16 %v3985, %v3977
    %v5106 = vpack.c.b16 %v3986, %v3978
    %v5107 = vpack.c.b16 %v3987, %v3979
    %v5108 = vpack.c.b16 %v3988, %v3980
    %v5109 = vpack.c.b16 %v3997, %v3989
    %v5110 = vpack.c.b16 %v3998, %v3990
    %v5111 = vpack.c.b16 %v3999, %v3991
    %v5112 = vpack.c.b16 %v4000, %v3992
    %v5113 = vpack.c.b16 %v4001, %v3993
    %v5114 = vpack.c.b16 %v4002, %v3994
    %v5115 = vpack.c.b16 %v4003, %v3995
    %v5116 = vpack.c.b16 %v4004, %v3996
    %v5117 = vpack.c.b16 %v4013, %v4005
    %v5118 = vpack.c.b16 %v4014, %v4006
    %v5119 = vpack.c.b16 %v4015, %v4007
    %v5120 = vpack.c.b16 %v4016, %v4008
    %v5121 = vpack.c.b16 %v4017, %v4009
    %v5122 = vpack.c.b16 %v4018, %v4010
    %v5123 = vpack.c.b16 %v4019, %v4011
    %v5124 = vpack.c.b16 %v4020, %v4012
    %v5125 = vpack.c.b16 %v4029, %v4021
    %v5126 = vpack.c.b16 %v4030, %v4022
    %v5127 = vpack.c.b16 %v4031, %v4023
    %v5128 = vpack.c.b16 %v4032, %v4024
    %v5129 = vpack.c.b16 %v4033, %v4025
    %v5130 = vpack.c.b16 %v4034, %v4026
    %v5131 = vpack.c.b16 %v4035, %v4027
    %v5132 = vpack.c.b16 %v4036, %v4028
    %v5133 = vpack.c.b16 %v4045, %v4037
    %v5134 = vpack.c.b16 %v4046, %v4038
    %v5135 = vpack.c.b16 %v4047, %v4039
    %v5136 = vpack.c.b16 %v4048, %v4040
    %v5137 = vpack.c.b16 %v4049, %v4041
    %v5138 = vpack.c.b16 %v4050, %v4042
    %v5139 = vpack.c.b16 %v4051, %v4043
    %v5140 = vpack.c.b16 %v4052, %v4044
    %v5141 = vpack.c.b16 %v4061, %v4053
    %v5142 = vpack.c.b16 %v4062, %v4054
    %v5143 = vpack.c.b16 %v4063, %v4055
    %v5144 = vpack.c.b16 %v4064, %v4056
    %v5145 = vpack.c.b16 %v4065, %v4057
    %v5146 = vpack.c.b16 %v4066, %v4058
    %v5147 = vpack.c.b16 %v4067, %v4059
    %v5148 = vpack.c.b16 %v4068, %v4060
    %v5149 = vpack.c.b16 %v4077, %v4069
    %v5150 = vpack.c.b16 %v4078, %v4070
    %v5151 = vpack.c.b16 %v4079, %v4071
    %v5152 = vpack.c.b16 %v4080, %v4072
    %v5153 = vpack.c.b16 %v4081, %v4073
    %v5154 = vpack.c.b16 %v4082, %v4074
    %v5155 = vpack.c.b16 %v4083, %v4075
    %v5156 = vpack.c.b16 %v4084, %v4076
    %v5157 = vpack.c.b16 %v4093, %v4085
    %v5158 = vpack.c.b16 %v4094, %v4086
    %v5159 = vpack.c.b16 %v4095, %v4087
    %v5160 = vpack.c.b16 %v4096, %v4088
    %v5161 = vpack.c.b16 %v4097, %v4089
    %v5162 = vpack.c.b16 %v4098, %v4090
    %v5163 = vpack.c.b16 %v4099, %v4091
    %v5164 = vpack.c.b16 %v4100, %v4092
    %v5165 = vpack.c.b16 %v4109, %v4101
    %v5166 = vpack.c.b16 %v4110, %v4102
    %v5167 = vpack.c.b16 %v4111, %v4103
    %v5168 = vpack.c.b16 %v4112, %v4104
    %v5169 = vpack.c.b16 %v4113, %v4105
    %v5170 = vpack.c.b16 %v4114, %v4106
    %v5171 = vpack.c.b16 %v4115, %v4107
    %v5172 = vpack.c.b16 %v4116, %v4108
    %v5173 = vpack.c.b16 %v4125, %v4117
    %v5174 = vpack.c.b16 %v4126, %v4118
    %v5175 = vpack.c.b16 %v4127, %v4119
    %v5176 = vpack.c.b16 %v4128, %v4120
    %v5177 = vpack.c.b16 %v4129, %v4121
    %v5178 = vpack.c.b16 %v4130, %v4122
    %v5179 = vpack.c.b16 %v4131, %v4123
    %v5180 = vpack.c.b16 %v4132, %v4124
    %v5181 = vpack.c.b16 %v4141, %v4133
    %v5182 = vpack.c.b16 %v4142, %v4134
    %v5183 = vpack.c.b16 %v4143, %v4135
    %v5184 = vpack.c.b16 %v4144, %v4136
    %v5185 = vpack.c.b16 %v4145, %v4137
    %v5186 = vpack.c.b16 %v4146, %v4138
    %v5187 = vpack.c.b16 %v4147, %v4139
    %v5188 = vpack.c.b16 %v4148, %v4140
    %v5189 = vpack.c.b16 %v4157, %v4149
    %v5190 = vpack.c.b16 %v4158, %v4150
    %v5191 = vpack.c.b16 %v4159, %v4151
    %v5192 = vpack.c.b16 %v4160, %v4152
    %v5193 = vpack.c.b16 %v4161, %v4153
    %v5194 = vpack.c.b16 %v4162, %v4154
    %v5195 = vpack.c.b16 %v4163, %v4155
    %v5196 = vpack.c.b16 %v4164, %v4156
    %v5197 = vpack.c.b16 %v4173, %v4165
    %v5198 = vpack.c.b16 %v4174, %v4166
    %v5199 = vpack.c.b16 %v4175, %v4167
    %v5200 = vpack.c.b16 %v4176, %v4168
    %v5201 = vpack.c.b16 %v4177, %v4169
    %v5202 = vpack.c.b16 %v4178, %v4170
    %v5203 = vpack.c.b16 %v4179, %v4171
    %v5204 = vpack.c.b16 %v4180, %v4172
    %6229 = vmatpush.bf16.msra.mxu0 %v4237
    %6230 = vmatpush.bf16.msra.mxu0 %v4229
    %6231 = vmatpush.bf16.msra.mxu0 %v4221
    %6232 = vmatpush.bf16.msra.mxu0 %v4213
    %6233 = vmatpush.bf16.msra.mxu0 %v4205
    %6234 = vmatpush.bf16.msra.mxu0 %v4197
    %6235 = vmatpush.bf16.msra.mxu0 %v4189
    %6236 = vmatpush.bf16.msra.mxu0 %v4181
    %6237 = vmatmul.bf16.gmra.mxu0 %v1075
    %v6238 = vpop.f32.mrf.mxu0
    %v6239 = vadd.f32 %v1057, %v6238
    %v6240 = vpop.f32.mrf.mxu0
    %6241 = vdwg.mxu0
    %6242 = vmatpush.bf16.msra.mxu0 %v4301
    %6243 = vmatpush.bf16.msra.mxu0 %v4293
    %6244 = vmatpush.bf16.msra.mxu0 %v4285
    %6245 = vmatpush.bf16.msra.mxu0 %v4277
    %6246 = vmatpush.bf16.msra.mxu0 %v4269
    %6247 = vmatpush.bf16.msra.mxu0 %v4261
    %6248 = vmatpush.bf16.msra.mxu0 %v4253
    %6249 = vmatpush.bf16.msra.mxu0 %v4245
    %6250 = vmatmul.bf16.gmra.mxu0 %v1076
    %v6251 = vpop.f32.mrf.mxu0
    %v6252 = vadd.f32 %v6239, %v6251
    %v6253 = vpop.f32.mrf.mxu0
    %6254 = vdwg.mxu0
    %6255 = vmatpush.bf16.msra.mxu0 %v4365
    %6256 = vmatpush.bf16.msra.mxu0 %v4357
    %6257 = vmatpush.bf16.msra.mxu0 %v4349
    %6258 = vmatpush.bf16.msra.mxu0 %v4341
    %6259 = vmatpush.bf16.msra.mxu0 %v4333
    %6260 = vmatpush.bf16.msra.mxu0 %v4325
    %6261 = vmatpush.bf16.msra.mxu0 %v4317
    %6262 = vmatpush.bf16.msra.mxu0 %v4309
    %6263 = vmatmul.bf16.gmra.mxu0 %v1077
    %v6264 = vpop.f32.mrf.mxu0
    %v6265 = vadd.f32 %v6252, %v6264
    %v6266 = vpop.f32.mrf.mxu0
    %6267 = vdwg.mxu0
    %6268 = vmatpush.bf16.msra.mxu0 %v4429
    %6269 = vmatpush.bf16.msra.mxu0 %v4421
    %6270 = vmatpush.bf16.msra.mxu0 %v4413
    %6271 = vmatpush.bf16.msra.mxu0 %v4405
    %6272 = vmatpush.bf16.msra.mxu0 %v4397
    %6273 = vmatpush.bf16.msra.mxu0 %v4389
    %6274 = vmatpush.bf16.msra.mxu0 %v4381
    %6275 = vmatpush.bf16.msra.mxu0 %v4373
    %6276 = vmatmul.bf16.gmra.mxu0 %v1078
    %v6277 = vpop.f32.mrf.mxu0
    %v6278 = vadd.f32 %v6265, %v6277
    %v6279 = vpop.f32.mrf.mxu0
    %6280 = vdwg.mxu0
    %6281 = vmatpush.bf16.msra.mxu0 %v4493
    %6282 = vmatpush.bf16.msra.mxu0 %v4485
    %6283 = vmatpush.bf16.msra.mxu0 %v4477
    %6284 = vmatpush.bf16.msra.mxu0 %v4469
    %6285 = vmatpush.bf16.msra.mxu0 %v4461
    %6286 = vmatpush.bf16.msra.mxu0 %v4453
    %6287 = vmatpush.bf16.msra.mxu0 %v4445
    %6288 = vmatpush.bf16.msra.mxu0 %v4437
    %6289 = vmatmul.bf16.gmra.mxu0 %v1079
    %v6290 = vpop.f32.mrf.mxu0
    %v6291 = vadd.f32 %v6278, %v6290
    %v6292 = vpop.f32.mrf.mxu0
    %6293 = vdwg.mxu0
    %6294 = vmatpush.bf16.msra.mxu0 %v4557
    %6295 = vmatpush.bf16.msra.mxu0 %v4549
    %6296 = vmatpush.bf16.msra.mxu0 %v4541
    %6297 = vmatpush.bf16.msra.mxu0 %v4533
    %6298 = vmatpush.bf16.msra.mxu0 %v4525
    %6299 = vmatpush.bf16.msra.mxu0 %v4517
    %6300 = vmatpush.bf16.msra.mxu0 %v4509
    %6301 = vmatpush.bf16.msra.mxu0 %v4501
    %6302 = vmatmul.bf16.gmra.mxu0 %v1080
    %v6303 = vpop.f32.mrf.mxu0
    %v6304 = vadd.f32 %v6291, %v6303
    %v6305 = vpop.f32.mrf.mxu0
    %6306 = vdwg.mxu0
    %6307 = vmatpush.bf16.msra.mxu0 %v4621
    %6308 = vmatpush.bf16.msra.mxu0 %v4613
    %6309 = vmatpush.bf16.msra.mxu0 %v4605
    %6310 = vmatpush.bf16.msra.mxu0 %v4597
    %6311 = vmatpush.bf16.msra.mxu0 %v4589
    %6312 = vmatpush.bf16.msra.mxu0 %v4581
    %6313 = vmatpush.bf16.msra.mxu0 %v4573
    %6314 = vmatpush.bf16.msra.mxu0 %v4565
    %6315 = vmatmul.bf16.gmra.mxu0 %v1081
    %v6316 = vpop.f32.mrf.mxu0
    %v6317 = vadd.f32 %v6304, %v6316
    %v6318 = vpop.f32.mrf.mxu0
    %6319 = vdwg.mxu0
    %6320 = vmatpush.bf16.msra.mxu0 %v4685
    %6321 = vmatpush.bf16.msra.mxu0 %v4677
    %6322 = vmatpush.bf16.msra.mxu0 %v4669
    %6323 = vmatpush.bf16.msra.mxu0 %v4661
    %6324 = vmatpush.bf16.msra.mxu0 %v4653
    %6325 = vmatpush.bf16.msra.mxu0 %v4645
    %6326 = vmatpush.bf16.msra.mxu0 %v4637
    %6327 = vmatpush.bf16.msra.mxu0 %v4629
    %6328 = vmatmul.bf16.gmra.mxu0 %v1082
    %v6329 = vpop.f32.mrf.mxu0
    %v6330 = vadd.f32 %v6317, %v6329
    %v6331 = vpop.f32.mrf.mxu0
    %6332 = vdwg.mxu0
    %6333 = vmatpush.bf16.msra.mxu0 %v4749
    %6334 = vmatpush.bf16.msra.mxu0 %v4741
    %6335 = vmatpush.bf16.msra.mxu0 %v4733
    %6336 = vmatpush.bf16.msra.mxu0 %v4725
    %6337 = vmatpush.bf16.msra.mxu0 %v4717
    %6338 = vmatpush.bf16.msra.mxu0 %v4709
    %6339 = vmatpush.bf16.msra.mxu0 %v4701
    %6340 = vmatpush.bf16.msra.mxu0 %v4693
    %6341 = vmatmul.bf16.gmra.mxu0 %v1085
    %v6342 = vpop.f32.mrf.mxu0
    %v6343 = vadd.f32 %v6330, %v6342
    %v6344 = vpop.f32.mrf.mxu0
    %6345 = vdwg.mxu0
    %6346 = vmatpush.bf16.msra.mxu0 %v4813
    %6347 = vmatpush.bf16.msra.mxu0 %v4805
    %6348 = vmatpush.bf16.msra.mxu0 %v4797
    %6349 = vmatpush.bf16.msra.mxu0 %v4789
    %6350 = vmatpush.bf16.msra.mxu0 %v4781
    %6351 = vmatpush.bf16.msra.mxu0 %v4773
    %6352 = vmatpush.bf16.msra.mxu0 %v4765
    %6353 = vmatpush.bf16.msra.mxu0 %v4757
    %6354 = vmatmul.bf16.gmra.mxu0 %v1086
    %v6355 = vpop.f32.mrf.mxu0
    %v6356 = vadd.f32 %v6343, %v6355
    %v6357 = vpop.f32.mrf.mxu0
    %6358 = vdwg.mxu0
    %6359 = vmatpush.bf16.msra.mxu0 %v4877
    %6360 = vmatpush.bf16.msra.mxu0 %v4869
    %6361 = vmatpush.bf16.msra.mxu0 %v4861
    %6362 = vmatpush.bf16.msra.mxu0 %v4853
    %6363 = vmatpush.bf16.msra.mxu0 %v4845
    %6364 = vmatpush.bf16.msra.mxu0 %v4837
    %6365 = vmatpush.bf16.msra.mxu0 %v4829
    %6366 = vmatpush.bf16.msra.mxu0 %v4821
    %6367 = vmatmul.bf16.gmra.mxu0 %v1087
    %v6368 = vpop.f32.mrf.mxu0
    %v6369 = vadd.f32 %v6356, %v6368
    %v6370 = vpop.f32.mrf.mxu0
    %6371 = vdwg.mxu0
    %6372 = vmatpush.bf16.msra.mxu0 %v4941
    %6373 = vmatpush.bf16.msra.mxu0 %v4933
    %6374 = vmatpush.bf16.msra.mxu0 %v4925
    %6375 = vmatpush.bf16.msra.mxu0 %v4917
    %6376 = vmatpush.bf16.msra.mxu0 %v4909
    %6377 = vmatpush.bf16.msra.mxu0 %v4901
    %6378 = vmatpush.bf16.msra.mxu0 %v4893
    %6379 = vmatpush.bf16.msra.mxu0 %v4885
    %6380 = vmatmul.bf16.gmra.mxu0 %v1088
    %v6381 = vpop.f32.mrf.mxu0
    %v6382 = vadd.f32 %v6369, %v6381
    %v6383 = vpop.f32.mrf.mxu0
    %6384 = vdwg.mxu0
    %6385 = vmatpush.bf16.msra.mxu0 %v5005
    %6386 = vmatpush.bf16.msra.mxu0 %v4997
    %6387 = vmatpush.bf16.msra.mxu0 %v4989
    %6388 = vmatpush.bf16.msra.mxu0 %v4981
    %6389 = vmatpush.bf16.msra.mxu0 %v4973
    %6390 = vmatpush.bf16.msra.mxu0 %v4965
    %6391 = vmatpush.bf16.msra.mxu0 %v4957
    %6392 = vmatpush.bf16.msra.mxu0 %v4949
    %6393 = vmatmul.bf16.gmra.mxu0 %v1089
    %v6394 = vpop.f32.mrf.mxu0
    %v6395 = vadd.f32 %v6382, %v6394
    %v6396 = vpop.f32.mrf.mxu0
    %6397 = vdwg.mxu0
    %6398 = vmatpush.bf16.msra.mxu0 %v5069
    %6399 = vmatpush.bf16.msra.mxu0 %v5061
    %6400 = vmatpush.bf16.msra.mxu0 %v5053
    %6401 = vmatpush.bf16.msra.mxu0 %v5045
    %6402 = vmatpush.bf16.msra.mxu0 %v5037
    %6403 = vmatpush.bf16.msra.mxu0 %v5029
    %6404 = vmatpush.bf16.msra.mxu0 %v5021
    %6405 = vmatpush.bf16.msra.mxu0 %v5013
    %6406 = vmatmul.bf16.gmra.mxu0 %v1090
    %v6407 = vpop.f32.mrf.mxu0
    %v6408 = vadd.f32 %v6395, %v6407
    %v6409 = vpop.f32.mrf.mxu0
    %6410 = vdwg.mxu0
    %6411 = vmatpush.bf16.msra.mxu0 %v5133
    %6412 = vmatpush.bf16.msra.mxu0 %v5125
    %6413 = vmatpush.bf16.msra.mxu0 %v5117
    %6414 = vmatpush.bf16.msra.mxu0 %v5109
    %6415 = vmatpush.bf16.msra.mxu0 %v5101
    %6416 = vmatpush.bf16.msra.mxu0 %v5093
    %6417 = vmatpush.bf16.msra.mxu0 %v5085
    %6418 = vmatpush.bf16.msra.mxu0 %v5077
    %6419 = vmatmul.bf16.gmra.mxu0 %v1091
    %v6420 = vpop.f32.mrf.mxu0
    %v6421 = vadd.f32 %v6408, %v6420
    %v6422 = vpop.f32.mrf.mxu0
    %6423 = vdwg.mxu0
    %6424 = vmatpush.bf16.msra.mxu0 %v5197
    %6425 = vmatpush.bf16.msra.mxu0 %v5189
    %6426 = vmatpush.bf16.msra.mxu0 %v5181
    %6427 = vmatpush.bf16.msra.mxu0 %v5173
    %6428 = vmatpush.bf16.msra.mxu0 %v5165
    %6429 = vmatpush.bf16.msra.mxu0 %v5157
    %6430 = vmatpush.bf16.msra.mxu0 %v5149
    %6431 = vmatpush.bf16.msra.mxu0 %v5141
    %6432 = vmatmul.bf16.gmra.mxu0 %v1092
    %v6433 = vpop.f32.mrf.mxu0
    %v6434 = vadd.f32 %v6421, %v6433
    %v6435 = vpop.f32.mrf.mxu0
    %6436 = vdwg.mxu0
    %6437 = vmatpush.bf16.msra.mxu0 %v4238
    %6438 = vmatpush.bf16.msra.mxu0 %v4230
    %6439 = vmatpush.bf16.msra.mxu0 %v4222
    %6440 = vmatpush.bf16.msra.mxu0 %v4214
    %6441 = vmatpush.bf16.msra.mxu0 %v4206
    %6442 = vmatpush.bf16.msra.mxu0 %v4198
    %6443 = vmatpush.bf16.msra.mxu0 %v4190
    %6444 = vmatpush.bf16.msra.mxu0 %v4182
    %6445 = vmatmul.bf16.gmra.mxu0 %v1075
    %v6446 = vpop.f32.mrf.mxu0
    %v6447 = vadd.f32 %v1058, %v6446
    %v6448 = vpop.f32.mrf.mxu0
    %6449 = vdwg.mxu0
    %6450 = vmatpush.bf16.msra.mxu0 %v4302
    %6451 = vmatpush.bf16.msra.mxu0 %v4294
    %6452 = vmatpush.bf16.msra.mxu0 %v4286
    %6453 = vmatpush.bf16.msra.mxu0 %v4278
    %6454 = vmatpush.bf16.msra.mxu0 %v4270
    %6455 = vmatpush.bf16.msra.mxu0 %v4262
    %6456 = vmatpush.bf16.msra.mxu0 %v4254
    %6457 = vmatpush.bf16.msra.mxu0 %v4246
    %6458 = vmatmul.bf16.gmra.mxu0 %v1076
    %v6459 = vpop.f32.mrf.mxu0
    %v6460 = vadd.f32 %v6447, %v6459
    %v6461 = vpop.f32.mrf.mxu0
    %6462 = vdwg.mxu0
    %6463 = vmatpush.bf16.msra.mxu0 %v4366
    %6464 = vmatpush.bf16.msra.mxu0 %v4358
    %6465 = vmatpush.bf16.msra.mxu0 %v4350
    %6466 = vmatpush.bf16.msra.mxu0 %v4342
    %6467 = vmatpush.bf16.msra.mxu0 %v4334
    %6468 = vmatpush.bf16.msra.mxu0 %v4326
    %6469 = vmatpush.bf16.msra.mxu0 %v4318
    %6470 = vmatpush.bf16.msra.mxu0 %v4310
    %6471 = vmatmul.bf16.gmra.mxu0 %v1077
    %v6472 = vpop.f32.mrf.mxu0
    %v6473 = vadd.f32 %v6460, %v6472
    %v6474 = vpop.f32.mrf.mxu0
    %6475 = vdwg.mxu0
    %6476 = vmatpush.bf16.msra.mxu0 %v4430
    %6477 = vmatpush.bf16.msra.mxu0 %v4422
    %6478 = vmatpush.bf16.msra.mxu0 %v4414
    %6479 = vmatpush.bf16.msra.mxu0 %v4406
    %6480 = vmatpush.bf16.msra.mxu0 %v4398
    %6481 = vmatpush.bf16.msra.mxu0 %v4390
    %6482 = vmatpush.bf16.msra.mxu0 %v4382
    %6483 = vmatpush.bf16.msra.mxu0 %v4374
    %6484 = vmatmul.bf16.gmra.mxu0 %v1078
    %v6485 = vpop.f32.mrf.mxu0
    %v6486 = vadd.f32 %v6473, %v6485
    %v6487 = vpop.f32.mrf.mxu0
    %6488 = vdwg.mxu0
    %6489 = vmatpush.bf16.msra.mxu0 %v4494
    %6490 = vmatpush.bf16.msra.mxu0 %v4486
    %6491 = vmatpush.bf16.msra.mxu0 %v4478
    %6492 = vmatpush.bf16.msra.mxu0 %v4470
    %6493 = vmatpush.bf16.msra.mxu0 %v4462
    %6494 = vmatpush.bf16.msra.mxu0 %v4454
    %6495 = vmatpush.bf16.msra.mxu0 %v4446
    %6496 = vmatpush.bf16.msra.mxu0 %v4438
    %6497 = vmatmul.bf16.gmra.mxu0 %v1079
    %v6498 = vpop.f32.mrf.mxu0
    %v6499 = vadd.f32 %v6486, %v6498
    %v6500 = vpop.f32.mrf.mxu0
    %6501 = vdwg.mxu0
    %6502 = vmatpush.bf16.msra.mxu0 %v4558
    %6503 = vmatpush.bf16.msra.mxu0 %v4550
    %6504 = vmatpush.bf16.msra.mxu0 %v4542
    %6505 = vmatpush.bf16.msra.mxu0 %v4534
    %6506 = vmatpush.bf16.msra.mxu0 %v4526
    %6507 = vmatpush.bf16.msra.mxu0 %v4518
    %6508 = vmatpush.bf16.msra.mxu0 %v4510
    %6509 = vmatpush.bf16.msra.mxu0 %v4502
    %6510 = vmatmul.bf16.gmra.mxu0 %v1080
    %v6511 = vpop.f32.mrf.mxu0
    %v6512 = vadd.f32 %v6499, %v6511
    %v6513 = vpop.f32.mrf.mxu0
    %6514 = vdwg.mxu0
    %6515 = vmatpush.bf16.msra.mxu0 %v4622
    %6516 = vmatpush.bf16.msra.mxu0 %v4614
    %6517 = vmatpush.bf16.msra.mxu0 %v4606
    %6518 = vmatpush.bf16.msra.mxu0 %v4598
    %6519 = vmatpush.bf16.msra.mxu0 %v4590
    %6520 = vmatpush.bf16.msra.mxu0 %v4582
    %6521 = vmatpush.bf16.msra.mxu0 %v4574
    %6522 = vmatpush.bf16.msra.mxu0 %v4566
    %6523 = vmatmul.bf16.gmra.mxu0 %v1081
    %v6524 = vpop.f32.mrf.mxu0
    %v6525 = vadd.f32 %v6512, %v6524
    %v6526 = vpop.f32.mrf.mxu0
    %6527 = vdwg.mxu0
    %6528 = vmatpush.bf16.msra.mxu0 %v4686
    %6529 = vmatpush.bf16.msra.mxu0 %v4678
    %6530 = vmatpush.bf16.msra.mxu0 %v4670
    %6531 = vmatpush.bf16.msra.mxu0 %v4662
    %6532 = vmatpush.bf16.msra.mxu0 %v4654
    %6533 = vmatpush.bf16.msra.mxu0 %v4646
    %6534 = vmatpush.bf16.msra.mxu0 %v4638
    %6535 = vmatpush.bf16.msra.mxu0 %v4630
    %6536 = vmatmul.bf16.gmra.mxu0 %v1082
    %v6537 = vpop.f32.mrf.mxu0
    %v6538 = vadd.f32 %v6525, %v6537
    %v6539 = vpop.f32.mrf.mxu0
    %6540 = vdwg.mxu0
    %6541 = vmatpush.bf16.msra.mxu0 %v4750
    %6542 = vmatpush.bf16.msra.mxu0 %v4742
    %6543 = vmatpush.bf16.msra.mxu0 %v4734
    %6544 = vmatpush.bf16.msra.mxu0 %v4726
    %6545 = vmatpush.bf16.msra.mxu0 %v4718
    %6546 = vmatpush.bf16.msra.mxu0 %v4710
    %6547 = vmatpush.bf16.msra.mxu0 %v4702
    %6548 = vmatpush.bf16.msra.mxu0 %v4694
    %6549 = vmatmul.bf16.gmra.mxu0 %v1085
    %v6550 = vpop.f32.mrf.mxu0
    %v6551 = vadd.f32 %v6538, %v6550
    %v6552 = vpop.f32.mrf.mxu0
    %6553 = vdwg.mxu0
    %6554 = vmatpush.bf16.msra.mxu0 %v4814
    %6555 = vmatpush.bf16.msra.mxu0 %v4806
    %6556 = vmatpush.bf16.msra.mxu0 %v4798
    %6557 = vmatpush.bf16.msra.mxu0 %v4790
    %6558 = vmatpush.bf16.msra.mxu0 %v4782
    %6559 = vmatpush.bf16.msra.mxu0 %v4774
    %6560 = vmatpush.bf16.msra.mxu0 %v4766
    %6561 = vmatpush.bf16.msra.mxu0 %v4758
    %6562 = vmatmul.bf16.gmra.mxu0 %v1086
    %v6563 = vpop.f32.mrf.mxu0
    %v6564 = vadd.f32 %v6551, %v6563
    %v6565 = vpop.f32.mrf.mxu0
    %6566 = vdwg.mxu0
    %6567 = vmatpush.bf16.msra.mxu0 %v4878
    %6568 = vmatpush.bf16.msra.mxu0 %v4870
    %6569 = vmatpush.bf16.msra.mxu0 %v4862
    %6570 = vmatpush.bf16.msra.mxu0 %v4854
    %6571 = vmatpush.bf16.msra.mxu0 %v4846
    %6572 = vmatpush.bf16.msra.mxu0 %v4838
    %6573 = vmatpush.bf16.msra.mxu0 %v4830
    %6574 = vmatpush.bf16.msra.mxu0 %v4822
    %6575 = vmatmul.bf16.gmra.mxu0 %v1087
    %v6576 = vpop.f32.mrf.mxu0
    %v6577 = vadd.f32 %v6564, %v6576
    %v6578 = vpop.f32.mrf.mxu0
    %6579 = vdwg.mxu0
    %6580 = vmatpush.bf16.msra.mxu0 %v4942
    %6581 = vmatpush.bf16.msra.mxu0 %v4934
    %6582 = vmatpush.bf16.msra.mxu0 %v4926
    %6583 = vmatpush.bf16.msra.mxu0 %v4918
    %6584 = vmatpush.bf16.msra.mxu0 %v4910
    %6585 = vmatpush.bf16.msra.mxu0 %v4902
    %6586 = vmatpush.bf16.msra.mxu0 %v4894
    %6587 = vmatpush.bf16.msra.mxu0 %v4886
    %6588 = vmatmul.bf16.gmra.mxu0 %v1088
    %v6589 = vpop.f32.mrf.mxu0
    %v6590 = vadd.f32 %v6577, %v6589
    %v6591 = vpop.f32.mrf.mxu0
    %6592 = vdwg.mxu0
    %6593 = vmatpush.bf16.msra.mxu0 %v5006
    %6594 = vmatpush.bf16.msra.mxu0 %v4998
    %6595 = vmatpush.bf16.msra.mxu0 %v4990
    %6596 = vmatpush.bf16.msra.mxu0 %v4982
    %6597 = vmatpush.bf16.msra.mxu0 %v4974
    %6598 = vmatpush.bf16.msra.mxu0 %v4966
    %6599 = vmatpush.bf16.msra.mxu0 %v4958
    %6600 = vmatpush.bf16.msra.mxu0 %v4950
    %6601 = vmatmul.bf16.gmra.mxu0 %v1089
    %v6602 = vpop.f32.mrf.mxu0
    %v6603 = vadd.f32 %v6590, %v6602
    %v6604 = vpop.f32.mrf.mxu0
    %6605 = vdwg.mxu0
    %6606 = vmatpush.bf16.msra.mxu0 %v5070
    %6607 = vmatpush.bf16.msra.mxu0 %v5062
    %6608 = vmatpush.bf16.msra.mxu0 %v5054
    %6609 = vmatpush.bf16.msra.mxu0 %v5046
    %6610 = vmatpush.bf16.msra.mxu0 %v5038
    %6611 = vmatpush.bf16.msra.mxu0 %v5030
    %6612 = vmatpush.bf16.msra.mxu0 %v5022
    %6613 = vmatpush.bf16.msra.mxu0 %v5014
    %6614 = vmatmul.bf16.gmra.mxu0 %v1090
    %v6615 = vpop.f32.mrf.mxu0
    %v6616 = vadd.f32 %v6603, %v6615
    %v6617 = vpop.f32.mrf.mxu0
    %6618 = vdwg.mxu0
    %6619 = vmatpush.bf16.msra.mxu0 %v5134
    %6620 = vmatpush.bf16.msra.mxu0 %v5126
    %6621 = vmatpush.bf16.msra.mxu0 %v5118
    %6622 = vmatpush.bf16.msra.mxu0 %v5110
    %6623 = vmatpush.bf16.msra.mxu0 %v5102
    %6624 = vmatpush.bf16.msra.mxu0 %v5094
    %6625 = vmatpush.bf16.msra.mxu0 %v5086
    %6626 = vmatpush.bf16.msra.mxu0 %v5078
    %6627 = vmatmul.bf16.gmra.mxu0 %v1091
    %v6628 = vpop.f32.mrf.mxu0
    %v6629 = vadd.f32 %v6616, %v6628
    %v6630 = vpop.f32.mrf.mxu0
    %6631 = vdwg.mxu0
    %6632 = vmatpush.bf16.msra.mxu0 %v5198
    %6633 = vmatpush.bf16.msra.mxu0 %v5190
    %6634 = vmatpush.bf16.msra.mxu0 %v5182
    %6635 = vmatpush.bf16.msra.mxu0 %v5174
    %6636 = vmatpush.bf16.msra.mxu0 %v5166
    %6637 = vmatpush.bf16.msra.mxu0 %v5158
    %6638 = vmatpush.bf16.msra.mxu0 %v5150
    %6639 = vmatpush.bf16.msra.mxu0 %v5142
    %6640 = vmatmul.bf16.gmra.mxu0 %v1092
    %v6641 = vpop.f32.mrf.mxu0
    %v6642 = vadd.f32 %v6629, %v6641
    %v6643 = vpop.f32.mrf.mxu0
    %6644 = vdwg.mxu0
    %6645 = vmatpush.bf16.msra.mxu0 %v4239
    %6646 = vmatpush.bf16.msra.mxu0 %v4231
    %6647 = vmatpush.bf16.msra.mxu0 %v4223
    %6648 = vmatpush.bf16.msra.mxu0 %v4215
    %6649 = vmatpush.bf16.msra.mxu0 %v4207
    %6650 = vmatpush.bf16.msra.mxu0 %v4199
    %6651 = vmatpush.bf16.msra.mxu0 %v4191
    %6652 = vmatpush.bf16.msra.mxu0 %v4183
    %6653 = vmatmul.bf16.gmra.mxu0 %v1075
    %v6654 = vpop.f32.mrf.mxu0
    %v6655 = vadd.f32 %v1059, %v6654
    %v6656 = vpop.f32.mrf.mxu0
    %6657 = vdwg.mxu0
    %6658 = vmatpush.bf16.msra.mxu0 %v4303
    %6659 = vmatpush.bf16.msra.mxu0 %v4295
    %6660 = vmatpush.bf16.msra.mxu0 %v4287
    %6661 = vmatpush.bf16.msra.mxu0 %v4279
    %6662 = vmatpush.bf16.msra.mxu0 %v4271
    %6663 = vmatpush.bf16.msra.mxu0 %v4263
    %6664 = vmatpush.bf16.msra.mxu0 %v4255
    %6665 = vmatpush.bf16.msra.mxu0 %v4247
    %6666 = vmatmul.bf16.gmra.mxu0 %v1076
    %v6667 = vpop.f32.mrf.mxu0
    %v6668 = vadd.f32 %v6655, %v6667
    %v6669 = vpop.f32.mrf.mxu0
    %6670 = vdwg.mxu0
    %6671 = vmatpush.bf16.msra.mxu0 %v4367
    %6672 = vmatpush.bf16.msra.mxu0 %v4359
    %6673 = vmatpush.bf16.msra.mxu0 %v4351
    %6674 = vmatpush.bf16.msra.mxu0 %v4343
    %6675 = vmatpush.bf16.msra.mxu0 %v4335
    %6676 = vmatpush.bf16.msra.mxu0 %v4327
    %6677 = vmatpush.bf16.msra.mxu0 %v4319
    %6678 = vmatpush.bf16.msra.mxu0 %v4311
    %6679 = vmatmul.bf16.gmra.mxu0 %v1077
    %v6680 = vpop.f32.mrf.mxu0
    %v6681 = vadd.f32 %v6668, %v6680
    %v6682 = vpop.f32.mrf.mxu0
    %6683 = vdwg.mxu0
    %6684 = vmatpush.bf16.msra.mxu0 %v4431
    %6685 = vmatpush.bf16.msra.mxu0 %v4423
    %6686 = vmatpush.bf16.msra.mxu0 %v4415
    %6687 = vmatpush.bf16.msra.mxu0 %v4407
    %6688 = vmatpush.bf16.msra.mxu0 %v4399
    %6689 = vmatpush.bf16.msra.mxu0 %v4391
    %6690 = vmatpush.bf16.msra.mxu0 %v4383
    %6691 = vmatpush.bf16.msra.mxu0 %v4375
    %6692 = vmatmul.bf16.gmra.mxu0 %v1078
    %v6693 = vpop.f32.mrf.mxu0
    %v6694 = vadd.f32 %v6681, %v6693
    %v6695 = vpop.f32.mrf.mxu0
    %6696 = vdwg.mxu0
    %6697 = vmatpush.bf16.msra.mxu0 %v4495
    %6698 = vmatpush.bf16.msra.mxu0 %v4487
    %6699 = vmatpush.bf16.msra.mxu0 %v4479
    %6700 = vmatpush.bf16.msra.mxu0 %v4471
    %6701 = vmatpush.bf16.msra.mxu0 %v4463
    %6702 = vmatpush.bf16.msra.mxu0 %v4455
    %6703 = vmatpush.bf16.msra.mxu0 %v4447
    %6704 = vmatpush.bf16.msra.mxu0 %v4439
    %6705 = vmatmul.bf16.gmra.mxu0 %v1079
    %v6706 = vpop.f32.mrf.mxu0
    %v6707 = vadd.f32 %v6694, %v6706
    %v6708 = vpop.f32.mrf.mxu0
    %6709 = vdwg.mxu0
    %6710 = vmatpush.bf16.msra.mxu0 %v4559
    %6711 = vmatpush.bf16.msra.mxu0 %v4551
    %6712 = vmatpush.bf16.msra.mxu0 %v4543
    %6713 = vmatpush.bf16.msra.mxu0 %v4535
    %6714 = vmatpush.bf16.msra.mxu0 %v4527
    %6715 = vmatpush.bf16.msra.mxu0 %v4519
    %6716 = vmatpush.bf16.msra.mxu0 %v4511
    %6717 = vmatpush.bf16.msra.mxu0 %v4503
    %6718 = vmatmul.bf16.gmra.mxu0 %v1080
    %v6719 = vpop.f32.mrf.mxu0
    %v6720 = vadd.f32 %v6707, %v6719
    %v6721 = vpop.f32.mrf.mxu0
    %6722 = vdwg.mxu0
    %6723 = vmatpush.bf16.msra.mxu0 %v4623
    %6724 = vmatpush.bf16.msra.mxu0 %v4615
    %6725 = vmatpush.bf16.msra.mxu0 %v4607
    %6726 = vmatpush.bf16.msra.mxu0 %v4599
    %6727 = vmatpush.bf16.msra.mxu0 %v4591
    %6728 = vmatpush.bf16.msra.mxu0 %v4583
    %6729 = vmatpush.bf16.msra.mxu0 %v4575
    %6730 = vmatpush.bf16.msra.mxu0 %v4567
    %6731 = vmatmul.bf16.gmra.mxu0 %v1081
    %v6732 = vpop.f32.mrf.mxu0
    %v6733 = vadd.f32 %v6720, %v6732
    %v6734 = vpop.f32.mrf.mxu0
    %6735 = vdwg.mxu0
    %6736 = vmatpush.bf16.msra.mxu0 %v4687
    %6737 = vmatpush.bf16.msra.mxu0 %v4679
    %6738 = vmatpush.bf16.msra.mxu0 %v4671
    %6739 = vmatpush.bf16.msra.mxu0 %v4663
    %6740 = vmatpush.bf16.msra.mxu0 %v4655
    %6741 = vmatpush.bf16.msra.mxu0 %v4647
    %6742 = vmatpush.bf16.msra.mxu0 %v4639
    %6743 = vmatpush.bf16.msra.mxu0 %v4631
    %6744 = vmatmul.bf16.gmra.mxu0 %v1082
    %v6745 = vpop.f32.mrf.mxu0
    %v6746 = vadd.f32 %v6733, %v6745
    %v6747 = vpop.f32.mrf.mxu0
    %6748 = vdwg.mxu0
    %6749 = vmatpush.bf16.msra.mxu0 %v4751
    %6750 = vmatpush.bf16.msra.mxu0 %v4743
    %6751 = vmatpush.bf16.msra.mxu0 %v4735
    %6752 = vmatpush.bf16.msra.mxu0 %v4727
    %6753 = vmatpush.bf16.msra.mxu0 %v4719
    %6754 = vmatpush.bf16.msra.mxu0 %v4711
    %6755 = vmatpush.bf16.msra.mxu0 %v4703
    %6756 = vmatpush.bf16.msra.mxu0 %v4695
    %6757 = vmatmul.bf16.gmra.mxu0 %v1085
    %v6758 = vpop.f32.mrf.mxu0
    %v6759 = vadd.f32 %v6746, %v6758
    %v6760 = vpop.f32.mrf.mxu0
    %6761 = vdwg.mxu0
    %6762 = vmatpush.bf16.msra.mxu0 %v4815
    %6763 = vmatpush.bf16.msra.mxu0 %v4807
    %6764 = vmatpush.bf16.msra.mxu0 %v4799
    %6765 = vmatpush.bf16.msra.mxu0 %v4791
    %6766 = vmatpush.bf16.msra.mxu0 %v4783
    %6767 = vmatpush.bf16.msra.mxu0 %v4775
    %6768 = vmatpush.bf16.msra.mxu0 %v4767
    %6769 = vmatpush.bf16.msra.mxu0 %v4759
    %6770 = vmatmul.bf16.gmra.mxu0 %v1086
    %v6771 = vpop.f32.mrf.mxu0
    %v6772 = vadd.f32 %v6759, %v6771
    %v6773 = vpop.f32.mrf.mxu0
    %6774 = vdwg.mxu0
    %6775 = vmatpush.bf16.msra.mxu0 %v4879
    %6776 = vmatpush.bf16.msra.mxu0 %v4871
    %6777 = vmatpush.bf16.msra.mxu0 %v4863
    %6778 = vmatpush.bf16.msra.mxu0 %v4855
    %6779 = vmatpush.bf16.msra.mxu0 %v4847
    %6780 = vmatpush.bf16.msra.mxu0 %v4839
    %6781 = vmatpush.bf16.msra.mxu0 %v4831
    %6782 = vmatpush.bf16.msra.mxu0 %v4823
    %6783 = vmatmul.bf16.gmra.mxu0 %v1087
    %v6784 = vpop.f32.mrf.mxu0
    %v6785 = vadd.f32 %v6772, %v6784
    %v6786 = vpop.f32.mrf.mxu0
    %6787 = vdwg.mxu0
    %6788 = vmatpush.bf16.msra.mxu0 %v4943
    %6789 = vmatpush.bf16.msra.mxu0 %v4935
    %6790 = vmatpush.bf16.msra.mxu0 %v4927
    %6791 = vmatpush.bf16.msra.mxu0 %v4919
    %6792 = vmatpush.bf16.msra.mxu0 %v4911
    %6793 = vmatpush.bf16.msra.mxu0 %v4903
    %6794 = vmatpush.bf16.msra.mxu0 %v4895
    %6795 = vmatpush.bf16.msra.mxu0 %v4887
    %6796 = vmatmul.bf16.gmra.mxu0 %v1088
    %v6797 = vpop.f32.mrf.mxu0
    %v6798 = vadd.f32 %v6785, %v6797
    %v6799 = vpop.f32.mrf.mxu0
    %6800 = vdwg.mxu0
    %6801 = vmatpush.bf16.msra.mxu0 %v5007
    %6802 = vmatpush.bf16.msra.mxu0 %v4999
    %6803 = vmatpush.bf16.msra.mxu0 %v4991
    %6804 = vmatpush.bf16.msra.mxu0 %v4983
    %6805 = vmatpush.bf16.msra.mxu0 %v4975
    %6806 = vmatpush.bf16.msra.mxu0 %v4967
    %6807 = vmatpush.bf16.msra.mxu0 %v4959
    %6808 = vmatpush.bf16.msra.mxu0 %v4951
    %6809 = vmatmul.bf16.gmra.mxu0 %v1089
    %v6810 = vpop.f32.mrf.mxu0
    %v6811 = vadd.f32 %v6798, %v6810
    %v6812 = vpop.f32.mrf.mxu0
    %6813 = vdwg.mxu0
    %6814 = vmatpush.bf16.msra.mxu0 %v5071
    %6815 = vmatpush.bf16.msra.mxu0 %v5063
    %6816 = vmatpush.bf16.msra.mxu0 %v5055
    %6817 = vmatpush.bf16.msra.mxu0 %v5047
    %6818 = vmatpush.bf16.msra.mxu0 %v5039
    %6819 = vmatpush.bf16.msra.mxu0 %v5031
    %6820 = vmatpush.bf16.msra.mxu0 %v5023
    %6821 = vmatpush.bf16.msra.mxu0 %v5015
    %6822 = vmatmul.bf16.gmra.mxu0 %v1090
    %v6823 = vpop.f32.mrf.mxu0
    %v6824 = vadd.f32 %v6811, %v6823
    %v6825 = vpop.f32.mrf.mxu0
    %6826 = vdwg.mxu0
    %6827 = vmatpush.bf16.msra.mxu0 %v5135
    %6828 = vmatpush.bf16.msra.mxu0 %v5127
    %6829 = vmatpush.bf16.msra.mxu0 %v5119
    %6830 = vmatpush.bf16.msra.mxu0 %v5111
    %6831 = vmatpush.bf16.msra.mxu0 %v5103
    %6832 = vmatpush.bf16.msra.mxu0 %v5095
    %6833 = vmatpush.bf16.msra.mxu0 %v5087
    %6834 = vmatpush.bf16.msra.mxu0 %v5079
    %6835 = vmatmul.bf16.gmra.mxu0 %v1091
    %v6836 = vpop.f32.mrf.mxu0
    %v6837 = vadd.f32 %v6824, %v6836
    %v6838 = vpop.f32.mrf.mxu0
    %6839 = vdwg.mxu0
    %6840 = vmatpush.bf16.msra.mxu0 %v5199
    %6841 = vmatpush.bf16.msra.mxu0 %v5191
    %6842 = vmatpush.bf16.msra.mxu0 %v5183
    %6843 = vmatpush.bf16.msra.mxu0 %v5175
    %6844 = vmatpush.bf16.msra.mxu0 %v5167
    %6845 = vmatpush.bf16.msra.mxu0 %v5159
    %6846 = vmatpush.bf16.msra.mxu0 %v5151
    %6847 = vmatpush.bf16.msra.mxu0 %v5143
    %6848 = vmatmul.bf16.gmra.mxu0 %v1092
    %v6849 = vpop.f32.mrf.mxu0
    %v6850 = vadd.f32 %v6837, %v6849
    %v6851 = vpop.f32.mrf.mxu0
    %6852 = vdwg.mxu0
    %6853 = vmatpush.bf16.msra.mxu0 %v4240
    %6854 = vmatpush.bf16.msra.mxu0 %v4232
    %6855 = vmatpush.bf16.msra.mxu0 %v4224
    %6856 = vmatpush.bf16.msra.mxu0 %v4216
    %6857 = vmatpush.bf16.msra.mxu0 %v4208
    %6858 = vmatpush.bf16.msra.mxu0 %v4200
    %6859 = vmatpush.bf16.msra.mxu0 %v4192
    %6860 = vmatpush.bf16.msra.mxu0 %v4184
    %6861 = vmatmul.bf16.gmra.mxu0 %v1075
    %v6862 = vpop.f32.mrf.mxu0
    %v6863 = vadd.f32 %v1060, %v6862
    %v6864 = vpop.f32.mrf.mxu0
    %6865 = vdwg.mxu0
    %6866 = vmatpush.bf16.msra.mxu0 %v4304
    %6867 = vmatpush.bf16.msra.mxu0 %v4296
    %6868 = vmatpush.bf16.msra.mxu0 %v4288
    %6869 = vmatpush.bf16.msra.mxu0 %v4280
    %6870 = vmatpush.bf16.msra.mxu0 %v4272
    %6871 = vmatpush.bf16.msra.mxu0 %v4264
    %6872 = vmatpush.bf16.msra.mxu0 %v4256
    %6873 = vmatpush.bf16.msra.mxu0 %v4248
    %6874 = vmatmul.bf16.gmra.mxu0 %v1076
    %v6875 = vpop.f32.mrf.mxu0
    %v6876 = vadd.f32 %v6863, %v6875
    %v6877 = vpop.f32.mrf.mxu0
    %6878 = vdwg.mxu0
    %6879 = vmatpush.bf16.msra.mxu0 %v4368
    %6880 = vmatpush.bf16.msra.mxu0 %v4360
    %6881 = vmatpush.bf16.msra.mxu0 %v4352
    %6882 = vmatpush.bf16.msra.mxu0 %v4344
    %6883 = vmatpush.bf16.msra.mxu0 %v4336
    %6884 = vmatpush.bf16.msra.mxu0 %v4328
    %6885 = vmatpush.bf16.msra.mxu0 %v4320
    %6886 = vmatpush.bf16.msra.mxu0 %v4312
    %6887 = vmatmul.bf16.gmra.mxu0 %v1077
    %v6888 = vpop.f32.mrf.mxu0
    %v6889 = vadd.f32 %v6876, %v6888
    %v6890 = vpop.f32.mrf.mxu0
    %6891 = vdwg.mxu0
    %6892 = vmatpush.bf16.msra.mxu0 %v4432
    %6893 = vmatpush.bf16.msra.mxu0 %v4424
    %6894 = vmatpush.bf16.msra.mxu0 %v4416
    %6895 = vmatpush.bf16.msra.mxu0 %v4408
    %6896 = vmatpush.bf16.msra.mxu0 %v4400
    %6897 = vmatpush.bf16.msra.mxu0 %v4392
    %6898 = vmatpush.bf16.msra.mxu0 %v4384
    %6899 = vmatpush.bf16.msra.mxu0 %v4376
    %6900 = vmatmul.bf16.gmra.mxu0 %v1078
    %v6901 = vpop.f32.mrf.mxu0
    %v6902 = vadd.f32 %v6889, %v6901
    %v6903 = vpop.f32.mrf.mxu0
    %6904 = vdwg.mxu0
    %6905 = vmatpush.bf16.msra.mxu0 %v4496
    %6906 = vmatpush.bf16.msra.mxu0 %v4488
    %6907 = vmatpush.bf16.msra.mxu0 %v4480
    %6908 = vmatpush.bf16.msra.mxu0 %v4472
    %6909 = vmatpush.bf16.msra.mxu0 %v4464
    %6910 = vmatpush.bf16.msra.mxu0 %v4456
    %6911 = vmatpush.bf16.msra.mxu0 %v4448
    %6912 = vmatpush.bf16.msra.mxu0 %v4440
    %6913 = vmatmul.bf16.gmra.mxu0 %v1079
    %v6914 = vpop.f32.mrf.mxu0
    %v6915 = vadd.f32 %v6902, %v6914
    %v6916 = vpop.f32.mrf.mxu0
    %6917 = vdwg.mxu0
    %6918 = vmatpush.bf16.msra.mxu0 %v4560
    %6919 = vmatpush.bf16.msra.mxu0 %v4552
    %6920 = vmatpush.bf16.msra.mxu0 %v4544
    %6921 = vmatpush.bf16.msra.mxu0 %v4536
    %6922 = vmatpush.bf16.msra.mxu0 %v4528
    %6923 = vmatpush.bf16.msra.mxu0 %v4520
    %6924 = vmatpush.bf16.msra.mxu0 %v4512
    %6925 = vmatpush.bf16.msra.mxu0 %v4504
    %6926 = vmatmul.bf16.gmra.mxu0 %v1080
    %v6927 = vpop.f32.mrf.mxu0
    %v6928 = vadd.f32 %v6915, %v6927
    %v6929 = vpop.f32.mrf.mxu0
    %6930 = vdwg.mxu0
    %6931 = vmatpush.bf16.msra.mxu0 %v4624
    %6932 = vmatpush.bf16.msra.mxu0 %v4616
    %6933 = vmatpush.bf16.msra.mxu0 %v4608
    %6934 = vmatpush.bf16.msra.mxu0 %v4600
    %6935 = vmatpush.bf16.msra.mxu0 %v4592
    %6936 = vmatpush.bf16.msra.mxu0 %v4584
    %6937 = vmatpush.bf16.msra.mxu0 %v4576
    %6938 = vmatpush.bf16.msra.mxu0 %v4568
    %6939 = vmatmul.bf16.gmra.mxu0 %v1081
    %v6940 = vpop.f32.mrf.mxu0
    %v6941 = vadd.f32 %v6928, %v6940
    %v6942 = vpop.f32.mrf.mxu0
    %6943 = vdwg.mxu0
    %6944 = vmatpush.bf16.msra.mxu0 %v4688
    %6945 = vmatpush.bf16.msra.mxu0 %v4680
    %6946 = vmatpush.bf16.msra.mxu0 %v4672
    %6947 = vmatpush.bf16.msra.mxu0 %v4664
    %6948 = vmatpush.bf16.msra.mxu0 %v4656
    %6949 = vmatpush.bf16.msra.mxu0 %v4648
    %6950 = vmatpush.bf16.msra.mxu0 %v4640
    %6951 = vmatpush.bf16.msra.mxu0 %v4632
    %6952 = vmatmul.bf16.gmra.mxu0 %v1082
    %v6953 = vpop.f32.mrf.mxu0
    %v6954 = vadd.f32 %v6941, %v6953
    %v6955 = vpop.f32.mrf.mxu0
    %6956 = vdwg.mxu0
    %6957 = vmatpush.bf16.msra.mxu0 %v4752
    %6958 = vmatpush.bf16.msra.mxu0 %v4744
    %6959 = vmatpush.bf16.msra.mxu0 %v4736
    %6960 = vmatpush.bf16.msra.mxu0 %v4728
    %6961 = vmatpush.bf16.msra.mxu0 %v4720
    %6962 = vmatpush.bf16.msra.mxu0 %v4712
    %6963 = vmatpush.bf16.msra.mxu0 %v4704
    %6964 = vmatpush.bf16.msra.mxu0 %v4696
    %6965 = vmatmul.bf16.gmra.mxu0 %v1085
    %v6966 = vpop.f32.mrf.mxu0
    %v6967 = vadd.f32 %v6954, %v6966
    %v6968 = vpop.f32.mrf.mxu0
    %6969 = vdwg.mxu0
    %6970 = vmatpush.bf16.msra.mxu0 %v4816
    %6971 = vmatpush.bf16.msra.mxu0 %v4808
    %6972 = vmatpush.bf16.msra.mxu0 %v4800
    %6973 = vmatpush.bf16.msra.mxu0 %v4792
    %6974 = vmatpush.bf16.msra.mxu0 %v4784
    %6975 = vmatpush.bf16.msra.mxu0 %v4776
    %6976 = vmatpush.bf16.msra.mxu0 %v4768
    %6977 = vmatpush.bf16.msra.mxu0 %v4760
    %6978 = vmatmul.bf16.gmra.mxu0 %v1086
    %v6979 = vpop.f32.mrf.mxu0
    %v6980 = vadd.f32 %v6967, %v6979
    %v6981 = vpop.f32.mrf.mxu0
    %6982 = vdwg.mxu0
    %6983 = vmatpush.bf16.msra.mxu0 %v4880
    %6984 = vmatpush.bf16.msra.mxu0 %v4872
    %6985 = vmatpush.bf16.msra.mxu0 %v4864
    %6986 = vmatpush.bf16.msra.mxu0 %v4856
    %6987 = vmatpush.bf16.msra.mxu0 %v4848
    %6988 = vmatpush.bf16.msra.mxu0 %v4840
    %6989 = vmatpush.bf16.msra.mxu0 %v4832
    %6990 = vmatpush.bf16.msra.mxu0 %v4824
    %6991 = vmatmul.bf16.gmra.mxu0 %v1087
    %v6992 = vpop.f32.mrf.mxu0
    %v6993 = vadd.f32 %v6980, %v6992
    %v6994 = vpop.f32.mrf.mxu0
    %6995 = vdwg.mxu0
    %6996 = vmatpush.bf16.msra.mxu0 %v4944
    %6997 = vmatpush.bf16.msra.mxu0 %v4936
    %6998 = vmatpush.bf16.msra.mxu0 %v4928
    %6999 = vmatpush.bf16.msra.mxu0 %v4920
    %7000 = vmatpush.bf16.msra.mxu0 %v4912
    %7001 = vmatpush.bf16.msra.mxu0 %v4904
    %7002 = vmatpush.bf16.msra.mxu0 %v4896
    %7003 = vmatpush.bf16.msra.mxu0 %v4888
    %7004 = vmatmul.bf16.gmra.mxu0 %v1088
    %v7005 = vpop.f32.mrf.mxu0
    %v7006 = vadd.f32 %v6993, %v7005
    %v7007 = vpop.f32.mrf.mxu0
    %7008 = vdwg.mxu0
    %7009 = vmatpush.bf16.msra.mxu0 %v5008
    %7010 = vmatpush.bf16.msra.mxu0 %v5000
    %7011 = vmatpush.bf16.msra.mxu0 %v4992
    %7012 = vmatpush.bf16.msra.mxu0 %v4984
    %7013 = vmatpush.bf16.msra.mxu0 %v4976
    %7014 = vmatpush.bf16.msra.mxu0 %v4968
    %7015 = vmatpush.bf16.msra.mxu0 %v4960
    %7016 = vmatpush.bf16.msra.mxu0 %v4952
    %7017 = vmatmul.bf16.gmra.mxu0 %v1089
    %v7018 = vpop.f32.mrf.mxu0
    %v7019 = vadd.f32 %v7006, %v7018
    %v7020 = vpop.f32.mrf.mxu0
    %7021 = vdwg.mxu0
    %7022 = vmatpush.bf16.msra.mxu0 %v5072
    %7023 = vmatpush.bf16.msra.mxu0 %v5064
    %7024 = vmatpush.bf16.msra.mxu0 %v5056
    %7025 = vmatpush.bf16.msra.mxu0 %v5048
    %7026 = vmatpush.bf16.msra.mxu0 %v5040
    %7027 = vmatpush.bf16.msra.mxu0 %v5032
    %7028 = vmatpush.bf16.msra.mxu0 %v5024
    %7029 = vmatpush.bf16.msra.mxu0 %v5016
    %7030 = vmatmul.bf16.gmra.mxu0 %v1090
    %v7031 = vpop.f32.mrf.mxu0
    %v7032 = vadd.f32 %v7019, %v7031
    %v7033 = vpop.f32.mrf.mxu0
    %7034 = vdwg.mxu0
    %7035 = vmatpush.bf16.msra.mxu0 %v5136
    %7036 = vmatpush.bf16.msra.mxu0 %v5128
    %7037 = vmatpush.bf16.msra.mxu0 %v5120
    %7038 = vmatpush.bf16.msra.mxu0 %v5112
    %7039 = vmatpush.bf16.msra.mxu0 %v5104
    %7040 = vmatpush.bf16.msra.mxu0 %v5096
    %7041 = vmatpush.bf16.msra.mxu0 %v5088
    %7042 = vmatpush.bf16.msra.mxu0 %v5080
    %7043 = vmatmul.bf16.gmra.mxu0 %v1091
    %v7044 = vpop.f32.mrf.mxu0
    %v7045 = vadd.f32 %v7032, %v7044
    %v7046 = vpop.f32.mrf.mxu0
    %7047 = vdwg.mxu0
    %7048 = vmatpush.bf16.msra.mxu0 %v5200
    %7049 = vmatpush.bf16.msra.mxu0 %v5192
    %7050 = vmatpush.bf16.msra.mxu0 %v5184
    %7051 = vmatpush.bf16.msra.mxu0 %v5176
    %7052 = vmatpush.bf16.msra.mxu0 %v5168
    %7053 = vmatpush.bf16.msra.mxu0 %v5160
    %7054 = vmatpush.bf16.msra.mxu0 %v5152
    %7055 = vmatpush.bf16.msra.mxu0 %v5144
    %7056 = vmatmul.bf16.gmra.mxu0 %v1092
    %v7057 = vpop.f32.mrf.mxu0
    %v7058 = vadd.f32 %v7045, %v7057
    %v7059 = vpop.f32.mrf.mxu0
    %7060 = vdwg.mxu0
    %7061 = vmatpush.bf16.msra.mxu0 %v4241
    %7062 = vmatpush.bf16.msra.mxu0 %v4233
    %7063 = vmatpush.bf16.msra.mxu0 %v4225
    %7064 = vmatpush.bf16.msra.mxu0 %v4217
    %7065 = vmatpush.bf16.msra.mxu0 %v4209
    %7066 = vmatpush.bf16.msra.mxu0 %v4201
    %7067 = vmatpush.bf16.msra.mxu0 %v4193
    %7068 = vmatpush.bf16.msra.mxu0 %v4185
    %7069 = vmatmul.bf16.gmra.mxu0 %v1075
    %v7070 = vpop.f32.mrf.mxu0
    %v7071 = vadd.f32 %v1061, %v7070
    %v7072 = vpop.f32.mrf.mxu0
    %7073 = vdwg.mxu0
    %7074 = vmatpush.bf16.msra.mxu0 %v4305
    %7075 = vmatpush.bf16.msra.mxu0 %v4297
    %7076 = vmatpush.bf16.msra.mxu0 %v4289
    %7077 = vmatpush.bf16.msra.mxu0 %v4281
    %7078 = vmatpush.bf16.msra.mxu0 %v4273
    %7079 = vmatpush.bf16.msra.mxu0 %v4265
    %7080 = vmatpush.bf16.msra.mxu0 %v4257
    %7081 = vmatpush.bf16.msra.mxu0 %v4249
    %7082 = vmatmul.bf16.gmra.mxu0 %v1076
    %v7083 = vpop.f32.mrf.mxu0
    %v7084 = vadd.f32 %v7071, %v7083
    %v7085 = vpop.f32.mrf.mxu0
    %7086 = vdwg.mxu0
    %7087 = vmatpush.bf16.msra.mxu0 %v4369
    %7088 = vmatpush.bf16.msra.mxu0 %v4361
    %7089 = vmatpush.bf16.msra.mxu0 %v4353
    %7090 = vmatpush.bf16.msra.mxu0 %v4345
    %7091 = vmatpush.bf16.msra.mxu0 %v4337
    %7092 = vmatpush.bf16.msra.mxu0 %v4329
    %7093 = vmatpush.bf16.msra.mxu0 %v4321
    %7094 = vmatpush.bf16.msra.mxu0 %v4313
    %7095 = vmatmul.bf16.gmra.mxu0 %v1077
    %v7096 = vpop.f32.mrf.mxu0
    %v7097 = vadd.f32 %v7084, %v7096
    %v7098 = vpop.f32.mrf.mxu0
    %7099 = vdwg.mxu0
    %7100 = vmatpush.bf16.msra.mxu0 %v4433
    %7101 = vmatpush.bf16.msra.mxu0 %v4425
    %7102 = vmatpush.bf16.msra.mxu0 %v4417
    %7103 = vmatpush.bf16.msra.mxu0 %v4409
    %7104 = vmatpush.bf16.msra.mxu0 %v4401
    %7105 = vmatpush.bf16.msra.mxu0 %v4393
    %7106 = vmatpush.bf16.msra.mxu0 %v4385
    %7107 = vmatpush.bf16.msra.mxu0 %v4377
    %7108 = vmatmul.bf16.gmra.mxu0 %v1078
    %v7109 = vpop.f32.mrf.mxu0
    %v7110 = vadd.f32 %v7097, %v7109
    %v7111 = vpop.f32.mrf.mxu0
    %7112 = vdwg.mxu0
    %7113 = vmatpush.bf16.msra.mxu0 %v4497
    %7114 = vmatpush.bf16.msra.mxu0 %v4489
    %7115 = vmatpush.bf16.msra.mxu0 %v4481
    %7116 = vmatpush.bf16.msra.mxu0 %v4473
    %7117 = vmatpush.bf16.msra.mxu0 %v4465
    %7118 = vmatpush.bf16.msra.mxu0 %v4457
    %7119 = vmatpush.bf16.msra.mxu0 %v4449
    %7120 = vmatpush.bf16.msra.mxu0 %v4441
    %7121 = vmatmul.bf16.gmra.mxu0 %v1079
    %v7122 = vpop.f32.mrf.mxu0
    %v7123 = vadd.f32 %v7110, %v7122
    %v7124 = vpop.f32.mrf.mxu0
    %7125 = vdwg.mxu0
    %7126 = vmatpush.bf16.msra.mxu0 %v4561
    %7127 = vmatpush.bf16.msra.mxu0 %v4553
    %7128 = vmatpush.bf16.msra.mxu0 %v4545
    %7129 = vmatpush.bf16.msra.mxu0 %v4537
    %7130 = vmatpush.bf16.msra.mxu0 %v4529
    %7131 = vmatpush.bf16.msra.mxu0 %v4521
    %7132 = vmatpush.bf16.msra.mxu0 %v4513
    %7133 = vmatpush.bf16.msra.mxu0 %v4505
    %7134 = vmatmul.bf16.gmra.mxu0 %v1080
    %v7135 = vpop.f32.mrf.mxu0
    %v7136 = vadd.f32 %v7123, %v7135
    %v7137 = vpop.f32.mrf.mxu0
    %7138 = vdwg.mxu0
    %7139 = vmatpush.bf16.msra.mxu0 %v4625
    %7140 = vmatpush.bf16.msra.mxu0 %v4617
    %7141 = vmatpush.bf16.msra.mxu0 %v4609
    %7142 = vmatpush.bf16.msra.mxu0 %v4601
    %7143 = vmatpush.bf16.msra.mxu0 %v4593
    %7144 = vmatpush.bf16.msra.mxu0 %v4585
    %7145 = vmatpush.bf16.msra.mxu0 %v4577
    %7146 = vmatpush.bf16.msra.mxu0 %v4569
    %7147 = vmatmul.bf16.gmra.mxu0 %v1081
    %v7148 = vpop.f32.mrf.mxu0
    %v7149 = vadd.f32 %v7136, %v7148
    %v7150 = vpop.f32.mrf.mxu0
    %7151 = vdwg.mxu0
    %7152 = vmatpush.bf16.msra.mxu0 %v4689
    %7153 = vmatpush.bf16.msra.mxu0 %v4681
    %7154 = vmatpush.bf16.msra.mxu0 %v4673
    %7155 = vmatpush.bf16.msra.mxu0 %v4665
    %7156 = vmatpush.bf16.msra.mxu0 %v4657
    %7157 = vmatpush.bf16.msra.mxu0 %v4649
    %7158 = vmatpush.bf16.msra.mxu0 %v4641
    %7159 = vmatpush.bf16.msra.mxu0 %v4633
    %7160 = vmatmul.bf16.gmra.mxu0 %v1082
    %v7161 = vpop.f32.mrf.mxu0
    %v7162 = vadd.f32 %v7149, %v7161
    %v7163 = vpop.f32.mrf.mxu0
    %7164 = vdwg.mxu0
    %7165 = vmatpush.bf16.msra.mxu0 %v4753
    %7166 = vmatpush.bf16.msra.mxu0 %v4745
    %7167 = vmatpush.bf16.msra.mxu0 %v4737
    %7168 = vmatpush.bf16.msra.mxu0 %v4729
    %7169 = vmatpush.bf16.msra.mxu0 %v4721
    %7170 = vmatpush.bf16.msra.mxu0 %v4713
    %7171 = vmatpush.bf16.msra.mxu0 %v4705
    %7172 = vmatpush.bf16.msra.mxu0 %v4697
    %7173 = vmatmul.bf16.gmra.mxu0 %v1085
    %v7174 = vpop.f32.mrf.mxu0
    %v7175 = vadd.f32 %v7162, %v7174
    %v7176 = vpop.f32.mrf.mxu0
    %7177 = vdwg.mxu0
    %7178 = vmatpush.bf16.msra.mxu0 %v4817
    %7179 = vmatpush.bf16.msra.mxu0 %v4809
    %7180 = vmatpush.bf16.msra.mxu0 %v4801
    %7181 = vmatpush.bf16.msra.mxu0 %v4793
    %7182 = vmatpush.bf16.msra.mxu0 %v4785
    %7183 = vmatpush.bf16.msra.mxu0 %v4777
    %7184 = vmatpush.bf16.msra.mxu0 %v4769
    %7185 = vmatpush.bf16.msra.mxu0 %v4761
    %7186 = vmatmul.bf16.gmra.mxu0 %v1086
    %v7187 = vpop.f32.mrf.mxu0
    %v7188 = vadd.f32 %v7175, %v7187
    %v7189 = vpop.f32.mrf.mxu0
    %7190 = vdwg.mxu0
    %7191 = vmatpush.bf16.msra.mxu0 %v4881
    %7192 = vmatpush.bf16.msra.mxu0 %v4873
    %7193 = vmatpush.bf16.msra.mxu0 %v4865
    %7194 = vmatpush.bf16.msra.mxu0 %v4857
    %7195 = vmatpush.bf16.msra.mxu0 %v4849
    %7196 = vmatpush.bf16.msra.mxu0 %v4841
    %7197 = vmatpush.bf16.msra.mxu0 %v4833
    %7198 = vmatpush.bf16.msra.mxu0 %v4825
    %7199 = vmatmul.bf16.gmra.mxu0 %v1087
    %v7200 = vpop.f32.mrf.mxu0
    %v7201 = vadd.f32 %v7188, %v7200
    %v7202 = vpop.f32.mrf.mxu0
    %7203 = vdwg.mxu0
    %7204 = vmatpush.bf16.msra.mxu0 %v4945
    %7205 = vmatpush.bf16.msra.mxu0 %v4937
    %7206 = vmatpush.bf16.msra.mxu0 %v4929
    %7207 = vmatpush.bf16.msra.mxu0 %v4921
    %7208 = vmatpush.bf16.msra.mxu0 %v4913
    %7209 = vmatpush.bf16.msra.mxu0 %v4905
    %7210 = vmatpush.bf16.msra.mxu0 %v4897
    %7211 = vmatpush.bf16.msra.mxu0 %v4889
    %7212 = vmatmul.bf16.gmra.mxu0 %v1088
    %v7213 = vpop.f32.mrf.mxu0
    %v7214 = vadd.f32 %v7201, %v7213
    %v7215 = vpop.f32.mrf.mxu0
    %7216 = vdwg.mxu0
    %7217 = vmatpush.bf16.msra.mxu0 %v5009
    %7218 = vmatpush.bf16.msra.mxu0 %v5001
    %7219 = vmatpush.bf16.msra.mxu0 %v4993
    %7220 = vmatpush.bf16.msra.mxu0 %v4985
    %7221 = vmatpush.bf16.msra.mxu0 %v4977
    %7222 = vmatpush.bf16.msra.mxu0 %v4969
    %7223 = vmatpush.bf16.msra.mxu0 %v4961
    %7224 = vmatpush.bf16.msra.mxu0 %v4953
    %7225 = vmatmul.bf16.gmra.mxu0 %v1089
    %v7226 = vpop.f32.mrf.mxu0
    %v7227 = vadd.f32 %v7214, %v7226
    %v7228 = vpop.f32.mrf.mxu0
    %7229 = vdwg.mxu0
    %7230 = vmatpush.bf16.msra.mxu0 %v5073
    %7231 = vmatpush.bf16.msra.mxu0 %v5065
    %7232 = vmatpush.bf16.msra.mxu0 %v5057
    %7233 = vmatpush.bf16.msra.mxu0 %v5049
    %7234 = vmatpush.bf16.msra.mxu0 %v5041
    %7235 = vmatpush.bf16.msra.mxu0 %v5033
    %7236 = vmatpush.bf16.msra.mxu0 %v5025
    %7237 = vmatpush.bf16.msra.mxu0 %v5017
    %7238 = vmatmul.bf16.gmra.mxu0 %v1090
    %v7239 = vpop.f32.mrf.mxu0
    %v7240 = vadd.f32 %v7227, %v7239
    %v7241 = vpop.f32.mrf.mxu0
    %7242 = vdwg.mxu0
    %7243 = vmatpush.bf16.msra.mxu0 %v5137
    %7244 = vmatpush.bf16.msra.mxu0 %v5129
    %7245 = vmatpush.bf16.msra.mxu0 %v5121
    %7246 = vmatpush.bf16.msra.mxu0 %v5113
    %7247 = vmatpush.bf16.msra.mxu0 %v5105
    %7248 = vmatpush.bf16.msra.mxu0 %v5097
    %7249 = vmatpush.bf16.msra.mxu0 %v5089
    %7250 = vmatpush.bf16.msra.mxu0 %v5081
    %7251 = vmatmul.bf16.gmra.mxu0 %v1091
    %v7252 = vpop.f32.mrf.mxu0
    %v7253 = vadd.f32 %v7240, %v7252
    %v7254 = vpop.f32.mrf.mxu0
    %7255 = vdwg.mxu0
    %7256 = vmatpush.bf16.msra.mxu0 %v5201
    %7257 = vmatpush.bf16.msra.mxu0 %v5193
    %7258 = vmatpush.bf16.msra.mxu0 %v5185
    %7259 = vmatpush.bf16.msra.mxu0 %v5177
    %7260 = vmatpush.bf16.msra.mxu0 %v5169
    %7261 = vmatpush.bf16.msra.mxu0 %v5161
    %7262 = vmatpush.bf16.msra.mxu0 %v5153
    %7263 = vmatpush.bf16.msra.mxu0 %v5145
    %7264 = vmatmul.bf16.gmra.mxu0 %v1092
    %v7265 = vpop.f32.mrf.mxu0
    %v7266 = vadd.f32 %v7253, %v7265
    %v7267 = vpop.f32.mrf.mxu0
    %7268 = vdwg.mxu0
    %7269 = vmatpush.bf16.msra.mxu0 %v4242
    %7270 = vmatpush.bf16.msra.mxu0 %v4234
    %7271 = vmatpush.bf16.msra.mxu0 %v4226
    %7272 = vmatpush.bf16.msra.mxu0 %v4218
    %7273 = vmatpush.bf16.msra.mxu0 %v4210
    %7274 = vmatpush.bf16.msra.mxu0 %v4202
    %7275 = vmatpush.bf16.msra.mxu0 %v4194
    %7276 = vmatpush.bf16.msra.mxu0 %v4186
    %7277 = vmatmul.bf16.gmra.mxu0 %v1075
    %v7278 = vpop.f32.mrf.mxu0
    %v7279 = vadd.f32 %v1062, %v7278
    %v7280 = vpop.f32.mrf.mxu0
    %7281 = vdwg.mxu0
    %7282 = vmatpush.bf16.msra.mxu0 %v4306
    %7283 = vmatpush.bf16.msra.mxu0 %v4298
    %7284 = vmatpush.bf16.msra.mxu0 %v4290
    %7285 = vmatpush.bf16.msra.mxu0 %v4282
    %7286 = vmatpush.bf16.msra.mxu0 %v4274
    %7287 = vmatpush.bf16.msra.mxu0 %v4266
    %7288 = vmatpush.bf16.msra.mxu0 %v4258
    %7289 = vmatpush.bf16.msra.mxu0 %v4250
    %7290 = vmatmul.bf16.gmra.mxu0 %v1076
    %v7291 = vpop.f32.mrf.mxu0
    %v7292 = vadd.f32 %v7279, %v7291
    %v7293 = vpop.f32.mrf.mxu0
    %7294 = vdwg.mxu0
    %7295 = vmatpush.bf16.msra.mxu0 %v4370
    %7296 = vmatpush.bf16.msra.mxu0 %v4362
    %7297 = vmatpush.bf16.msra.mxu0 %v4354
    %7298 = vmatpush.bf16.msra.mxu0 %v4346
    %7299 = vmatpush.bf16.msra.mxu0 %v4338
    %7300 = vmatpush.bf16.msra.mxu0 %v4330
    %7301 = vmatpush.bf16.msra.mxu0 %v4322
    %7302 = vmatpush.bf16.msra.mxu0 %v4314
    %7303 = vmatmul.bf16.gmra.mxu0 %v1077
    %v7304 = vpop.f32.mrf.mxu0
    %v7305 = vadd.f32 %v7292, %v7304
    %v7306 = vpop.f32.mrf.mxu0
    %7307 = vdwg.mxu0
    %7308 = vmatpush.bf16.msra.mxu0 %v4434
    %7309 = vmatpush.bf16.msra.mxu0 %v4426
    %7310 = vmatpush.bf16.msra.mxu0 %v4418
    %7311 = vmatpush.bf16.msra.mxu0 %v4410
    %7312 = vmatpush.bf16.msra.mxu0 %v4402
    %7313 = vmatpush.bf16.msra.mxu0 %v4394
    %7314 = vmatpush.bf16.msra.mxu0 %v4386
    %7315 = vmatpush.bf16.msra.mxu0 %v4378
    %7316 = vmatmul.bf16.gmra.mxu0 %v1078
    %v7317 = vpop.f32.mrf.mxu0
    %v7318 = vadd.f32 %v7305, %v7317
    %v7319 = vpop.f32.mrf.mxu0
    %7320 = vdwg.mxu0
    %7321 = vmatpush.bf16.msra.mxu0 %v4498
    %7322 = vmatpush.bf16.msra.mxu0 %v4490
    %7323 = vmatpush.bf16.msra.mxu0 %v4482
    %7324 = vmatpush.bf16.msra.mxu0 %v4474
    %7325 = vmatpush.bf16.msra.mxu0 %v4466
    %7326 = vmatpush.bf16.msra.mxu0 %v4458
    %7327 = vmatpush.bf16.msra.mxu0 %v4450
    %7328 = vmatpush.bf16.msra.mxu0 %v4442
    %7329 = vmatmul.bf16.gmra.mxu0 %v1079
    %v7330 = vpop.f32.mrf.mxu0
    %v7331 = vadd.f32 %v7318, %v7330
    %v7332 = vpop.f32.mrf.mxu0
    %7333 = vdwg.mxu0
    %7334 = vmatpush.bf16.msra.mxu0 %v4562
    %7335 = vmatpush.bf16.msra.mxu0 %v4554
    %7336 = vmatpush.bf16.msra.mxu0 %v4546
    %7337 = vmatpush.bf16.msra.mxu0 %v4538
    %7338 = vmatpush.bf16.msra.mxu0 %v4530
    %7339 = vmatpush.bf16.msra.mxu0 %v4522
    %7340 = vmatpush.bf16.msra.mxu0 %v4514
    %7341 = vmatpush.bf16.msra.mxu0 %v4506
    %7342 = vmatmul.bf16.gmra.mxu0 %v1080
    %v7343 = vpop.f32.mrf.mxu0
    %v7344 = vadd.f32 %v7331, %v7343
    %v7345 = vpop.f32.mrf.mxu0
    %7346 = vdwg.mxu0
    %7347 = vmatpush.bf16.msra.mxu0 %v4626
    %7348 = vmatpush.bf16.msra.mxu0 %v4618
    %7349 = vmatpush.bf16.msra.mxu0 %v4610
    %7350 = vmatpush.bf16.msra.mxu0 %v4602
    %7351 = vmatpush.bf16.msra.mxu0 %v4594
    %7352 = vmatpush.bf16.msra.mxu0 %v4586
    %7353 = vmatpush.bf16.msra.mxu0 %v4578
    %7354 = vmatpush.bf16.msra.mxu0 %v4570
    %7355 = vmatmul.bf16.gmra.mxu0 %v1081
    %v7356 = vpop.f32.mrf.mxu0
    %v7357 = vadd.f32 %v7344, %v7356
    %v7358 = vpop.f32.mrf.mxu0
    %7359 = vdwg.mxu0
    %7360 = vmatpush.bf16.msra.mxu0 %v4690
    %7361 = vmatpush.bf16.msra.mxu0 %v4682
    %7362 = vmatpush.bf16.msra.mxu0 %v4674
    %7363 = vmatpush.bf16.msra.mxu0 %v4666
    %7364 = vmatpush.bf16.msra.mxu0 %v4658
    %7365 = vmatpush.bf16.msra.mxu0 %v4650
    %7366 = vmatpush.bf16.msra.mxu0 %v4642
    %7367 = vmatpush.bf16.msra.mxu0 %v4634
    %7368 = vmatmul.bf16.gmra.mxu0 %v1082
    %v7369 = vpop.f32.mrf.mxu0
    %v7370 = vadd.f32 %v7357, %v7369
    %v7371 = vpop.f32.mrf.mxu0
    %7372 = vdwg.mxu0
    %7373 = vmatpush.bf16.msra.mxu0 %v4754
    %7374 = vmatpush.bf16.msra.mxu0 %v4746
    %7375 = vmatpush.bf16.msra.mxu0 %v4738
    %7376 = vmatpush.bf16.msra.mxu0 %v4730
    %7377 = vmatpush.bf16.msra.mxu0 %v4722
    %7378 = vmatpush.bf16.msra.mxu0 %v4714
    %7379 = vmatpush.bf16.msra.mxu0 %v4706
    %7380 = vmatpush.bf16.msra.mxu0 %v4698
    %7381 = vmatmul.bf16.gmra.mxu0 %v1085
    %v7382 = vpop.f32.mrf.mxu0
    %v7383 = vadd.f32 %v7370, %v7382
    %v7384 = vpop.f32.mrf.mxu0
    %7385 = vdwg.mxu0
    %7386 = vmatpush.bf16.msra.mxu0 %v4818
    %7387 = vmatpush.bf16.msra.mxu0 %v4810
    %7388 = vmatpush.bf16.msra.mxu0 %v4802
    %7389 = vmatpush.bf16.msra.mxu0 %v4794
    %7390 = vmatpush.bf16.msra.mxu0 %v4786
    %7391 = vmatpush.bf16.msra.mxu0 %v4778
    %7392 = vmatpush.bf16.msra.mxu0 %v4770
    %7393 = vmatpush.bf16.msra.mxu0 %v4762
    %7394 = vmatmul.bf16.gmra.mxu0 %v1086
    %v7395 = vpop.f32.mrf.mxu0
    %v7396 = vadd.f32 %v7383, %v7395
    %v7397 = vpop.f32.mrf.mxu0
    %7398 = vdwg.mxu0
    %7399 = vmatpush.bf16.msra.mxu0 %v4882
    %7400 = vmatpush.bf16.msra.mxu0 %v4874
    %7401 = vmatpush.bf16.msra.mxu0 %v4866
    %7402 = vmatpush.bf16.msra.mxu0 %v4858
    %7403 = vmatpush.bf16.msra.mxu0 %v4850
    %7404 = vmatpush.bf16.msra.mxu0 %v4842
    %7405 = vmatpush.bf16.msra.mxu0 %v4834
    %7406 = vmatpush.bf16.msra.mxu0 %v4826
    %7407 = vmatmul.bf16.gmra.mxu0 %v1087
    %v7408 = vpop.f32.mrf.mxu0
    %v7409 = vadd.f32 %v7396, %v7408
    %v7410 = vpop.f32.mrf.mxu0
    %7411 = vdwg.mxu0
    %7412 = vmatpush.bf16.msra.mxu0 %v4946
    %7413 = vmatpush.bf16.msra.mxu0 %v4938
    %7414 = vmatpush.bf16.msra.mxu0 %v4930
    %7415 = vmatpush.bf16.msra.mxu0 %v4922
    %7416 = vmatpush.bf16.msra.mxu0 %v4914
    %7417 = vmatpush.bf16.msra.mxu0 %v4906
    %7418 = vmatpush.bf16.msra.mxu0 %v4898
    %7419 = vmatpush.bf16.msra.mxu0 %v4890
    %7420 = vmatmul.bf16.gmra.mxu0 %v1088
    %v7421 = vpop.f32.mrf.mxu0
    %v7422 = vadd.f32 %v7409, %v7421
    %v7423 = vpop.f32.mrf.mxu0
    %7424 = vdwg.mxu0
    %7425 = vmatpush.bf16.msra.mxu0 %v5010
    %7426 = vmatpush.bf16.msra.mxu0 %v5002
    %7427 = vmatpush.bf16.msra.mxu0 %v4994
    %7428 = vmatpush.bf16.msra.mxu0 %v4986
    %7429 = vmatpush.bf16.msra.mxu0 %v4978
    %7430 = vmatpush.bf16.msra.mxu0 %v4970
    %7431 = vmatpush.bf16.msra.mxu0 %v4962
    %7432 = vmatpush.bf16.msra.mxu0 %v4954
    %7433 = vmatmul.bf16.gmra.mxu0 %v1089
    %v7434 = vpop.f32.mrf.mxu0
    %v7435 = vadd.f32 %v7422, %v7434
    %v7436 = vpop.f32.mrf.mxu0
    %7437 = vdwg.mxu0
    %7438 = vmatpush.bf16.msra.mxu0 %v5074
    %7439 = vmatpush.bf16.msra.mxu0 %v5066
    %7440 = vmatpush.bf16.msra.mxu0 %v5058
    %7441 = vmatpush.bf16.msra.mxu0 %v5050
    %7442 = vmatpush.bf16.msra.mxu0 %v5042
    %7443 = vmatpush.bf16.msra.mxu0 %v5034
    %7444 = vmatpush.bf16.msra.mxu0 %v5026
    %7445 = vmatpush.bf16.msra.mxu0 %v5018
    %7446 = vmatmul.bf16.gmra.mxu0 %v1090
    %v7447 = vpop.f32.mrf.mxu0
    %v7448 = vadd.f32 %v7435, %v7447
    %v7449 = vpop.f32.mrf.mxu0
    %7450 = vdwg.mxu0
    %7451 = vmatpush.bf16.msra.mxu0 %v5138
    %7452 = vmatpush.bf16.msra.mxu0 %v5130
    %7453 = vmatpush.bf16.msra.mxu0 %v5122
    %7454 = vmatpush.bf16.msra.mxu0 %v5114
    %7455 = vmatpush.bf16.msra.mxu0 %v5106
    %7456 = vmatpush.bf16.msra.mxu0 %v5098
    %7457 = vmatpush.bf16.msra.mxu0 %v5090
    %7458 = vmatpush.bf16.msra.mxu0 %v5082
    %7459 = vmatmul.bf16.gmra.mxu0 %v1091
    %v7460 = vpop.f32.mrf.mxu0
    %v7461 = vadd.f32 %v7448, %v7460
    %v7462 = vpop.f32.mrf.mxu0
    %7463 = vdwg.mxu0
    %7464 = vmatpush.bf16.msra.mxu0 %v5202
    %7465 = vmatpush.bf16.msra.mxu0 %v5194
    %7466 = vmatpush.bf16.msra.mxu0 %v5186
    %7467 = vmatpush.bf16.msra.mxu0 %v5178
    %7468 = vmatpush.bf16.msra.mxu0 %v5170
    %7469 = vmatpush.bf16.msra.mxu0 %v5162
    %7470 = vmatpush.bf16.msra.mxu0 %v5154
    %7471 = vmatpush.bf16.msra.mxu0 %v5146
    %7472 = vmatmul.bf16.gmra.mxu0 %v1092
    %v7473 = vpop.f32.mrf.mxu0
    %v7474 = vadd.f32 %v7461, %v7473
    %v7475 = vpop.f32.mrf.mxu0
    %7476 = vdwg.mxu0
    %7477 = vmatpush.bf16.msra.mxu0 %v4243
    %7478 = vmatpush.bf16.msra.mxu0 %v4235
    %7479 = vmatpush.bf16.msra.mxu0 %v4227
    %7480 = vmatpush.bf16.msra.mxu0 %v4219
    %7481 = vmatpush.bf16.msra.mxu0 %v4211
    %7482 = vmatpush.bf16.msra.mxu0 %v4203
    %7483 = vmatpush.bf16.msra.mxu0 %v4195
    %7484 = vmatpush.bf16.msra.mxu0 %v4187
    %7485 = vmatmul.bf16.gmra.mxu0 %v1075
    %v7486 = vpop.f32.mrf.mxu0
    %v7487 = vadd.f32 %v1063, %v7486
    %v7488 = vpop.f32.mrf.mxu0
    %7489 = vdwg.mxu0
    %7490 = vmatpush.bf16.msra.mxu0 %v4307
    %7491 = vmatpush.bf16.msra.mxu0 %v4299
    %7492 = vmatpush.bf16.msra.mxu0 %v4291
    %7493 = vmatpush.bf16.msra.mxu0 %v4283
    %7494 = vmatpush.bf16.msra.mxu0 %v4275
    %7495 = vmatpush.bf16.msra.mxu0 %v4267
    %7496 = vmatpush.bf16.msra.mxu0 %v4259
    %7497 = vmatpush.bf16.msra.mxu0 %v4251
    %7498 = vmatmul.bf16.gmra.mxu0 %v1076
    %v7499 = vpop.f32.mrf.mxu0
    %v7500 = vadd.f32 %v7487, %v7499
    %v7501 = vpop.f32.mrf.mxu0
    %7502 = vdwg.mxu0
    %7503 = vmatpush.bf16.msra.mxu0 %v4371
    %7504 = vmatpush.bf16.msra.mxu0 %v4363
    %7505 = vmatpush.bf16.msra.mxu0 %v4355
    %7506 = vmatpush.bf16.msra.mxu0 %v4347
    %7507 = vmatpush.bf16.msra.mxu0 %v4339
    %7508 = vmatpush.bf16.msra.mxu0 %v4331
    %7509 = vmatpush.bf16.msra.mxu0 %v4323
    %7510 = vmatpush.bf16.msra.mxu0 %v4315
    %7511 = vmatmul.bf16.gmra.mxu0 %v1077
    %v7512 = vpop.f32.mrf.mxu0
    %v7513 = vadd.f32 %v7500, %v7512
    %v7514 = vpop.f32.mrf.mxu0
    %7515 = vdwg.mxu0
    %7516 = vmatpush.bf16.msra.mxu0 %v4435
    %7517 = vmatpush.bf16.msra.mxu0 %v4427
    %7518 = vmatpush.bf16.msra.mxu0 %v4419
    %7519 = vmatpush.bf16.msra.mxu0 %v4411
    %7520 = vmatpush.bf16.msra.mxu0 %v4403
    %7521 = vmatpush.bf16.msra.mxu0 %v4395
    %7522 = vmatpush.bf16.msra.mxu0 %v4387
    %7523 = vmatpush.bf16.msra.mxu0 %v4379
    %7524 = vmatmul.bf16.gmra.mxu0 %v1078
    %v7525 = vpop.f32.mrf.mxu0
    %v7526 = vadd.f32 %v7513, %v7525
    %v7527 = vpop.f32.mrf.mxu0
    %7528 = vdwg.mxu0
    %7529 = vmatpush.bf16.msra.mxu0 %v4499
    %7530 = vmatpush.bf16.msra.mxu0 %v4491
    %7531 = vmatpush.bf16.msra.mxu0 %v4483
    %7532 = vmatpush.bf16.msra.mxu0 %v4475
    %7533 = vmatpush.bf16.msra.mxu0 %v4467
    %7534 = vmatpush.bf16.msra.mxu0 %v4459
    %7535 = vmatpush.bf16.msra.mxu0 %v4451
    %7536 = vmatpush.bf16.msra.mxu0 %v4443
    %7537 = vmatmul.bf16.gmra.mxu0 %v1079
    %v7538 = vpop.f32.mrf.mxu0
    %v7539 = vadd.f32 %v7526, %v7538
    %v7540 = vpop.f32.mrf.mxu0
    %7541 = vdwg.mxu0
    %7542 = vmatpush.bf16.msra.mxu0 %v4563
    %7543 = vmatpush.bf16.msra.mxu0 %v4555
    %7544 = vmatpush.bf16.msra.mxu0 %v4547
    %7545 = vmatpush.bf16.msra.mxu0 %v4539
    %7546 = vmatpush.bf16.msra.mxu0 %v4531
    %7547 = vmatpush.bf16.msra.mxu0 %v4523
    %7548 = vmatpush.bf16.msra.mxu0 %v4515
    %7549 = vmatpush.bf16.msra.mxu0 %v4507
    %7550 = vmatmul.bf16.gmra.mxu0 %v1080
    %v7551 = vpop.f32.mrf.mxu0
    %v7552 = vadd.f32 %v7539, %v7551
    %v7553 = vpop.f32.mrf.mxu0
    %7554 = vdwg.mxu0
    %7555 = vmatpush.bf16.msra.mxu0 %v4627
    %7556 = vmatpush.bf16.msra.mxu0 %v4619
    %7557 = vmatpush.bf16.msra.mxu0 %v4611
    %7558 = vmatpush.bf16.msra.mxu0 %v4603
    %7559 = vmatpush.bf16.msra.mxu0 %v4595
    %7560 = vmatpush.bf16.msra.mxu0 %v4587
    %7561 = vmatpush.bf16.msra.mxu0 %v4579
    %7562 = vmatpush.bf16.msra.mxu0 %v4571
    %7563 = vmatmul.bf16.gmra.mxu0 %v1081
    %v7564 = vpop.f32.mrf.mxu0
    %v7565 = vadd.f32 %v7552, %v7564
    %v7566 = vpop.f32.mrf.mxu0
    %7567 = vdwg.mxu0
    %7568 = vmatpush.bf16.msra.mxu0 %v4691
    %7569 = vmatpush.bf16.msra.mxu0 %v4683
    %7570 = vmatpush.bf16.msra.mxu0 %v4675
    %7571 = vmatpush.bf16.msra.mxu0 %v4667
    %7572 = vmatpush.bf16.msra.mxu0 %v4659
    %7573 = vmatpush.bf16.msra.mxu0 %v4651
    %7574 = vmatpush.bf16.msra.mxu0 %v4643
    %7575 = vmatpush.bf16.msra.mxu0 %v4635
    %7576 = vmatmul.bf16.gmra.mxu0 %v1082
    %v7577 = vpop.f32.mrf.mxu0
    %v7578 = vadd.f32 %v7565, %v7577
    %v7579 = vpop.f32.mrf.mxu0
    %7580 = vdwg.mxu0
    %7581 = vmatpush.bf16.msra.mxu0 %v4755
    %7582 = vmatpush.bf16.msra.mxu0 %v4747
    %7583 = vmatpush.bf16.msra.mxu0 %v4739
    %7584 = vmatpush.bf16.msra.mxu0 %v4731
    %7585 = vmatpush.bf16.msra.mxu0 %v4723
    %7586 = vmatpush.bf16.msra.mxu0 %v4715
    %7587 = vmatpush.bf16.msra.mxu0 %v4707
    %7588 = vmatpush.bf16.msra.mxu0 %v4699
    %7589 = vmatmul.bf16.gmra.mxu0 %v1085
    %v7590 = vpop.f32.mrf.mxu0
    %v7591 = vadd.f32 %v7578, %v7590
    %v7592 = vpop.f32.mrf.mxu0
    %7593 = vdwg.mxu0
    %7594 = vmatpush.bf16.msra.mxu0 %v4819
    %7595 = vmatpush.bf16.msra.mxu0 %v4811
    %7596 = vmatpush.bf16.msra.mxu0 %v4803
    %7597 = vmatpush.bf16.msra.mxu0 %v4795
    %7598 = vmatpush.bf16.msra.mxu0 %v4787
    %7599 = vmatpush.bf16.msra.mxu0 %v4779
    %7600 = vmatpush.bf16.msra.mxu0 %v4771
    %7601 = vmatpush.bf16.msra.mxu0 %v4763
    %7602 = vmatmul.bf16.gmra.mxu0 %v1086
    %v7603 = vpop.f32.mrf.mxu0
    %v7604 = vadd.f32 %v7591, %v7603
    %v7605 = vpop.f32.mrf.mxu0
    %7606 = vdwg.mxu0
    %7607 = vmatpush.bf16.msra.mxu0 %v4883
    %7608 = vmatpush.bf16.msra.mxu0 %v4875
    %7609 = vmatpush.bf16.msra.mxu0 %v4867
    %7610 = vmatpush.bf16.msra.mxu0 %v4859
    %7611 = vmatpush.bf16.msra.mxu0 %v4851
    %7612 = vmatpush.bf16.msra.mxu0 %v4843
    %7613 = vmatpush.bf16.msra.mxu0 %v4835
    %7614 = vmatpush.bf16.msra.mxu0 %v4827
    %7615 = vmatmul.bf16.gmra.mxu0 %v1087
    %v7616 = vpop.f32.mrf.mxu0
    %v7617 = vadd.f32 %v7604, %v7616
    %v7618 = vpop.f32.mrf.mxu0
    %7619 = vdwg.mxu0
    %7620 = vmatpush.bf16.msra.mxu0 %v4947
    %7621 = vmatpush.bf16.msra.mxu0 %v4939
    %7622 = vmatpush.bf16.msra.mxu0 %v4931
    %7623 = vmatpush.bf16.msra.mxu0 %v4923
    %7624 = vmatpush.bf16.msra.mxu0 %v4915
    %7625 = vmatpush.bf16.msra.mxu0 %v4907
    %7626 = vmatpush.bf16.msra.mxu0 %v4899
    %7627 = vmatpush.bf16.msra.mxu0 %v4891
    %7628 = vmatmul.bf16.gmra.mxu0 %v1088
    %v7629 = vpop.f32.mrf.mxu0
    %v7630 = vadd.f32 %v7617, %v7629
    %v7631 = vpop.f32.mrf.mxu0
    %7632 = vdwg.mxu0
    %7633 = vmatpush.bf16.msra.mxu0 %v5011
    %7634 = vmatpush.bf16.msra.mxu0 %v5003
    %7635 = vmatpush.bf16.msra.mxu0 %v4995
    %7636 = vmatpush.bf16.msra.mxu0 %v4987
    %7637 = vmatpush.bf16.msra.mxu0 %v4979
    %7638 = vmatpush.bf16.msra.mxu0 %v4971
    %7639 = vmatpush.bf16.msra.mxu0 %v4963
    %7640 = vmatpush.bf16.msra.mxu0 %v4955
    %7641 = vmatmul.bf16.gmra.mxu0 %v1089
    %v7642 = vpop.f32.mrf.mxu0
    %v7643 = vadd.f32 %v7630, %v7642
    %v7644 = vpop.f32.mrf.mxu0
    %7645 = vdwg.mxu0
    %7646 = vmatpush.bf16.msra.mxu0 %v5075
    %7647 = vmatpush.bf16.msra.mxu0 %v5067
    %7648 = vmatpush.bf16.msra.mxu0 %v5059
    %7649 = vmatpush.bf16.msra.mxu0 %v5051
    %7650 = vmatpush.bf16.msra.mxu0 %v5043
    %7651 = vmatpush.bf16.msra.mxu0 %v5035
    %7652 = vmatpush.bf16.msra.mxu0 %v5027
    %7653 = vmatpush.bf16.msra.mxu0 %v5019
    %7654 = vmatmul.bf16.gmra.mxu0 %v1090
    %v7655 = vpop.f32.mrf.mxu0
    %v7656 = vadd.f32 %v7643, %v7655
    %v7657 = vpop.f32.mrf.mxu0
    %7658 = vdwg.mxu0
    %7659 = vmatpush.bf16.msra.mxu0 %v5139
    %7660 = vmatpush.bf16.msra.mxu0 %v5131
    %7661 = vmatpush.bf16.msra.mxu0 %v5123
    %7662 = vmatpush.bf16.msra.mxu0 %v5115
    %7663 = vmatpush.bf16.msra.mxu0 %v5107
    %7664 = vmatpush.bf16.msra.mxu0 %v5099
    %7665 = vmatpush.bf16.msra.mxu0 %v5091
    %7666 = vmatpush.bf16.msra.mxu0 %v5083
    %7667 = vmatmul.bf16.gmra.mxu0 %v1091
    %v7668 = vpop.f32.mrf.mxu0
    %v7669 = vadd.f32 %v7656, %v7668
    %v7670 = vpop.f32.mrf.mxu0
    %7671 = vdwg.mxu0
    %7672 = vmatpush.bf16.msra.mxu0 %v5203
    %7673 = vmatpush.bf16.msra.mxu0 %v5195
    %7674 = vmatpush.bf16.msra.mxu0 %v5187
    %7675 = vmatpush.bf16.msra.mxu0 %v5179
    %7676 = vmatpush.bf16.msra.mxu0 %v5171
    %7677 = vmatpush.bf16.msra.mxu0 %v5163
    %7678 = vmatpush.bf16.msra.mxu0 %v5155
    %7679 = vmatpush.bf16.msra.mxu0 %v5147
    %7680 = vmatmul.bf16.gmra.mxu0 %v1092
    %v7681 = vpop.f32.mrf.mxu0
    %v7682 = vadd.f32 %v7669, %v7681
    %v7683 = vpop.f32.mrf.mxu0
    %7684 = vdwg.mxu0
    %7685 = vmatpush.bf16.msra.mxu0 %v4244
    %7686 = vmatpush.bf16.msra.mxu0 %v4236
    %7687 = vmatpush.bf16.msra.mxu0 %v4228
    %7688 = vmatpush.bf16.msra.mxu0 %v4220
    %7689 = vmatpush.bf16.msra.mxu0 %v4212
    %7690 = vmatpush.bf16.msra.mxu0 %v4204
    %7691 = vmatpush.bf16.msra.mxu0 %v4196
    %7692 = vmatpush.bf16.msra.mxu0 %v4188
    %7693 = vmatmul.bf16.gmra.mxu0 %v1075
    %v7694 = vpop.f32.mrf.mxu0
    %v7695 = vadd.f32 %v1064, %v7694
    %v7696 = vpop.f32.mrf.mxu0
    %7697 = vdwg.mxu0
    %7698 = vmatpush.bf16.msra.mxu0 %v4308
    %7699 = vmatpush.bf16.msra.mxu0 %v4300
    %7700 = vmatpush.bf16.msra.mxu0 %v4292
    %7701 = vmatpush.bf16.msra.mxu0 %v4284
    %7702 = vmatpush.bf16.msra.mxu0 %v4276
    %7703 = vmatpush.bf16.msra.mxu0 %v4268
    %7704 = vmatpush.bf16.msra.mxu0 %v4260
    %7705 = vmatpush.bf16.msra.mxu0 %v4252
    %7706 = vmatmul.bf16.gmra.mxu0 %v1076
    %v7707 = vpop.f32.mrf.mxu0
    %v7708 = vadd.f32 %v7695, %v7707
    %v7709 = vpop.f32.mrf.mxu0
    %7710 = vdwg.mxu0
    %7711 = vmatpush.bf16.msra.mxu0 %v4372
    %7712 = vmatpush.bf16.msra.mxu0 %v4364
    %7713 = vmatpush.bf16.msra.mxu0 %v4356
    %7714 = vmatpush.bf16.msra.mxu0 %v4348
    %7715 = vmatpush.bf16.msra.mxu0 %v4340
    %7716 = vmatpush.bf16.msra.mxu0 %v4332
    %7717 = vmatpush.bf16.msra.mxu0 %v4324
    %7718 = vmatpush.bf16.msra.mxu0 %v4316
    %7719 = vmatmul.bf16.gmra.mxu0 %v1077
    %v7720 = vpop.f32.mrf.mxu0
    %v7721 = vadd.f32 %v7708, %v7720
    %v7722 = vpop.f32.mrf.mxu0
    %7723 = vdwg.mxu0
    %7724 = vmatpush.bf16.msra.mxu0 %v4436
    %7725 = vmatpush.bf16.msra.mxu0 %v4428
    %7726 = vmatpush.bf16.msra.mxu0 %v4420
    %7727 = vmatpush.bf16.msra.mxu0 %v4412
    %7728 = vmatpush.bf16.msra.mxu0 %v4404
    %7729 = vmatpush.bf16.msra.mxu0 %v4396
    %7730 = vmatpush.bf16.msra.mxu0 %v4388
    %7731 = vmatpush.bf16.msra.mxu0 %v4380
    %7732 = vmatmul.bf16.gmra.mxu0 %v1078
    %v7733 = vpop.f32.mrf.mxu0
    %v7734 = vadd.f32 %v7721, %v7733
    %v7735 = vpop.f32.mrf.mxu0
    %7736 = vdwg.mxu0
    %7737 = vmatpush.bf16.msra.mxu0 %v4500
    %7738 = vmatpush.bf16.msra.mxu0 %v4492
    %7739 = vmatpush.bf16.msra.mxu0 %v4484
    %7740 = vmatpush.bf16.msra.mxu0 %v4476
    %7741 = vmatpush.bf16.msra.mxu0 %v4468
    %7742 = vmatpush.bf16.msra.mxu0 %v4460
    %7743 = vmatpush.bf16.msra.mxu0 %v4452
    %7744 = vmatpush.bf16.msra.mxu0 %v4444
    %7745 = vmatmul.bf16.gmra.mxu0 %v1079
    %v7746 = vpop.f32.mrf.mxu0
    %v7747 = vadd.f32 %v7734, %v7746
    %v7748 = vpop.f32.mrf.mxu0
    %7749 = vdwg.mxu0
    %7750 = vmatpush.bf16.msra.mxu0 %v4564
    %7751 = vmatpush.bf16.msra.mxu0 %v4556
    %7752 = vmatpush.bf16.msra.mxu0 %v4548
    %7753 = vmatpush.bf16.msra.mxu0 %v4540
    %7754 = vmatpush.bf16.msra.mxu0 %v4532
    %7755 = vmatpush.bf16.msra.mxu0 %v4524
    %7756 = vmatpush.bf16.msra.mxu0 %v4516
    %7757 = vmatpush.bf16.msra.mxu0 %v4508
    %7758 = vmatmul.bf16.gmra.mxu0 %v1080
    %v7759 = vpop.f32.mrf.mxu0
    %v7760 = vadd.f32 %v7747, %v7759
    %v7761 = vpop.f32.mrf.mxu0
    %7762 = vdwg.mxu0
    %7763 = vmatpush.bf16.msra.mxu0 %v4628
    %7764 = vmatpush.bf16.msra.mxu0 %v4620
    %7765 = vmatpush.bf16.msra.mxu0 %v4612
    %7766 = vmatpush.bf16.msra.mxu0 %v4604
    %7767 = vmatpush.bf16.msra.mxu0 %v4596
    %7768 = vmatpush.bf16.msra.mxu0 %v4588
    %7769 = vmatpush.bf16.msra.mxu0 %v4580
    %7770 = vmatpush.bf16.msra.mxu0 %v4572
    %7771 = vmatmul.bf16.gmra.mxu0 %v1081
    %v7772 = vpop.f32.mrf.mxu0
    %v7773 = vadd.f32 %v7760, %v7772
    %v7774 = vpop.f32.mrf.mxu0
    %7775 = vdwg.mxu0
    %7776 = vmatpush.bf16.msra.mxu0 %v4692
    %7777 = vmatpush.bf16.msra.mxu0 %v4684
    %7778 = vmatpush.bf16.msra.mxu0 %v4676
    %7779 = vmatpush.bf16.msra.mxu0 %v4668
    %7780 = vmatpush.bf16.msra.mxu0 %v4660
    %7781 = vmatpush.bf16.msra.mxu0 %v4652
    %7782 = vmatpush.bf16.msra.mxu0 %v4644
    %7783 = vmatpush.bf16.msra.mxu0 %v4636
    %7784 = vmatmul.bf16.gmra.mxu0 %v1082
    %v7785 = vpop.f32.mrf.mxu0
    %v7786 = vadd.f32 %v7773, %v7785
    %v7787 = vpop.f32.mrf.mxu0
    %7788 = vdwg.mxu0
    %7789 = vmatpush.bf16.msra.mxu0 %v4756
    %7790 = vmatpush.bf16.msra.mxu0 %v4748
    %7791 = vmatpush.bf16.msra.mxu0 %v4740
    %7792 = vmatpush.bf16.msra.mxu0 %v4732
    %7793 = vmatpush.bf16.msra.mxu0 %v4724
    %7794 = vmatpush.bf16.msra.mxu0 %v4716
    %7795 = vmatpush.bf16.msra.mxu0 %v4708
    %7796 = vmatpush.bf16.msra.mxu0 %v4700
    %7797 = vmatmul.bf16.gmra.mxu0 %v1085
    %v7798 = vpop.f32.mrf.mxu0
    %v7799 = vadd.f32 %v7786, %v7798
    %v7800 = vpop.f32.mrf.mxu0
    %7801 = vdwg.mxu0
    %7802 = vmatpush.bf16.msra.mxu0 %v4820
    %7803 = vmatpush.bf16.msra.mxu0 %v4812
    %7804 = vmatpush.bf16.msra.mxu0 %v4804
    %7805 = vmatpush.bf16.msra.mxu0 %v4796
    %7806 = vmatpush.bf16.msra.mxu0 %v4788
    %7807 = vmatpush.bf16.msra.mxu0 %v4780
    %7808 = vmatpush.bf16.msra.mxu0 %v4772
    %7809 = vmatpush.bf16.msra.mxu0 %v4764
    %7810 = vmatmul.bf16.gmra.mxu0 %v1086
    %v7811 = vpop.f32.mrf.mxu0
    %v7812 = vadd.f32 %v7799, %v7811
    %v7813 = vpop.f32.mrf.mxu0
    %7814 = vdwg.mxu0
    %7815 = vmatpush.bf16.msra.mxu0 %v4884
    %7816 = vmatpush.bf16.msra.mxu0 %v4876
    %7817 = vmatpush.bf16.msra.mxu0 %v4868
    %7818 = vmatpush.bf16.msra.mxu0 %v4860
    %7819 = vmatpush.bf16.msra.mxu0 %v4852
    %7820 = vmatpush.bf16.msra.mxu0 %v4844
    %7821 = vmatpush.bf16.msra.mxu0 %v4836
    %7822 = vmatpush.bf16.msra.mxu0 %v4828
    %7823 = vmatmul.bf16.gmra.mxu0 %v1087
    %v7824 = vpop.f32.mrf.mxu0
    %v7825 = vadd.f32 %v7812, %v7824
    %v7826 = vpop.f32.mrf.mxu0
    %7827 = vdwg.mxu0
    %7828 = vmatpush.bf16.msra.mxu0 %v4948
    %7829 = vmatpush.bf16.msra.mxu0 %v4940
    %7830 = vmatpush.bf16.msra.mxu0 %v4932
    %7831 = vmatpush.bf16.msra.mxu0 %v4924
    %7832 = vmatpush.bf16.msra.mxu0 %v4916
    %7833 = vmatpush.bf16.msra.mxu0 %v4908
    %7834 = vmatpush.bf16.msra.mxu0 %v4900
    %7835 = vmatpush.bf16.msra.mxu0 %v4892
    %7836 = vmatmul.bf16.gmra.mxu0 %v1088
    %v7837 = vpop.f32.mrf.mxu0
    %v7838 = vadd.f32 %v7825, %v7837
    %v7839 = vpop.f32.mrf.mxu0
    %7840 = vdwg.mxu0
    %7841 = vmatpush.bf16.msra.mxu0 %v5012
    %7842 = vmatpush.bf16.msra.mxu0 %v5004
    %7843 = vmatpush.bf16.msra.mxu0 %v4996
    %7844 = vmatpush.bf16.msra.mxu0 %v4988
    %7845 = vmatpush.bf16.msra.mxu0 %v4980
    %7846 = vmatpush.bf16.msra.mxu0 %v4972
    %7847 = vmatpush.bf16.msra.mxu0 %v4964
    %7848 = vmatpush.bf16.msra.mxu0 %v4956
    %7849 = vmatmul.bf16.gmra.mxu0 %v1089
    %v7850 = vpop.f32.mrf.mxu0
    %v7851 = vadd.f32 %v7838, %v7850
    %v7852 = vpop.f32.mrf.mxu0
    %7853 = vdwg.mxu0
    %7854 = vmatpush.bf16.msra.mxu0 %v5076
    %7855 = vmatpush.bf16.msra.mxu0 %v5068
    %7856 = vmatpush.bf16.msra.mxu0 %v5060
    %7857 = vmatpush.bf16.msra.mxu0 %v5052
    %7858 = vmatpush.bf16.msra.mxu0 %v5044
    %7859 = vmatpush.bf16.msra.mxu0 %v5036
    %7860 = vmatpush.bf16.msra.mxu0 %v5028
    %7861 = vmatpush.bf16.msra.mxu0 %v5020
    %7862 = vmatmul.bf16.gmra.mxu0 %v1090
    %v7863 = vpop.f32.mrf.mxu0
    %v7864 = vadd.f32 %v7851, %v7863
    %v7865 = vpop.f32.mrf.mxu0
    %7866 = vdwg.mxu0
    %7867 = vmatpush.bf16.msra.mxu0 %v5140
    %7868 = vmatpush.bf16.msra.mxu0 %v5132
    %7869 = vmatpush.bf16.msra.mxu0 %v5124
    %7870 = vmatpush.bf16.msra.mxu0 %v5116
    %7871 = vmatpush.bf16.msra.mxu0 %v5108
    %7872 = vmatpush.bf16.msra.mxu0 %v5100
    %7873 = vmatpush.bf16.msra.mxu0 %v5092
    %7874 = vmatpush.bf16.msra.mxu0 %v5084
    %7875 = vmatmul.bf16.gmra.mxu0 %v1091
    %v7876 = vpop.f32.mrf.mxu0
    %v7877 = vadd.f32 %v7864, %v7876
    %v7878 = vpop.f32.mrf.mxu0
    %7879 = vdwg.mxu0
    %7880 = vmatpush.bf16.msra.mxu0 %v5204
    %7881 = vmatpush.bf16.msra.mxu0 %v5196
    %7882 = vmatpush.bf16.msra.mxu0 %v5188
    %7883 = vmatpush.bf16.msra.mxu0 %v5180
    %7884 = vmatpush.bf16.msra.mxu0 %v5172
    %7885 = vmatpush.bf16.msra.mxu0 %v5164
    %7886 = vmatpush.bf16.msra.mxu0 %v5156
    %7887 = vmatpush.bf16.msra.mxu0 %v5148
    %7888 = vmatmul.bf16.gmra.mxu0 %v1092
    %v7889 = vpop.f32.mrf.mxu0
    %v7890 = vadd.f32 %v7877, %v7889
    %v7891 = vpop.f32.mrf.mxu0
    %7892 = vdwg.mxu0
    %v7893 = vmax.f32 %v6434, 0.0
    %v7894 = vmax.f32 %v6642, 0.0
    %v7895 = vmax.f32 %v6850, 0.0
    %v7896 = vmax.f32 %v7058, 0.0
    %v7897 = vmax.f32 %v7266, 0.0
    %v7898 = vmax.f32 %v7474, 0.0
    %v7899 = vmax.f32 %v7682, 0.0
    %v7900 = vmax.f32 %v7890, 0.0
    %v7901 = vpack.c.bf16 %v7894, %v7893
    %v7902 = vpack.c.bf16 %v7896, %v7895
    %v7903 = vpack.c.bf16 %v7898, %v7897
    %v7904 = vpack.c.bf16 %v7900, %v7899
    %v7905 = vld [vmem:[%s3] sm:$0xf]
    %v7906 = vld [vmem:[%s3 + $0x4] sm:$0xf]
    %v7907 = vld [vmem:[%s3 + $0x8] sm:$0xf]
    %v7908 = vld [vmem:[%s3 + $0xc] sm:$0xf]
    %v7909 = vld [vmem:[%s3 + $0x10] sm:$0xf]
    %v7910 = vld [vmem:[%s3 + $0x14] sm:$0xf]
    %v7911 = vld [vmem:[%s3 + $0x18] sm:$0xf]
    %v7912 = vld [vmem:[%s3 + $0x1c] sm:$0xf]
    %v7913 = vld [vmem:[%s3 + $0x20] sm:$0xf]
    %v7914 = vld [vmem:[%s3 + $0x24] sm:$0xf]
    %v7915 = vld [vmem:[%s3 + $0x28] sm:$0xf]
    %v7916 = vld [vmem:[%s3 + $0x2c] sm:$0xf]
    %v7917 = vld [vmem:[%s3 + $0x30] sm:$0xf]
    %v7918 = vld [vmem:[%s3 + $0x34] sm:$0xf]
    %v7919 = vld [vmem:[%s3 + $0x38] sm:$0xf]
    %v7920 = vld [vmem:[%s3 + $0x3c] sm:$0xf]
    %v7921 = vld [vmem:[%s3 + $0x40] sm:$0xf]
    %v7922 = vld [vmem:[%s3 + $0x44] sm:$0xf]
    %v7923 = vld [vmem:[%s3 + $0x48] sm:$0xf]
    %v7924 = vld [vmem:[%s3 + $0x4c] sm:$0xf]
    %v7925 = vld [vmem:[%s3 + $0x50] sm:$0xf]
    %v7926 = vld [vmem:[%s3 + $0x54] sm:$0xf]
    %v7927 = vld [vmem:[%s3 + $0x58] sm:$0xf]
    %v7928 = vld [vmem:[%s3 + $0x5c] sm:$0xf]
    %v7929 = vld [vmem:[%s3 + $0x60] sm:$0xf]
    %v7930 = vld [vmem:[%s3 + $0x64] sm:$0xf]
    %v7931 = vld [vmem:[%s3 + $0x68] sm:$0xf]
    %v7932 = vld [vmem:[%s3 + $0x6c] sm:$0xf]
    %v7933 = vld [vmem:[%s3 + $0x70] sm:$0xf]
    %v7934 = vld [vmem:[%s3 + $0x74] sm:$0xf]
    %v7935 = vld [vmem:[%s3 + $0x78] sm:$0xf]
    %v7936 = vld [vmem:[%s3 + $0x7c] sm:$0xf]
    %v7937 = vld [vmem:[%s3 + $0x80] sm:$0xf]
    %v7938 = vld [vmem:[%s3 + $0x84] sm:$0xf]
    %v7939 = vld [vmem:[%s3 + $0x88] sm:$0xf]
    %v7940 = vld [vmem:[%s3 + $0x8c] sm:$0xf]
    %v7941 = vld [vmem:[%s3 + $0x90] sm:$0xf]
    %v7942 = vld [vmem:[%s3 + $0x94] sm:$0xf]
    %v7943 = vld [vmem:[%s3 + $0x98] sm:$0xf]
    %v7944 = vld [vmem:[%s3 + $0x9c] sm:$0xf]
    %v7945 = vld [vmem:[%s3 + $0xa0] sm:$0xf]
    %v7946 = vld [vmem:[%s3 + $0xa4] sm:$0xf]
    %v7947 = vld [vmem:[%s3 + $0xa8] sm:$0xf]
    %v7948 = vld [vmem:[%s3 + $0xac] sm:$0xf]
    %v7949 = vld [vmem:[%s3 + $0xb0] sm:$0xf]
    %v7950 = vld [vmem:[%s3 + $0xb4] sm:$0xf]
    %v7951 = vld [vmem:[%s3 + $0xb8] sm:$0xf]
    %v7952 = vld [vmem:[%s3 + $0xbc] sm:$0xf]
    %v7953 = vld [vmem:[%s3 + $0xc0] sm:$0xf]
    %v7954 = vld [vmem:[%s3 + $0xc4] sm:$0xf]
    %v7955 = vld [vmem:[%s3 + $0xc8] sm:$0xf]
    %v7956 = vld [vmem:[%s3 + $0xcc] sm:$0xf]
    %v7957 = vld [vmem:[%s3 + $0xd0] sm:$0xf]
    %v7958 = vld [vmem:[%s3 + $0xd4] sm:$0xf]
    %v7959 = vld [vmem:[%s3 + $0xd8] sm:$0xf]
    %v7960 = vld [vmem:[%s3 + $0xdc] sm:$0xf]
    %v7961 = vld [vmem:[%s3 + $0xe0] sm:$0xf]
    %v7962 = vld [vmem:[%s3 + $0xe4] sm:$0xf]
    %v7963 = vld [vmem:[%s3 + $0xe8] sm:$0xf]
    %v7964 = vld [vmem:[%s3 + $0xec] sm:$0xf]
    %v7965 = vld [vmem:[%s3 + $0xf0] sm:$0xf]
    %v7966 = vld [vmem:[%s3 + $0xf4] sm:$0xf]
    %v7967 = vld [vmem:[%s3 + $0xf8] sm:$0xf]
    %v7968 = vld [vmem:[%s3 + $0xfc] sm:$0xf]
    %v7969 = vld [vmem:[%s4] sm:$0x1]
    %v7971 = vperm.slane %v7969, 0
    %v7975 = vunpack.c.l.b16 %v7901
    %v7976 = vunpack.c.h.b16 %v7901
    %v7977 = vunpack.c.l.b16 %v7902
    %v7978 = vunpack.c.h.b16 %v7902
    %v7979 = vpack.c.b16 %v7975, %v7975
    %v7980 = vpack.c.b16 %v7976, %v7976
    %v7981 = vpack.c.b16 %v7977, %v7977
    %v7982 = vpack.c.b16 %v7978, %v7978
    %v8051 = vunpack.c.l.b16 %v7905
    %v8052 = vunpack.c.l.b16 %v7906
    %v8053 = vunpack.c.l.b16 %v7907
    %v8054 = vunpack.c.l.b16 %v7908
    %v8055 = vunpack.c.l.b16 %v7909
    %v8056 = vunpack.c.l.b16 %v7910
    %v8057 = vunpack.c.l.b16 %v7911
    %v8058 = vunpack.c.l.b16 %v7912
    %v8059 = vunpack.c.l.b16 %v7913
    %v8060 = vunpack.c.l.b16 %v7914
    %v8061 = vunpack.c.l.b16 %v7915
    %v8062 = vunpack.c.l.b16 %v7916
    %v8063 = vunpack.c.l.b16 %v7917
    %v8064 = vunpack.c.l.b16 %v7918
    %v8065 = vunpack.c.l.b16 %v7919
    %v8066 = vunpack.c.l.b16 %v7920
    %v8067 = vunpack.c.l.b16 %v7921
    %v8068 = vunpack.c.l.b16 %v7922
    %v8069 = vunpack.c.l.b16 %v7923
    %v8070 = vunpack.c.l.b16 %v7924
    %v8071 = vunpack.c.l.b16 %v7925
    %v8072 = vunpack.c.l.b16 %v7926
    %v8073 = vunpack.c.l.b16 %v7927
    %v8074 = vunpack.c.l.b16 %v7928
    %v8075 = vunpack.c.l.b16 %v7929
    %v8076 = vunpack.c.l.b16 %v7930
    %v8077 = vunpack.c.l.b16 %v7931
    %v8078 = vunpack.c.l.b16 %v7932
    %v8079 = vunpack.c.l.b16 %v7933
    %v8080 = vunpack.c.l.b16 %v7934
    %v8081 = vunpack.c.l.b16 %v7935
    %v8082 = vunpack.c.l.b16 %v7936
    %v8083 = vunpack.c.l.b16 %v7937
    %v8084 = vunpack.c.l.b16 %v7938
    %v8085 = vunpack.c.l.b16 %v7939
    %v8086 = vunpack.c.l.b16 %v7940
    %v8087 = vunpack.c.l.b16 %v7941
    %v8088 = vunpack.c.l.b16 %v7942
    %v8089 = vunpack.c.l.b16 %v7943
    %v8090 = vunpack.c.l.b16 %v7944
    %v8091 = vunpack.c.l.b16 %v7945
    %v8092 = vunpack.c.l.b16 %v7946
    %v8093 = vunpack.c.l.b16 %v7947
    %v8094 = vunpack.c.l.b16 %v7948
    %v8095 = vunpack.c.l.b16 %v7949
    %v8096 = vunpack.c.l.b16 %v7950
    %v8097 = vunpack.c.l.b16 %v7951
    %v8098 = vunpack.c.l.b16 %v7952
    %v8099 = vunpack.c.l.b16 %v7953
    %v8100 = vunpack.c.l.b16 %v7954
    %v8101 = vunpack.c.l.b16 %v7955
    %v8102 = vunpack.c.l.b16 %v7956
    %v8103 = vunpack.c.l.b16 %v7957
    %v8104 = vunpack.c.l.b16 %v7958
    %v8105 = vunpack.c.l.b16 %v7959
    %v8106 = vunpack.c.l.b16 %v7960
    %v8107 = vunpack.c.l.b16 %v7961
    %v8108 = vunpack.c.l.b16 %v7962
    %v8109 = vunpack.c.l.b16 %v7963
    %v8110 = vunpack.c.l.b16 %v7964
    %v8111 = vunpack.c.l.b16 %v7965
    %v8112 = vunpack.c.l.b16 %v7966
    %v8113 = vunpack.c.l.b16 %v7967
    %v8114 = vunpack.c.l.b16 %v7968
    %v8115 = vpack.c.b16 %v8052, %v8051
    %v8116 = vpack.c.b16 %v8054, %v8053
    %v8117 = vpack.c.b16 %v8056, %v8055
    %v8118 = vpack.c.b16 %v8058, %v8057
    %v8119 = vpack.c.b16 %v8060, %v8059
    %v8120 = vpack.c.b16 %v8062, %v8061
    %v8121 = vpack.c.b16 %v8064, %v8063
    %v8122 = vpack.c.b16 %v8066, %v8065
    %v8123 = vpack.c.b16 %v8068, %v8067
    %v8124 = vpack.c.b16 %v8070, %v8069
    %v8125 = vpack.c.b16 %v8072, %v8071
    %v8126 = vpack.c.b16 %v8074, %v8073
    %v8127 = vpack.c.b16 %v8076, %v8075
    %v8128 = vpack.c.b16 %v8078, %v8077
    %v8129 = vpack.c.b16 %v8080, %v8079
    %v8130 = vpack.c.b16 %v8082, %v8081
    %v8131 = vpack.c.b16 %v8084, %v8083
    %v8132 = vpack.c.b16 %v8086, %v8085
    %v8133 = vpack.c.b16 %v8088, %v8087
    %v8134 = vpack.c.b16 %v8090, %v8089
    %v8135 = vpack.c.b16 %v8092, %v8091
    %v8136 = vpack.c.b16 %v8094, %v8093
    %v8137 = vpack.c.b16 %v8096, %v8095
    %v8138 = vpack.c.b16 %v8098, %v8097
    %v8139 = vpack.c.b16 %v8100, %v8099
    %v8140 = vpack.c.b16 %v8102, %v8101
    %v8141 = vpack.c.b16 %v8104, %v8103
    %v8142 = vpack.c.b16 %v8106, %v8105
    %v8143 = vpack.c.b16 %v8108, %v8107
    %v8144 = vpack.c.b16 %v8110, %v8109
    %v8145 = vpack.c.b16 %v8112, %v8111
    %v8146 = vpack.c.b16 %v8114, %v8113
    %8179 = vmatpush.bf16.msra.mxu0 %v8122
    %8180 = vmatpush.bf16.msra.mxu0 %v8121
    %8181 = vmatpush.bf16.msra.mxu0 %v8120
    %8182 = vmatpush.bf16.msra.mxu0 %v8119
    %8183 = vmatpush.bf16.msra.mxu0 %v8118
    %8184 = vmatpush.bf16.msra.mxu0 %v8117
    %8185 = vmatpush.bf16.msra.mxu0 %v8116
    %8186 = vmatpush.bf16.msra.mxu0 %v8115
    %8187 = vmatmul.bf16.gmra.mxu0 %v7979
    %v8188 = vpop.f32.mrf.mxu0
    %v8189 = vadd.f32 %v7971, %v8188
    %v8190 = vpop.f32.mrf.mxu0
    %8191 = vdwg.mxu0
    %8192 = vmatpush.bf16.msra.mxu0 %v8130
    %8193 = vmatpush.bf16.msra.mxu0 %v8129
    %8194 = vmatpush.bf16.msra.mxu0 %v8128
    %8195 = vmatpush.bf16.msra.mxu0 %v8127
    %8196 = vmatpush.bf16.msra.mxu0 %v8126
    %8197 = vmatpush.bf16.msra.mxu0 %v8125
    %8198 = vmatpush.bf16.msra.mxu0 %v8124
    %8199 = vmatpush.bf16.msra.mxu0 %v8123
    %8200 = vmatmul.bf16.gmra.mxu0 %v7980
    %v8201 = vpop.f32.mrf.mxu0
    %v8202 = vadd.f32 %v8189, %v8201
    %v8203 = vpop.f32.mrf.mxu0
    %8204 = vdwg.mxu0
    %8205 = vmatpush.bf16.msra.mxu0 %v8138
    %8206 = vmatpush.bf16.msra.mxu0 %v8137
    %8207 = vmatpush.bf16.msra.mxu0 %v8136
    %8208 = vmatpush.bf16.msra.mxu0 %v8135
    %8209 = vmatpush.bf16.msra.mxu0 %v8134
    %8210 = vmatpush.bf16.msra.mxu0 %v8133
    %8211 = vmatpush.bf16.msra.mxu0 %v8132
    %8212 = vmatpush.bf16.msra.mxu0 %v8131
    %8213 = vmatmul.bf16.gmra.mxu0 %v7981
    %v8214 = vpop.f32.mrf.mxu0
    %v8215 = vadd.f32 %v8202, %v8214
    %v8216 = vpop.f32.mrf.mxu0
    %8217 = vdwg.mxu0
    %8218 = vmatpush.bf16.msra.mxu0 %v8146
    %8219 = vmatpush.bf16.msra.mxu0 %v8145
    %8220 = vmatpush.bf16.msra.mxu0 %v8144
    %8221 = vmatpush.bf16.msra.mxu0 %v8143
    %8222 = vmatpush.bf16.msra.mxu0 %v8142
    %8223 = vmatpush.bf16.msra.mxu0 %v8141
    %8224 = vmatpush.bf16.msra.mxu0 %v8140
    %8225 = vmatpush.bf16.msra.mxu0 %v8139
    %8226 = vmatmul.bf16.gmra.mxu0 %v7982
    %v8227 = vpop.f32.mrf.mxu0
    %v8228 = vadd.f32 %v8215, %v8227
    %v8229 = vpop.f32.mrf.mxu0
    %8230 = vdwg.mxu0
    %v8231 = vld [vmem:[%s5] sm:$0xf]
    %v8232 = vld [vmem:[%s5 + $0x4] sm:$0xf]
    %v8233 = vld [vmem:[%s5 + $0x8] sm:$0xf]
    %v8234 = vld [vmem:[%s5 + $0xc] sm:$0xf]
    %v8235 = vld [vmem:[%s5 + $0x10] sm:$0xf]
    %v8236 = vld [vmem:[%s5 + $0x14] sm:$0xf]
    %v8237 = vld [vmem:[%s5 + $0x18] sm:$0xf]
    %v8238 = vld [vmem:[%s5 + $0x1c] sm:$0xf]
    %v8239 = vld [vmem:[%s5 + $0x20] sm:$0xf]
    %v8240 = vld [vmem:[%s5 + $0x24] sm:$0xf]
    %v8241 = vld [vmem:[%s5 + $0x28] sm:$0xf]
    %v8242 = vld [vmem:[%s5 + $0x2c] sm:$0xf]
    %v8243 = vld [vmem:[%s5 + $0x30] sm:$0xf]
    %v8244 = vld [vmem:[%s5 + $0x34] sm:$0xf]
    %v8245 = vld [vmem:[%s5 + $0x38] sm:$0xf]
    %v8246 = vld [vmem:[%s5 + $0x3c] sm:$0xf]
    %v8247 = vld [vmem:[%s5 + $0x40] sm:$0xf]
    %v8248 = vld [vmem:[%s5 + $0x44] sm:$0xf]
    %v8249 = vld [vmem:[%s5 + $0x48] sm:$0xf]
    %v8250 = vld [vmem:[%s5 + $0x4c] sm:$0xf]
    %v8251 = vld [vmem:[%s5 + $0x50] sm:$0xf]
    %v8252 = vld [vmem:[%s5 + $0x54] sm:$0xf]
    %v8253 = vld [vmem:[%s5 + $0x58] sm:$0xf]
    %v8254 = vld [vmem:[%s5 + $0x5c] sm:$0xf]
    %v8255 = vld [vmem:[%s5 + $0x60] sm:$0xf]
    %v8256 = vld [vmem:[%s5 + $0x64] sm:$0xf]
    %v8257 = vld [vmem:[%s5 + $0x68] sm:$0xf]
    %v8258 = vld [vmem:[%s5 + $0x6c] sm:$0xf]
    %v8259 = vld [vmem:[%s5 + $0x70] sm:$0xf]
    %v8260 = vld [vmem:[%s5 + $0x74] sm:$0xf]
    %v8261 = vld [vmem:[%s5 + $0x78] sm:$0xf]
    %v8262 = vld [vmem:[%s5 + $0x7c] sm:$0xf]
    %v8263 = vld [vmem:[%s5 + $0x80] sm:$0xf]
    %v8264 = vld [vmem:[%s5 + $0x84] sm:$0xf]
    %v8265 = vld [vmem:[%s5 + $0x88] sm:$0xf]
    %v8266 = vld [vmem:[%s5 + $0x8c] sm:$0xf]
    %v8267 = vld [vmem:[%s5 + $0x90] sm:$0xf]
    %v8268 = vld [vmem:[%s5 + $0x94] sm:$0xf]
    %v8269 = vld [vmem:[%s5 + $0x98] sm:$0xf]
    %v8270 = vld [vmem:[%s5 + $0x9c] sm:$0xf]
    %v8271 = vld [vmem:[%s5 + $0xa0] sm:$0xf]
    %v8272 = vld [vmem:[%s5 + $0xa4] sm:$0xf]
    %v8273 = vld [vmem:[%s5 + $0xa8] sm:$0xf]
    %v8274 = vld [vmem:[%s5 + $0xac] sm:$0xf]
    %v8275 = vld [vmem:[%s5 + $0xb0] sm:$0xf]
    %v8276 = vld [vmem:[%s5 + $0xb4] sm:$0xf]
    %v8277 = vld [vmem:[%s5 + $0xb8] sm:$0xf]
    %v8278 = vld [vmem:[%s5 + $0xbc] sm:$0xf]
    %v8279 = vld [vmem:[%s5 + $0xc0] sm:$0xf]
    %v8280 = vld [vmem:[%s5 + $0xc4] sm:$0xf]
    %v8281 = vld [vmem:[%s5 + $0xc8] sm:$0xf]
    %v8282 = vld [vmem:[%s5 + $0xcc] sm:$0xf]
    %v8283 = vld [vmem:[%s5 + $0xd0] sm:$0xf]
    %v8284 = vld [vmem:[%s5 + $0xd4] sm:$0xf]
    %v8285 = vld [vmem:[%s5 + $0xd8] sm:$0xf]
    %v8286 = vld [vmem:[%s5 + $0xdc] sm:$0xf]
    %v8287 = vld [vmem:[%s5 + $0xe0] sm:$0xf]
    %v8288 = vld [vmem:[%s5 + $0xe4] sm:$0xf]
    %v8289 = vld [vmem:[%s5 + $0xe8] sm:$0xf]
    %v8290 = vld [vmem:[%s5 + $0xec] sm:$0xf]
    %v8291 = vld [vmem:[%s5 + $0xf0] sm:$0xf]
    %v8292 = vld [vmem:[%s5 + $0xf4] sm:$0xf]
    %v8293 = vld [vmem:[%s5 + $0xf8] sm:$0xf]
    %v8294 = vld [vmem:[%s5 + $0xfc] sm:$0xf]
    %v8295 = vld [vmem:[#allocation2] sm:$0x1]
    %v8297 = vperm.slane %v8295, 0
    %v8301 = vunpack.c.l.b16 %v7903
    %v8302 = vunpack.c.h.b16 %v7903
    %v8303 = vunpack.c.l.b16 %v7904
    %v8304 = vunpack.c.h.b16 %v7904
    %v8305 = vpack.c.b16 %v8301, %v8301
    %v8306 = vpack.c.b16 %v8302, %v8302
    %v8307 = vpack.c.b16 %v8303, %v8303
    %v8308 = vpack.c.b16 %v8304, %v8304
    %v8377 = vunpack.c.l.b16 %v8231
    %v8378 = vunpack.c.l.b16 %v8232
    %v8379 = vunpack.c.l.b16 %v8233
    %v8380 = vunpack.c.l.b16 %v8234
    %v8381 = vunpack.c.l.b16 %v8235
    %v8382 = vunpack.c.l.b16 %v8236
    %v8383 = vunpack.c.l.b16 %v8237
    %v8384 = vunpack.c.l.b16 %v8238
    %v8385 = vunpack.c.l.b16 %v8239
    %v8386 = vunpack.c.l.b16 %v8240
    %v8387 = vunpack.c.l.b16 %v8241
    %v8388 = vunpack.c.l.b16 %v8242
    %v8389 = vunpack.c.l.b16 %v8243
    %v8390 = vunpack.c.l.b16 %v8244
    %v8391 = vunpack.c.l.b16 %v8245
    %v8392 = vunpack.c.l.b16 %v8246
    %v8393 = vunpack.c.l.b16 %v8247
    %v8394 = vunpack.c.l.b16 %v8248
    %v8395 = vunpack.c.l.b16 %v8249
    %v8396 = vunpack.c.l.b16 %v8250
    %v8397 = vunpack.c.l.b16 %v8251
    %v8398 = vunpack.c.l.b16 %v8252
    %v8399 = vunpack.c.l.b16 %v8253
    %v8400 = vunpack.c.l.b16 %v8254
    %v8401 = vunpack.c.l.b16 %v8255
    %v8402 = vunpack.c.l.b16 %v8256
    %v8403 = vunpack.c.l.b16 %v8257
    %v8404 = vunpack.c.l.b16 %v8258
    %v8405 = vunpack.c.l.b16 %v8259
    %v8406 = vunpack.c.l.b16 %v8260
    %v8407 = vunpack.c.l.b16 %v8261
    %v8408 = vunpack.c.l.b16 %v8262
    %v8409 = vunpack.c.l.b16 %v8263
    %v8410 = vunpack.c.l.b16 %v8264
    %v8411 = vunpack.c.l.b16 %v8265
    %v8412 = vunpack.c.l.b16 %v8266
    %v8413 = vunpack.c.l.b16 %v8267
    %v8414 = vunpack.c.l.b16 %v8268
    %v8415 = vunpack.c.l.b16 %v8269
    %v8416 = vunpack.c.l.b16 %v8270
    %v8417 = vunpack.c.l.b16 %v8271
    %v8418 = vunpack.c.l.b16 %v8272
    %v8419 = vunpack.c.l.b16 %v8273
    %v8420 = vunpack.c.l.b16 %v8274
    %v8421 = vunpack.c.l.b16 %v8275
    %v8422 = vunpack.c.l.b16 %v8276
    %v8423 = vunpack.c.l.b16 %v8277
    %v8424 = vunpack.c.l.b16 %v8278
    %v8425 = vunpack.c.l.b16 %v8279
    %v8426 = vunpack.c.l.b16 %v8280
    %v8427 = vunpack.c.l.b16 %v8281
    %v8428 = vunpack.c.l.b16 %v8282
    %v8429 = vunpack.c.l.b16 %v8283
    %v8430 = vunpack.c.l.b16 %v8284
    %v8431 = vunpack.c.l.b16 %v8285
    %v8432 = vunpack.c.l.b16 %v8286
    %v8433 = vunpack.c.l.b16 %v8287
    %v8434 = vunpack.c.l.b16 %v8288
    %v8435 = vunpack.c.l.b16 %v8289
    %v8436 = vunpack.c.l.b16 %v8290
    %v8437 = vunpack.c.l.b16 %v8291
    %v8438 = vunpack.c.l.b16 %v8292
    %v8439 = vunpack.c.l.b16 %v8293
    %v8440 = vunpack.c.l.b16 %v8294
    %v8441 = vpack.c.b16 %v8378, %v8377
    %v8442 = vpack.c.b16 %v8380, %v8379
    %v8443 = vpack.c.b16 %v8382, %v8381
    %v8444 = vpack.c.b16 %v8384, %v8383
    %v8445 = vpack.c.b16 %v8386, %v8385
    %v8446 = vpack.c.b16 %v8388, %v8387
    %v8447 = vpack.c.b16 %v8390, %v8389
    %v8448 = vpack.c.b16 %v8392, %v8391
    %v8449 = vpack.c.b16 %v8394, %v8393
    %v8450 = vpack.c.b16 %v8396, %v8395
    %v8451 = vpack.c.b16 %v8398, %v8397
    %v8452 = vpack.c.b16 %v8400, %v8399
    %v8453 = vpack.c.b16 %v8402, %v8401
    %v8454 = vpack.c.b16 %v8404, %v8403
    %v8455 = vpack.c.b16 %v8406, %v8405
    %v8456 = vpack.c.b16 %v8408, %v8407
    %v8457 = vpack.c.b16 %v8410, %v8409
    %v8458 = vpack.c.b16 %v8412, %v8411
    %v8459 = vpack.c.b16 %v8414, %v8413
    %v8460 = vpack.c.b16 %v8416, %v8415
    %v8461 = vpack.c.b16 %v8418, %v8417
    %v8462 = vpack.c.b16 %v8420, %v8419
    %v8463 = vpack.c.b16 %v8422, %v8421
    %v8464 = vpack.c.b16 %v8424, %v8423
    %v8465 = vpack.c.b16 %v8426, %v8425
    %v8466 = vpack.c.b16 %v8428, %v8427
    %v8467 = vpack.c.b16 %v8430, %v8429
    %v8468 = vpack.c.b16 %v8432, %v8431
    %v8469 = vpack.c.b16 %v8434, %v8433
    %v8470 = vpack.c.b16 %v8436, %v8435
    %v8471 = vpack.c.b16 %v8438, %v8437
    %v8472 = vpack.c.b16 %v8440, %v8439
    %8505 = vmatpush.bf16.msra.mxu0 %v8448
    %8506 = vmatpush.bf16.msra.mxu0 %v8447
    %8507 = vmatpush.bf16.msra.mxu0 %v8446
    %8508 = vmatpush.bf16.msra.mxu0 %v8445
    %8509 = vmatpush.bf16.msra.mxu0 %v8444
    %8510 = vmatpush.bf16.msra.mxu0 %v8443
    %8511 = vmatpush.bf16.msra.mxu0 %v8442
    %8512 = vmatpush.bf16.msra.mxu0 %v8441
    %8513 = vmatmul.bf16.gmra.mxu0 %v8305
    %v8514 = vpop.f32.mrf.mxu0
    %v8515 = vadd.f32 %v8297, %v8514
    %v8516 = vpop.f32.mrf.mxu0
    %8517 = vdwg.mxu0
    %8518 = vmatpush.bf16.msra.mxu0 %v8456
    %8519 = vmatpush.bf16.msra.mxu0 %v8455
    %8520 = vmatpush.bf16.msra.mxu0 %v8454
    %8521 = vmatpush.bf16.msra.mxu0 %v8453
    %8522 = vmatpush.bf16.msra.mxu0 %v8452
    %8523 = vmatpush.bf16.msra.mxu0 %v8451
    %8524 = vmatpush.bf16.msra.mxu0 %v8450
    %8525 = vmatpush.bf16.msra.mxu0 %v8449
    %8526 = vmatmul.bf16.gmra.mxu0 %v8306
    %v8527 = vpop.f32.mrf.mxu0
    %v8528 = vadd.f32 %v8515, %v8527
    %v8529 = vpop.f32.mrf.mxu0
    %8530 = vdwg.mxu0
    %8531 = vmatpush.bf16.msra.mxu0 %v8464
    %8532 = vmatpush.bf16.msra.mxu0 %v8463
    %8533 = vmatpush.bf16.msra.mxu0 %v8462
    %8534 = vmatpush.bf16.msra.mxu0 %v8461
    %8535 = vmatpush.bf16.msra.mxu0 %v8460
    %8536 = vmatpush.bf16.msra.mxu0 %v8459
    %8537 = vmatpush.bf16.msra.mxu0 %v8458
    %8538 = vmatpush.bf16.msra.mxu0 %v8457
    %8539 = vmatmul.bf16.gmra.mxu0 %v8307
    %v8540 = vpop.f32.mrf.mxu0
    %v8541 = vadd.f32 %v8528, %v8540
    %v8542 = vpop.f32.mrf.mxu0
    %8543 = vdwg.mxu0
    %8544 = vmatpush.bf16.msra.mxu0 %v8472
    %8545 = vmatpush.bf16.msra.mxu0 %v8471
    %8546 = vmatpush.bf16.msra.mxu0 %v8470
    %8547 = vmatpush.bf16.msra.mxu0 %v8469
    %8548 = vmatpush.bf16.msra.mxu0 %v8468
    %8549 = vmatpush.bf16.msra.mxu0 %v8467
    %8550 = vmatpush.bf16.msra.mxu0 %v8466
    %8551 = vmatpush.bf16.msra.mxu0 %v8465
    %8552 = vmatmul.bf16.gmra.mxu0 %v8308
    %v8553 = vpop.f32.mrf.mxu0
    %v8554 = vadd.f32 %v8541, %v8553
    %v8555 = vpop.f32.mrf.mxu0
    %8556 = vdwg.mxu0
    %vm8557 = vcmask 25600
    %v8558 = vsel %vm8557, %v8228, 0.0
    %8559 = vadd.xlane.f32.xlu0 %v8558
    %v8560 = vpop.xlane.xlu0 %8559
    %v8561 = vrot.slane %v8560, 4
    %v8562 = vadd.f32 %v8560, %v8561
    %v8563 = vrot.slane %v8562, 2
    %v8564 = vadd.f32 %v8562, %v8563
    %v8565 = vrot.slane %v8564, 1
    %v8566 = vadd.f32 %v8564, %v8565
    %s8567 = vtos %v8566
    %s8568 = smul.f32 %s8567, 0.125
    %8570 = vset.pattern.permute.xlu0 0
    %8571 = vperm.xlu0 %8570, %v8554
    %v8572 = vpop.permute.xlu0 %8571
    %v8574 = vadd.f32 %v8572, %v8228
    %v8575 = vstv %s8568
    %v8576 = vsub.f32 %v8574, %v8575
    %8577 = vst.msk [vmem:[#allocation3] sm:$0x3] %vm8557, %v8576
    // Predicated region
    $region30: #{dueling_dqn_forward.7} parent=1 // pred_check
      _
    $region31: #{dueling_dqn_forward.7} parent=1 // pred_check_branch
      %8579 = sbr.rel (0) target = $region33
    $region32: #{dueling_dqn_forward.7} parent=1 // pred_region
      %8581 = vsyncadd [#allocation4], 0
      %s8583 = sshll.u32 [#allocation3], 4
      %s8584 = int_to_ptr.vmem [resolvable:$true] %s8583
      %s8585 = sshll.u32 %s7, 4
      %s8586 = int_to_ptr.hbm [resolvable:$true] %s8585
      %8588 = dma.vmem_to_hbm [thread:$0]  %s8584, 32, %s8586, [#allocation4]
    $region33: #{dueling_dqn_forward.7} parent=1 // pred_fallthru
      _
    // Predicated region
    $region34: #{dueling_dqn_forward.7} parent=1 // pred_check
      _
    $region35: #{dueling_dqn_forward.7} parent=1 // pred_check_branch
      %8590 = sbr.rel (0) target = $region37
    $region36: #{dueling_dqn_forward.7} parent=1 // pred_region
      %8592 = dma.done [#allocation4], 32
    $region37: #{dueling_dqn_forward.7} parent=1 // pred_fallthru
      _
    %8593 = vsyncpa [#allocation4], 1

</llo_original>
